<compile_context>
chip_gen: v7x
topology: tpu7x:2x2x1
jax: 0.10.0
libtpu: 0.0.40
codegen_flags: <defaults>
</compile_context>

<pallas_src>
import functools

import jax
import jax.numpy as jnp
import numpy as np
from jax.experimental import pallas as pl
from jax.experimental.pallas import tpu as pltpu


# ---------------------------------------------------------------------------
# Offline weight / constant preparation (runs once, outside the jitted step)
# ---------------------------------------------------------------------------
def _build_toeplitz(w, w_in, stride_x):
    """Block-Toeplitz matrices for a 3x3, padding=1 conv over (row, W*C) slabs.

    Returns (stride_x, 3, (w_in+2)*Cin, (w_in//stride_x)*Cout) with
      T[q, ky][u*Cin + c, xo*Cout + co] = w[co, c, ky, u - (xo*stride_x + q)]
    so that conv_out[y, x = xo*stride_x + q, co] = sum_ky A[y+ky, :] @ T[q, ky]
    where A is the zero-padded activation in (row, u*Cin + c) layout.
    """
    w = np.asarray(w, np.float32)
    cout, cin = w.shape[0], w.shape[1]
    wpad = w_in + 2
    wout = w_in // stride_x
    t = np.zeros((stride_x, 3, wpad * cin, wout * cout), np.float32)
    for q in range(stride_x):
        for ky in range(3):
            for kx in range(3):
                blk = w[:, :, ky, kx].T  # (Cin, Cout)
                for xo in range(wout):
                    u = xo * stride_x + q + kx
                    t[q, ky, u * cin:(u + 1) * cin,
                      xo * cout:(xo + 1) * cout] = blk
    return t


def _build_pool_row_select(n_batch, h_in, hpad_in, hpad_out):
    """0/1 matrices selecting conv-output rows of parity p into the next layer's
    zero-padded row frame (also drops rows straddling batch-image boundaries)."""
    ho = h_in // 2
    rd = n_batch * hpad_in - 2
    e = np.zeros((2, n_batch * hpad_out, rd), np.float32)
    for p in range(2):
        for n in range(n_batch):
            for yo in range(ho):
                e[p, n * hpad_out + 1 + yo, n * hpad_in + 2 * yo + p] = 1.0
    return e


def _build_fc_row_select(n_batch, hpad_in, n_rows):
    """0/1 matrices S[h]: pick conv3-output row h of every batch image."""
    rd = n_batch * hpad_in - 2
    s = np.zeros((n_rows, n_batch, rd), np.float32)
    for h in range(n_rows):
        for n in range(n_batch):
            s[h, n, n * hpad_in + h] = 1.0
    return s


def prepare_params(params):
    """Torch-layout params -> kernel operands (all layout work done here, once)."""
    f32 = np.float32
    c1w = np.asarray(params["conv1_w"], f32); c1b = np.asarray(params["conv1_b"], f32)
    c2w = np.asarray(params["conv2_w"], f32); c2b = np.asarray(params["conv2_b"], f32)
    c3w = np.asarray(params["conv3_w"], f32); c3b = np.asarray(params["conv3_b"], f32)
    f1w = np.asarray(params["fc1_w"], f32);   f1b = np.asarray(params["fc1_b"], f32)
    f2w = np.asarray(params["fc2_w"], f32);   f2b = np.asarray(params["fc2_b"], f32)
    f3w = np.asarray(params["fc3_w"], f32);   f3b = np.asarray(params["fc3_b"], f32)

    # fc1: fold the PyTorch NCHW flatten order (c, h, x) into the weight so the
    # kernel consumes conv3 activations in their native (h, x*C + c) layout.
    w1r = f1w.reshape(256, 64, 5, 5).transpose(2, 3, 1, 0).reshape(5, 5 * 64, 256)

    # fc3: pad the 3 logits to 128 lanes for a lane-dense store.
    w3p = np.zeros((64, 128), f32); w3p[:, :3] = f3w.T
    fb3p = np.zeros((128,), f32);   fb3p[:3] = f3b

    bf16 = jnp.bfloat16
    return {
        "t1": jnp.asarray(_build_toeplitz(c1w, 20, 2), bf16),    # (2,3, 66,320)
        "t2": jnp.asarray(_build_toeplitz(c2w, 10, 2), bf16),    # (2,3,384,320)
        "t3": jnp.asarray(_build_toeplitz(c3w, 5, 1)[0], bf16),  # (3, 448,320)
        "b1": jnp.asarray(np.tile(c1b, 10)[None, :], jnp.float32),  # (1,320)
        "b2": jnp.asarray(np.tile(c2b, 5)[None, :], jnp.float32),   # (1,320)
        "b3": jnp.asarray(np.tile(c3b, 5)[None, :], jnp.float32),   # (1,320)
        "w1": jnp.asarray(w1r, bf16),                    # (5,320,256)
        "fb1": jnp.asarray(f1b[None, :], jnp.float32),   # (1,256)
        "w2": jnp.asarray(f2w.T, bf16),                  # (256,64)
        "fb2": jnp.asarray(f2b[None, :], jnp.float32),   # (1,64)
        "w3": jnp.asarray(w3p, bf16),                    # (64,128)
        "fb3": jnp.asarray(fb3p[None, :], jnp.float32),  # (1,128)
    }


# ---------------------------------------------------------------------------
# The fused Pallas kernel
# ---------------------------------------------------------------------------
def _fused_cnn_kernel(
    x_ref,          # (N*20, 60)         f32  input, (n*H + y, x*Cin + c) layout
    t1_ref,         # (2, 3, 66, 320)    bf16 conv1 column-parity Toeplitz
    t2_ref,         # (2, 3, 384, 320)   bf16 conv2 column-parity Toeplitz
    t3_ref,         # (3, 448, 320)      bf16 conv3 Toeplitz
    e1_ref,         # (2, N*12, N*22-2)  bf16 pool1 row-parity selection
    e2_ref,         # (2, N*7,  N*12-2)  bf16 pool2 row-parity selection
    sfc_ref,        # (5, N,    N*7-2)   bf16 conv3-row selection for fc1
    b1_ref, b2_ref, b3_ref,              # (1, 320) f32 conv biases tiled over W
    w1_ref,         # (5, 320, 256)      bf16
    fb1_ref,        # (1, 256)           f32
    w2_ref,         # (256, 64)          bf16
    fb2_ref,        # (1, 64)            f32
    w3_ref,         # (64, 128)          bf16
    fb3_ref,        # (1, 128)           f32
    o_ref,          # (N, 128)           f32  padded logits
    a1_ref,         # scratch (N*22, 66)  f32  zero-padded conv1 input
    a2_ref,         # scratch (N*12, 384) f32  zero-padded conv2 input
    a3_ref,         # scratch (N*7, 448)  f32  zero-padded conv3 input
    *, n_batch,
):
    f32, bf16 = jnp.float32, jnp.bfloat16

    def mm(a, b):
        return jnp.dot(a, b, preferred_element_type=f32)

    # ---- scatter the input into the zero-padded conv1 activation buffer ----
    a1_ref[...] = jnp.zeros_like(a1_ref)
    a2_ref[...] = jnp.zeros_like(a2_ref)
    a3_ref[...] = jnp.zeros_like(a3_ref)
    for n in range(n_batch):
        a1_ref[n * 22 + 1:n * 22 + 21, 3:63] = x_ref[n * 20:(n + 1) * 20, :]

    # ---- fused conv(3x3, pad=1) + bias + relu + 2x2 maxpool ----
    def conv_relu_pool(a_ref, t_ref, e_ref, b_row, out_ref, c_off, width):
        rd = a_ref.shape[0] - 2
        slabs = [a_ref[ky:ky + rd, :].astype(bf16) for ky in range(3)]
        cmax = None
        for q in range(2):                       # column parity of the 2x2 pool
            acc = None
            for ky in range(3):
                d = mm(slabs[ky], t_ref[q, ky])
                acc = d if acc is None else acc + d
            r = jnp.maximum(acc + b_row, 0.0)    # f32 bias + relu on the VPU
            cmax = r if cmax is None else jnp.maximum(cmax, r)
        c16 = cmax.astype(bf16)
        p0 = mm(e_ref[0], c16)                   # exact 0/1 row selection (MXU)
        p1 = mm(e_ref[1], c16)
        out_ref[:, c_off:c_off + width] = jnp.maximum(p0, p1)

    conv_relu_pool(a1_ref, t1_ref, e1_ref, b1_ref[...], a2_ref, 32, 320)
    conv_relu_pool(a2_ref, t2_ref, e2_ref, b2_ref[...], a3_ref, 64, 320)

    # ---- conv3 + relu (no pool) ----
    rd3 = a3_ref.shape[0] - 2
    acc3 = None
    for ky in range(3):
        d = mm(a3_ref[ky:ky + rd3, :].astype(bf16), t3_ref[ky])
        acc3 = d if acc3 is None else acc3 + d
    r3 = jnp.maximum(acc3 + b3_ref[...], 0.0).astype(bf16)   # (N*7-2, 320)

    # ---- fc1 (PyTorch flatten handled via row selection + per-row weight slabs) ----
    y1 = None
    for h in range(5):
        rows = mm(sfc_ref[h], r3).astype(bf16)   # (N, 320), exact selection
        d = mm(rows, w1_ref[h])                  # (N, 256)
        y1 = d if y1 is None else y1 + d
    y1 = jnp.maximum(y1 + fb1_ref[...], 0.0)

    # ---- fc2 + relu, fc3 (logits padded to 128 lanes) ----
    y2 = jnp.maximum(mm(y1.astype(bf16), w2_ref[...]) + fb2_ref[...], 0.0)
    y3 = mm(y2.astype(bf16), w3_ref[...]) + fb3_ref[...]
    o_ref[...] = y3.astype(o_ref.dtype)


def _fused_forward(x2d, ops, n_batch):
    operands = [
        x2d, ops["t1"], ops["t2"], ops["t3"], ops["e1"], ops["e2"], ops["sfc"],
        ops["b1"], ops["b2"], ops["b3"], ops["w1"], ops["fb1"],
        ops["w2"], ops["fb2"], ops["w3"], ops["fb3"],
    ]

    def _full_block(a):
        nd = a.ndim
        return pl.BlockSpec(a.shape, lambda i, _nd=nd: (0,) * _nd)

    return pl.pallas_call(
        functools.partial(_fused_cnn_kernel, n_batch=n_batch),
        out_shape=jax.ShapeDtypeStruct((n_batch, 128), jnp.float32),
        grid=(1,),
        in_specs=[_full_block(a) for a in operands],
        out_specs=pl.BlockSpec((n_batch, 128), lambda i: (0, 0)),
        scratch_shapes=[
            pltpu.VMEM((n_batch * 22, 66), jnp.float32),
            pltpu.VMEM((n_batch * 12, 384), jnp.float32),
            pltpu.VMEM((n_batch * 7, 448), jnp.float32),
        ],
        compiler_params=pltpu.CompilerParams(
            dimension_semantics=("arbitrary",),
            vmem_limit_bytes=32 * 1024 * 1024,
        ),
        cost_estimate=pl.CostEstimate(
            flops=60_000_000, transcendentals=0, bytes_accessed=4_200_000),
    )(*operands)


# ---------------------------------------------------------------------------
# SimpleCNN forward (accepts NCHW input, PyTorch convention)
# ---------------------------------------------------------------------------
def simple_cnn_forward(x_nchw, kernel_params):
    n = x_nchw.shape[0]
    ops = dict(kernel_params)
    # batch-size-dependent 0/1 selection constants (weight independent)
    ops["e1"] = jnp.asarray(_build_pool_row_select(n, 20, 22, 12), jnp.bfloat16)
    ops["e2"] = jnp.asarray(_build_pool_row_select(n, 10, 12, 7), jnp.bfloat16)
    ops["sfc"] = jnp.asarray(_build_fc_row_select(n, 7, 5), jnp.bfloat16)

    # NCHW -> (n*H + y, x*Cin + c): the only per-step layout glue outside the kernel
    x2d = jnp.transpose(x_nchw, (0, 2, 3, 1)).reshape(n * 20, 20 * 3)
    x2d = x2d.astype(jnp.float32)

    logits = _fused_forward(x2d, ops, n)
    return logits[:, :3]


# ---------------------------------------------------------------------------
# Plain-XLA f32 reference (for the in-script self check)
# ---------------------------------------------------------------------------
def reference_forward(x, params):
    def conv(x, w, b):
        y = jax.lax.conv_general_dilated(
            x, w, window_strides=(1, 1), padding=((1, 1), (1, 1)),
            dimension_numbers=("NCHW", "OIHW", "NCHW"))
        return jax.nn.relu(y + b[None, :, None, None])

    def pool(x):
        return jax.lax.reduce_window(
            x, -jnp.inf, jax.lax.max, (1, 1, 2, 2), (1, 1, 2, 2), "VALID")

    x = pool(conv(x, params["conv1_w"], params["conv1_b"]))
    x = pool(conv(x, params["conv2_w"], params["conv2_b"]))
    x = conv(x, params["conv3_w"], params["conv3_b"])
    x = x.reshape(x.shape[0], -1)
    x = jax.nn.relu(x @ params["fc1_w"].T + params["fc1_b"])
    x = jax.nn.relu(x @ params["fc2_w"].T + params["fc2_b"])
    return x @ params["fc3_w"].T + params["fc3_b"]


def init_params(key):
    ks = jax.random.split(key, 12)
    scale = 0.05
    return {
        "conv1_w": scale * jax.random.normal(ks[0], (32, 3, 3, 3), jnp.float32),
        "conv1_b": scale * jax.random.normal(ks[1], (32,), jnp.float32),
        "conv2_w": scale * jax.random.normal(ks[2], (64, 32, 3, 3), jnp.float32),
        "conv2_b": scale * jax.random.normal(ks[3], (64,), jnp.float32),
        "conv3_w": scale * jax.random.normal(ks[4], (64, 64, 3, 3), jnp.float32),
        "conv3_b": scale * jax.random.normal(ks[5], (64,), jnp.float32),
        "fc1_w": scale * jax.random.normal(ks[6], (256, 64 * 5 * 5), jnp.float32),
        "fc1_b": scale * jax.random.normal(ks[7], (256,), jnp.float32),
        "fc2_w": scale * jax.random.normal(ks[8], (64, 256), jnp.float32),
        "fc2_b": scale * jax.random.normal(ks[9], (64,), jnp.float32),
        "fc3_w": scale * jax.random.normal(ks[10], (3, 64), jnp.float32),
        "fc3_b": scale * jax.random.normal(ks[11], (3,), jnp.float32),
    }


if __name__ == "__main__":
    key = jax.random.PRNGKey(0)
    k_x, k_p = jax.random.split(key)

    # Input must be 20x20 spatial so that 64 * 5 * 5 matches fc1 (two 2x2 pools).
    x = jax.random.normal(k_x, (2, 3, 20, 20), jnp.float32)  # NCHW like PyTorch
    params = init_params(k_p)

    kernel_params = prepare_params(params)   # one-time offline weight layout work
    fwd = jax.jit(simple_cnn_forward)
    out = jax.block_until_ready(fwd(x, kernel_params))

    assert out.shape == (2, 3), out.shape
    assert out.dtype == jnp.float32

    # Self-check vs a plain-XLA f32 reference (bf16 MXU operands -> loose tolerance).
    ref = jax.block_until_ready(jax.jit(reference_forward)(x, params))
    np.testing.assert_allclose(np.asarray(out), np.asarray(ref), rtol=5e-2, atol=3e-2)

    print("KERNEL_OK")
</pallas_src>

<mosaic_0001>
module attributes {stable_mosaic.version = 11 : i64} {
  func.func @_fused_cnn_kernel(%arg0: i32, %arg1: memref<40x60xf32, #tpu.memory_space<vmem>>, %arg2: memref<2x3x66x320xbf16, #tpu.memory_space<vmem>>, %arg3: memref<2x3x384x320xbf16, #tpu.memory_space<vmem>>, %arg4: memref<3x448x320xbf16, #tpu.memory_space<vmem>>, %arg5: memref<2x24x42xbf16, #tpu.memory_space<vmem>>, %arg6: memref<2x14x22xbf16, #tpu.memory_space<vmem>>, %arg7: memref<5x2x12xbf16, #tpu.memory_space<vmem>>, %arg8: memref<1x320xf32, #tpu.memory_space<vmem>>, %arg9: memref<1x320xf32, #tpu.memory_space<vmem>>, %arg10: memref<1x320xf32, #tpu.memory_space<vmem>>, %arg11: memref<5x320x256xbf16, #tpu.memory_space<vmem>>, %arg12: memref<1x256xf32, #tpu.memory_space<vmem>>, %arg13: memref<256x64xbf16, #tpu.memory_space<vmem>>, %arg14: memref<1x64xf32, #tpu.memory_space<vmem>>, %arg15: memref<64x128xbf16, #tpu.memory_space<vmem>>, %arg16: memref<1x128xf32, #tpu.memory_space<vmem>>, %arg17: memref<2x128xf32, #tpu.memory_space<vmem>>, %arg18: memref<44x66xf32, #tpu.memory_space<vmem>>, %arg19: memref<24x384xf32, #tpu.memory_space<vmem>>, %arg20: memref<14x448xf32, #tpu.memory_space<vmem>>) attributes {dimension_semantics = [#tpu.dimension_semantics<arbitrary>], iteration_bounds = array<i64: 1>, scalar_prefetch = 0 : i64, scratch_operands = 3 : i64, tpu.core_type = #tpu.core_type<tc>, window_params = [{pipeline_mode = #tpu.pipeline_mode<synchronous>, transform_indices = @transform_0, window_bounds = array<i64: 40, 60>}, {pipeline_mode = #tpu.pipeline_mode<synchronous>, transform_indices = @transform_1, window_bounds = array<i64: 2, 3, 66, 320>}, {pipeline_mode = #tpu.pipeline_mode<synchronous>, transform_indices = @transform_2, window_bounds = array<i64: 2, 3, 384, 320>}, {pipeline_mode = #tpu.pipeline_mode<synchronous>, transform_indices = @transform_3, window_bounds = array<i64: 3, 448, 320>}, {pipeline_mode = #tpu.pipeline_mode<synchronous>, transform_indices = @transform_4, window_bounds = array<i64: 2, 24, 42>}, {pipeline_mode = #tpu.pipeline_mode<synchronous>, transform_indices = @transform_5, window_bounds = array<i64: 2, 14, 22>}, {pipeline_mode = #tpu.pipeline_mode<synchronous>, transform_indices = @transform_6, window_bounds = array<i64: 5, 2, 12>}, {pipeline_mode = #tpu.pipeline_mode<synchronous>, transform_indices = @transform_7, window_bounds = array<i64: 1, 320>}, {pipeline_mode = #tpu.pipeline_mode<synchronous>, transform_indices = @transform_8, window_bounds = array<i64: 1, 320>}, {pipeline_mode = #tpu.pipeline_mode<synchronous>, transform_indices = @transform_9, window_bounds = array<i64: 1, 320>}, {pipeline_mode = #tpu.pipeline_mode<synchronous>, transform_indices = @transform_10, window_bounds = array<i64: 5, 320, 256>}, {pipeline_mode = #tpu.pipeline_mode<synchronous>, transform_indices = @transform_11, window_bounds = array<i64: 1, 256>}, {pipeline_mode = #tpu.pipeline_mode<synchronous>, transform_indices = @transform_12, window_bounds = array<i64: 256, 64>}, {pipeline_mode = #tpu.pipeline_mode<synchronous>, transform_indices = @transform_13, window_bounds = array<i64: 1, 64>}, {pipeline_mode = #tpu.pipeline_mode<synchronous>, transform_indices = @transform_14, window_bounds = array<i64: 64, 128>}, {pipeline_mode = #tpu.pipeline_mode<synchronous>, transform_indices = @transform_15, window_bounds = array<i64: 1, 128>}, {pipeline_mode = #tpu.pipeline_mode<synchronous>, transform_indices = @transform_16, window_bounds = array<i64: 2, 128>}]} {
    %cst = arith.constant 0.000000e+00 : f32
    %0 = vector.broadcast %cst : f32 to vector<44x66xf32>
    %c0 = arith.constant 0 : index
    %c0_0 = arith.constant 0 : index
    %1 = vector.load %arg18[%c0, %c0_0] : memref<44x66xf32, #tpu.memory_space<vmem>>, vector<44x66xf32>
    tpu.vector_store %arg18[%c0, %c0_0], %0 {strides = array<i32>} : memref<44x66xf32, #tpu.memory_space<vmem>>, vector<44x66xf32>,
    %cst_1 = arith.constant 0.000000e+00 : f32
    %2 = vector.broadcast %cst_1 : f32 to vector<24x384xf32>
    %c0_2 = arith.constant 0 : index
    %c0_3 = arith.constant 0 : index
    %3 = vector.load %arg19[%c0_2, %c0_3] : memref<24x384xf32, #tpu.memory_space<vmem>>, vector<24x384xf32>
    tpu.vector_store %arg19[%c0_2, %c0_3], %2 {strides = array<i32>} : memref<24x384xf32, #tpu.memory_space<vmem>>, vector<24x384xf32>,
    %cst_4 = arith.constant 0.000000e+00 : f32
    %4 = vector.broadcast %cst_4 : f32 to vector<14x448xf32>
    %c0_5 = arith.constant 0 : index
    %c0_6 = arith.constant 0 : index
    %5 = vector.load %arg20[%c0_5, %c0_6] : memref<14x448xf32, #tpu.memory_space<vmem>>, vector<14x448xf32>
    tpu.vector_store %arg20[%c0_5, %c0_6], %4 {strides = array<i32>} : memref<14x448xf32, #tpu.memory_space<vmem>>, vector<14x448xf32>,
    %c0_7 = arith.constant 0 : index
    %c0_8 = arith.constant 0 : index
    %6 = vector.load %arg1[%c0_7, %c0_8] : memref<40x60xf32, #tpu.memory_space<vmem>>, vector<20x60xf32>
    %c1 = arith.constant 1 : index
    %c3 = arith.constant 3 : index
    %7 = vector.load %arg18[%c1, %c3] : memref<44x66xf32, #tpu.memory_space<vmem>>, vector<20x60xf32>
    tpu.vector_store %arg18[%c1, %c3], %6 {strides = array<i32>} : memref<44x66xf32, #tpu.memory_space<vmem>>, vector<20x60xf32>,
    %c20 = arith.constant 20 : index
    %c0_9 = arith.constant 0 : index
    %8 = vector.load %arg1[%c20, %c0_9] : memref<40x60xf32, #tpu.memory_space<vmem>>, vector<20x60xf32>
    %c23 = arith.constant 23 : index
    %c3_10 = arith.constant 3 : index
    %9 = vector.load %arg18[%c23, %c3_10] : memref<44x66xf32, #tpu.memory_space<vmem>>, vector<20x60xf32>
    tpu.vector_store %arg18[%c23, %c3_10], %8 {strides = array<i32>} : memref<44x66xf32, #tpu.memory_space<vmem>>, vector<20x60xf32>,
    %c0_11 = arith.constant 0 : index
    %c0_12 = arith.constant 0 : index
    %10 = vector.load %arg8[%c0_11, %c0_12] : memref<1x320xf32, #tpu.memory_space<vmem>>, vector<1x320xf32>
    %c0_13 = arith.constant 0 : index
    %c0_14 = arith.constant 0 : index
    %11 = vector.load %arg18[%c0_13, %c0_14] : memref<44x66xf32, #tpu.memory_space<vmem>>, vector<42x66xf32>
    %12 = arith.truncf %11 : vector<42x66xf32> to vector<42x66xbf16>
    %c1_15 = arith.constant 1 : index
    %c0_16 = arith.constant 0 : index
    %13 = vector.load %arg18[%c1_15, %c0_16] : memref<44x66xf32, #tpu.memory_space<vmem>>, vector<42x66xf32>
    %14 = arith.truncf %13 : vector<42x66xf32> to vector<42x66xbf16>
    %c2 = arith.constant 2 : index
    %c0_17 = arith.constant 0 : index
    %15 = vector.load %arg18[%c2, %c0_17] : memref<44x66xf32, #tpu.memory_space<vmem>>, vector<42x66xf32>
    %16 = arith.truncf %15 : vector<42x66xf32> to vector<42x66xbf16>
    %c0_18 = arith.constant 0 : index
    %c0_19 = arith.constant 0 : index
    %c0_20 = arith.constant 0 : index
    %c0_21 = arith.constant 0 : index
    %17 = vector.load %arg2[%c0_18, %c0_19, %c0_20, %c0_21] : memref<2x3x66x320xbf16, #tpu.memory_space<vmem>>, vector<1x1x66x320xbf16>
    %18 = vector.shape_cast %17 : vector<1x1x66x320xbf16> to vector<66x320xbf16>
    %cst_22 = arith.constant dense<0.000000e+00> : vector<42x320xf32>
    %19 = tpu.matmul %12, %18, %cst_22 {dimension_numbers = #tpu.dot_dimension_numbers<[1], [0], [0], [1], [0, 0, 1, 1], [], []>} : vector<42x66xbf16>, vector<66x320xbf16>, vector<42x320xf32> -> vector<42x320xf32>
    %c0_23 = arith.constant 0 : index
    %c1_24 = arith.constant 1 : index
    %c0_25 = arith.constant 0 : index
    %c0_26 = arith.constant 0 : index
    %20 = vector.load %arg2[%c0_23, %c1_24, %c0_25, %c0_26] : memref<2x3x66x320xbf16, #tpu.memory_space<vmem>>, vector<1x1x66x320xbf16>
    %21 = vector.shape_cast %20 : vector<1x1x66x320xbf16> to vector<66x320xbf16>
    %cst_27 = arith.constant dense<0.000000e+00> : vector<42x320xf32>
    %22 = tpu.matmul %14, %21, %cst_27 {dimension_numbers = #tpu.dot_dimension_numbers<[1], [0], [0], [1], [0, 0, 1, 1], [], []>} : vector<42x66xbf16>, vector<66x320xbf16>, vector<42x320xf32> -> vector<42x320xf32>
    %23 = arith.addf %19, %22 : vector<42x320xf32>
    %c0_28 = arith.constant 0 : index
    %c2_29 = arith.constant 2 : index
    %c0_30 = arith.constant 0 : index
    %c0_31 = arith.constant 0 : index
    %24 = vector.load %arg2[%c0_28, %c2_29, %c0_30, %c0_31] : memref<2x3x66x320xbf16, #tpu.memory_space<vmem>>, vector<1x1x66x320xbf16>
    %25 = vector.shape_cast %24 : vector<1x1x66x320xbf16> to vector<66x320xbf16>
    %cst_32 = arith.constant dense<0.000000e+00> : vector<42x320xf32>
    %26 = tpu.matmul %16, %25, %cst_32 {dimension_numbers = #tpu.dot_dimension_numbers<[1], [0], [0], [1], [0, 0, 1, 1], [], []>} : vector<42x66xbf16>, vector<66x320xbf16>, vector<42x320xf32> -> vector<42x320xf32>
    %27 = arith.addf %23, %26 : vector<42x320xf32>
    %28 = vector.broadcast %10 : vector<1x320xf32> to vector<42x320xf32>
    %29 = arith.addf %27, %28 : vector<42x320xf32>
    %cst_33 = arith.constant 0.000000e+00 : f32
    %30 = vector.broadcast %cst_33 : f32 to vector<42x320xf32>
    %31 = arith.maximumf %29, %30 : vector<42x320xf32>
    %c1_34 = arith.constant 1 : index
    %c0_35 = arith.constant 0 : index
    %c0_36 = arith.constant 0 : index
    %c0_37 = arith.constant 0 : index
    %32 = vector.load %arg2[%c1_34, %c0_35, %c0_36, %c0_37] : memref<2x3x66x320xbf16, #tpu.memory_space<vmem>>, vector<1x1x66x320xbf16>
    %33 = vector.shape_cast %32 : vector<1x1x66x320xbf16> to vector<66x320xbf16>
    %cst_38 = arith.constant dense<0.000000e+00> : vector<42x320xf32>
    %34 = tpu.matmul %12, %33, %cst_38 {dimension_numbers = #tpu.dot_dimension_numbers<[1], [0], [0], [1], [0, 0, 1, 1], [], []>} : vector<42x66xbf16>, vector<66x320xbf16>, vector<42x320xf32> -> vector<42x320xf32>
    %c1_39 = arith.constant 1 : index
    %c1_40 = arith.constant 1 : index
    %c0_41 = arith.constant 0 : index
    %c0_42 = arith.constant 0 : index
    %35 = vector.load %arg2[%c1_39, %c1_40, %c0_41, %c0_42] : memref<2x3x66x320xbf16, #tpu.memory_space<vmem>>, vector<1x1x66x320xbf16>
    %36 = vector.shape_cast %35 : vector<1x1x66x320xbf16> to vector<66x320xbf16>
    %cst_43 = arith.constant dense<0.000000e+00> : vector<42x320xf32>
    %37 = tpu.matmul %14, %36, %cst_43 {dimension_numbers = #tpu.dot_dimension_numbers<[1], [0], [0], [1], [0, 0, 1, 1], [], []>} : vector<42x66xbf16>, vector<66x320xbf16>, vector<42x320xf32> -> vector<42x320xf32>
    %38 = arith.addf %34, %37 : vector<42x320xf32>
    %c1_44 = arith.constant 1 : index
    %c2_45 = arith.constant 2 : index
    %c0_46 = arith.constant 0 : index
    %c0_47 = arith.constant 0 : index
    %39 = vector.load %arg2[%c1_44, %c2_45, %c0_46, %c0_47] : memref<2x3x66x320xbf16, #tpu.memory_space<vmem>>, vector<1x1x66x320xbf16>
    %40 = vector.shape_cast %39 : vector<1x1x66x320xbf16> to vector<66x320xbf16>
    %cst_48 = arith.constant dense<0.000000e+00> : vector<42x320xf32>
    %41 = tpu.matmul %16, %40, %cst_48 {dimension_numbers = #tpu.dot_dimension_numbers<[1], [0], [0], [1], [0, 0, 1, 1], [], []>} : vector<42x66xbf16>, vector<66x320xbf16>, vector<42x320xf32> -> vector<42x320xf32>
    %42 = arith.addf %38, %41 : vector<42x320xf32>
    %43 = vector.broadcast %10 : vector<1x320xf32> to vector<42x320xf32>
    %44 = arith.addf %42, %43 : vector<42x320xf32>
    %cst_49 = arith.constant 0.000000e+00 : f32
    %45 = vector.broadcast %cst_49 : f32 to vector<42x320xf32>
    %46 = arith.maximumf %44, %45 : vector<42x320xf32>
    %47 = arith.maximumf %31, %46 : vector<42x320xf32>
    %48 = arith.truncf %47 : vector<42x320xf32> to vector<42x320xbf16>
    %c0_50 = arith.constant 0 : index
    %c0_51 = arith.constant 0 : index
    %c0_52 = arith.constant 0 : index
    %49 = vector.load %arg5[%c0_50, %c0_51, %c0_52] : memref<2x24x42xbf16, #tpu.memory_space<vmem>>, vector<1x24x42xbf16>
    %50 = vector.shape_cast %49 : vector<1x24x42xbf16> to vector<24x42xbf16>
    %cst_53 = arith.constant dense<0.000000e+00> : vector<24x320xf32>
    %51 = tpu.matmul %50, %48, %cst_53 {dimension_numbers = #tpu.dot_dimension_numbers<[1], [0], [0], [1], [0, 0, 1, 1], [], []>} : vector<24x42xbf16>, vector<42x320xbf16>, vector<24x320xf32> -> vector<24x320xf32>
    %c1_54 = arith.constant 1 : index
    %c0_55 = arith.constant 0 : index
    %c0_56 = arith.constant 0 : index
    %52 = vector.load %arg5[%c1_54, %c0_55, %c0_56] : memref<2x24x42xbf16, #tpu.memory_space<vmem>>, vector<1x24x42xbf16>
    %53 = vector.shape_cast %52 : vector<1x24x42xbf16> to vector<24x42xbf16>
    %cst_57 = arith.constant dense<0.000000e+00> : vector<24x320xf32>
    %54 = tpu.matmul %53, %48, %cst_57 {dimension_numbers = #tpu.dot_dimension_numbers<[1], [0], [0], [1], [0, 0, 1, 1], [], []>} : vector<24x42xbf16>, vector<42x320xbf16>, vector<24x320xf32> -> vector<24x320xf32>
    %55 = arith.maximumf %51, %54 : vector<24x320xf32>
    %c0_58 = arith.constant 0 : index
    %c32 = arith.constant 32 : index
    %56 = vector.load %arg19[%c0_58, %c32] : memref<24x384xf32, #tpu.memory_space<vmem>>, vector<24x320xf32>
    tpu.vector_store %arg19[%c0_58, %c32], %55 {strides = array<i32>} : memref<24x384xf32, #tpu.memory_space<vmem>>, vector<24x320xf32>,
    %c0_59 = arith.constant 0 : index
    %c0_60 = arith.constant 0 : index
    %57 = vector.load %arg9[%c0_59, %c0_60] : memref<1x320xf32, #tpu.memory_space<vmem>>, vector<1x320xf32>
    %c0_61 = arith.constant 0 : index
    %c0_62 = arith.constant 0 : index
    %58 = vector.load %arg19[%c0_61, %c0_62] : memref<24x384xf32, #tpu.memory_space<vmem>>, vector<22x384xf32>
    %59 = arith.truncf %58 : vector<22x384xf32> to vector<22x384xbf16>
    %c1_63 = arith.constant 1 : index
    %c0_64 = arith.constant 0 : index
    %60 = vector.load %arg19[%c1_63, %c0_64] : memref<24x384xf32, #tpu.memory_space<vmem>>, vector<22x384xf32>
    %61 = arith.truncf %60 : vector<22x384xf32> to vector<22x384xbf16>
    %c2_65 = arith.constant 2 : index
    %c0_66 = arith.constant 0 : index
    %62 = vector.load %arg19[%c2_65, %c0_66] : memref<24x384xf32, #tpu.memory_space<vmem>>, vector<22x384xf32>
    %63 = arith.truncf %62 : vector<22x384xf32> to vector<22x384xbf16>
    %c0_67 = arith.constant 0 : index
    %c0_68 = arith.constant 0 : index
    %c0_69 = arith.constant 0 : index
    %c0_70 = arith.constant 0 : index
    %64 = vector.load %arg3[%c0_67, %c0_68, %c0_69, %c0_70] : memref<2x3x384x320xbf16, #tpu.memory_space<vmem>>, vector<1x1x384x320xbf16>
    %65 = vector.shape_cast %64 : vector<1x1x384x320xbf16> to vector<384x320xbf16>
    %cst_71 = arith.constant dense<0.000000e+00> : vector<22x320xf32>
    %66 = tpu.matmul %59, %65, %cst_71 {dimension_numbers = #tpu.dot_dimension_numbers<[1], [0], [0], [1], [0, 0, 1, 1], [], []>} : vector<22x384xbf16>, vector<384x320xbf16>, vector<22x320xf32> -> vector<22x320xf32>
    %c0_72 = arith.constant 0 : index
    %c1_73 = arith.constant 1 : index
    %c0_74 = arith.constant 0 : index
    %c0_75 = arith.constant 0 : index
    %67 = vector.load %arg3[%c0_72, %c1_73, %c0_74, %c0_75] : memref<2x3x384x320xbf16, #tpu.memory_space<vmem>>, vector<1x1x384x320xbf16>
    %68 = vector.shape_cast %67 : vector<1x1x384x320xbf16> to vector<384x320xbf16>
    %cst_76 = arith.constant dense<0.000000e+00> : vector<22x320xf32>
    %69 = tpu.matmul %61, %68, %cst_76 {dimension_numbers = #tpu.dot_dimension_numbers<[1], [0], [0], [1], [0, 0, 1, 1], [], []>} : vector<22x384xbf16>, vector<384x320xbf16>, vector<22x320xf32> -> vector<22x320xf32>
    %70 = arith.addf %66, %69 : vector<22x320xf32>
    %c0_77 = arith.constant 0 : index
    %c2_78 = arith.constant 2 : index
    %c0_79 = arith.constant 0 : index
    %c0_80 = arith.constant 0 : index
    %71 = vector.load %arg3[%c0_77, %c2_78, %c0_79, %c0_80] : memref<2x3x384x320xbf16, #tpu.memory_space<vmem>>, vector<1x1x384x320xbf16>
    %72 = vector.shape_cast %71 : vector<1x1x384x320xbf16> to vector<384x320xbf16>
    %cst_81 = arith.constant dense<0.000000e+00> : vector<22x320xf32>
    %73 = tpu.matmul %63, %72, %cst_81 {dimension_numbers = #tpu.dot_dimension_numbers<[1], [0], [0], [1], [0, 0, 1, 1], [], []>} : vector<22x384xbf16>, vector<384x320xbf16>, vector<22x320xf32> -> vector<22x320xf32>
    %74 = arith.addf %70, %73 : vector<22x320xf32>
    %75 = vector.broadcast %57 : vector<1x320xf32> to vector<22x320xf32>
    %76 = arith.addf %74, %75 : vector<22x320xf32>
    %cst_82 = arith.constant 0.000000e+00 : f32
    %77 = vector.broadcast %cst_82 : f32 to vector<22x320xf32>
    %78 = arith.maximumf %76, %77 : vector<22x320xf32>
    %c1_83 = arith.constant 1 : index
    %c0_84 = arith.constant 0 : index
    %c0_85 = arith.constant 0 : index
    %c0_86 = arith.constant 0 : index
    %79 = vector.load %arg3[%c1_83, %c0_84, %c0_85, %c0_86] : memref<2x3x384x320xbf16, #tpu.memory_space<vmem>>, vector<1x1x384x320xbf16>
    %80 = vector.shape_cast %79 : vector<1x1x384x320xbf16> to vector<384x320xbf16>
    %cst_87 = arith.constant dense<0.000000e+00> : vector<22x320xf32>
    %81 = tpu.matmul %59, %80, %cst_87 {dimension_numbers = #tpu.dot_dimension_numbers<[1], [0], [0], [1], [0, 0, 1, 1], [], []>} : vector<22x384xbf16>, vector<384x320xbf16>, vector<22x320xf32> -> vector<22x320xf32>
    %c1_88 = arith.constant 1 : index
    %c1_89 = arith.constant 1 : index
    %c0_90 = arith.constant 0 : index
    %c0_91 = arith.constant 0 : index
    %82 = vector.load %arg3[%c1_88, %c1_89, %c0_90, %c0_91] : memref<2x3x384x320xbf16, #tpu.memory_space<vmem>>, vector<1x1x384x320xbf16>
    %83 = vector.shape_cast %82 : vector<1x1x384x320xbf16> to vector<384x320xbf16>
    %cst_92 = arith.constant dense<0.000000e+00> : vector<22x320xf32>
    %84 = tpu.matmul %61, %83, %cst_92 {dimension_numbers = #tpu.dot_dimension_numbers<[1], [0], [0], [1], [0, 0, 1, 1], [], []>} : vector<22x384xbf16>, vector<384x320xbf16>, vector<22x320xf32> -> vector<22x320xf32>
    %85 = arith.addf %81, %84 : vector<22x320xf32>
    %c1_93 = arith.constant 1 : index
    %c2_94 = arith.constant 2 : index
    %c0_95 = arith.constant 0 : index
    %c0_96 = arith.constant 0 : index
    %86 = vector.load %arg3[%c1_93, %c2_94, %c0_95, %c0_96] : memref<2x3x384x320xbf16, #tpu.memory_space<vmem>>, vector<1x1x384x320xbf16>
    %87 = vector.shape_cast %86 : vector<1x1x384x320xbf16> to vector<384x320xbf16>
    %cst_97 = arith.constant dense<0.000000e+00> : vector<22x320xf32>
    %88 = tpu.matmul %63, %87, %cst_97 {dimension_numbers = #tpu.dot_dimension_numbers<[1], [0], [0], [1], [0, 0, 1, 1], [], []>} : vector<22x384xbf16>, vector<384x320xbf16>, vector<22x320xf32> -> vector<22x320xf32>
    %89 = arith.addf %85, %88 : vector<22x320xf32>
    %90 = vector.broadcast %57 : vector<1x320xf32> to vector<22x320xf32>
    %91 = arith.addf %89, %90 : vector<22x320xf32>
    %cst_98 = arith.constant 0.000000e+00 : f32
    %92 = vector.broadcast %cst_98 : f32 to vector<22x320xf32>
    %93 = arith.maximumf %91, %92 : vector<22x320xf32>
    %94 = arith.maximumf %78, %93 : vector<22x320xf32>
    %95 = arith.truncf %94 : vector<22x320xf32> to vector<22x320xbf16>
    %c0_99 = arith.constant 0 : index
    %c0_100 = arith.constant 0 : index
    %c0_101 = arith.constant 0 : index
    %96 = vector.load %arg6[%c0_99, %c0_100, %c0_101] : memref<2x14x22xbf16, #tpu.memory_space<vmem>>, vector<1x14x22xbf16>
    %97 = vector.shape_cast %96 : vector<1x14x22xbf16> to vector<14x22xbf16>
    %cst_102 = arith.constant dense<0.000000e+00> : vector<14x320xf32>
    %98 = tpu.matmul %97, %95, %cst_102 {dimension_numbers = #tpu.dot_dimension_numbers<[1], [0], [0], [1], [0, 0, 1, 1], [], []>} : vector<14x22xbf16>, vector<22x320xbf16>, vector<14x320xf32> -> vector<14x320xf32>
    %c1_103 = arith.constant 1 : index
    %c0_104 = arith.constant 0 : index
    %c0_105 = arith.constant 0 : index
    %99 = vector.load %arg6[%c1_103, %c0_104, %c0_105] : memref<2x14x22xbf16, #tpu.memory_space<vmem>>, vector<1x14x22xbf16>
    %100 = vector.shape_cast %99 : vector<1x14x22xbf16> to vector<14x22xbf16>
    %cst_106 = arith.constant dense<0.000000e+00> : vector<14x320xf32>
    %101 = tpu.matmul %100, %95, %cst_106 {dimension_numbers = #tpu.dot_dimension_numbers<[1], [0], [0], [1], [0, 0, 1, 1], [], []>} : vector<14x22xbf16>, vector<22x320xbf16>, vector<14x320xf32> -> vector<14x320xf32>
    %102 = arith.maximumf %98, %101 : vector<14x320xf32>
    %c0_107 = arith.constant 0 : index
    %c64 = arith.constant 64 : index
    %103 = vector.load %arg20[%c0_107, %c64] : memref<14x448xf32, #tpu.memory_space<vmem>>, vector<14x320xf32>
    tpu.vector_store %arg20[%c0_107, %c64], %102 {strides = array<i32>} : memref<14x448xf32, #tpu.memory_space<vmem>>, vector<14x320xf32>,
    %c0_108 = arith.constant 0 : index
    %c0_109 = arith.constant 0 : index
    %104 = vector.load %arg20[%c0_108, %c0_109] : memref<14x448xf32, #tpu.memory_space<vmem>>, vector<12x448xf32>
    %105 = arith.truncf %104 : vector<12x448xf32> to vector<12x448xbf16>
    %c0_110 = arith.constant 0 : index
    %c0_111 = arith.constant 0 : index
    %c0_112 = arith.constant 0 : index
    %106 = vector.load %arg4[%c0_110, %c0_111, %c0_112] : memref<3x448x320xbf16, #tpu.memory_space<vmem>>, vector<1x448x320xbf16>
    %107 = vector.shape_cast %106 : vector<1x448x320xbf16> to vector<448x320xbf16>
    %cst_113 = arith.constant dense<0.000000e+00> : vector<12x320xf32>
    %108 = tpu.matmul %105, %107, %cst_113 {dimension_numbers = #tpu.dot_dimension_numbers<[1], [0], [0], [1], [0, 0, 1, 1], [], []>} : vector<12x448xbf16>, vector<448x320xbf16>, vector<12x320xf32> -> vector<12x320xf32>
    %c1_114 = arith.constant 1 : index
    %c0_115 = arith.constant 0 : index
    %109 = vector.load %arg20[%c1_114, %c0_115] : memref<14x448xf32, #tpu.memory_space<vmem>>, vector<12x448xf32>
    %110 = arith.truncf %109 : vector<12x448xf32> to vector<12x448xbf16>
    %c1_116 = arith.constant 1 : index
    %c0_117 = arith.constant 0 : index
    %c0_118 = arith.constant 0 : index
    %111 = vector.load %arg4[%c1_116, %c0_117, %c0_118] : memref<3x448x320xbf16, #tpu.memory_space<vmem>>, vector<1x448x320xbf16>
    %112 = vector.shape_cast %111 : vector<1x448x320xbf16> to vector<448x320xbf16>
    %cst_119 = arith.constant dense<0.000000e+00> : vector<12x320xf32>
    %113 = tpu.matmul %110, %112, %cst_119 {dimension_numbers = #tpu.dot_dimension_numbers<[1], [0], [0], [1], [0, 0, 1, 1], [], []>} : vector<12x448xbf16>, vector<448x320xbf16>, vector<12x320xf32> -> vector<12x320xf32>
    %114 = arith.addf %108, %113 : vector<12x320xf32>
    %c2_120 = arith.constant 2 : index
    %c0_121 = arith.constant 0 : index
    %115 = vector.load %arg20[%c2_120, %c0_121] : memref<14x448xf32, #tpu.memory_space<vmem>>, vector<12x448xf32>
    %116 = arith.truncf %115 : vector<12x448xf32> to vector<12x448xbf16>
    %c2_122 = arith.constant 2 : index
    %c0_123 = arith.constant 0 : index
    %c0_124 = arith.constant 0 : index
    %117 = vector.load %arg4[%c2_122, %c0_123, %c0_124] : memref<3x448x320xbf16, #tpu.memory_space<vmem>>, vector<1x448x320xbf16>
    %118 = vector.shape_cast %117 : vector<1x448x320xbf16> to vector<448x320xbf16>
    %cst_125 = arith.constant dense<0.000000e+00> : vector<12x320xf32>
    %119 = tpu.matmul %116, %118, %cst_125 {dimension_numbers = #tpu.dot_dimension_numbers<[1], [0], [0], [1], [0, 0, 1, 1], [], []>} : vector<12x448xbf16>, vector<448x320xbf16>, vector<12x320xf32> -> vector<12x320xf32>
    %120 = arith.addf %114, %119 : vector<12x320xf32>
    %c0_126 = arith.constant 0 : index
    %c0_127 = arith.constant 0 : index
    %121 = vector.load %arg10[%c0_126, %c0_127] : memref<1x320xf32, #tpu.memory_space<vmem>>, vector<1x320xf32>
    %122 = vector.broadcast %121 : vector<1x320xf32> to vector<12x320xf32>
    %123 = arith.addf %120, %122 : vector<12x320xf32>
    %cst_128 = arith.constant 0.000000e+00 : f32
    %124 = vector.broadcast %cst_128 : f32 to vector<12x320xf32>
    %125 = arith.maximumf %123, %124 : vector<12x320xf32>
    %126 = arith.truncf %125 : vector<12x320xf32> to vector<12x320xbf16>
    %c0_129 = arith.constant 0 : index
    %c0_130 = arith.constant 0 : index
    %c0_131 = arith.constant 0 : index
    %127 = vector.load %arg7[%c0_129, %c0_130, %c0_131] : memref<5x2x12xbf16, #tpu.memory_space<vmem>>, vector<1x2x12xbf16>
    %128 = vector.shape_cast %127 : vector<1x2x12xbf16> to vector<2x12xbf16>
    %cst_132 = arith.constant dense<0.000000e+00> : vector<2x320xf32>
    %129 = tpu.matmul %128, %126, %cst_132 {dimension_numbers = #tpu.dot_dimension_numbers<[1], [0], [0], [1], [0, 0, 1, 1], [], []>} : vector<2x12xbf16>, vector<12x320xbf16>, vector<2x320xf32> -> vector<2x320xf32>
    %130 = arith.truncf %129 : vector<2x320xf32> to vector<2x320xbf16>
    %c0_133 = arith.constant 0 : index
    %c0_134 = arith.constant 0 : index
    %c0_135 = arith.constant 0 : index
    %131 = vector.load %arg11[%c0_133, %c0_134, %c0_135] : memref<5x320x256xbf16, #tpu.memory_space<vmem>>, vector<1x320x256xbf16>
    %132 = vector.shape_cast %131 : vector<1x320x256xbf16> to vector<320x256xbf16>
    %cst_136 = arith.constant dense<0.000000e+00> : vector<2x256xf32>
    %133 = tpu.matmul %130, %132, %cst_136 {dimension_numbers = #tpu.dot_dimension_numbers<[1], [0], [0], [1], [0, 0, 1, 1], [], []>} : vector<2x320xbf16>, vector<320x256xbf16>, vector<2x256xf32> -> vector<2x256xf32>
    %c1_137 = arith.constant 1 : index
    %c0_138 = arith.constant 0 : index
    %c0_139 = arith.constant 0 : index
    %134 = vector.load %arg7[%c1_137, %c0_138, %c0_139] : memref<5x2x12xbf16, #tpu.memory_space<vmem>>, vector<1x2x12xbf16>
    %135 = vector.shape_cast %134 : vector<1x2x12xbf16> to vector<2x12xbf16>
    %cst_140 = arith.constant dense<0.000000e+00> : vector<2x320xf32>
    %136 = tpu.matmul %135, %126, %cst_140 {dimension_numbers = #tpu.dot_dimension_numbers<[1], [0], [0], [1], [0, 0, 1, 1], [], []>} : vector<2x12xbf16>, vector<12x320xbf16>, vector<2x320xf32> -> vector<2x320xf32>
    %137 = arith.truncf %136 : vector<2x320xf32> to vector<2x320xbf16>
    %c1_141 = arith.constant 1 : index
    %c0_142 = arith.constant 0 : index
    %c0_143 = arith.constant 0 : index
    %138 = vector.load %arg11[%c1_141, %c0_142, %c0_143] : memref<5x320x256xbf16, #tpu.memory_space<vmem>>, vector<1x320x256xbf16>
    %139 = vector.shape_cast %138 : vector<1x320x256xbf16> to vector<320x256xbf16>
    %cst_144 = arith.constant dense<0.000000e+00> : vector<2x256xf32>
    %140 = tpu.matmul %137, %139, %cst_144 {dimension_numbers = #tpu.dot_dimension_numbers<[1], [0], [0], [1], [0, 0, 1, 1], [], []>} : vector<2x320xbf16>, vector<320x256xbf16>, vector<2x256xf32> -> vector<2x256xf32>
    %141 = arith.addf %133, %140 : vector<2x256xf32>
    %c2_145 = arith.constant 2 : index
    %c0_146 = arith.constant 0 : index
    %c0_147 = arith.constant 0 : index
    %142 = vector.load %arg7[%c2_145, %c0_146, %c0_147] : memref<5x2x12xbf16, #tpu.memory_space<vmem>>, vector<1x2x12xbf16>
    %143 = vector.shape_cast %142 : vector<1x2x12xbf16> to vector<2x12xbf16>
    %cst_148 = arith.constant dense<0.000000e+00> : vector<2x320xf32>
    %144 = tpu.matmul %143, %126, %cst_148 {dimension_numbers = #tpu.dot_dimension_numbers<[1], [0], [0], [1], [0, 0, 1, 1], [], []>} : vector<2x12xbf16>, vector<12x320xbf16>, vector<2x320xf32> -> vector<2x320xf32>
    %145 = arith.truncf %144 : vector<2x320xf32> to vector<2x320xbf16>
    %c2_149 = arith.constant 2 : index
    %c0_150 = arith.constant 0 : index
    %c0_151 = arith.constant 0 : index
    %146 = vector.load %arg11[%c2_149, %c0_150, %c0_151] : memref<5x320x256xbf16, #tpu.memory_space<vmem>>, vector<1x320x256xbf16>
    %147 = vector.shape_cast %146 : vector<1x320x256xbf16> to vector<320x256xbf16>
    %cst_152 = arith.constant dense<0.000000e+00> : vector<2x256xf32>
    %148 = tpu.matmul %145, %147, %cst_152 {dimension_numbers = #tpu.dot_dimension_numbers<[1], [0], [0], [1], [0, 0, 1, 1], [], []>} : vector<2x320xbf16>, vector<320x256xbf16>, vector<2x256xf32> -> vector<2x256xf32>
    %149 = arith.addf %141, %148 : vector<2x256xf32>
    %c3_153 = arith.constant 3 : index
    %c0_154 = arith.constant 0 : index
    %c0_155 = arith.constant 0 : index
    %150 = vector.load %arg7[%c3_153, %c0_154, %c0_155] : memref<5x2x12xbf16, #tpu.memory_space<vmem>>, vector<1x2x12xbf16>
    %151 = vector.shape_cast %150 : vector<1x2x12xbf16> to vector<2x12xbf16>
    %cst_156 = arith.constant dense<0.000000e+00> : vector<2x320xf32>
    %152 = tpu.matmul %151, %126, %cst_156 {dimension_numbers = #tpu.dot_dimension_numbers<[1], [0], [0], [1], [0, 0, 1, 1], [], []>} : vector<2x12xbf16>, vector<12x320xbf16>, vector<2x320xf32> -> vector<2x320xf32>
    %153 = arith.truncf %152 : vector<2x320xf32> to vector<2x320xbf16>
    %c3_157 = arith.constant 3 : index
    %c0_158 = arith.constant 0 : index
    %c0_159 = arith.constant 0 : index
    %154 = vector.load %arg11[%c3_157, %c0_158, %c0_159] : memref<5x320x256xbf16, #tpu.memory_space<vmem>>, vector<1x320x256xbf16>
    %155 = vector.shape_cast %154 : vector<1x320x256xbf16> to vector<320x256xbf16>
    %cst_160 = arith.constant dense<0.000000e+00> : vector<2x256xf32>
    %156 = tpu.matmul %153, %155, %cst_160 {dimension_numbers = #tpu.dot_dimension_numbers<[1], [0], [0], [1], [0, 0, 1, 1], [], []>} : vector<2x320xbf16>, vector<320x256xbf16>, vector<2x256xf32> -> vector<2x256xf32>
    %157 = arith.addf %149, %156 : vector<2x256xf32>
    %c4 = arith.constant 4 : index
    %c0_161 = arith.constant 0 : index
    %c0_162 = arith.constant 0 : index
    %158 = vector.load %arg7[%c4, %c0_161, %c0_162] : memref<5x2x12xbf16, #tpu.memory_space<vmem>>, vector<1x2x12xbf16>
    %159 = vector.shape_cast %158 : vector<1x2x12xbf16> to vector<2x12xbf16>
    %cst_163 = arith.constant dense<0.000000e+00> : vector<2x320xf32>
    %160 = tpu.matmul %159, %126, %cst_163 {dimension_numbers = #tpu.dot_dimension_numbers<[1], [0], [0], [1], [0, 0, 1, 1], [], []>} : vector<2x12xbf16>, vector<12x320xbf16>, vector<2x320xf32> -> vector<2x320xf32>
    %161 = arith.truncf %160 : vector<2x320xf32> to vector<2x320xbf16>
    %c4_164 = arith.constant 4 : index
    %c0_165 = arith.constant 0 : index
    %c0_166 = arith.constant 0 : index
    %162 = vector.load %arg11[%c4_164, %c0_165, %c0_166] : memref<5x320x256xbf16, #tpu.memory_space<vmem>>, vector<1x320x256xbf16>
    %163 = vector.shape_cast %162 : vector<1x320x256xbf16> to vector<320x256xbf16>
    %cst_167 = arith.constant dense<0.000000e+00> : vector<2x256xf32>
    %164 = tpu.matmul %161, %163, %cst_167 {dimension_numbers = #tpu.dot_dimension_numbers<[1], [0], [0], [1], [0, 0, 1, 1], [], []>} : vector<2x320xbf16>, vector<320x256xbf16>, vector<2x256xf32> -> vector<2x256xf32>
    %165 = arith.addf %157, %164 : vector<2x256xf32>
    %c0_168 = arith.constant 0 : index
    %c0_169 = arith.constant 0 : index
    %166 = vector.load %arg12[%c0_168, %c0_169] : memref<1x256xf32, #tpu.memory_space<vmem>>, vector<1x256xf32>
    %167 = vector.broadcast %166 : vector<1x256xf32> to vector<2x256xf32>
    %168 = arith.addf %165, %167 : vector<2x256xf32>
    %cst_170 = arith.constant 0.000000e+00 : f32
    %169 = vector.broadcast %cst_170 : f32 to vector<2x256xf32>
    %170 = arith.maximumf %168, %169 : vector<2x256xf32>
    %171 = arith.truncf %170 : vector<2x256xf32> to vector<2x256xbf16>
    %c0_171 = arith.constant 0 : index
    %c0_172 = arith.constant 0 : index
    %172 = vector.load %arg13[%c0_171, %c0_172] : memref<256x64xbf16, #tpu.memory_space<vmem>>, vector<256x64xbf16>
    %cst_173 = arith.constant dense<0.000000e+00> : vector<2x64xf32>
    %173 = tpu.matmul %171, %172, %cst_173 {dimension_numbers = #tpu.dot_dimension_numbers<[1], [0], [0], [1], [0, 0, 1, 1], [], []>} : vector<2x256xbf16>, vector<256x64xbf16>, vector<2x64xf32> -> vector<2x64xf32>
    %c0_174 = arith.constant 0 : index
    %c0_175 = arith.constant 0 : index
    %174 = vector.load %arg14[%c0_174, %c0_175] : memref<1x64xf32, #tpu.memory_space<vmem>>, vector<1x64xf32>
    %175 = vector.broadcast %174 : vector<1x64xf32> to vector<2x64xf32>
    %176 = arith.addf %173, %175 : vector<2x64xf32>
    %cst_176 = arith.constant 0.000000e+00 : f32
    %177 = vector.broadcast %cst_176 : f32 to vector<2x64xf32>
    %178 = arith.maximumf %176, %177 : vector<2x64xf32>
    %179 = arith.truncf %178 : vector<2x64xf32> to vector<2x64xbf16>
    %c0_177 = arith.constant 0 : index
    %c0_178 = arith.constant 0 : index
    %180 = vector.load %arg15[%c0_177, %c0_178] : memref<64x128xbf16, #tpu.memory_space<vmem>>, vector<64x128xbf16>
    %cst_179 = arith.constant dense<0.000000e+00> : vector<2x128xf32>
    %181 = tpu.matmul %179, %180, %cst_179 {dimension_numbers = #tpu.dot_dimension_numbers<[1], [0], [0], [1], [0, 0, 1, 1], [], []>} : vector<2x64xbf16>, vector<64x128xbf16>, vector<2x128xf32> -> vector<2x128xf32>
    %c0_180 = arith.constant 0 : index
    %c0_181 = arith.constant 0 : index
    %182 = vector.load %arg16[%c0_180, %c0_181] : memref<1x128xf32, #tpu.memory_space<vmem>>, vector<1x128xf32>
    %183 = vector.broadcast %182 : vector<1x128xf32> to vector<2x128xf32>
    %184 = arith.addf %181, %183 : vector<2x128xf32>
    %c0_182 = arith.constant 0 : index
    %c0_183 = arith.constant 0 : index
    %185 = vector.load %arg17[%c0_182, %c0_183] : memref<2x128xf32, #tpu.memory_space<vmem>>, vector<2x128xf32>
    tpu.vector_store %arg17[%c0_182, %c0_183], %184 {strides = array<i32>} : memref<2x128xf32, #tpu.memory_space<vmem>>, vector<2x128xf32>,
    return
  }
  func.func @transform_0(%arg0: i32) -> (i32, i32) {
    %c0_i32 = arith.constant 0 : i32
    %c0_i32_0 = arith.constant 0 : i32
    %c0_i32_1 = arith.constant 0 : i32
    return %c0_i32, %c0_i32_0 : i32, i32
  }
  func.func @transform_1(%arg0: i32) -> (i32, i32, i32, i32) {
    %c0_i32 = arith.constant 0 : i32
    %c0_i32_0 = arith.constant 0 : i32
    %c0_i32_1 = arith.constant 0 : i32
    %c0_i32_2 = arith.constant 0 : i32
    %c0_i32_3 = arith.constant 0 : i32
    return %c0_i32, %c0_i32_0, %c0_i32_1, %c0_i32_2 : i32, i32, i32, i32
  }
  func.func @transform_2(%arg0: i32) -> (i32, i32, i32, i32) {
    %c0_i32 = arith.constant 0 : i32
    %c0_i32_0 = arith.constant 0 : i32
    %c0_i32_1 = arith.constant 0 : i32
    %c0_i32_2 = arith.constant 0 : i32
    %c0_i32_3 = arith.constant 0 : i32
    return %c0_i32, %c0_i32_0, %c0_i32_1, %c0_i32_2 : i32, i32, i32, i32
  }
  func.func @transform_3(%arg0: i32) -> (i32, i32, i32) {
    %c0_i32 = arith.constant 0 : i32
    %c0_i32_0 = arith.constant 0 : i32
    %c0_i32_1 = arith.constant 0 : i32
    %c0_i32_2 = arith.constant 0 : i32
    return %c0_i32, %c0_i32_0, %c0_i32_1 : i32, i32, i32
  }
  func.func @transform_4(%arg0: i32) -> (i32, i32, i32) {
    %c0_i32 = arith.constant 0 : i32
    %c0_i32_0 = arith.constant 0 : i32
    %c0_i32_1 = arith.constant 0 : i32
    %c0_i32_2 = arith.constant 0 : i32
    return %c0_i32, %c0_i32_0, %c0_i32_1 : i32, i32, i32
  }
  func.func @transform_5(%arg0: i32) -> (i32, i32, i32) {
    %c0_i32 = arith.constant 0 : i32
    %c0_i32_0 = arith.constant 0 : i32
    %c0_i32_1 = arith.constant 0 : i32
    %c0_i32_2 = arith.constant 0 : i32
    return %c0_i32, %c0_i32_0, %c0_i32_1 : i32, i32, i32
  }
  func.func @transform_6(%arg0: i32) -> (i32, i32, i32) {
    %c0_i32 = arith.constant 0 : i32
    %c0_i32_0 = arith.constant 0 : i32
    %c0_i32_1 = arith.constant 0 : i32
    %c0_i32_2 = arith.constant 0 : i32
    return %c0_i32, %c0_i32_0, %c0_i32_1 : i32, i32, i32
  }
  func.func @transform_7(%arg0: i32) -> (i32, i32) {
    %c0_i32 = arith.constant 0 : i32
    %c0_i32_0 = arith.constant 0 : i32
    %c0_i32_1 = arith.constant 0 : i32
    return %c0_i32, %c0_i32_0 : i32, i32
  }
  func.func @transform_8(%arg0: i32) -> (i32, i32) {
    %c0_i32 = arith.constant 0 : i32
    %c0_i32_0 = arith.constant 0 : i32
    %c0_i32_1 = arith.constant 0 : i32
    return %c0_i32, %c0_i32_0 : i32, i32
  }
  func.func @transform_9(%arg0: i32) -> (i32, i32) {
    %c0_i32 = arith.constant 0 : i32
    %c0_i32_0 = arith.constant 0 : i32
    %c0_i32_1 = arith.constant 0 : i32
    return %c0_i32, %c0_i32_0 : i32, i32
  }
  func.func @transform_10(%arg0: i32) -> (i32, i32, i32) {
    %c0_i32 = arith.constant 0 : i32
    %c0_i32_0 = arith.constant 0 : i32
    %c0_i32_1 = arith.constant 0 : i32
    %c0_i32_2 = arith.constant 0 : i32
    return %c0_i32, %c0_i32_0, %c0_i32_1 : i32, i32, i32
  }
  func.func @transform_11(%arg0: i32) -> (i32, i32) {
    %c0_i32 = arith.constant 0 : i32
    %c0_i32_0 = arith.constant 0 : i32
    %c0_i32_1 = arith.constant 0 : i32
    return %c0_i32, %c0_i32_0 : i32, i32
  }
  func.func @transform_12(%arg0: i32) -> (i32, i32) {
    %c0_i32 = arith.constant 0 : i32
    %c0_i32_0 = arith.constant 0 : i32
    %c0_i32_1 = arith.constant 0 : i32
    return %c0_i32, %c0_i32_0 : i32, i32
  }
  func.func @transform_13(%arg0: i32) -> (i32, i32) {
    %c0_i32 = arith.constant 0 : i32
    %c0_i32_0 = arith.constant 0 : i32
    %c0_i32_1 = arith.constant 0 : i32
    return %c0_i32, %c0_i32_0 : i32, i32
  }
  func.func @transform_14(%arg0: i32) -> (i32, i32) {
    %c0_i32 = arith.constant 0 : i32
    %c0_i32_0 = arith.constant 0 : i32
    %c0_i32_1 = arith.constant 0 : i32
    return %c0_i32, %c0_i32_0 : i32, i32
  }
  func.func @transform_15(%arg0: i32) -> (i32, i32) {
    %c0_i32 = arith.constant 0 : i32
    %c0_i32_0 = arith.constant 0 : i32
    %c0_i32_1 = arith.constant 0 : i32
    return %c0_i32, %c0_i32_0 : i32, i32
  }
  func.func @transform_16(%arg0: i32) -> (i32, i32) {
    %c0_i32 = arith.constant 0 : i32
    %c0_i32_0 = arith.constant 0 : i32
    %c0_i32_1 = arith.constant 0 : i32
    return %c0_i32, %c0_i32_0 : i32, i32
  }
}

</mosaic_0001>

<llo_original>
// kernel: simple_cnn_forward.1
$region0: #{simple_cnn_forward.1}
  #allocation0 [shape = 'u32[]', space=smem, size = 0x4, offset = 0x4, fixed_abs, tag = 'smem constant byte address 0x4 - core index']
  #allocation1 [shape = 'u32[144,128]{1,0:T(1,128)}', space=vmem, size = 0x12000, scoped, tag = 'internal scratch']
  #allocation2 [shape = 'f32[44,66]{1,0:T(8,128)}', space=vmem, size = 0x6000, scoped, tag = 'scratch operand']
  #allocation3 [shape = 'f32[24,384]{1,0:T(8,128)}', space=vmem, size = 0x9000, scoped, tag = 'scratch operand']
  #allocation4 [shape = 'f32[14,448]{1,0:T(8,128)}', space=vmem, size = 0x8000, scoped, tag = 'scratch operand']
  %s0 = inlined_call_operand.vmem [shape: f32[40,60], index: 0, kind: input, shape index: {}]
  %s1 = inlined_call_operand.vmem [shape: bf16[2,3,66,320], index: 1, kind: input, shape index: {}]
  %s2 = inlined_call_operand.vmem [shape: bf16[2,3,384,320], index: 2, kind: input, shape index: {}]
  %s3 = inlined_call_operand.vmem [shape: bf16[3,448,320], index: 3, kind: input, shape index: {}]
  %s4 = inlined_call_operand.vmem [shape: bf16[2,24,42], index: 4, kind: input, shape index: {}]
  %s5 = inlined_call_operand.vmem [shape: bf16[2,14,22], index: 5, kind: input, shape index: {}]
  %s6 = inlined_call_operand.vmem [shape: bf16[5,2,12], index: 6, kind: input, shape index: {}]
  %s7 = inlined_call_operand.vmem [shape: f32[1,320], index: 7, kind: input, shape index: {}]
  %s8 = inlined_call_operand.vmem [shape: f32[1,320], index: 8, kind: input, shape index: {}]
  %s9 = inlined_call_operand.vmem [shape: f32[1,320], index: 9, kind: input, shape index: {}]
  %s10 = inlined_call_operand.vmem [shape: bf16[5,320,256], index: 10, kind: input, shape index: {}]
  %s11 = inlined_call_operand.vmem [shape: f32[1,256], index: 11, kind: input, shape index: {}]
  %s12 = inlined_call_operand.vmem [shape: bf16[256,64], index: 12, kind: input, shape index: {}]
  %s13 = inlined_call_operand.vmem [shape: f32[1,64], index: 13, kind: input, shape index: {}]
  %s14 = inlined_call_operand.vmem [shape: bf16[64,128], index: 14, kind: input, shape index: {}]
  %s15 = inlined_call_operand.vmem [shape: f32[1,128], index: 15, kind: input, shape index: {}]
  %s16 = inlined_call_operand.hbm [shape: f32[2,128], index: 16, kind: output, shape index: {}]
  %s17 = sld [smem:[#allocation0]]
  $region74: #{simple_cnn_forward.1} parent=0
    _
  %s19 = ssub.s32 1, %s17
  %s20 = scalar_select 0, %s19, %s17
  $region1: #{simple_cnn_forward.1} parent=0
    #allocation5 [shape = 'u8[1024]{0}', space=vmem, size = 0x400, scoped, tag = 'output window, operand 0, single buffered']
    #allocation6 [shape = 's32[1]{0}', space=sflag, size = 0x4, scoped, tag = 'scoped memory for simple_cnn_forward.1']
    %21 = vsyncpa [#allocation6], 0
    // Predicated region
    $region2: #{simple_cnn_forward.1} parent=1 // pred_check
      _
    $region3: #{simple_cnn_forward.1} parent=1 // pred_check_branch
      %23 = sbr.rel (0) target = $region5
    $region4: #{simple_cnn_forward.1} parent=1 // pred_region
      _
    $region5: #{simple_cnn_forward.1} parent=1 // pred_fallthru
      _
    // Predicated region
    $region6: #{simple_cnn_forward.1} parent=1 // pred_check
      _
    $region7: #{simple_cnn_forward.1} parent=1 // pred_check_branch
      %25 = sbr.rel (0) target = $region9
    $region8: #{simple_cnn_forward.1} parent=1 // pred_region
      _
    $region9: #{simple_cnn_forward.1} parent=1 // pred_fallthru
      _
    // Predicated region
    $region10: #{simple_cnn_forward.1} parent=1 // pred_check
      _
    $region11: #{simple_cnn_forward.1} parent=1 // pred_check_branch
      %27 = sbr.rel (0) target = $region13
    $region12: #{simple_cnn_forward.1} parent=1 // pred_region
      _
    $region13: #{simple_cnn_forward.1} parent=1 // pred_fallthru
      _
    // Predicated region
    $region14: #{simple_cnn_forward.1} parent=1 // pred_check
      _
    $region15: #{simple_cnn_forward.1} parent=1 // pred_check_branch
      %29 = sbr.rel (0) target = $region17
    $region16: #{simple_cnn_forward.1} parent=1 // pred_region
      _
    $region17: #{simple_cnn_forward.1} parent=1 // pred_fallthru
      _
    // Predicated region
    $region18: #{simple_cnn_forward.1} parent=1 // pred_check
      _
    $region19: #{simple_cnn_forward.1} parent=1 // pred_check_branch
      %31 = sbr.rel (0) target = $region21
    $region20: #{simple_cnn_forward.1} parent=1 // pred_region
      _
    $region21: #{simple_cnn_forward.1} parent=1 // pred_fallthru
      _
    // Predicated region
    $region22: #{simple_cnn_forward.1} parent=1 // pred_check
      _
    $region23: #{simple_cnn_forward.1} parent=1 // pred_check_branch
      %33 = sbr.rel (0) target = $region25
    $region24: #{simple_cnn_forward.1} parent=1 // pred_region
      _
    $region25: #{simple_cnn_forward.1} parent=1 // pred_fallthru
      _
    // Predicated region
    $region26: #{simple_cnn_forward.1} parent=1 // pred_check
      _
    $region27: #{simple_cnn_forward.1} parent=1 // pred_check_branch
      %35 = sbr.rel (0) target = $region29
    $region28: #{simple_cnn_forward.1} parent=1 // pred_region
      _
    $region29: #{simple_cnn_forward.1} parent=1 // pred_fallthru
      _
    // Predicated region
    $region30: #{simple_cnn_forward.1} parent=1 // pred_check
      _
    $region31: #{simple_cnn_forward.1} parent=1 // pred_check_branch
      %37 = sbr.rel (0) target = $region33
    $region32: #{simple_cnn_forward.1} parent=1 // pred_region
      _
    $region33: #{simple_cnn_forward.1} parent=1 // pred_fallthru
      _
    // Predicated region
    $region34: #{simple_cnn_forward.1} parent=1 // pred_check
      _
    $region35: #{simple_cnn_forward.1} parent=1 // pred_check_branch
      %39 = sbr.rel (0) target = $region37
    $region36: #{simple_cnn_forward.1} parent=1 // pred_region
      _
    $region37: #{simple_cnn_forward.1} parent=1 // pred_fallthru
      _
    // Predicated region
    $region38: #{simple_cnn_forward.1} parent=1 // pred_check
      _
    $region39: #{simple_cnn_forward.1} parent=1 // pred_check_branch
      %41 = sbr.rel (0) target = $region41
    $region40: #{simple_cnn_forward.1} parent=1 // pred_region
      _
    $region41: #{simple_cnn_forward.1} parent=1 // pred_fallthru
      _
    // Predicated region
    $region42: #{simple_cnn_forward.1} parent=1 // pred_check
      _
    $region43: #{simple_cnn_forward.1} parent=1 // pred_check_branch
      %43 = sbr.rel (0) target = $region45
    $region44: #{simple_cnn_forward.1} parent=1 // pred_region
      _
    $region45: #{simple_cnn_forward.1} parent=1 // pred_fallthru
      _
    // Predicated region
    $region46: #{simple_cnn_forward.1} parent=1 // pred_check
      _
    $region47: #{simple_cnn_forward.1} parent=1 // pred_check_branch
      %45 = sbr.rel (0) target = $region49
    $region48: #{simple_cnn_forward.1} parent=1 // pred_region
      _
    $region49: #{simple_cnn_forward.1} parent=1 // pred_fallthru
      _
    // Predicated region
    $region50: #{simple_cnn_forward.1} parent=1 // pred_check
      _
    $region51: #{simple_cnn_forward.1} parent=1 // pred_check_branch
      %47 = sbr.rel (0) target = $region53
    $region52: #{simple_cnn_forward.1} parent=1 // pred_region
      _
    $region53: #{simple_cnn_forward.1} parent=1 // pred_fallthru
      _
    // Predicated region
    $region54: #{simple_cnn_forward.1} parent=1 // pred_check
      _
    $region55: #{simple_cnn_forward.1} parent=1 // pred_check_branch
      %49 = sbr.rel (0) target = $region57
    $region56: #{simple_cnn_forward.1} parent=1 // pred_region
      _
    $region57: #{simple_cnn_forward.1} parent=1 // pred_fallthru
      _
    // Predicated region
    $region58: #{simple_cnn_forward.1} parent=1 // pred_check
      _
    $region59: #{simple_cnn_forward.1} parent=1 // pred_check_branch
      %51 = sbr.rel (0) target = $region61
    $region60: #{simple_cnn_forward.1} parent=1 // pred_region
      _
    $region61: #{simple_cnn_forward.1} parent=1 // pred_fallthru
      _
    // Predicated region
    $region62: #{simple_cnn_forward.1} parent=1 // pred_check
      _
    $region63: #{simple_cnn_forward.1} parent=1 // pred_check_branch
      %53 = sbr.rel (0) target = $region65
    $region64: #{simple_cnn_forward.1} parent=1 // pred_region
      _
    $region65: #{simple_cnn_forward.1} parent=1 // pred_fallthru
      _
    %vm55 = vcmask 539648
    %56 = vst.msk [vmem:[#allocation2] sm:$0xff] %vm55, 0.0
    %57 = vst.msk [vmem:[#allocation2 + $0x8] sm:$0xff] %vm55, 0.0
    %58 = vst.msk [vmem:[#allocation2 + $0x10] sm:$0xff] %vm55, 0.0
    %59 = vst.msk [vmem:[#allocation2 + $0x18] sm:$0xff] %vm55, 0.0
    %60 = vst.msk [vmem:[#allocation2 + $0x20] sm:$0xff] %vm55, 0.0
    %vm61 = vcmask 535552
    %62 = vst.msk [vmem:[#allocation2 + $0x28] sm:$0xf] %vm61, 0.0
    %63 = vst [vmem:[#allocation3] sm:$0xff] 0.0
    %64 = vst [vmem:[#allocation3 + $0x8] sm:$0xff] 0.0
    %65 = vst [vmem:[#allocation3 + $0x10] sm:$0xff] 0.0
    %66 = vst [vmem:[#allocation3 + $0x18] sm:$0xff] 0.0
    %67 = vst [vmem:[#allocation3 + $0x20] sm:$0xff] 0.0
    %68 = vst [vmem:[#allocation3 + $0x28] sm:$0xff] 0.0
    %69 = vst [vmem:[#allocation3 + $0x30] sm:$0xff] 0.0
    %70 = vst [vmem:[#allocation3 + $0x38] sm:$0xff] 0.0
    %71 = vst [vmem:[#allocation3 + $0x40] sm:$0xff] 0.0
    %72 = vst [vmem:[#allocation4] sm:$0xff] 0.0
    %73 = vst [vmem:[#allocation4 + $0x8] sm:$0xff] 0.0
    %74 = vst [vmem:[#allocation4 + $0x10] sm:$0xff] 0.0
    %vm75 = vcmask 523264
    %76 = vst.msk [vmem:[#allocation4 + $0x18] sm:$0xff] %vm75, 0.0
    %77 = vst [vmem:[#allocation4 + $0x20] sm:$0x3f] 0.0
    %78 = vst [vmem:[#allocation4 + $0x28] sm:$0x3f] 0.0
    %79 = vst [vmem:[#allocation4 + $0x30] sm:$0x3f] 0.0
    %vm80 = vcmask 521216
    %81 = vst.msk [vmem:[#allocation4 + $0x38] sm:$0x3f] %vm80, 0.0
    %v82 = vld [vmem:[%s0] sm:$0xff]
    %v83 = vld [vmem:[%s0 + $0x8] sm:$0xff]
    %v84 = vld [vmem:[%s0 + $0x10] sm:$0xf]
    %88 = vrot.lane.b32.xlu0 %v82, 3
    %v89 = vpop.permute.xlu0 %88
    %90 = vrot.lane.b32.xlu0 %v83, 3
    %v91 = vpop.permute.xlu0 %90
    %92 = vrot.lane.b32.xlu0 %v84, 3
    %v93 = vpop.permute.xlu0 %92
    %vm97 = vcmask 515096
    %98 = vst.msk [vmem:[#allocation2 + $0x1] sm:$0xff] %vm97, %v89
    %99 = vst.msk [vmem:[#allocation2 + $0x9] sm:$0xff] %vm97, %v91
    %vm100 = vcmask 511000
    %101 = vst.msk [vmem:[#allocation2 + $0x11] sm:$0xf] %vm100, %v93
    %v102 = vld [vmem:[%s0 + $0x14] sm:$0xff]
    %v103 = vld [vmem:[%s0 + $0x1c] sm:$0xff]
    %v104 = vld [vmem:[%s0 + $0x24] sm:$0xf]
    %108 = vrot.lane.b32.xlu0 %v102, 3
    %v109 = vpop.permute.xlu0 %108
    %110 = vrot.lane.b32.xlu0 %v103, 3
    %v111 = vpop.permute.xlu0 %110
    %112 = vrot.lane.b32.xlu0 %v104, 3
    %v113 = vpop.permute.xlu0 %112
    %117 = vst.msk [vmem:[#allocation2 + $0x17] sm:$0xff] %vm97, %v109
    %118 = vst.msk [vmem:[#allocation2 + $0x1f] sm:$0xff] %vm97, %v111
    %119 = vst.msk [vmem:[#allocation2 + $0x27] sm:$0xf] %vm100, %v113
    %v120 = vld [vmem:[%s7] sm:$0x7]
    %v121 = vld [vmem:[#allocation2] sm:$0xff]
    %v122 = vld [vmem:[#allocation2 + $0x8] sm:$0xff]
    %v123 = vld [vmem:[#allocation2 + $0x10] sm:$0xff]
    %v124 = vld [vmem:[#allocation2 + $0x18] sm:$0xff]
    %v125 = vld [vmem:[#allocation2 + $0x20] sm:$0xff]
    %v126 = vld [vmem:[#allocation2 + $0x28] sm:$0x3]
    %v127 = vpack.c.bf16 %v122, %v121
    %v128 = vpack.c.bf16 %v124, %v123
    %v129 = vpack.c.bf16 %v126, %v125
    %v130 = vld [vmem:[#allocation2 + $0x1] sm:$0xff]
    %v131 = vld [vmem:[#allocation2 + $0x9] sm:$0xff]
    %v132 = vld [vmem:[#allocation2 + $0x11] sm:$0xff]
    %v133 = vld [vmem:[#allocation2 + $0x19] sm:$0xff]
    %v134 = vld [vmem:[#allocation2 + $0x21] sm:$0xff]
    %v135 = vld [vmem:[#allocation2 + $0x29] sm:$0x3]
    %v136 = vpack.c.bf16 %v131, %v130
    %v137 = vpack.c.bf16 %v133, %v132
    %v138 = vpack.c.bf16 %v135, %v134
    %v139 = vld [vmem:[#allocation2 + $0x2] sm:$0xff]
    %v140 = vld [vmem:[#allocation2 + $0xa] sm:$0xff]
    %v141 = vld [vmem:[#allocation2 + $0x12] sm:$0xff]
    %v142 = vld [vmem:[#allocation2 + $0x1a] sm:$0xff]
    %v143 = vld [vmem:[#allocation2 + $0x22] sm:$0xff]
    %v144 = vld [vmem:[#allocation2 + $0x2a] sm:$0x3]
    %v145 = vpack.c.bf16 %v140, %v139
    %v146 = vpack.c.bf16 %v142, %v141
    %v147 = vpack.c.bf16 %v144, %v143
    %v148 = vld [vmem:[%s1] sm:$0xff]
    %v149 = vld [vmem:[%s1 + $0x8] sm:$0xf]
    %v150 = vld [vmem:[%s1 + $0xc] sm:$0xff]
    %v151 = vld [vmem:[%s1 + $0x14] sm:$0xf]
    %v152 = vld [vmem:[%s1 + $0x18] sm:$0xff]
    %v153 = vld [vmem:[%s1 + $0x20] sm:$0xf]
    %v154 = vld [vmem:[%s1 + $0x24] sm:$0xff]
    %v155 = vld [vmem:[%s1 + $0x2c] sm:$0xf]
    %v156 = vld [vmem:[%s1 + $0x30] sm:$0xff]
    %v157 = vld [vmem:[%s1 + $0x38] sm:$0xf]
    %v158 = vld [vmem:[%s1 + $0x3c] sm:$0xff]
    %v159 = vld [vmem:[%s1 + $0x44] sm:$0xf]
    %v160 = vld [vmem:[%s1 + $0x48] sm:$0xff]
    %v161 = vld [vmem:[%s1 + $0x50] sm:$0xf]
    %v162 = vld [vmem:[%s1 + $0x54] sm:$0xff]
    %v163 = vld [vmem:[%s1 + $0x5c] sm:$0xf]
    %v164 = vld [vmem:[%s1 + $0x60] sm:$0x11]
    %v165 = vld [vmem:[%s1 + $0x68] sm:$0x1]
    %s166 = scalar_lea.vmem %s1, 108
    %v167 = vld [vmem:[%s166] sm:$0xff]
    %v168 = vld [vmem:[%s166 + $0x8] sm:$0xf]
    %v169 = vld [vmem:[%s166 + $0xc] sm:$0xff]
    %v170 = vld [vmem:[%s166 + $0x14] sm:$0xf]
    %v171 = vld [vmem:[%s166 + $0x18] sm:$0xff]
    %v172 = vld [vmem:[%s166 + $0x20] sm:$0xf]
    %v173 = vld [vmem:[%s166 + $0x24] sm:$0xff]
    %v174 = vld [vmem:[%s166 + $0x2c] sm:$0xf]
    %v175 = vld [vmem:[%s166 + $0x30] sm:$0xff]
    %v176 = vld [vmem:[%s166 + $0x38] sm:$0xf]
    %v177 = vld [vmem:[%s166 + $0x3c] sm:$0xff]
    %v178 = vld [vmem:[%s166 + $0x44] sm:$0xf]
    %v179 = vld [vmem:[%s166 + $0x48] sm:$0xff]
    %v180 = vld [vmem:[%s166 + $0x50] sm:$0xf]
    %v181 = vld [vmem:[%s166 + $0x54] sm:$0xff]
    %v182 = vld [vmem:[%s166 + $0x5c] sm:$0xf]
    %v183 = vld [vmem:[%s166 + $0x60] sm:$0x11]
    %v184 = vld [vmem:[%s166 + $0x68] sm:$0x1]
    %v203 = vunpack.c.l.b16 %v167
    %v204 = vunpack.c.h.b16 %v167
    %v205 = vunpack.c.l.b16 %v168
    %v206 = vunpack.c.l.b16 %v169
    %v207 = vunpack.c.h.b16 %v169
    %v208 = vunpack.c.l.b16 %v170
    %v209 = vunpack.c.l.b16 %v171
    %v210 = vunpack.c.h.b16 %v171
    %v211 = vunpack.c.l.b16 %v172
    %v212 = vunpack.c.l.b16 %v173
    %v213 = vunpack.c.h.b16 %v173
    %v214 = vunpack.c.l.b16 %v174
    %v215 = vunpack.c.l.b16 %v175
    %v216 = vunpack.c.h.b16 %v175
    %v217 = vunpack.c.l.b16 %v176
    %v218 = vunpack.c.l.b16 %v177
    %v219 = vunpack.c.h.b16 %v177
    %v220 = vunpack.c.l.b16 %v178
    %v221 = vunpack.c.l.b16 %v179
    %v222 = vunpack.c.h.b16 %v179
    %v223 = vunpack.c.l.b16 %v180
    %v224 = vunpack.c.l.b16 %v181
    %v225 = vunpack.c.h.b16 %v181
    %v226 = vunpack.c.l.b16 %v182
    %v227 = vunpack.c.l.b16 %v183
    %v228 = vunpack.c.h.b16 %v183
    %v229 = vunpack.c.l.b16 %v184
    %v230 = vpack.c.b16 %v206, %v203
    %v231 = vpack.c.b16 %v207, %v204
    %v232 = vpack.c.b16 %v208, %v205
    %v233 = vpack.c.b16 %v212, %v209
    %v234 = vpack.c.b16 %v213, %v210
    %v235 = vpack.c.b16 %v214, %v211
    %v236 = vpack.c.b16 %v218, %v215
    %v237 = vpack.c.b16 %v219, %v216
    %v238 = vpack.c.b16 %v220, %v217
    %v239 = vpack.c.b16 %v224, %v221
    %v240 = vpack.c.b16 %v225, %v222
    %v241 = vpack.c.b16 %v226, %v223
    %v242 = vpack.c.b16 %v227, %v227
    %v243 = vpack.c.b16 %v228, %v228
    %v244 = vpack.c.b16 %v229, %v229
    %v258 = vsel %vm55, %v136, 0
    %v261 = vsel %vm55, %v137, 0
    %v264 = vsel %vm55, %v138, 0
    %vm266 = vcmask 1040384
    %v268 = vsel %vm266, %v242, 0
    %v271 = vsel %vm266, %v243, 0
    %v274 = vsel %vm266, %v244, 0
    %276 = vmatprep.subr.bf16.mxu0 %v231
    %277 = vmatpush1.bf16.msra.mxu0 %v230
    %278 = vmatprep.subr.bf16.mxu0 %v234
    %279 = vmatpush1.bf16.msra.mxu0 %v233
    %280 = vmatprep.subr.bf16.mxu0 %v237
    %281 = vmatpush1.bf16.msra.mxu0 %v236
    %282 = vmatprep.subr.bf16.mxu0 %v240
    %283 = vmatpush1.bf16.msra.mxu0 %v239
    %284 = vmatprep.subr.bf16.mxu0 %v271
    %285 = vmatpush1.bf16.msra.mxu0 %v268
    %286 = vmatprep.subr.bf16.mxu0 0
    %287 = vmatpush1.bf16.msra.mxu0 0
    %288 = vmatprep.subr.bf16.mxu0 0
    %289 = vmatpush1.bf16.msra.mxu0 0
    %290 = vmatprep.subr.bf16.mxu0 0
    %291 = vmatpush1.bf16.msra.mxu0 0
    %292 = vmatprep.subr.bf16.mxu0 0
    %293 = vmatpush1.bf16.msra.mxu0 0
    %294 = vmatprep.subr.bf16.mxu0 0
    %295 = vmatpush1.bf16.msra.mxu0 0
    %296 = vmatprep.subr.bf16.mxu0 0
    %297 = vmatpush1.bf16.msra.mxu0 0
    %298 = vmatprep.subr.bf16.mxu0 0
    %299 = vmatpush1.bf16.msra.mxu0 0
    %300 = vmatprep.subr.bf16.mxu0 0
    %301 = vmatpush1.bf16.msra.mxu0 0
    %302 = vmatprep.subr.bf16.mxu0 0
    %303 = vmatpush1.bf16.msra.mxu0 0
    %304 = vmatprep.subr.bf16.mxu0 0
    %305 = vmatpush1.bf16.msra.mxu0 0
    %306 = vmatprep.subr.bf16.mxu0 0
    %307 = vmatpush1.bf16.msra.mxu0 0
    %308 = vmatprep.mubr.bf16.mxu0 0
    %309 = vmatmul.mubr.bf16.gmra.mrb[0].mxu0 %v258
    %v310 = vpop.f32.mrb[0].mxu0
    %v311 = vadd.f32 0.0, %v310
    %v312 = vpop.f32.mrb[0].mxu0
    %v313 = vadd.f32 0.0, %v312
    %v314 = vpop.f32.mrb[0].mxu0
    %v315 = vadd.f32 0.0, %v314
    %v316 = vpop.f32.mrb[0].mxu0
    %v317 = vadd.f32 0.0, %v316
    %318 = vmatprep.mubr.bf16.mxu0 0
    %319 = vmatmul.mubr.bf16.gmra.mrb[0].mxu0 %v261
    %v320 = vpop.f32.mrb[0].mxu0
    %v321 = vadd.f32 0.0, %v320
    %v322 = vpop.f32.mrb[0].mxu0
    %v323 = vadd.f32 0.0, %v322
    %v324 = vpop.f32.mrb[0].mxu0
    %v325 = vadd.f32 0.0, %v324
    %v326 = vpop.f32.mrb[0].mxu0
    %v327 = vadd.f32 0.0, %v326
    %328 = vmatprep.mubr.bf16.mxu0 0
    %329 = vmatmul.mubr.bf16.gmra.mrb[0].mxu0 %v264
    %v330 = vpop.f32.mrb[0].mxu0
    %v331 = vadd.f32 0.0, %v330
    %v332 = vpop.f32.mrb[0].mxu0
    %v333 = vadd.f32 0.0, %v332
    %v334 = vpop.f32.mrb[0].mxu0
    %v335 = vadd.f32 0.0, %v334
    %v336 = vpop.f32.mrb[0].mxu0
    %v337 = vadd.f32 0.0, %v336
    %338 = vdwg.mxu0
    %339 = vmatprep.subr.bf16.mxu0 0
    %340 = vmatpush1.bf16.msra.mxu0 %v232
    %341 = vmatprep.subr.bf16.mxu0 0
    %342 = vmatpush1.bf16.msra.mxu0 %v235
    %343 = vmatprep.subr.bf16.mxu0 0
    %344 = vmatpush1.bf16.msra.mxu0 %v238
    %345 = vmatprep.subr.bf16.mxu0 0
    %346 = vmatpush1.bf16.msra.mxu0 %v241
    %347 = vmatprep.subr.bf16.mxu0 0
    %348 = vmatpush1.bf16.msra.mxu0 %v274
    %349 = vmatprep.subr.bf16.mxu0 0
    %350 = vmatpush1.bf16.msra.mxu0 0
    %351 = vmatprep.subr.bf16.mxu0 0
    %352 = vmatpush1.bf16.msra.mxu0 0
    %353 = vmatprep.subr.bf16.mxu0 0
    %354 = vmatpush1.bf16.msra.mxu0 0
    %355 = vmatprep.subr.bf16.mxu0 0
    %356 = vmatpush1.bf16.msra.mxu0 0
    %357 = vmatprep.subr.bf16.mxu0 0
    %358 = vmatpush1.bf16.msra.mxu0 0
    %359 = vmatprep.subr.bf16.mxu0 0
    %360 = vmatpush1.bf16.msra.mxu0 0
    %361 = vmatprep.subr.bf16.mxu0 0
    %362 = vmatpush1.bf16.msra.mxu0 0
    %363 = vmatprep.subr.bf16.mxu0 0
    %364 = vmatpush1.bf16.msra.mxu0 0
    %365 = vmatprep.subr.bf16.mxu0 0
    %366 = vmatpush1.bf16.msra.mxu0 0
    %367 = vmatprep.subr.bf16.mxu0 0
    %368 = vmatpush1.bf16.msra.mxu0 0
    %369 = vmatprep.subr.bf16.mxu0 0
    %370 = vmatpush1.bf16.msra.mxu0 0
    %371 = vmatprep.mubr.bf16.mxu0 0
    %372 = vmatmul.mubr.bf16.gmra.mrb[0].mxu0 %v258
    %v373 = vpop.f32.mrb[0].mxu0
    %v374 = vadd.f32 0.0, %v373
    %v375 = vpop.f32.mrb[0].mxu0
    %v376 = vpop.f32.mrb[0].mxu0
    %v377 = vadd.f32 0.0, %v376
    %v378 = vpop.f32.mrb[0].mxu0
    %379 = vmatprep.mubr.bf16.mxu0 0
    %380 = vmatmul.mubr.bf16.gmra.mrb[0].mxu0 %v261
    %v381 = vpop.f32.mrb[0].mxu0
    %v382 = vadd.f32 0.0, %v381
    %v383 = vpop.f32.mrb[0].mxu0
    %v384 = vpop.f32.mrb[0].mxu0
    %v385 = vadd.f32 0.0, %v384
    %v386 = vpop.f32.mrb[0].mxu0
    %387 = vmatprep.mubr.bf16.mxu0 0
    %388 = vmatmul.mubr.bf16.gmra.mrb[0].mxu0 %v264
    %v389 = vpop.f32.mrb[0].mxu0
    %v390 = vadd.f32 0.0, %v389
    %v391 = vpop.f32.mrb[0].mxu0
    %v392 = vpop.f32.mrb[0].mxu0
    %v393 = vadd.f32 0.0, %v392
    %v394 = vpop.f32.mrb[0].mxu0
    %395 = vdwg.mxu0
    %v414 = vunpack.c.l.b16 %v148
    %v415 = vunpack.c.h.b16 %v148
    %v416 = vunpack.c.l.b16 %v149
    %v417 = vunpack.c.l.b16 %v150
    %v418 = vunpack.c.h.b16 %v150
    %v419 = vunpack.c.l.b16 %v151
    %v420 = vunpack.c.l.b16 %v152
    %v421 = vunpack.c.h.b16 %v152
    %v422 = vunpack.c.l.b16 %v153
    %v423 = vunpack.c.l.b16 %v154
    %v424 = vunpack.c.h.b16 %v154
    %v425 = vunpack.c.l.b16 %v155
    %v426 = vunpack.c.l.b16 %v156
    %v427 = vunpack.c.h.b16 %v156
    %v428 = vunpack.c.l.b16 %v157
    %v429 = vunpack.c.l.b16 %v158
    %v430 = vunpack.c.h.b16 %v158
    %v431 = vunpack.c.l.b16 %v159
    %v432 = vunpack.c.l.b16 %v160
    %v433 = vunpack.c.h.b16 %v160
    %v434 = vunpack.c.l.b16 %v161
    %v435 = vunpack.c.l.b16 %v162
    %v436 = vunpack.c.h.b16 %v162
    %v437 = vunpack.c.l.b16 %v163
    %v438 = vunpack.c.l.b16 %v164
    %v439 = vunpack.c.h.b16 %v164
    %v440 = vunpack.c.l.b16 %v165
    %v441 = vpack.c.b16 %v417, %v414
    %v442 = vpack.c.b16 %v418, %v415
    %v443 = vpack.c.b16 %v419, %v416
    %v444 = vpack.c.b16 %v423, %v420
    %v445 = vpack.c.b16 %v424, %v421
    %v446 = vpack.c.b16 %v425, %v422
    %v447 = vpack.c.b16 %v429, %v426
    %v448 = vpack.c.b16 %v430, %v427
    %v449 = vpack.c.b16 %v431, %v428
    %v450 = vpack.c.b16 %v435, %v432
    %v451 = vpack.c.b16 %v436, %v433
    %v452 = vpack.c.b16 %v437, %v434
    %v453 = vpack.c.b16 %v438, %v438
    %v454 = vpack.c.b16 %v439, %v439
    %v455 = vpack.c.b16 %v440, %v440
    %v469 = vsel %vm55, %v127, 0
    %v472 = vsel %vm55, %v128, 0
    %v475 = vsel %vm55, %v129, 0
    %v478 = vsel %vm266, %v453, 0
    %v481 = vsel %vm266, %v454, 0
    %v484 = vsel %vm266, %v455, 0
    %486 = vmatprep.subr.bf16.mxu0 %v442
    %487 = vmatpush1.bf16.msra.mxu0 %v441
    %488 = vmatprep.subr.bf16.mxu0 %v445
    %489 = vmatpush1.bf16.msra.mxu0 %v444
    %490 = vmatprep.subr.bf16.mxu0 %v448
    %491 = vmatpush1.bf16.msra.mxu0 %v447
    %492 = vmatprep.subr.bf16.mxu0 %v451
    %493 = vmatpush1.bf16.msra.mxu0 %v450
    %494 = vmatprep.subr.bf16.mxu0 %v481
    %495 = vmatpush1.bf16.msra.mxu0 %v478
    %496 = vmatprep.subr.bf16.mxu0 0
    %497 = vmatpush1.bf16.msra.mxu0 0
    %498 = vmatprep.subr.bf16.mxu0 0
    %499 = vmatpush1.bf16.msra.mxu0 0
    %500 = vmatprep.subr.bf16.mxu0 0
    %501 = vmatpush1.bf16.msra.mxu0 0
    %502 = vmatprep.subr.bf16.mxu0 0
    %503 = vmatpush1.bf16.msra.mxu0 0
    %504 = vmatprep.subr.bf16.mxu0 0
    %505 = vmatpush1.bf16.msra.mxu0 0
    %506 = vmatprep.subr.bf16.mxu0 0
    %507 = vmatpush1.bf16.msra.mxu0 0
    %508 = vmatprep.subr.bf16.mxu0 0
    %509 = vmatpush1.bf16.msra.mxu0 0
    %510 = vmatprep.subr.bf16.mxu0 0
    %511 = vmatpush1.bf16.msra.mxu0 0
    %512 = vmatprep.subr.bf16.mxu0 0
    %513 = vmatpush1.bf16.msra.mxu0 0
    %514 = vmatprep.subr.bf16.mxu0 0
    %515 = vmatpush1.bf16.msra.mxu0 0
    %516 = vmatprep.subr.bf16.mxu0 0
    %517 = vmatpush1.bf16.msra.mxu0 0
    %518 = vmatprep.mubr.bf16.mxu0 0
    %519 = vmatmul.mubr.bf16.gmra.mrb[0].mxu0 %v469
    %v520 = vpop.f32.mrb[0].mxu0
    %v521 = vadd.f32 %v311, %v520
    %v522 = vpop.f32.mrb[0].mxu0
    %v523 = vadd.f32 %v313, %v522
    %v524 = vpop.f32.mrb[0].mxu0
    %v525 = vadd.f32 %v315, %v524
    %v526 = vpop.f32.mrb[0].mxu0
    %v527 = vadd.f32 %v317, %v526
    %528 = vmatprep.mubr.bf16.mxu0 0
    %529 = vmatmul.mubr.bf16.gmra.mrb[0].mxu0 %v472
    %v530 = vpop.f32.mrb[0].mxu0
    %v531 = vadd.f32 %v321, %v530
    %v532 = vpop.f32.mrb[0].mxu0
    %v533 = vadd.f32 %v323, %v532
    %v534 = vpop.f32.mrb[0].mxu0
    %v535 = vadd.f32 %v325, %v534
    %v536 = vpop.f32.mrb[0].mxu0
    %v537 = vadd.f32 %v327, %v536
    %538 = vmatprep.mubr.bf16.mxu0 0
    %539 = vmatmul.mubr.bf16.gmra.mrb[0].mxu0 %v475
    %v540 = vpop.f32.mrb[0].mxu0
    %v541 = vadd.f32 %v331, %v540
    %v542 = vpop.f32.mrb[0].mxu0
    %v543 = vadd.f32 %v333, %v542
    %v544 = vpop.f32.mrb[0].mxu0
    %v545 = vadd.f32 %v335, %v544
    %v546 = vpop.f32.mrb[0].mxu0
    %v547 = vadd.f32 %v337, %v546
    %548 = vdwg.mxu0
    %549 = vmatprep.subr.bf16.mxu0 0
    %550 = vmatpush1.bf16.msra.mxu0 %v443
    %551 = vmatprep.subr.bf16.mxu0 0
    %552 = vmatpush1.bf16.msra.mxu0 %v446
    %553 = vmatprep.subr.bf16.mxu0 0
    %554 = vmatpush1.bf16.msra.mxu0 %v449
    %555 = vmatprep.subr.bf16.mxu0 0
    %556 = vmatpush1.bf16.msra.mxu0 %v452
    %557 = vmatprep.subr.bf16.mxu0 0
    %558 = vmatpush1.bf16.msra.mxu0 %v484
    %559 = vmatprep.subr.bf16.mxu0 0
    %560 = vmatpush1.bf16.msra.mxu0 0
    %561 = vmatprep.subr.bf16.mxu0 0
    %562 = vmatpush1.bf16.msra.mxu0 0
    %563 = vmatprep.subr.bf16.mxu0 0
    %564 = vmatpush1.bf16.msra.mxu0 0
    %565 = vmatprep.subr.bf16.mxu0 0
    %566 = vmatpush1.bf16.msra.mxu0 0
    %567 = vmatprep.subr.bf16.mxu0 0
    %568 = vmatpush1.bf16.msra.mxu0 0
    %569 = vmatprep.subr.bf16.mxu0 0
    %570 = vmatpush1.bf16.msra.mxu0 0
    %571 = vmatprep.subr.bf16.mxu0 0
    %572 = vmatpush1.bf16.msra.mxu0 0
    %573 = vmatprep.subr.bf16.mxu0 0
    %574 = vmatpush1.bf16.msra.mxu0 0
    %575 = vmatprep.subr.bf16.mxu0 0
    %576 = vmatpush1.bf16.msra.mxu0 0
    %577 = vmatprep.subr.bf16.mxu0 0
    %578 = vmatpush1.bf16.msra.mxu0 0
    %579 = vmatprep.subr.bf16.mxu0 0
    %580 = vmatpush1.bf16.msra.mxu0 0
    %581 = vmatprep.mubr.bf16.mxu0 0
    %582 = vmatmul.mubr.bf16.gmra.mrb[0].mxu0 %v469
    %v583 = vpop.f32.mrb[0].mxu0
    %v584 = vadd.f32 %v374, %v583
    %v585 = vpop.f32.mrb[0].mxu0
    %v586 = vpop.f32.mrb[0].mxu0
    %v587 = vadd.f32 %v377, %v586
    %v588 = vpop.f32.mrb[0].mxu0
    %589 = vmatprep.mubr.bf16.mxu0 0
    %590 = vmatmul.mubr.bf16.gmra.mrb[0].mxu0 %v472
    %v591 = vpop.f32.mrb[0].mxu0
    %v592 = vadd.f32 %v382, %v591
    %v593 = vpop.f32.mrb[0].mxu0
    %v594 = vpop.f32.mrb[0].mxu0
    %v595 = vadd.f32 %v385, %v594
    %v596 = vpop.f32.mrb[0].mxu0
    %597 = vmatprep.mubr.bf16.mxu0 0
    %598 = vmatmul.mubr.bf16.gmra.mrb[0].mxu0 %v475
    %v599 = vpop.f32.mrb[0].mxu0
    %v600 = vadd.f32 %v390, %v599
    %v601 = vpop.f32.mrb[0].mxu0
    %v602 = vpop.f32.mrb[0].mxu0
    %v603 = vadd.f32 %v393, %v602
    %v604 = vpop.f32.mrb[0].mxu0
    %605 = vdwg.mxu0
    %s606 = scalar_lea.vmem %s1, 216
    %v607 = vld [vmem:[%s606] sm:$0xff]
    %v608 = vld [vmem:[%s606 + $0x8] sm:$0xf]
    %v609 = vld [vmem:[%s606 + $0xc] sm:$0xff]
    %v610 = vld [vmem:[%s606 + $0x14] sm:$0xf]
    %v611 = vld [vmem:[%s606 + $0x18] sm:$0xff]
    %v612 = vld [vmem:[%s606 + $0x20] sm:$0xf]
    %v613 = vld [vmem:[%s606 + $0x24] sm:$0xff]
    %v614 = vld [vmem:[%s606 + $0x2c] sm:$0xf]
    %v615 = vld [vmem:[%s606 + $0x30] sm:$0xff]
    %v616 = vld [vmem:[%s606 + $0x38] sm:$0xf]
    %v617 = vld [vmem:[%s606 + $0x3c] sm:$0xff]
    %v618 = vld [vmem:[%s606 + $0x44] sm:$0xf]
    %v619 = vld [vmem:[%s606 + $0x48] sm:$0xff]
    %v620 = vld [vmem:[%s606 + $0x50] sm:$0xf]
    %v621 = vld [vmem:[%s606 + $0x54] sm:$0xff]
    %v622 = vld [vmem:[%s606 + $0x5c] sm:$0xf]
    %v623 = vld [vmem:[%s606 + $0x60] sm:$0x11]
    %v624 = vld [vmem:[%s606 + $0x68] sm:$0x1]
    %v643 = vunpack.c.l.b16 %v607
    %v644 = vunpack.c.h.b16 %v607
    %v645 = vunpack.c.l.b16 %v608
    %v646 = vunpack.c.l.b16 %v609
    %v647 = vunpack.c.h.b16 %v609
    %v648 = vunpack.c.l.b16 %v610
    %v649 = vunpack.c.l.b16 %v611
    %v650 = vunpack.c.h.b16 %v611
    %v651 = vunpack.c.l.b16 %v612
    %v652 = vunpack.c.l.b16 %v613
    %v653 = vunpack.c.h.b16 %v613
    %v654 = vunpack.c.l.b16 %v614
    %v655 = vunpack.c.l.b16 %v615
    %v656 = vunpack.c.h.b16 %v615
    %v657 = vunpack.c.l.b16 %v616
    %v658 = vunpack.c.l.b16 %v617
    %v659 = vunpack.c.h.b16 %v617
    %v660 = vunpack.c.l.b16 %v618
    %v661 = vunpack.c.l.b16 %v619
    %v662 = vunpack.c.h.b16 %v619
    %v663 = vunpack.c.l.b16 %v620
    %v664 = vunpack.c.l.b16 %v621
    %v665 = vunpack.c.h.b16 %v621
    %v666 = vunpack.c.l.b16 %v622
    %v667 = vunpack.c.l.b16 %v623
    %v668 = vunpack.c.h.b16 %v623
    %v669 = vunpack.c.l.b16 %v624
    %v670 = vpack.c.b16 %v646, %v643
    %v671 = vpack.c.b16 %v647, %v644
    %v672 = vpack.c.b16 %v648, %v645
    %v673 = vpack.c.b16 %v652, %v649
    %v674 = vpack.c.b16 %v653, %v650
    %v675 = vpack.c.b16 %v654, %v651
    %v676 = vpack.c.b16 %v658, %v655
    %v677 = vpack.c.b16 %v659, %v656
    %v678 = vpack.c.b16 %v660, %v657
    %v679 = vpack.c.b16 %v664, %v661
    %v680 = vpack.c.b16 %v665, %v662
    %v681 = vpack.c.b16 %v666, %v663
    %v682 = vpack.c.b16 %v667, %v667
    %v683 = vpack.c.b16 %v668, %v668
    %v684 = vpack.c.b16 %v669, %v669
    %v698 = vsel %vm55, %v145, 0
    %v701 = vsel %vm55, %v146, 0
    %v704 = vsel %vm55, %v147, 0
    %v707 = vsel %vm266, %v682, 0
    %v710 = vsel %vm266, %v683, 0
    %v713 = vsel %vm266, %v684, 0
    %715 = vmatprep.subr.bf16.mxu0 %v671
    %716 = vmatpush1.bf16.msra.mxu0 %v670
    %717 = vmatprep.subr.bf16.mxu0 %v674
    %718 = vmatpush1.bf16.msra.mxu0 %v673
    %719 = vmatprep.subr.bf16.mxu0 %v677
    %720 = vmatpush1.bf16.msra.mxu0 %v676
    %721 = vmatprep.subr.bf16.mxu0 %v680
    %722 = vmatpush1.bf16.msra.mxu0 %v679
    %723 = vmatprep.subr.bf16.mxu0 %v710
    %724 = vmatpush1.bf16.msra.mxu0 %v707
    %725 = vmatprep.subr.bf16.mxu0 0
    %726 = vmatpush1.bf16.msra.mxu0 0
    %727 = vmatprep.subr.bf16.mxu0 0
    %728 = vmatpush1.bf16.msra.mxu0 0
    %729 = vmatprep.subr.bf16.mxu0 0
    %730 = vmatpush1.bf16.msra.mxu0 0
    %731 = vmatprep.subr.bf16.mxu0 0
    %732 = vmatpush1.bf16.msra.mxu0 0
    %733 = vmatprep.subr.bf16.mxu0 0
    %734 = vmatpush1.bf16.msra.mxu0 0
    %735 = vmatprep.subr.bf16.mxu0 0
    %736 = vmatpush1.bf16.msra.mxu0 0
    %737 = vmatprep.subr.bf16.mxu0 0
    %738 = vmatpush1.bf16.msra.mxu0 0
    %739 = vmatprep.subr.bf16.mxu0 0
    %740 = vmatpush1.bf16.msra.mxu0 0
    %741 = vmatprep.subr.bf16.mxu0 0
    %742 = vmatpush1.bf16.msra.mxu0 0
    %743 = vmatprep.subr.bf16.mxu0 0
    %744 = vmatpush1.bf16.msra.mxu0 0
    %745 = vmatprep.subr.bf16.mxu0 0
    %746 = vmatpush1.bf16.msra.mxu0 0
    %747 = vmatprep.mubr.bf16.mxu0 0
    %748 = vmatmul.mubr.bf16.gmra.mrb[0].mxu0 %v698
    %v749 = vpop.f32.mrb[0].mxu0
    %v750 = vadd.f32 0.0, %v749
    %v751 = vpop.f32.mrb[0].mxu0
    %v752 = vadd.f32 0.0, %v751
    %v753 = vpop.f32.mrb[0].mxu0
    %v754 = vadd.f32 0.0, %v753
    %v755 = vpop.f32.mrb[0].mxu0
    %v756 = vadd.f32 0.0, %v755
    %757 = vmatprep.mubr.bf16.mxu0 0
    %758 = vmatmul.mubr.bf16.gmra.mrb[0].mxu0 %v701
    %v759 = vpop.f32.mrb[0].mxu0
    %v760 = vadd.f32 0.0, %v759
    %v761 = vpop.f32.mrb[0].mxu0
    %v762 = vadd.f32 0.0, %v761
    %v763 = vpop.f32.mrb[0].mxu0
    %v764 = vadd.f32 0.0, %v763
    %v765 = vpop.f32.mrb[0].mxu0
    %v766 = vadd.f32 0.0, %v765
    %767 = vmatprep.mubr.bf16.mxu0 0
    %768 = vmatmul.mubr.bf16.gmra.mrb[0].mxu0 %v704
    %v769 = vpop.f32.mrb[0].mxu0
    %v770 = vadd.f32 0.0, %v769
    %v771 = vpop.f32.mrb[0].mxu0
    %v772 = vadd.f32 0.0, %v771
    %v773 = vpop.f32.mrb[0].mxu0
    %v774 = vadd.f32 0.0, %v773
    %v775 = vpop.f32.mrb[0].mxu0
    %v776 = vadd.f32 0.0, %v775
    %777 = vdwg.mxu0
    %778 = vmatprep.subr.bf16.mxu0 0
    %779 = vmatpush1.bf16.msra.mxu0 %v672
    %780 = vmatprep.subr.bf16.mxu0 0
    %781 = vmatpush1.bf16.msra.mxu0 %v675
    %782 = vmatprep.subr.bf16.mxu0 0
    %783 = vmatpush1.bf16.msra.mxu0 %v678
    %784 = vmatprep.subr.bf16.mxu0 0
    %785 = vmatpush1.bf16.msra.mxu0 %v681
    %786 = vmatprep.subr.bf16.mxu0 0
    %787 = vmatpush1.bf16.msra.mxu0 %v713
    %788 = vmatprep.subr.bf16.mxu0 0
    %789 = vmatpush1.bf16.msra.mxu0 0
    %790 = vmatprep.subr.bf16.mxu0 0
    %791 = vmatpush1.bf16.msra.mxu0 0
    %792 = vmatprep.subr.bf16.mxu0 0
    %793 = vmatpush1.bf16.msra.mxu0 0
    %794 = vmatprep.subr.bf16.mxu0 0
    %795 = vmatpush1.bf16.msra.mxu0 0
    %796 = vmatprep.subr.bf16.mxu0 0
    %797 = vmatpush1.bf16.msra.mxu0 0
    %798 = vmatprep.subr.bf16.mxu0 0
    %799 = vmatpush1.bf16.msra.mxu0 0
    %800 = vmatprep.subr.bf16.mxu0 0
    %801 = vmatpush1.bf16.msra.mxu0 0
    %802 = vmatprep.subr.bf16.mxu0 0
    %803 = vmatpush1.bf16.msra.mxu0 0
    %804 = vmatprep.subr.bf16.mxu0 0
    %805 = vmatpush1.bf16.msra.mxu0 0
    %806 = vmatprep.subr.bf16.mxu0 0
    %807 = vmatpush1.bf16.msra.mxu0 0
    %808 = vmatprep.subr.bf16.mxu0 0
    %809 = vmatpush1.bf16.msra.mxu0 0
    %810 = vmatprep.mubr.bf16.mxu0 0
    %811 = vmatmul.mubr.bf16.gmra.mrb[0].mxu0 %v698
    %v812 = vpop.f32.mrb[0].mxu0
    %v813 = vadd.f32 0.0, %v812
    %v814 = vpop.f32.mrb[0].mxu0
    %v815 = vpop.f32.mrb[0].mxu0
    %v816 = vadd.f32 0.0, %v815
    %v817 = vpop.f32.mrb[0].mxu0
    %818 = vmatprep.mubr.bf16.mxu0 0
    %819 = vmatmul.mubr.bf16.gmra.mrb[0].mxu0 %v701
    %v820 = vpop.f32.mrb[0].mxu0
    %v821 = vadd.f32 0.0, %v820
    %v822 = vpop.f32.mrb[0].mxu0
    %v823 = vpop.f32.mrb[0].mxu0
    %v824 = vadd.f32 0.0, %v823
    %v825 = vpop.f32.mrb[0].mxu0
    %826 = vmatprep.mubr.bf16.mxu0 0
    %827 = vmatmul.mubr.bf16.gmra.mrb[0].mxu0 %v704
    %v828 = vpop.f32.mrb[0].mxu0
    %v829 = vadd.f32 0.0, %v828
    %v830 = vpop.f32.mrb[0].mxu0
    %v831 = vpop.f32.mrb[0].mxu0
    %v832 = vadd.f32 0.0, %v831
    %v833 = vpop.f32.mrb[0].mxu0
    %834 = vdwg.mxu0
    %v835 = vadd.f32 %v521, %v750
    %v836 = vadd.f32 %v523, %v752
    %v837 = vadd.f32 %v584, %v813
    %v838 = vadd.f32 %v525, %v754
    %v839 = vadd.f32 %v527, %v756
    %v840 = vadd.f32 %v587, %v816
    %v841 = vadd.f32 %v531, %v760
    %v842 = vadd.f32 %v533, %v762
    %v843 = vadd.f32 %v592, %v821
    %v844 = vadd.f32 %v535, %v764
    %v845 = vadd.f32 %v537, %v766
    %v846 = vadd.f32 %v595, %v824
    %v847 = vadd.f32 %v541, %v770
    %v848 = vadd.f32 %v543, %v772
    %v849 = vadd.f32 %v600, %v829
    %v850 = vadd.f32 %v545, %v774
    %v851 = vadd.f32 %v547, %v776
    %v852 = vadd.f32 %v603, %v832
    %v854 = vlaneseq
    %v855 = vshrl.u32 %v854, 7
    %v856 = vsub.s32 0, %v855
    %v857 = vrot.slane %v120, %v856
    %v858 = vlaneseq
    %v859 = vshrl.u32 %v858, 7
    %v860 = vsub.s32 1, %v859
    %v861 = vrot.slane %v120, %v860
    %v862 = vlaneseq
    %v863 = vshrl.u32 %v862, 7
    %v864 = vsub.s32 2, %v863
    %v865 = vrot.slane %v120, %v864
    %v869 = vadd.f32 %v835, %v857
    %v870 = vadd.f32 %v836, %v861
    %v871 = vadd.f32 %v837, %v865
    %v872 = vadd.f32 %v838, %v857
    %v873 = vadd.f32 %v839, %v861
    %v874 = vadd.f32 %v840, %v865
    %v875 = vadd.f32 %v841, %v857
    %v876 = vadd.f32 %v842, %v861
    %v877 = vadd.f32 %v843, %v865
    %v878 = vadd.f32 %v844, %v857
    %v879 = vadd.f32 %v845, %v861
    %v880 = vadd.f32 %v846, %v865
    %v881 = vadd.f32 %v847, %v857
    %v882 = vadd.f32 %v848, %v861
    %v883 = vadd.f32 %v849, %v865
    %v884 = vadd.f32 %v850, %v857
    %v885 = vadd.f32 %v851, %v861
    %v886 = vadd.f32 %v852, %v865
    %v887 = vmax.f32 %v869, 0.0
    %v888 = vmax.f32 %v870, 0.0
    %v889 = vmax.f32 %v871, 0.0
    %v890 = vmax.f32 %v872, 0.0
    %v891 = vmax.f32 %v873, 0.0
    %v892 = vmax.f32 %v874, 0.0
    %v893 = vmax.f32 %v875, 0.0
    %v894 = vmax.f32 %v876, 0.0
    %v895 = vmax.f32 %v877, 0.0
    %v896 = vmax.f32 %v878, 0.0
    %v897 = vmax.f32 %v879, 0.0
    %v898 = vmax.f32 %v880, 0.0
    %v899 = vmax.f32 %v881, 0.0
    %v900 = vmax.f32 %v882, 0.0
    %v901 = vmax.f32 %v883, 0.0
    %v902 = vmax.f32 %v884, 0.0
    %v903 = vmax.f32 %v885, 0.0
    %v904 = vmax.f32 %v886, 0.0
    %s905 = scalar_lea.vmem %s1, 324
    %v906 = vld [vmem:[%s905] sm:$0xff]
    %v907 = vld [vmem:[%s905 + $0x8] sm:$0xf]
    %v908 = vld [vmem:[%s905 + $0xc] sm:$0xff]
    %v909 = vld [vmem:[%s905 + $0x14] sm:$0xf]
    %v910 = vld [vmem:[%s905 + $0x18] sm:$0xff]
    %v911 = vld [vmem:[%s905 + $0x20] sm:$0xf]
    %v912 = vld [vmem:[%s905 + $0x24] sm:$0xff]
    %v913 = vld [vmem:[%s905 + $0x2c] sm:$0xf]
    %v914 = vld [vmem:[%s905 + $0x30] sm:$0xff]
    %v915 = vld [vmem:[%s905 + $0x38] sm:$0xf]
    %v916 = vld [vmem:[%s905 + $0x3c] sm:$0xff]
    %v917 = vld [vmem:[%s905 + $0x44] sm:$0xf]
    %v918 = vld [vmem:[%s905 + $0x48] sm:$0xff]
    %v919 = vld [vmem:[%s905 + $0x50] sm:$0xf]
    %v920 = vld [vmem:[%s905 + $0x54] sm:$0xff]
    %v921 = vld [vmem:[%s905 + $0x5c] sm:$0xf]
    %v922 = vld [vmem:[%s905 + $0x60] sm:$0x11]
    %v923 = vld [vmem:[%s905 + $0x68] sm:$0x1]
    %s924 = scalar_lea.vmem %s1, 432
    %v925 = vld [vmem:[%s924] sm:$0xff]
    %v926 = vld [vmem:[%s924 + $0x8] sm:$0xf]
    %v927 = vld [vmem:[%s924 + $0xc] sm:$0xff]
    %v928 = vld [vmem:[%s924 + $0x14] sm:$0xf]
    %v929 = vld [vmem:[%s924 + $0x18] sm:$0xff]
    %v930 = vld [vmem:[%s924 + $0x20] sm:$0xf]
    %v931 = vld [vmem:[%s924 + $0x24] sm:$0xff]
    %v932 = vld [vmem:[%s924 + $0x2c] sm:$0xf]
    %v933 = vld [vmem:[%s924 + $0x30] sm:$0xff]
    %v934 = vld [vmem:[%s924 + $0x38] sm:$0xf]
    %v935 = vld [vmem:[%s924 + $0x3c] sm:$0xff]
    %v936 = vld [vmem:[%s924 + $0x44] sm:$0xf]
    %v937 = vld [vmem:[%s924 + $0x48] sm:$0xff]
    %v938 = vld [vmem:[%s924 + $0x50] sm:$0xf]
    %v939 = vld [vmem:[%s924 + $0x54] sm:$0xff]
    %v940 = vld [vmem:[%s924 + $0x5c] sm:$0xf]
    %v941 = vld [vmem:[%s924 + $0x60] sm:$0x11]
    %v942 = vld [vmem:[%s924 + $0x68] sm:$0x1]
    %v961 = vunpack.c.l.b16 %v925
    %v962 = vunpack.c.h.b16 %v925
    %v963 = vunpack.c.l.b16 %v926
    %v964 = vunpack.c.l.b16 %v927
    %v965 = vunpack.c.h.b16 %v927
    %v966 = vunpack.c.l.b16 %v928
    %v967 = vunpack.c.l.b16 %v929
    %v968 = vunpack.c.h.b16 %v929
    %v969 = vunpack.c.l.b16 %v930
    %v970 = vunpack.c.l.b16 %v931
    %v971 = vunpack.c.h.b16 %v931
    %v972 = vunpack.c.l.b16 %v932
    %v973 = vunpack.c.l.b16 %v933
    %v974 = vunpack.c.h.b16 %v933
    %v975 = vunpack.c.l.b16 %v934
    %v976 = vunpack.c.l.b16 %v935
    %v977 = vunpack.c.h.b16 %v935
    %v978 = vunpack.c.l.b16 %v936
    %v979 = vunpack.c.l.b16 %v937
    %v980 = vunpack.c.h.b16 %v937
    %v981 = vunpack.c.l.b16 %v938
    %v982 = vunpack.c.l.b16 %v939
    %v983 = vunpack.c.h.b16 %v939
    %v984 = vunpack.c.l.b16 %v940
    %v985 = vunpack.c.l.b16 %v941
    %v986 = vunpack.c.h.b16 %v941
    %v987 = vunpack.c.l.b16 %v942
    %v988 = vpack.c.b16 %v964, %v961
    %v989 = vpack.c.b16 %v965, %v962
    %v990 = vpack.c.b16 %v966, %v963
    %v991 = vpack.c.b16 %v970, %v967
    %v992 = vpack.c.b16 %v971, %v968
    %v993 = vpack.c.b16 %v972, %v969
    %v994 = vpack.c.b16 %v976, %v973
    %v995 = vpack.c.b16 %v977, %v974
    %v996 = vpack.c.b16 %v978, %v975
    %v997 = vpack.c.b16 %v982, %v979
    %v998 = vpack.c.b16 %v983, %v980
    %v999 = vpack.c.b16 %v984, %v981
    %v1000 = vpack.c.b16 %v985, %v985
    %v1001 = vpack.c.b16 %v986, %v986
    %v1002 = vpack.c.b16 %v987, %v987
    %v1016 = vsel %vm266, %v1000, 0
    %v1019 = vsel %vm266, %v1001, 0
    %v1022 = vsel %vm266, %v1002, 0
    %1024 = vmatprep.subr.bf16.mxu0 %v989
    %1025 = vmatpush1.bf16.msra.mxu0 %v988
    %1026 = vmatprep.subr.bf16.mxu0 %v992
    %1027 = vmatpush1.bf16.msra.mxu0 %v991
    %1028 = vmatprep.subr.bf16.mxu0 %v995
    %1029 = vmatpush1.bf16.msra.mxu0 %v994
    %1030 = vmatprep.subr.bf16.mxu0 %v998
    %1031 = vmatpush1.bf16.msra.mxu0 %v997
    %1032 = vmatprep.subr.bf16.mxu0 %v1019
    %1033 = vmatpush1.bf16.msra.mxu0 %v1016
    %1034 = vmatprep.subr.bf16.mxu0 0
    %1035 = vmatpush1.bf16.msra.mxu0 0
    %1036 = vmatprep.subr.bf16.mxu0 0
    %1037 = vmatpush1.bf16.msra.mxu0 0
    %1038 = vmatprep.subr.bf16.mxu0 0
    %1039 = vmatpush1.bf16.msra.mxu0 0
    %1040 = vmatprep.subr.bf16.mxu0 0
    %1041 = vmatpush1.bf16.msra.mxu0 0
    %1042 = vmatprep.subr.bf16.mxu0 0
    %1043 = vmatpush1.bf16.msra.mxu0 0
    %1044 = vmatprep.subr.bf16.mxu0 0
    %1045 = vmatpush1.bf16.msra.mxu0 0
    %1046 = vmatprep.subr.bf16.mxu0 0
    %1047 = vmatpush1.bf16.msra.mxu0 0
    %1048 = vmatprep.subr.bf16.mxu0 0
    %1049 = vmatpush1.bf16.msra.mxu0 0
    %1050 = vmatprep.subr.bf16.mxu0 0
    %1051 = vmatpush1.bf16.msra.mxu0 0
    %1052 = vmatprep.subr.bf16.mxu0 0
    %1053 = vmatpush1.bf16.msra.mxu0 0
    %1054 = vmatprep.subr.bf16.mxu0 0
    %1055 = vmatpush1.bf16.msra.mxu0 0
    %1056 = vmatprep.mubr.bf16.mxu0 0
    %1057 = vmatmul.mubr.bf16.gmra.mrb[0].mxu0 %v258
    %v1058 = vpop.f32.mrb[0].mxu0
    %v1059 = vadd.f32 0.0, %v1058
    %v1060 = vpop.f32.mrb[0].mxu0
    %v1061 = vadd.f32 0.0, %v1060
    %v1062 = vpop.f32.mrb[0].mxu0
    %v1063 = vadd.f32 0.0, %v1062
    %v1064 = vpop.f32.mrb[0].mxu0
    %v1065 = vadd.f32 0.0, %v1064
    %1066 = vmatprep.mubr.bf16.mxu0 0
    %1067 = vmatmul.mubr.bf16.gmra.mrb[0].mxu0 %v261
    %v1068 = vpop.f32.mrb[0].mxu0
    %v1069 = vadd.f32 0.0, %v1068
    %v1070 = vpop.f32.mrb[0].mxu0
    %v1071 = vadd.f32 0.0, %v1070
    %v1072 = vpop.f32.mrb[0].mxu0
    %v1073 = vadd.f32 0.0, %v1072
    %v1074 = vpop.f32.mrb[0].mxu0
    %v1075 = vadd.f32 0.0, %v1074
    %1076 = vmatprep.mubr.bf16.mxu0 0
    %1077 = vmatmul.mubr.bf16.gmra.mrb[0].mxu0 %v264
    %v1078 = vpop.f32.mrb[0].mxu0
    %v1079 = vadd.f32 0.0, %v1078
    %v1080 = vpop.f32.mrb[0].mxu0
    %v1081 = vadd.f32 0.0, %v1080
    %v1082 = vpop.f32.mrb[0].mxu0
    %v1083 = vadd.f32 0.0, %v1082
    %v1084 = vpop.f32.mrb[0].mxu0
    %v1085 = vadd.f32 0.0, %v1084
    %1086 = vdwg.mxu0
    %1087 = vmatprep.subr.bf16.mxu0 0
    %1088 = vmatpush1.bf16.msra.mxu0 %v990
    %1089 = vmatprep.subr.bf16.mxu0 0
    %1090 = vmatpush1.bf16.msra.mxu0 %v993
    %1091 = vmatprep.subr.bf16.mxu0 0
    %1092 = vmatpush1.bf16.msra.mxu0 %v996
    %1093 = vmatprep.subr.bf16.mxu0 0
    %1094 = vmatpush1.bf16.msra.mxu0 %v999
    %1095 = vmatprep.subr.bf16.mxu0 0
    %1096 = vmatpush1.bf16.msra.mxu0 %v1022
    %1097 = vmatprep.subr.bf16.mxu0 0
    %1098 = vmatpush1.bf16.msra.mxu0 0
    %1099 = vmatprep.subr.bf16.mxu0 0
    %1100 = vmatpush1.bf16.msra.mxu0 0
    %1101 = vmatprep.subr.bf16.mxu0 0
    %1102 = vmatpush1.bf16.msra.mxu0 0
    %1103 = vmatprep.subr.bf16.mxu0 0
    %1104 = vmatpush1.bf16.msra.mxu0 0
    %1105 = vmatprep.subr.bf16.mxu0 0
    %1106 = vmatpush1.bf16.msra.mxu0 0
    %1107 = vmatprep.subr.bf16.mxu0 0
    %1108 = vmatpush1.bf16.msra.mxu0 0
    %1109 = vmatprep.subr.bf16.mxu0 0
    %1110 = vmatpush1.bf16.msra.mxu0 0
    %1111 = vmatprep.subr.bf16.mxu0 0
    %1112 = vmatpush1.bf16.msra.mxu0 0
    %1113 = vmatprep.subr.bf16.mxu0 0
    %1114 = vmatpush1.bf16.msra.mxu0 0
    %1115 = vmatprep.subr.bf16.mxu0 0
    %1116 = vmatpush1.bf16.msra.mxu0 0
    %1117 = vmatprep.subr.bf16.mxu0 0
    %1118 = vmatpush1.bf16.msra.mxu0 0
    %1119 = vmatprep.mubr.bf16.mxu0 0
    %1120 = vmatmul.mubr.bf16.gmra.mrb[0].mxu0 %v258
    %v1121 = vpop.f32.mrb[0].mxu0
    %v1122 = vadd.f32 0.0, %v1121
    %v1123 = vpop.f32.mrb[0].mxu0
    %v1124 = vpop.f32.mrb[0].mxu0
    %v1125 = vadd.f32 0.0, %v1124
    %v1126 = vpop.f32.mrb[0].mxu0
    %1127 = vmatprep.mubr.bf16.mxu0 0
    %1128 = vmatmul.mubr.bf16.gmra.mrb[0].mxu0 %v261
    %v1129 = vpop.f32.mrb[0].mxu0
    %v1130 = vadd.f32 0.0, %v1129
    %v1131 = vpop.f32.mrb[0].mxu0
    %v1132 = vpop.f32.mrb[0].mxu0
    %v1133 = vadd.f32 0.0, %v1132
    %v1134 = vpop.f32.mrb[0].mxu0
    %1135 = vmatprep.mubr.bf16.mxu0 0
    %1136 = vmatmul.mubr.bf16.gmra.mrb[0].mxu0 %v264
    %v1137 = vpop.f32.mrb[0].mxu0
    %v1138 = vadd.f32 0.0, %v1137
    %v1139 = vpop.f32.mrb[0].mxu0
    %v1140 = vpop.f32.mrb[0].mxu0
    %v1141 = vadd.f32 0.0, %v1140
    %v1142 = vpop.f32.mrb[0].mxu0
    %1143 = vdwg.mxu0
    %v1162 = vunpack.c.l.b16 %v906
    %v1163 = vunpack.c.h.b16 %v906
    %v1164 = vunpack.c.l.b16 %v907
    %v1165 = vunpack.c.l.b16 %v908
    %v1166 = vunpack.c.h.b16 %v908
    %v1167 = vunpack.c.l.b16 %v909
    %v1168 = vunpack.c.l.b16 %v910
    %v1169 = vunpack.c.h.b16 %v910
    %v1170 = vunpack.c.l.b16 %v911
    %v1171 = vunpack.c.l.b16 %v912
    %v1172 = vunpack.c.h.b16 %v912
    %v1173 = vunpack.c.l.b16 %v913
    %v1174 = vunpack.c.l.b16 %v914
    %v1175 = vunpack.c.h.b16 %v914
    %v1176 = vunpack.c.l.b16 %v915
    %v1177 = vunpack.c.l.b16 %v916
    %v1178 = vunpack.c.h.b16 %v916
    %v1179 = vunpack.c.l.b16 %v917
    %v1180 = vunpack.c.l.b16 %v918
    %v1181 = vunpack.c.h.b16 %v918
    %v1182 = vunpack.c.l.b16 %v919
    %v1183 = vunpack.c.l.b16 %v920
    %v1184 = vunpack.c.h.b16 %v920
    %v1185 = vunpack.c.l.b16 %v921
    %v1186 = vunpack.c.l.b16 %v922
    %v1187 = vunpack.c.h.b16 %v922
    %v1188 = vunpack.c.l.b16 %v923
    %v1189 = vpack.c.b16 %v1165, %v1162
    %v1190 = vpack.c.b16 %v1166, %v1163
    %v1191 = vpack.c.b16 %v1167, %v1164
    %v1192 = vpack.c.b16 %v1171, %v1168
    %v1193 = vpack.c.b16 %v1172, %v1169
    %v1194 = vpack.c.b16 %v1173, %v1170
    %v1195 = vpack.c.b16 %v1177, %v1174
    %v1196 = vpack.c.b16 %v1178, %v1175
    %v1197 = vpack.c.b16 %v1179, %v1176
    %v1198 = vpack.c.b16 %v1183, %v1180
    %v1199 = vpack.c.b16 %v1184, %v1181
    %v1200 = vpack.c.b16 %v1185, %v1182
    %v1201 = vpack.c.b16 %v1186, %v1186
    %v1202 = vpack.c.b16 %v1187, %v1187
    %v1203 = vpack.c.b16 %v1188, %v1188
    %v1217 = vsel %vm266, %v1201, 0
    %v1220 = vsel %vm266, %v1202, 0
    %v1223 = vsel %vm266, %v1203, 0
    %1225 = vmatprep.subr.bf16.mxu0 %v1190
    %1226 = vmatpush1.bf16.msra.mxu0 %v1189
    %1227 = vmatprep.subr.bf16.mxu0 %v1193
    %1228 = vmatpush1.bf16.msra.mxu0 %v1192
    %1229 = vmatprep.subr.bf16.mxu0 %v1196
    %1230 = vmatpush1.bf16.msra.mxu0 %v1195
    %1231 = vmatprep.subr.bf16.mxu0 %v1199
    %1232 = vmatpush1.bf16.msra.mxu0 %v1198
    %1233 = vmatprep.subr.bf16.mxu0 %v1220
    %1234 = vmatpush1.bf16.msra.mxu0 %v1217
    %1235 = vmatprep.subr.bf16.mxu0 0
    %1236 = vmatpush1.bf16.msra.mxu0 0
    %1237 = vmatprep.subr.bf16.mxu0 0
    %1238 = vmatpush1.bf16.msra.mxu0 0
    %1239 = vmatprep.subr.bf16.mxu0 0
    %1240 = vmatpush1.bf16.msra.mxu0 0
    %1241 = vmatprep.subr.bf16.mxu0 0
    %1242 = vmatpush1.bf16.msra.mxu0 0
    %1243 = vmatprep.subr.bf16.mxu0 0
    %1244 = vmatpush1.bf16.msra.mxu0 0
    %1245 = vmatprep.subr.bf16.mxu0 0
    %1246 = vmatpush1.bf16.msra.mxu0 0
    %1247 = vmatprep.subr.bf16.mxu0 0
    %1248 = vmatpush1.bf16.msra.mxu0 0
    %1249 = vmatprep.subr.bf16.mxu0 0
    %1250 = vmatpush1.bf16.msra.mxu0 0
    %1251 = vmatprep.subr.bf16.mxu0 0
    %1252 = vmatpush1.bf16.msra.mxu0 0
    %1253 = vmatprep.subr.bf16.mxu0 0
    %1254 = vmatpush1.bf16.msra.mxu0 0
    %1255 = vmatprep.subr.bf16.mxu0 0
    %1256 = vmatpush1.bf16.msra.mxu0 0
    %1257 = vmatprep.mubr.bf16.mxu0 0
    %1258 = vmatmul.mubr.bf16.gmra.mrb[0].mxu0 %v469
    %v1259 = vpop.f32.mrb[0].mxu0
    %v1260 = vadd.f32 %v1059, %v1259
    %v1261 = vpop.f32.mrb[0].mxu0
    %v1262 = vadd.f32 %v1061, %v1261
    %v1263 = vpop.f32.mrb[0].mxu0
    %v1264 = vadd.f32 %v1063, %v1263
    %v1265 = vpop.f32.mrb[0].mxu0
    %v1266 = vadd.f32 %v1065, %v1265
    %1267 = vmatprep.mubr.bf16.mxu0 0
    %1268 = vmatmul.mubr.bf16.gmra.mrb[0].mxu0 %v472
    %v1269 = vpop.f32.mrb[0].mxu0
    %v1270 = vadd.f32 %v1069, %v1269
    %v1271 = vpop.f32.mrb[0].mxu0
    %v1272 = vadd.f32 %v1071, %v1271
    %v1273 = vpop.f32.mrb[0].mxu0
    %v1274 = vadd.f32 %v1073, %v1273
    %v1275 = vpop.f32.mrb[0].mxu0
    %v1276 = vadd.f32 %v1075, %v1275
    %1277 = vmatprep.mubr.bf16.mxu0 0
    %1278 = vmatmul.mubr.bf16.gmra.mrb[0].mxu0 %v475
    %v1279 = vpop.f32.mrb[0].mxu0
    %v1280 = vadd.f32 %v1079, %v1279
    %v1281 = vpop.f32.mrb[0].mxu0
    %v1282 = vadd.f32 %v1081, %v1281
    %v1283 = vpop.f32.mrb[0].mxu0
    %v1284 = vadd.f32 %v1083, %v1283
    %v1285 = vpop.f32.mrb[0].mxu0
    %v1286 = vadd.f32 %v1085, %v1285
    %1287 = vdwg.mxu0
    %1288 = vmatprep.subr.bf16.mxu0 0
    %1289 = vmatpush1.bf16.msra.mxu0 %v1191
    %1290 = vmatprep.subr.bf16.mxu0 0
    %1291 = vmatpush1.bf16.msra.mxu0 %v1194
    %1292 = vmatprep.subr.bf16.mxu0 0
    %1293 = vmatpush1.bf16.msra.mxu0 %v1197
    %1294 = vmatprep.subr.bf16.mxu0 0
    %1295 = vmatpush1.bf16.msra.mxu0 %v1200
    %1296 = vmatprep.subr.bf16.mxu0 0
    %1297 = vmatpush1.bf16.msra.mxu0 %v1223
    %1298 = vmatprep.subr.bf16.mxu0 0
    %1299 = vmatpush1.bf16.msra.mxu0 0
    %1300 = vmatprep.subr.bf16.mxu0 0
    %1301 = vmatpush1.bf16.msra.mxu0 0
    %1302 = vmatprep.subr.bf16.mxu0 0
    %1303 = vmatpush1.bf16.msra.mxu0 0
    %1304 = vmatprep.subr.bf16.mxu0 0
    %1305 = vmatpush1.bf16.msra.mxu0 0
    %1306 = vmatprep.subr.bf16.mxu0 0
    %1307 = vmatpush1.bf16.msra.mxu0 0
    %1308 = vmatprep.subr.bf16.mxu0 0
    %1309 = vmatpush1.bf16.msra.mxu0 0
    %1310 = vmatprep.subr.bf16.mxu0 0
    %1311 = vmatpush1.bf16.msra.mxu0 0
    %1312 = vmatprep.subr.bf16.mxu0 0
    %1313 = vmatpush1.bf16.msra.mxu0 0
    %1314 = vmatprep.subr.bf16.mxu0 0
    %1315 = vmatpush1.bf16.msra.mxu0 0
    %1316 = vmatprep.subr.bf16.mxu0 0
    %1317 = vmatpush1.bf16.msra.mxu0 0
    %1318 = vmatprep.subr.bf16.mxu0 0
    %1319 = vmatpush1.bf16.msra.mxu0 0
    %1320 = vmatprep.mubr.bf16.mxu0 0
    %1321 = vmatmul.mubr.bf16.gmra.mrb[0].mxu0 %v469
    %v1322 = vpop.f32.mrb[0].mxu0
    %v1323 = vadd.f32 %v1122, %v1322
    %v1324 = vpop.f32.mrb[0].mxu0
    %v1325 = vpop.f32.mrb[0].mxu0
    %v1326 = vadd.f32 %v1125, %v1325
    %v1327 = vpop.f32.mrb[0].mxu0
    %1328 = vmatprep.mubr.bf16.mxu0 0
    %1329 = vmatmul.mubr.bf16.gmra.mrb[0].mxu0 %v472
    %v1330 = vpop.f32.mrb[0].mxu0
    %v1331 = vadd.f32 %v1130, %v1330
    %v1332 = vpop.f32.mrb[0].mxu0
    %v1333 = vpop.f32.mrb[0].mxu0
    %v1334 = vadd.f32 %v1133, %v1333
    %v1335 = vpop.f32.mrb[0].mxu0
    %1336 = vmatprep.mubr.bf16.mxu0 0
    %1337 = vmatmul.mubr.bf16.gmra.mrb[0].mxu0 %v475
    %v1338 = vpop.f32.mrb[0].mxu0
    %v1339 = vadd.f32 %v1138, %v1338
    %v1340 = vpop.f32.mrb[0].mxu0
    %v1341 = vpop.f32.mrb[0].mxu0
    %v1342 = vadd.f32 %v1141, %v1341
    %v1343 = vpop.f32.mrb[0].mxu0
    %1344 = vdwg.mxu0
    %s1345 = scalar_lea.vmem %s1, 540
    %v1346 = vld [vmem:[%s1345] sm:$0xff]
    %v1347 = vld [vmem:[%s1345 + $0x8] sm:$0xf]
    %v1348 = vld [vmem:[%s1345 + $0xc] sm:$0xff]
    %v1349 = vld [vmem:[%s1345 + $0x14] sm:$0xf]
    %v1350 = vld [vmem:[%s1345 + $0x18] sm:$0xff]
    %v1351 = vld [vmem:[%s1345 + $0x20] sm:$0xf]
    %v1352 = vld [vmem:[%s1345 + $0x24] sm:$0xff]
    %v1353 = vld [vmem:[%s1345 + $0x2c] sm:$0xf]
    %v1354 = vld [vmem:[%s1345 + $0x30] sm:$0xff]
    %v1355 = vld [vmem:[%s1345 + $0x38] sm:$0xf]
    %v1356 = vld [vmem:[%s1345 + $0x3c] sm:$0xff]
    %v1357 = vld [vmem:[%s1345 + $0x44] sm:$0xf]
    %v1358 = vld [vmem:[%s1345 + $0x48] sm:$0xff]
    %v1359 = vld [vmem:[%s1345 + $0x50] sm:$0xf]
    %v1360 = vld [vmem:[%s1345 + $0x54] sm:$0xff]
    %v1361 = vld [vmem:[%s1345 + $0x5c] sm:$0xf]
    %v1362 = vld [vmem:[%s1345 + $0x60] sm:$0x11]
    %v1363 = vld [vmem:[%s1345 + $0x68] sm:$0x1]
    %v1382 = vunpack.c.l.b16 %v1346
    %v1383 = vunpack.c.h.b16 %v1346
    %v1384 = vunpack.c.l.b16 %v1347
    %v1385 = vunpack.c.l.b16 %v1348
    %v1386 = vunpack.c.h.b16 %v1348
    %v1387 = vunpack.c.l.b16 %v1349
    %v1388 = vunpack.c.l.b16 %v1350
    %v1389 = vunpack.c.h.b16 %v1350
    %v1390 = vunpack.c.l.b16 %v1351
    %v1391 = vunpack.c.l.b16 %v1352
    %v1392 = vunpack.c.h.b16 %v1352
    %v1393 = vunpack.c.l.b16 %v1353
    %v1394 = vunpack.c.l.b16 %v1354
    %v1395 = vunpack.c.h.b16 %v1354
    %v1396 = vunpack.c.l.b16 %v1355
    %v1397 = vunpack.c.l.b16 %v1356
    %v1398 = vunpack.c.h.b16 %v1356
    %v1399 = vunpack.c.l.b16 %v1357
    %v1400 = vunpack.c.l.b16 %v1358
    %v1401 = vunpack.c.h.b16 %v1358
    %v1402 = vunpack.c.l.b16 %v1359
    %v1403 = vunpack.c.l.b16 %v1360
    %v1404 = vunpack.c.h.b16 %v1360
    %v1405 = vunpack.c.l.b16 %v1361
    %v1406 = vunpack.c.l.b16 %v1362
    %v1407 = vunpack.c.h.b16 %v1362
    %v1408 = vunpack.c.l.b16 %v1363
    %v1409 = vpack.c.b16 %v1385, %v1382
    %v1410 = vpack.c.b16 %v1386, %v1383
    %v1411 = vpack.c.b16 %v1387, %v1384
    %v1412 = vpack.c.b16 %v1391, %v1388
    %v1413 = vpack.c.b16 %v1392, %v1389
    %v1414 = vpack.c.b16 %v1393, %v1390
    %v1415 = vpack.c.b16 %v1397, %v1394
    %v1416 = vpack.c.b16 %v1398, %v1395
    %v1417 = vpack.c.b16 %v1399, %v1396
    %v1418 = vpack.c.b16 %v1403, %v1400
    %v1419 = vpack.c.b16 %v1404, %v1401
    %v1420 = vpack.c.b16 %v1405, %v1402
    %v1421 = vpack.c.b16 %v1406, %v1406
    %v1422 = vpack.c.b16 %v1407, %v1407
    %v1423 = vpack.c.b16 %v1408, %v1408
    %v1437 = vsel %vm266, %v1421, 0
    %v1440 = vsel %vm266, %v1422, 0
    %v1443 = vsel %vm266, %v1423, 0
    %1445 = vmatprep.subr.bf16.mxu0 %v1410
    %1446 = vmatpush1.bf16.msra.mxu0 %v1409
    %1447 = vmatprep.subr.bf16.mxu0 %v1413
    %1448 = vmatpush1.bf16.msra.mxu0 %v1412
    %1449 = vmatprep.subr.bf16.mxu0 %v1416
    %1450 = vmatpush1.bf16.msra.mxu0 %v1415
    %1451 = vmatprep.subr.bf16.mxu0 %v1419
    %1452 = vmatpush1.bf16.msra.mxu0 %v1418
    %1453 = vmatprep.subr.bf16.mxu0 %v1440
    %1454 = vmatpush1.bf16.msra.mxu0 %v1437
    %1455 = vmatprep.subr.bf16.mxu0 0
    %1456 = vmatpush1.bf16.msra.mxu0 0
    %1457 = vmatprep.subr.bf16.mxu0 0
    %1458 = vmatpush1.bf16.msra.mxu0 0
    %1459 = vmatprep.subr.bf16.mxu0 0
    %1460 = vmatpush1.bf16.msra.mxu0 0
    %1461 = vmatprep.subr.bf16.mxu0 0
    %1462 = vmatpush1.bf16.msra.mxu0 0
    %1463 = vmatprep.subr.bf16.mxu0 0
    %1464 = vmatpush1.bf16.msra.mxu0 0
    %1465 = vmatprep.subr.bf16.mxu0 0
    %1466 = vmatpush1.bf16.msra.mxu0 0
    %1467 = vmatprep.subr.bf16.mxu0 0
    %1468 = vmatpush1.bf16.msra.mxu0 0
    %1469 = vmatprep.subr.bf16.mxu0 0
    %1470 = vmatpush1.bf16.msra.mxu0 0
    %1471 = vmatprep.subr.bf16.mxu0 0
    %1472 = vmatpush1.bf16.msra.mxu0 0
    %1473 = vmatprep.subr.bf16.mxu0 0
    %1474 = vmatpush1.bf16.msra.mxu0 0
    %1475 = vmatprep.subr.bf16.mxu0 0
    %1476 = vmatpush1.bf16.msra.mxu0 0
    %1477 = vmatprep.mubr.bf16.mxu0 0
    %1478 = vmatmul.mubr.bf16.gmra.mrb[0].mxu0 %v698
    %v1479 = vpop.f32.mrb[0].mxu0
    %v1480 = vadd.f32 0.0, %v1479
    %v1481 = vpop.f32.mrb[0].mxu0
    %v1482 = vadd.f32 0.0, %v1481
    %v1483 = vpop.f32.mrb[0].mxu0
    %v1484 = vadd.f32 0.0, %v1483
    %v1485 = vpop.f32.mrb[0].mxu0
    %v1486 = vadd.f32 0.0, %v1485
    %1487 = vmatprep.mubr.bf16.mxu0 0
    %1488 = vmatmul.mubr.bf16.gmra.mrb[0].mxu0 %v701
    %v1489 = vpop.f32.mrb[0].mxu0
    %v1490 = vadd.f32 0.0, %v1489
    %v1491 = vpop.f32.mrb[0].mxu0
    %v1492 = vadd.f32 0.0, %v1491
    %v1493 = vpop.f32.mrb[0].mxu0
    %v1494 = vadd.f32 0.0, %v1493
    %v1495 = vpop.f32.mrb[0].mxu0
    %v1496 = vadd.f32 0.0, %v1495
    %1497 = vmatprep.mubr.bf16.mxu0 0
    %1498 = vmatmul.mubr.bf16.gmra.mrb[0].mxu0 %v704
    %v1499 = vpop.f32.mrb[0].mxu0
    %v1500 = vadd.f32 0.0, %v1499
    %v1501 = vpop.f32.mrb[0].mxu0
    %v1502 = vadd.f32 0.0, %v1501
    %v1503 = vpop.f32.mrb[0].mxu0
    %v1504 = vadd.f32 0.0, %v1503
    %v1505 = vpop.f32.mrb[0].mxu0
    %v1506 = vadd.f32 0.0, %v1505
    %1507 = vdwg.mxu0
    %1508 = vmatprep.subr.bf16.mxu0 0
    %1509 = vmatpush1.bf16.msra.mxu0 %v1411
    %1510 = vmatprep.subr.bf16.mxu0 0
    %1511 = vmatpush1.bf16.msra.mxu0 %v1414
    %1512 = vmatprep.subr.bf16.mxu0 0
    %1513 = vmatpush1.bf16.msra.mxu0 %v1417
    %1514 = vmatprep.subr.bf16.mxu0 0
    %1515 = vmatpush1.bf16.msra.mxu0 %v1420
    %1516 = vmatprep.subr.bf16.mxu0 0
    %1517 = vmatpush1.bf16.msra.mxu0 %v1443
    %1518 = vmatprep.subr.bf16.mxu0 0
    %1519 = vmatpush1.bf16.msra.mxu0 0
    %1520 = vmatprep.subr.bf16.mxu0 0
    %1521 = vmatpush1.bf16.msra.mxu0 0
    %1522 = vmatprep.subr.bf16.mxu0 0
    %1523 = vmatpush1.bf16.msra.mxu0 0
    %1524 = vmatprep.subr.bf16.mxu0 0
    %1525 = vmatpush1.bf16.msra.mxu0 0
    %1526 = vmatprep.subr.bf16.mxu0 0
    %1527 = vmatpush1.bf16.msra.mxu0 0
    %1528 = vmatprep.subr.bf16.mxu0 0
    %1529 = vmatpush1.bf16.msra.mxu0 0
    %1530 = vmatprep.subr.bf16.mxu0 0
    %1531 = vmatpush1.bf16.msra.mxu0 0
    %1532 = vmatprep.subr.bf16.mxu0 0
    %1533 = vmatpush1.bf16.msra.mxu0 0
    %1534 = vmatprep.subr.bf16.mxu0 0
    %1535 = vmatpush1.bf16.msra.mxu0 0
    %1536 = vmatprep.subr.bf16.mxu0 0
    %1537 = vmatpush1.bf16.msra.mxu0 0
    %1538 = vmatprep.subr.bf16.mxu0 0
    %1539 = vmatpush1.bf16.msra.mxu0 0
    %1540 = vmatprep.mubr.bf16.mxu0 0
    %1541 = vmatmul.mubr.bf16.gmra.mrb[0].mxu0 %v698
    %v1542 = vpop.f32.mrb[0].mxu0
    %v1543 = vadd.f32 0.0, %v1542
    %v1544 = vpop.f32.mrb[0].mxu0
    %v1545 = vpop.f32.mrb[0].mxu0
    %v1546 = vadd.f32 0.0, %v1545
    %v1547 = vpop.f32.mrb[0].mxu0
    %1548 = vmatprep.mubr.bf16.mxu0 0
    %1549 = vmatmul.mubr.bf16.gmra.mrb[0].mxu0 %v701
    %v1550 = vpop.f32.mrb[0].mxu0
    %v1551 = vadd.f32 0.0, %v1550
    %v1552 = vpop.f32.mrb[0].mxu0
    %v1553 = vpop.f32.mrb[0].mxu0
    %v1554 = vadd.f32 0.0, %v1553
    %v1555 = vpop.f32.mrb[0].mxu0
    %1556 = vmatprep.mubr.bf16.mxu0 0
    %1557 = vmatmul.mubr.bf16.gmra.mrb[0].mxu0 %v704
    %v1558 = vpop.f32.mrb[0].mxu0
    %v1559 = vadd.f32 0.0, %v1558
    %v1560 = vpop.f32.mrb[0].mxu0
    %v1561 = vpop.f32.mrb[0].mxu0
    %v1562 = vadd.f32 0.0, %v1561
    %v1563 = vpop.f32.mrb[0].mxu0
    %1564 = vdwg.mxu0
    %v1565 = vadd.f32 %v1260, %v1480
    %v1566 = vadd.f32 %v1262, %v1482
    %v1567 = vadd.f32 %v1323, %v1543
    %v1568 = vadd.f32 %v1264, %v1484
    %v1569 = vadd.f32 %v1266, %v1486
    %v1570 = vadd.f32 %v1326, %v1546
    %v1571 = vadd.f32 %v1270, %v1490
    %v1572 = vadd.f32 %v1272, %v1492
    %v1573 = vadd.f32 %v1331, %v1551
    %v1574 = vadd.f32 %v1274, %v1494
    %v1575 = vadd.f32 %v1276, %v1496
    %v1576 = vadd.f32 %v1334, %v1554
    %v1577 = vadd.f32 %v1280, %v1500
    %v1578 = vadd.f32 %v1282, %v1502
    %v1579 = vadd.f32 %v1339, %v1559
    %v1580 = vadd.f32 %v1284, %v1504
    %v1581 = vadd.f32 %v1286, %v1506
    %v1582 = vadd.f32 %v1342, %v1562
    %v1583 = vadd.f32 %v1565, %v857
    %v1584 = vadd.f32 %v1566, %v861
    %v1585 = vadd.f32 %v1567, %v865
    %v1586 = vadd.f32 %v1568, %v857
    %v1587 = vadd.f32 %v1569, %v861
    %v1588 = vadd.f32 %v1570, %v865
    %v1589 = vadd.f32 %v1571, %v857
    %v1590 = vadd.f32 %v1572, %v861
    %v1591 = vadd.f32 %v1573, %v865
    %v1592 = vadd.f32 %v1574, %v857
    %v1593 = vadd.f32 %v1575, %v861
    %v1594 = vadd.f32 %v1576, %v865
    %v1595 = vadd.f32 %v1577, %v857
    %v1596 = vadd.f32 %v1578, %v861
    %v1597 = vadd.f32 %v1579, %v865
    %v1598 = vadd.f32 %v1580, %v857
    %v1599 = vadd.f32 %v1581, %v861
    %v1600 = vadd.f32 %v1582, %v865
    %v1601 = vmax.f32 %v1583, 0.0
    %v1602 = vmax.f32 %v1584, 0.0
    %v1603 = vmax.f32 %v1585, 0.0
    %v1604 = vmax.f32 %v1586, 0.0
    %v1605 = vmax.f32 %v1587, 0.0
    %v1606 = vmax.f32 %v1588, 0.0
    %v1607 = vmax.f32 %v1589, 0.0
    %v1608 = vmax.f32 %v1590, 0.0
    %v1609 = vmax.f32 %v1591, 0.0
    %v1610 = vmax.f32 %v1592, 0.0
    %v1611 = vmax.f32 %v1593, 0.0
    %v1612 = vmax.f32 %v1594, 0.0
    %v1613 = vmax.f32 %v1595, 0.0
    %v1614 = vmax.f32 %v1596, 0.0
    %v1615 = vmax.f32 %v1597, 0.0
    %v1616 = vmax.f32 %v1598, 0.0
    %v1617 = vmax.f32 %v1599, 0.0
    %v1618 = vmax.f32 %v1600, 0.0
    %v1619 = vmax.f32 %v887, %v1601
    %v1620 = vmax.f32 %v888, %v1602
    %v1621 = vmax.f32 %v889, %v1603
    %v1622 = vmax.f32 %v890, %v1604
    %v1623 = vmax.f32 %v891, %v1605
    %v1624 = vmax.f32 %v892, %v1606
    %v1625 = vmax.f32 %v893, %v1607
    %v1626 = vmax.f32 %v894, %v1608
    %v1627 = vmax.f32 %v895, %v1609
    %v1628 = vmax.f32 %v896, %v1610
    %v1629 = vmax.f32 %v897, %v1611
    %v1630 = vmax.f32 %v898, %v1612
    %v1631 = vmax.f32 %v899, %v1613
    %v1632 = vmax.f32 %v900, %v1614
    %v1633 = vmax.f32 %v901, %v1615
    %v1634 = vmax.f32 %v902, %v1616
    %v1635 = vmax.f32 %v903, %v1617
    %v1636 = vmax.f32 %v904, %v1618
    %v1637 = vpack.c.bf16 %v1622, %v1619
    %v1638 = vpack.c.bf16 %v1623, %v1620
    %v1639 = vpack.c.bf16 %v1624, %v1621
    %v1640 = vpack.c.bf16 %v1628, %v1625
    %v1641 = vpack.c.bf16 %v1629, %v1626
    %v1642 = vpack.c.bf16 %v1630, %v1627
    %v1643 = vpack.c.bf16 %v1634, %v1631
    %v1644 = vpack.c.bf16 %v1635, %v1632
    %v1645 = vpack.c.bf16 %v1636, %v1633
    %v1646 = vld [vmem:[%s4] sm:$0xf]
    %v1647 = vld [vmem:[%s4 + $0x4] sm:$0xf]
    %v1648 = vld [vmem:[%s4 + $0x8] sm:$0xf]
    %v1652 = vunpack.c.l.b16 %v1646
    %v1653 = vunpack.c.l.b16 %v1647
    %v1654 = vunpack.c.l.b16 %v1648
    %v1655 = vpack.c.b16 %v1653, %v1652
    %v1656 = vpack.c.b16 %v1654, %v1654
    %vm1657 = vcmask 343040
    %v1659 = vsel %vm1657, %v1655, 0
    %v1662 = vsel %vm1657, %v1656, 0
    %vm1664 = vcmask 1044480
    %v1666 = vsel %vm1664, %v1643, 0
    %v1669 = vsel %vm1664, %v1644, 0
    %v1672 = vsel %vm1664, %v1645, 0
    %1674 = vmatprep.subr.bf16.mxu0 %v1638
    %1675 = vmatpush1.bf16.msra.mxu0 %v1637
    %1676 = vmatprep.subr.bf16.mxu0 %v1641
    %1677 = vmatpush1.bf16.msra.mxu0 %v1640
    %1678 = vmatprep.subr.bf16.mxu0 %v1669
    %1679 = vmatpush1.bf16.msra.mxu0 %v1666
    %1680 = vmatprep.subr.bf16.mxu0 0
    %1681 = vmatpush1.bf16.msra.mxu0 0
    %1682 = vmatprep.subr.bf16.mxu0 0
    %1683 = vmatpush1.bf16.msra.mxu0 0
    %1684 = vmatprep.subr.bf16.mxu0 0
    %1685 = vmatpush1.bf16.msra.mxu0 0
    %1686 = vmatprep.subr.bf16.mxu0 0
    %1687 = vmatpush1.bf16.msra.mxu0 0
    %1688 = vmatprep.subr.bf16.mxu0 0
    %1689 = vmatpush1.bf16.msra.mxu0 0
    %1690 = vmatprep.subr.bf16.mxu0 0
    %1691 = vmatpush1.bf16.msra.mxu0 0
    %1692 = vmatprep.subr.bf16.mxu0 0
    %1693 = vmatpush1.bf16.msra.mxu0 0
    %1694 = vmatprep.subr.bf16.mxu0 0
    %1695 = vmatpush1.bf16.msra.mxu0 0
    %1696 = vmatprep.subr.bf16.mxu0 0
    %1697 = vmatpush1.bf16.msra.mxu0 0
    %1698 = vmatprep.subr.bf16.mxu0 0
    %1699 = vmatpush1.bf16.msra.mxu0 0
    %1700 = vmatprep.subr.bf16.mxu0 0
    %1701 = vmatpush1.bf16.msra.mxu0 0
    %1702 = vmatprep.subr.bf16.mxu0 0
    %1703 = vmatpush1.bf16.msra.mxu0 0
    %1704 = vmatprep.subr.bf16.mxu0 0
    %1705 = vmatpush1.bf16.msra.mxu0 0
    %1706 = vmatprep.mubr.bf16.mxu0 0
    %1707 = vmatmul.mubr.bf16.gmra.mrb[0].mxu0 %v1659
    %v1708 = vpop.f32.mrb[0].mxu0
    %v1709 = vadd.f32 0.0, %v1708
    %v1710 = vpop.f32.mrb[0].mxu0
    %v1711 = vadd.f32 0.0, %v1710
    %v1712 = vpop.f32.mrb[0].mxu0
    %v1713 = vadd.f32 0.0, %v1712
    %v1714 = vpop.f32.mrb[0].mxu0
    %v1715 = vadd.f32 0.0, %v1714
    %1716 = vmatprep.mubr.bf16.mxu0 0
    %1717 = vmatmul.mubr.bf16.gmra.mrb[0].mxu0 %v1662
    %v1718 = vpop.f32.mrb[0].mxu0
    %v1719 = vadd.f32 0.0, %v1718
    %v1720 = vpop.f32.mrb[0].mxu0
    %v1721 = vadd.f32 0.0, %v1720
    %v1722 = vpop.f32.mrb[0].mxu0
    %v1723 = vpop.f32.mrb[0].mxu0
    %1724 = vdwg.mxu0
    %1725 = vmatprep.subr.bf16.mxu0 0
    %1726 = vmatpush1.bf16.msra.mxu0 %v1639
    %1727 = vmatprep.subr.bf16.mxu0 0
    %1728 = vmatpush1.bf16.msra.mxu0 %v1642
    %1729 = vmatprep.subr.bf16.mxu0 0
    %1730 = vmatpush1.bf16.msra.mxu0 %v1672
    %1731 = vmatprep.subr.bf16.mxu0 0
    %1732 = vmatpush1.bf16.msra.mxu0 0
    %1733 = vmatprep.subr.bf16.mxu0 0
    %1734 = vmatpush1.bf16.msra.mxu0 0
    %1735 = vmatprep.subr.bf16.mxu0 0
    %1736 = vmatpush1.bf16.msra.mxu0 0
    %1737 = vmatprep.subr.bf16.mxu0 0
    %1738 = vmatpush1.bf16.msra.mxu0 0
    %1739 = vmatprep.subr.bf16.mxu0 0
    %1740 = vmatpush1.bf16.msra.mxu0 0
    %1741 = vmatprep.subr.bf16.mxu0 0
    %1742 = vmatpush1.bf16.msra.mxu0 0
    %1743 = vmatprep.subr.bf16.mxu0 0
    %1744 = vmatpush1.bf16.msra.mxu0 0
    %1745 = vmatprep.subr.bf16.mxu0 0
    %1746 = vmatpush1.bf16.msra.mxu0 0
    %1747 = vmatprep.subr.bf16.mxu0 0
    %1748 = vmatpush1.bf16.msra.mxu0 0
    %1749 = vmatprep.subr.bf16.mxu0 0
    %1750 = vmatpush1.bf16.msra.mxu0 0
    %1751 = vmatprep.subr.bf16.mxu0 0
    %1752 = vmatpush1.bf16.msra.mxu0 0
    %1753 = vmatprep.subr.bf16.mxu0 0
    %1754 = vmatpush1.bf16.msra.mxu0 0
    %1755 = vmatprep.subr.bf16.mxu0 0
    %1756 = vmatpush1.bf16.msra.mxu0 0
    %1757 = vmatprep.mubr.bf16.mxu0 0
    %1758 = vmatmul.mubr.bf16.gmra.mrb[0].mxu0 %v1659
    %v1759 = vpop.f32.mrb[0].mxu0
    %v1760 = vadd.f32 0.0, %v1759
    %v1761 = vpop.f32.mrb[0].mxu0
    %v1762 = vpop.f32.mrb[0].mxu0
    %v1763 = vadd.f32 0.0, %v1762
    %v1764 = vpop.f32.mrb[0].mxu0
    %1765 = vmatprep.mubr.bf16.mxu0 0
    %1766 = vmatmul.mubr.bf16.gmra.mrb[0].mxu0 %v1662
    %v1767 = vpop.f32.mrb[0].mxu0
    %v1768 = vadd.f32 0.0, %v1767
    %v1769 = vpop.f32.mrb[0].mxu0
    %v1770 = vpop.f32.mrb[0].mxu0
    %v1771 = vpop.f32.mrb[0].mxu0
    %1772 = vdwg.mxu0
    %s1773 = scalar_lea.vmem %s4, 12
    %v1774 = vld [vmem:[%s1773] sm:$0xf]
    %v1775 = vld [vmem:[%s1773 + $0x4] sm:$0xf]
    %v1776 = vld [vmem:[%s1773 + $0x8] sm:$0xf]
    %v1780 = vunpack.c.l.b16 %v1774
    %v1781 = vunpack.c.l.b16 %v1775
    %v1782 = vunpack.c.l.b16 %v1776
    %v1783 = vpack.c.b16 %v1781, %v1780
    %v1784 = vpack.c.b16 %v1782, %v1782
    %v1786 = vsel %vm1657, %v1783, 0
    %v1789 = vsel %vm1657, %v1784, 0
    %1791 = vmatprep.subr.bf16.mxu0 %v1638
    %1792 = vmatpush1.bf16.msra.mxu0 %v1637
    %1793 = vmatprep.subr.bf16.mxu0 %v1641
    %1794 = vmatpush1.bf16.msra.mxu0 %v1640
    %1795 = vmatprep.subr.bf16.mxu0 %v1669
    %1796 = vmatpush1.bf16.msra.mxu0 %v1666
    %1797 = vmatprep.subr.bf16.mxu0 0
    %1798 = vmatpush1.bf16.msra.mxu0 0
    %1799 = vmatprep.subr.bf16.mxu0 0
    %1800 = vmatpush1.bf16.msra.mxu0 0
    %1801 = vmatprep.subr.bf16.mxu0 0
    %1802 = vmatpush1.bf16.msra.mxu0 0
    %1803 = vmatprep.subr.bf16.mxu0 0
    %1804 = vmatpush1.bf16.msra.mxu0 0
    %1805 = vmatprep.subr.bf16.mxu0 0
    %1806 = vmatpush1.bf16.msra.mxu0 0
    %1807 = vmatprep.subr.bf16.mxu0 0
    %1808 = vmatpush1.bf16.msra.mxu0 0
    %1809 = vmatprep.subr.bf16.mxu0 0
    %1810 = vmatpush1.bf16.msra.mxu0 0
    %1811 = vmatprep.subr.bf16.mxu0 0
    %1812 = vmatpush1.bf16.msra.mxu0 0
    %1813 = vmatprep.subr.bf16.mxu0 0
    %1814 = vmatpush1.bf16.msra.mxu0 0
    %1815 = vmatprep.subr.bf16.mxu0 0
    %1816 = vmatpush1.bf16.msra.mxu0 0
    %1817 = vmatprep.subr.bf16.mxu0 0
    %1818 = vmatpush1.bf16.msra.mxu0 0
    %1819 = vmatprep.subr.bf16.mxu0 0
    %1820 = vmatpush1.bf16.msra.mxu0 0
    %1821 = vmatprep.subr.bf16.mxu0 0
    %1822 = vmatpush1.bf16.msra.mxu0 0
    %1823 = vmatprep.mubr.bf16.mxu0 0
    %1824 = vmatmul.mubr.bf16.gmra.mrb[0].mxu0 %v1786
    %v1825 = vpop.f32.mrb[0].mxu0
    %v1826 = vadd.f32 0.0, %v1825
    %v1827 = vpop.f32.mrb[0].mxu0
    %v1828 = vadd.f32 0.0, %v1827
    %v1829 = vpop.f32.mrb[0].mxu0
    %v1830 = vadd.f32 0.0, %v1829
    %v1831 = vpop.f32.mrb[0].mxu0
    %v1832 = vadd.f32 0.0, %v1831
    %1833 = vmatprep.mubr.bf16.mxu0 0
    %1834 = vmatmul.mubr.bf16.gmra.mrb[0].mxu0 %v1789
    %v1835 = vpop.f32.mrb[0].mxu0
    %v1836 = vadd.f32 0.0, %v1835
    %v1837 = vpop.f32.mrb[0].mxu0
    %v1838 = vadd.f32 0.0, %v1837
    %v1839 = vpop.f32.mrb[0].mxu0
    %v1840 = vpop.f32.mrb[0].mxu0
    %1841 = vdwg.mxu0
    %1842 = vmatprep.subr.bf16.mxu0 0
    %1843 = vmatpush1.bf16.msra.mxu0 %v1639
    %1844 = vmatprep.subr.bf16.mxu0 0
    %1845 = vmatpush1.bf16.msra.mxu0 %v1642
    %1846 = vmatprep.subr.bf16.mxu0 0
    %1847 = vmatpush1.bf16.msra.mxu0 %v1672
    %1848 = vmatprep.subr.bf16.mxu0 0
    %1849 = vmatpush1.bf16.msra.mxu0 0
    %1850 = vmatprep.subr.bf16.mxu0 0
    %1851 = vmatpush1.bf16.msra.mxu0 0
    %1852 = vmatprep.subr.bf16.mxu0 0
    %1853 = vmatpush1.bf16.msra.mxu0 0
    %1854 = vmatprep.subr.bf16.mxu0 0
    %1855 = vmatpush1.bf16.msra.mxu0 0
    %1856 = vmatprep.subr.bf16.mxu0 0
    %1857 = vmatpush1.bf16.msra.mxu0 0
    %1858 = vmatprep.subr.bf16.mxu0 0
    %1859 = vmatpush1.bf16.msra.mxu0 0
    %1860 = vmatprep.subr.bf16.mxu0 0
    %1861 = vmatpush1.bf16.msra.mxu0 0
    %1862 = vmatprep.subr.bf16.mxu0 0
    %1863 = vmatpush1.bf16.msra.mxu0 0
    %1864 = vmatprep.subr.bf16.mxu0 0
    %1865 = vmatpush1.bf16.msra.mxu0 0
    %1866 = vmatprep.subr.bf16.mxu0 0
    %1867 = vmatpush1.bf16.msra.mxu0 0
    %1868 = vmatprep.subr.bf16.mxu0 0
    %1869 = vmatpush1.bf16.msra.mxu0 0
    %1870 = vmatprep.subr.bf16.mxu0 0
    %1871 = vmatpush1.bf16.msra.mxu0 0
    %1872 = vmatprep.subr.bf16.mxu0 0
    %1873 = vmatpush1.bf16.msra.mxu0 0
    %1874 = vmatprep.mubr.bf16.mxu0 0
    %1875 = vmatmul.mubr.bf16.gmra.mrb[0].mxu0 %v1786
    %v1876 = vpop.f32.mrb[0].mxu0
    %v1877 = vadd.f32 0.0, %v1876
    %v1878 = vpop.f32.mrb[0].mxu0
    %v1879 = vpop.f32.mrb[0].mxu0
    %v1880 = vadd.f32 0.0, %v1879
    %v1881 = vpop.f32.mrb[0].mxu0
    %1882 = vmatprep.mubr.bf16.mxu0 0
    %1883 = vmatmul.mubr.bf16.gmra.mrb[0].mxu0 %v1789
    %v1884 = vpop.f32.mrb[0].mxu0
    %v1885 = vadd.f32 0.0, %v1884
    %v1886 = vpop.f32.mrb[0].mxu0
    %v1887 = vpop.f32.mrb[0].mxu0
    %v1888 = vpop.f32.mrb[0].mxu0
    %1889 = vdwg.mxu0
    %v1890 = vmax.f32 %v1709, %v1826
    %v1891 = vmax.f32 %v1711, %v1828
    %v1892 = vmax.f32 %v1760, %v1877
    %v1893 = vmax.f32 %v1713, %v1830
    %v1894 = vmax.f32 %v1715, %v1832
    %v1895 = vmax.f32 %v1763, %v1880
    %v1896 = vmax.f32 %v1719, %v1836
    %v1897 = vmax.f32 %v1721, %v1838
    %v1898 = vmax.f32 %v1768, %v1885
    %1908 = vrot.lane.b32.xlu0 %v1890, 32
    %v1909 = vpop.permute.xlu0 %1908
    %1910 = vrot.lane.b32.xlu0 %v1891, 32
    %v1911 = vpop.permute.xlu0 %1910
    %1912 = vrot.lane.b32.xlu0 %v1892, 32
    %v1913 = vpop.permute.xlu0 %1912
    %1914 = vrot.lane.b32.xlu0 %v1893, 32
    %v1915 = vpop.permute.xlu0 %1914
    %1916 = vrot.lane.b32.xlu0 %v1894, 32
    %v1917 = vpop.permute.xlu0 %1916
    %1918 = vrot.lane.b32.xlu0 %v1895, 32
    %v1919 = vpop.permute.xlu0 %1918
    %1920 = vrot.lane.b32.xlu0 %v1896, 32
    %v1921 = vpop.permute.xlu0 %1920
    %1922 = vrot.lane.b32.xlu0 %v1897, 32
    %v1923 = vpop.permute.xlu0 %1922
    %1924 = vrot.lane.b32.xlu0 %v1898, 32
    %v1925 = vpop.permute.xlu0 %1924
    %vm1926 = vcmask 261120
    %v1927 = vsel %vm1926, %v1909, %v1911
    %v1928 = vsel %vm1926, %v1911, %v1913
    %v1929 = vsel %vm1926, %v1915, %v1917
    %v1930 = vsel %vm1926, %v1917, %v1919
    %v1931 = vsel %vm1926, %v1921, %v1923
    %v1932 = vsel %vm1926, %v1923, %v1925
    %vm1942 = vcmask 1047808
    %1943 = vst.msk [vmem:[#allocation3] sm:$0xff] %vm1942, %v1909
    %1944 = vst [vmem:[#allocation3 + $0x8] sm:$0xff] %v1927
    %vm1945 = vcmask 785408
    %1946 = vst.msk [vmem:[#allocation3 + $0x10] sm:$0xff] %vm1945, %v1928
    %1947 = vst.msk [vmem:[#allocation3 + $0x18] sm:$0xff] %vm1942, %v1915
    %1948 = vst [vmem:[#allocation3 + $0x20] sm:$0xff] %v1929
    %1949 = vst.msk [vmem:[#allocation3 + $0x28] sm:$0xff] %vm1945, %v1930
    %1950 = vst.msk [vmem:[#allocation3 + $0x30] sm:$0xff] %vm1942, %v1921
    %1951 = vst [vmem:[#allocation3 + $0x38] sm:$0xff] %v1931
    %1952 = vst.msk [vmem:[#allocation3 + $0x40] sm:$0xff] %vm1945, %v1932
    %v1953 = vld [vmem:[%s8] sm:$0x7]
    %v1954 = vld [vmem:[#allocation3] sm:$0xff]
    %v1955 = vld [vmem:[#allocation3 + $0x8] sm:$0xff]
    %v1956 = vld [vmem:[#allocation3 + $0x10] sm:$0xff]
    %v1957 = vld [vmem:[#allocation3 + $0x18] sm:$0xff]
    %v1958 = vld [vmem:[#allocation3 + $0x20] sm:$0xff]
    %v1959 = vld [vmem:[#allocation3 + $0x28] sm:$0xff]
    %v1960 = vld [vmem:[#allocation3 + $0x30] sm:$0x3f]
    %v1961 = vld [vmem:[#allocation3 + $0x38] sm:$0x3f]
    %v1962 = vld [vmem:[#allocation3 + $0x40] sm:$0x3f]
    %v1963 = vpack.c.bf16 %v1957, %v1954
    %v1964 = vpack.c.bf16 %v1958, %v1955
    %v1965 = vpack.c.bf16 %v1959, %v1956
    %v1966 = vpack.c.bf16 %v1960, %v1960
    %v1967 = vpack.c.bf16 %v1961, %v1961
    %v1968 = vpack.c.bf16 %v1962, %v1962
    %v1969 = vld [vmem:[#allocation3] sm:$0xfe]
    %v1970 = vld [vmem:[#allocation3 + $0x8] sm:$0xfe]
    %v1971 = vld [vmem:[#allocation3 + $0x10] sm:$0xfe]
    %v1972 = vld [vmem:[#allocation3 + $0x30] sm:$0x7f]
    %v1973 = vld [vmem:[#allocation3 + $0x38] sm:$0x7f]
    %v1974 = vld [vmem:[#allocation3 + $0x40] sm:$0x7f]
    %v1975 = vpack.c.bf16 %v1957, %v1969
    %v1976 = vpack.c.bf16 %v1958, %v1970
    %v1977 = vpack.c.bf16 %v1959, %v1971
    %v1978 = vpack.c.bf16 %v1972, %v1972
    %v1979 = vpack.c.bf16 %v1973, %v1973
    %v1980 = vpack.c.bf16 %v1974, %v1974
    %v1981 = vld [vmem:[#allocation3] sm:$0xfc]
    %v1982 = vld [vmem:[#allocation3 + $0x8] sm:$0xfc]
    %v1983 = vld [vmem:[#allocation3 + $0x10] sm:$0xfc]
    %v1984 = vld [vmem:[#allocation3 + $0x30] sm:$0xff]
    %v1985 = vld [vmem:[#allocation3 + $0x38] sm:$0xff]
    %v1986 = vld [vmem:[#allocation3 + $0x40] sm:$0xff]
    %v1987 = vpack.c.bf16 %v1957, %v1981
    %v1988 = vpack.c.bf16 %v1958, %v1982
    %v1989 = vpack.c.bf16 %v1959, %v1983
    %v1990 = vpack.c.bf16 %v1984, %v1984
    %v1991 = vpack.c.bf16 %v1985, %v1985
    %v1992 = vpack.c.bf16 %v1986, %v1986
    %v1993 = vld [vmem:[%s2] sm:$0xff]
    %v1994 = vld [vmem:[%s2 + $0x8] sm:$0xf]
    %v1995 = vld [vmem:[%s2 + $0xc] sm:$0xff]
    %v1996 = vld [vmem:[%s2 + $0x14] sm:$0xf]
    %v1997 = vld [vmem:[%s2 + $0x18] sm:$0xff]
    %v1998 = vld [vmem:[%s2 + $0x20] sm:$0xf]
    %v1999 = vld [vmem:[%s2 + $0x24] sm:$0xff]
    %v2000 = vld [vmem:[%s2 + $0x2c] sm:$0xf]
    %v2001 = vld [vmem:[%s2 + $0x30] sm:$0xff]
    %v2002 = vld [vmem:[%s2 + $0x38] sm:$0xf]
    %v2003 = vld [vmem:[%s2 + $0x3c] sm:$0xff]
    %v2004 = vld [vmem:[%s2 + $0x44] sm:$0xf]
    %v2005 = vld [vmem:[%s2 + $0x48] sm:$0xff]
    %v2006 = vld [vmem:[%s2 + $0x50] sm:$0xf]
    %v2007 = vld [vmem:[%s2 + $0x54] sm:$0xff]
    %v2008 = vld [vmem:[%s2 + $0x5c] sm:$0xf]
    %v2009 = vld [vmem:[%s2 + $0x60] sm:$0xff]
    %v2010 = vld [vmem:[%s2 + $0x68] sm:$0xf]
    %v2011 = vld [vmem:[%s2 + $0x6c] sm:$0xff]
    %v2012 = vld [vmem:[%s2 + $0x74] sm:$0xf]
    %v2013 = vld [vmem:[%s2 + $0x78] sm:$0xff]
    %v2014 = vld [vmem:[%s2 + $0x80] sm:$0xf]
    %v2015 = vld [vmem:[%s2 + $0x84] sm:$0xff]
    %v2016 = vld [vmem:[%s2 + $0x8c] sm:$0xf]
    %v2017 = vld [vmem:[%s2 + $0x90] sm:$0xff]
    %v2018 = vld [vmem:[%s2 + $0x98] sm:$0xf]
    %v2019 = vld [vmem:[%s2 + $0x9c] sm:$0xff]
    %v2020 = vld [vmem:[%s2 + $0xa4] sm:$0xf]
    %v2021 = vld [vmem:[%s2 + $0xa8] sm:$0xff]
    %v2022 = vld [vmem:[%s2 + $0xb0] sm:$0xf]
    %v2023 = vld [vmem:[%s2 + $0xb4] sm:$0xff]
    %v2024 = vld [vmem:[%s2 + $0xbc] sm:$0xf]
    %v2025 = vld [vmem:[%s2 + $0xc0] sm:$0xff]
    %v2026 = vld [vmem:[%s2 + $0xc8] sm:$0xf]
    %v2027 = vld [vmem:[%s2 + $0xcc] sm:$0xff]
    %v2028 = vld [vmem:[%s2 + $0xd4] sm:$0xf]
    %v2029 = vld [vmem:[%s2 + $0xd8] sm:$0xff]
    %v2030 = vld [vmem:[%s2 + $0xe0] sm:$0xf]
    %v2031 = vld [vmem:[%s2 + $0xe4] sm:$0xff]
    %v2032 = vld [vmem:[%s2 + $0xec] sm:$0xf]
    %v2033 = vld [vmem:[%s2 + $0xf0] sm:$0xff]
    %v2034 = vld [vmem:[%s2 + $0xf8] sm:$0xf]
    %v2035 = vld [vmem:[%s2 + $0xfc] sm:$0xff]
    %v2036 = vld [vmem:[%s2 + $0x104] sm:$0xf]
    %v2037 = vld [vmem:[%s2 + $0x108] sm:$0xff]
    %v2038 = vld [vmem:[%s2 + $0x110] sm:$0xf]
    %v2039 = vld [vmem:[%s2 + $0x114] sm:$0xff]
    %v2040 = vld [vmem:[%s2 + $0x11c] sm:$0xf]
    %v2041 = vld [vmem:[%s2 + $0x120] sm:$0xff]
    %v2042 = vld [vmem:[%s2 + $0x128] sm:$0xf]
    %v2043 = vld [vmem:[%s2 + $0x12c] sm:$0xff]
    %v2044 = vld [vmem:[%s2 + $0x134] sm:$0xf]
    %v2045 = vld [vmem:[%s2 + $0x138] sm:$0xff]
    %v2046 = vld [vmem:[%s2 + $0x140] sm:$0xf]
    %v2047 = vld [vmem:[%s2 + $0x144] sm:$0xff]
    %v2048 = vld [vmem:[%s2 + $0x14c] sm:$0xf]
    %v2049 = vld [vmem:[%s2 + $0x150] sm:$0xff]
    %v2050 = vld [vmem:[%s2 + $0x158] sm:$0xf]
    %v2051 = vld [vmem:[%s2 + $0x15c] sm:$0xff]
    %v2052 = vld [vmem:[%s2 + $0x164] sm:$0xf]
    %v2053 = vld [vmem:[%s2 + $0x168] sm:$0xff]
    %v2054 = vld [vmem:[%s2 + $0x170] sm:$0xf]
    %v2055 = vld [vmem:[%s2 + $0x174] sm:$0xff]
    %v2056 = vld [vmem:[%s2 + $0x17c] sm:$0xf]
    %v2057 = vld [vmem:[%s2 + $0x180] sm:$0xff]
    %v2058 = vld [vmem:[%s2 + $0x188] sm:$0xf]
    %v2059 = vld [vmem:[%s2 + $0x18c] sm:$0xff]
    %v2060 = vld [vmem:[%s2 + $0x194] sm:$0xf]
    %v2061 = vld [vmem:[%s2 + $0x198] sm:$0xff]
    %v2062 = vld [vmem:[%s2 + $0x1a0] sm:$0xf]
    %v2063 = vld [vmem:[%s2 + $0x1a4] sm:$0xff]
    %v2064 = vld [vmem:[%s2 + $0x1ac] sm:$0xf]
    %v2065 = vld [vmem:[%s2 + $0x1b0] sm:$0xff]
    %v2066 = vld [vmem:[%s2 + $0x1b8] sm:$0xf]
    %v2067 = vld [vmem:[%s2 + $0x1bc] sm:$0xff]
    %v2068 = vld [vmem:[%s2 + $0x1c4] sm:$0xf]
    %v2069 = vld [vmem:[%s2 + $0x1c8] sm:$0xff]
    %v2070 = vld [vmem:[%s2 + $0x1d0] sm:$0xf]
    %v2071 = vld [vmem:[%s2 + $0x1d4] sm:$0xff]
    %v2072 = vld [vmem:[%s2 + $0x1dc] sm:$0xf]
    %v2073 = vld [vmem:[%s2 + $0x1e0] sm:$0xff]
    %v2074 = vld [vmem:[%s2 + $0x1e8] sm:$0xf]
    %v2075 = vld [vmem:[%s2 + $0x1ec] sm:$0xff]
    %v2076 = vld [vmem:[%s2 + $0x1f4] sm:$0xf]
    %v2077 = vld [vmem:[%s2 + $0x1f8] sm:$0xff]
    %v2078 = vld [vmem:[%s2 + $0x200] sm:$0xf]
    %v2079 = vld [vmem:[%s2 + $0x204] sm:$0xff]
    %v2080 = vld [vmem:[%s2 + $0x20c] sm:$0xf]
    %v2081 = vld [vmem:[%s2 + $0x210] sm:$0xff]
    %v2082 = vld [vmem:[%s2 + $0x218] sm:$0xf]
    %v2083 = vld [vmem:[%s2 + $0x21c] sm:$0xff]
    %v2084 = vld [vmem:[%s2 + $0x224] sm:$0xf]
    %v2085 = vld [vmem:[%s2 + $0x228] sm:$0xff]
    %v2086 = vld [vmem:[%s2 + $0x230] sm:$0xf]
    %v2087 = vld [vmem:[%s2 + $0x234] sm:$0xff]
    %v2088 = vld [vmem:[%s2 + $0x23c] sm:$0xf]
    %s2089 = scalar_lea.vmem %s2, 576
    %v2090 = vld [vmem:[%s2089] sm:$0xff]
    %v2091 = vld [vmem:[%s2089 + $0x8] sm:$0xf]
    %v2092 = vld [vmem:[%s2089 + $0xc] sm:$0xff]
    %v2093 = vld [vmem:[%s2089 + $0x14] sm:$0xf]
    %v2094 = vld [vmem:[%s2089 + $0x18] sm:$0xff]
    %v2095 = vld [vmem:[%s2089 + $0x20] sm:$0xf]
    %v2096 = vld [vmem:[%s2089 + $0x24] sm:$0xff]
    %v2097 = vld [vmem:[%s2089 + $0x2c] sm:$0xf]
    %v2098 = vld [vmem:[%s2089 + $0x30] sm:$0xff]
    %v2099 = vld [vmem:[%s2089 + $0x38] sm:$0xf]
    %v2100 = vld [vmem:[%s2089 + $0x3c] sm:$0xff]
    %v2101 = vld [vmem:[%s2089 + $0x44] sm:$0xf]
    %v2102 = vld [vmem:[%s2089 + $0x48] sm:$0xff]
    %v2103 = vld [vmem:[%s2089 + $0x50] sm:$0xf]
    %v2104 = vld [vmem:[%s2089 + $0x54] sm:$0xff]
    %v2105 = vld [vmem:[%s2089 + $0x5c] sm:$0xf]
    %v2106 = vld [vmem:[%s2089 + $0x60] sm:$0xff]
    %v2107 = vld [vmem:[%s2089 + $0x68] sm:$0xf]
    %v2108 = vld [vmem:[%s2089 + $0x6c] sm:$0xff]
    %v2109 = vld [vmem:[%s2089 + $0x74] sm:$0xf]
    %v2110 = vld [vmem:[%s2089 + $0x78] sm:$0xff]
    %v2111 = vld [vmem:[%s2089 + $0x80] sm:$0xf]
    %v2112 = vld [vmem:[%s2089 + $0x84] sm:$0xff]
    %v2113 = vld [vmem:[%s2089 + $0x8c] sm:$0xf]
    %v2114 = vld [vmem:[%s2089 + $0x90] sm:$0xff]
    %v2115 = vld [vmem:[%s2089 + $0x98] sm:$0xf]
    %v2116 = vld [vmem:[%s2089 + $0x9c] sm:$0xff]
    %v2117 = vld [vmem:[%s2089 + $0xa4] sm:$0xf]
    %v2118 = vld [vmem:[%s2089 + $0xa8] sm:$0xff]
    %v2119 = vld [vmem:[%s2089 + $0xb0] sm:$0xf]
    %v2120 = vld [vmem:[%s2089 + $0xb4] sm:$0xff]
    %v2121 = vld [vmem:[%s2089 + $0xbc] sm:$0xf]
    %v2122 = vld [vmem:[%s2089 + $0xc0] sm:$0xff]
    %v2123 = vld [vmem:[%s2089 + $0xc8] sm:$0xf]
    %v2124 = vld [vmem:[%s2089 + $0xcc] sm:$0xff]
    %v2125 = vld [vmem:[%s2089 + $0xd4] sm:$0xf]
    %v2126 = vld [vmem:[%s2089 + $0xd8] sm:$0xff]
    %v2127 = vld [vmem:[%s2089 + $0xe0] sm:$0xf]
    %v2128 = vld [vmem:[%s2089 + $0xe4] sm:$0xff]
    %v2129 = vld [vmem:[%s2089 + $0xec] sm:$0xf]
    %v2130 = vld [vmem:[%s2089 + $0xf0] sm:$0xff]
    %v2131 = vld [vmem:[%s2089 + $0xf8] sm:$0xf]
    %v2132 = vld [vmem:[%s2089 + $0xfc] sm:$0xff]
    %v2133 = vld [vmem:[%s2089 + $0x104] sm:$0xf]
    %v2134 = vld [vmem:[%s2089 + $0x108] sm:$0xff]
    %v2135 = vld [vmem:[%s2089 + $0x110] sm:$0xf]
    %v2136 = vld [vmem:[%s2089 + $0x114] sm:$0xff]
    %v2137 = vld [vmem:[%s2089 + $0x11c] sm:$0xf]
    %v2138 = vld [vmem:[%s2089 + $0x120] sm:$0xff]
    %v2139 = vld [vmem:[%s2089 + $0x128] sm:$0xf]
    %v2140 = vld [vmem:[%s2089 + $0x12c] sm:$0xff]
    %v2141 = vld [vmem:[%s2089 + $0x134] sm:$0xf]
    %v2142 = vld [vmem:[%s2089 + $0x138] sm:$0xff]
    %v2143 = vld [vmem:[%s2089 + $0x140] sm:$0xf]
    %v2144 = vld [vmem:[%s2089 + $0x144] sm:$0xff]
    %v2145 = vld [vmem:[%s2089 + $0x14c] sm:$0xf]
    %v2146 = vld [vmem:[%s2089 + $0x150] sm:$0xff]
    %v2147 = vld [vmem:[%s2089 + $0x158] sm:$0xf]
    %v2148 = vld [vmem:[%s2089 + $0x15c] sm:$0xff]
    %v2149 = vld [vmem:[%s2089 + $0x164] sm:$0xf]
    %v2150 = vld [vmem:[%s2089 + $0x168] sm:$0xff]
    %v2151 = vld [vmem:[%s2089 + $0x170] sm:$0xf]
    %v2152 = vld [vmem:[%s2089 + $0x174] sm:$0xff]
    %v2153 = vld [vmem:[%s2089 + $0x17c] sm:$0xf]
    %v2154 = vld [vmem:[%s2089 + $0x180] sm:$0xff]
    %v2155 = vld [vmem:[%s2089 + $0x188] sm:$0xf]
    %v2156 = vld [vmem:[%s2089 + $0x18c] sm:$0xff]
    %v2157 = vld [vmem:[%s2089 + $0x194] sm:$0xf]
    %v2158 = vld [vmem:[%s2089 + $0x198] sm:$0xff]
    %v2159 = vld [vmem:[%s2089 + $0x1a0] sm:$0xf]
    %v2160 = vld [vmem:[%s2089 + $0x1a4] sm:$0xff]
    %v2161 = vld [vmem:[%s2089 + $0x1ac] sm:$0xf]
    %v2162 = vld [vmem:[%s2089 + $0x1b0] sm:$0xff]
    %v2163 = vld [vmem:[%s2089 + $0x1b8] sm:$0xf]
    %v2164 = vld [vmem:[%s2089 + $0x1bc] sm:$0xff]
    %v2165 = vld [vmem:[%s2089 + $0x1c4] sm:$0xf]
    %v2166 = vld [vmem:[%s2089 + $0x1c8] sm:$0xff]
    %v2167 = vld [vmem:[%s2089 + $0x1d0] sm:$0xf]
    %v2168 = vld [vmem:[%s2089 + $0x1d4] sm:$0xff]
    %v2169 = vld [vmem:[%s2089 + $0x1dc] sm:$0xf]
    %v2170 = vld [vmem:[%s2089 + $0x1e0] sm:$0xff]
    %v2171 = vld [vmem:[%s2089 + $0x1e8] sm:$0xf]
    %v2172 = vld [vmem:[%s2089 + $0x1ec] sm:$0xff]
    %v2173 = vld [vmem:[%s2089 + $0x1f4] sm:$0xf]
    %v2174 = vld [vmem:[%s2089 + $0x1f8] sm:$0xff]
    %v2175 = vld [vmem:[%s2089 + $0x200] sm:$0xf]
    %v2176 = vld [vmem:[%s2089 + $0x204] sm:$0xff]
    %v2177 = vld [vmem:[%s2089 + $0x20c] sm:$0xf]
    %v2178 = vld [vmem:[%s2089 + $0x210] sm:$0xff]
    %v2179 = vld [vmem:[%s2089 + $0x218] sm:$0xf]
    %v2180 = vld [vmem:[%s2089 + $0x21c] sm:$0xff]
    %v2181 = vld [vmem:[%s2089 + $0x224] sm:$0xf]
    %v2182 = vld [vmem:[%s2089 + $0x228] sm:$0xff]
    %v2183 = vld [vmem:[%s2089 + $0x230] sm:$0xf]
    %v2184 = vld [vmem:[%s2089 + $0x234] sm:$0xff]
    %v2185 = vld [vmem:[%s2089 + $0x23c] sm:$0xf]
    %vm2186 = vsmask.f32 7424
    %v2188 = vshrl.u32 %v1975, 16
    %v2190 = vshll.u32 %v1975, 16
    %v2192 = vrot.slane %v2190, 1
    %v2193 = vor.u32 %v2188, %v2192
    %v2195 = vshll.u32 %v1978, 16
    %v2197 = vrot.slane %v2195, 1
    %v2198 = vsel %vm2186, %v2193, %v2197
    %v2200 = vshrl.u32 %v1976, 16
    %v2202 = vshll.u32 %v1976, 16
    %v2204 = vrot.slane %v2202, 1
    %v2205 = vor.u32 %v2200, %v2204
    %v2207 = vshll.u32 %v1979, 16
    %v2209 = vrot.slane %v2207, 1
    %v2210 = vsel %vm2186, %v2205, %v2209
    %v2212 = vshrl.u32 %v1977, 16
    %v2214 = vshll.u32 %v1977, 16
    %v2216 = vrot.slane %v2214, 1
    %v2217 = vor.u32 %v2212, %v2216
    %v2219 = vshll.u32 %v1980, 16
    %v2221 = vrot.slane %v2219, 1
    %v2222 = vsel %vm2186, %v2217, %v2221
    %v2223 = vshrl.u32 %v1978, 16
    %v2225 = vor.u32 %v2223, %v2197
    %v2226 = vshrl.u32 %v1979, 16
    %v2228 = vor.u32 %v2226, %v2209
    %v2229 = vshrl.u32 %v1980, 16
    %v2231 = vor.u32 %v2229, %v2221
    %v2334 = vunpack.c.l.b16 %v2090
    %v2335 = vunpack.c.h.b16 %v2090
    %v2336 = vunpack.c.l.b16 %v2091
    %v2337 = vunpack.c.l.b16 %v2092
    %v2338 = vunpack.c.h.b16 %v2092
    %v2339 = vunpack.c.l.b16 %v2093
    %v2340 = vunpack.c.l.b16 %v2094
    %v2341 = vunpack.c.h.b16 %v2094
    %v2342 = vunpack.c.l.b16 %v2095
    %v2343 = vunpack.c.l.b16 %v2096
    %v2344 = vunpack.c.h.b16 %v2096
    %v2345 = vunpack.c.l.b16 %v2097
    %v2346 = vunpack.c.l.b16 %v2098
    %v2347 = vunpack.c.h.b16 %v2098
    %v2348 = vunpack.c.l.b16 %v2099
    %v2349 = vunpack.c.l.b16 %v2100
    %v2350 = vunpack.c.h.b16 %v2100
    %v2351 = vunpack.c.l.b16 %v2101
    %v2352 = vunpack.c.l.b16 %v2102
    %v2353 = vunpack.c.h.b16 %v2102
    %v2354 = vunpack.c.l.b16 %v2103
    %v2355 = vunpack.c.l.b16 %v2104
    %v2356 = vunpack.c.h.b16 %v2104
    %v2357 = vunpack.c.l.b16 %v2105
    %v2358 = vunpack.c.l.b16 %v2106
    %v2359 = vunpack.c.h.b16 %v2106
    %v2360 = vunpack.c.l.b16 %v2107
    %v2361 = vunpack.c.l.b16 %v2108
    %v2362 = vunpack.c.h.b16 %v2108
    %v2363 = vunpack.c.l.b16 %v2109
    %v2364 = vunpack.c.l.b16 %v2110
    %v2365 = vunpack.c.h.b16 %v2110
    %v2366 = vunpack.c.l.b16 %v2111
    %v2367 = vunpack.c.l.b16 %v2112
    %v2368 = vunpack.c.h.b16 %v2112
    %v2369 = vunpack.c.l.b16 %v2113
    %v2370 = vunpack.c.l.b16 %v2114
    %v2371 = vunpack.c.h.b16 %v2114
    %v2372 = vunpack.c.l.b16 %v2115
    %v2373 = vunpack.c.l.b16 %v2116
    %v2374 = vunpack.c.h.b16 %v2116
    %v2375 = vunpack.c.l.b16 %v2117
    %v2376 = vunpack.c.l.b16 %v2118
    %v2377 = vunpack.c.h.b16 %v2118
    %v2378 = vunpack.c.l.b16 %v2119
    %v2379 = vunpack.c.l.b16 %v2120
    %v2380 = vunpack.c.h.b16 %v2120
    %v2381 = vunpack.c.l.b16 %v2121
    %v2382 = vunpack.c.l.b16 %v2122
    %v2383 = vunpack.c.h.b16 %v2122
    %v2384 = vunpack.c.l.b16 %v2123
    %v2385 = vunpack.c.l.b16 %v2124
    %v2386 = vunpack.c.h.b16 %v2124
    %v2387 = vunpack.c.l.b16 %v2125
    %v2388 = vunpack.c.l.b16 %v2126
    %v2389 = vunpack.c.h.b16 %v2126
    %v2390 = vunpack.c.l.b16 %v2127
    %v2391 = vunpack.c.l.b16 %v2128
    %v2392 = vunpack.c.h.b16 %v2128
    %v2393 = vunpack.c.l.b16 %v2129
    %v2394 = vunpack.c.l.b16 %v2130
    %v2395 = vunpack.c.h.b16 %v2130
    %v2396 = vunpack.c.l.b16 %v2131
    %v2397 = vunpack.c.l.b16 %v2132
    %v2398 = vunpack.c.h.b16 %v2132
    %v2399 = vunpack.c.l.b16 %v2133
    %v2400 = vunpack.c.l.b16 %v2134
    %v2401 = vunpack.c.h.b16 %v2134
    %v2402 = vunpack.c.l.b16 %v2135
    %v2403 = vunpack.c.l.b16 %v2136
    %v2404 = vunpack.c.h.b16 %v2136
    %v2405 = vunpack.c.l.b16 %v2137
    %v2406 = vunpack.c.l.b16 %v2138
    %v2407 = vunpack.c.h.b16 %v2138
    %v2408 = vunpack.c.l.b16 %v2139
    %v2409 = vunpack.c.l.b16 %v2140
    %v2410 = vunpack.c.h.b16 %v2140
    %v2411 = vunpack.c.l.b16 %v2141
    %v2412 = vunpack.c.l.b16 %v2142
    %v2413 = vunpack.c.h.b16 %v2142
    %v2414 = vunpack.c.l.b16 %v2143
    %v2415 = vunpack.c.l.b16 %v2144
    %v2416 = vunpack.c.h.b16 %v2144
    %v2417 = vunpack.c.l.b16 %v2145
    %v2418 = vunpack.c.l.b16 %v2146
    %v2419 = vunpack.c.h.b16 %v2146
    %v2420 = vunpack.c.l.b16 %v2147
    %v2421 = vunpack.c.l.b16 %v2148
    %v2422 = vunpack.c.h.b16 %v2148
    %v2423 = vunpack.c.l.b16 %v2149
    %v2424 = vunpack.c.l.b16 %v2150
    %v2425 = vunpack.c.h.b16 %v2150
    %v2426 = vunpack.c.l.b16 %v2151
    %v2427 = vunpack.c.l.b16 %v2152
    %v2428 = vunpack.c.h.b16 %v2152
    %v2429 = vunpack.c.l.b16 %v2153
    %v2430 = vunpack.c.l.b16 %v2154
    %v2431 = vunpack.c.h.b16 %v2154
    %v2432 = vunpack.c.l.b16 %v2155
    %v2433 = vunpack.c.l.b16 %v2156
    %v2434 = vunpack.c.h.b16 %v2156
    %v2435 = vunpack.c.l.b16 %v2157
    %v2436 = vunpack.c.l.b16 %v2158
    %v2437 = vunpack.c.h.b16 %v2158
    %v2438 = vunpack.c.l.b16 %v2159
    %v2439 = vunpack.c.l.b16 %v2160
    %v2440 = vunpack.c.h.b16 %v2160
    %v2441 = vunpack.c.l.b16 %v2161
    %v2442 = vunpack.c.l.b16 %v2162
    %v2443 = vunpack.c.h.b16 %v2162
    %v2444 = vunpack.c.l.b16 %v2163
    %v2445 = vunpack.c.l.b16 %v2164
    %v2446 = vunpack.c.h.b16 %v2164
    %v2447 = vunpack.c.l.b16 %v2165
    %v2448 = vunpack.c.l.b16 %v2166
    %v2449 = vunpack.c.h.b16 %v2166
    %v2450 = vunpack.c.l.b16 %v2167
    %v2451 = vunpack.c.l.b16 %v2168
    %v2452 = vunpack.c.h.b16 %v2168
    %v2453 = vunpack.c.l.b16 %v2169
    %v2454 = vunpack.c.l.b16 %v2170
    %v2455 = vunpack.c.h.b16 %v2170
    %v2456 = vunpack.c.l.b16 %v2171
    %v2457 = vunpack.c.l.b16 %v2172
    %v2458 = vunpack.c.h.b16 %v2172
    %v2459 = vunpack.c.l.b16 %v2173
    %v2460 = vunpack.c.l.b16 %v2174
    %v2461 = vunpack.c.h.b16 %v2174
    %v2462 = vunpack.c.l.b16 %v2175
    %v2463 = vunpack.c.l.b16 %v2176
    %v2464 = vunpack.c.h.b16 %v2176
    %v2465 = vunpack.c.l.b16 %v2177
    %v2466 = vunpack.c.l.b16 %v2178
    %v2467 = vunpack.c.h.b16 %v2178
    %v2468 = vunpack.c.l.b16 %v2179
    %v2469 = vunpack.c.l.b16 %v2180
    %v2470 = vunpack.c.h.b16 %v2180
    %v2471 = vunpack.c.l.b16 %v2181
    %v2472 = vunpack.c.l.b16 %v2182
    %v2473 = vunpack.c.h.b16 %v2182
    %v2474 = vunpack.c.l.b16 %v2183
    %v2475 = vunpack.c.l.b16 %v2184
    %v2476 = vunpack.c.h.b16 %v2184
    %v2477 = vunpack.c.l.b16 %v2185
    %v2478 = vpack.c.b16 %v2337, %v2334
    %v2479 = vpack.c.b16 %v2338, %v2335
    %v2480 = vpack.c.b16 %v2339, %v2336
    %v2481 = vpack.c.b16 %v2343, %v2340
    %v2482 = vpack.c.b16 %v2344, %v2341
    %v2483 = vpack.c.b16 %v2345, %v2342
    %v2484 = vpack.c.b16 %v2349, %v2346
    %v2485 = vpack.c.b16 %v2350, %v2347
    %v2486 = vpack.c.b16 %v2351, %v2348
    %v2487 = vpack.c.b16 %v2355, %v2352
    %v2488 = vpack.c.b16 %v2356, %v2353
    %v2489 = vpack.c.b16 %v2357, %v2354
    %v2490 = vpack.c.b16 %v2361, %v2358
    %v2491 = vpack.c.b16 %v2362, %v2359
    %v2492 = vpack.c.b16 %v2363, %v2360
    %v2493 = vpack.c.b16 %v2367, %v2364
    %v2494 = vpack.c.b16 %v2368, %v2365
    %v2495 = vpack.c.b16 %v2369, %v2366
    %v2496 = vpack.c.b16 %v2373, %v2370
    %v2497 = vpack.c.b16 %v2374, %v2371
    %v2498 = vpack.c.b16 %v2375, %v2372
    %v2499 = vpack.c.b16 %v2379, %v2376
    %v2500 = vpack.c.b16 %v2380, %v2377
    %v2501 = vpack.c.b16 %v2381, %v2378
    %v2502 = vpack.c.b16 %v2385, %v2382
    %v2503 = vpack.c.b16 %v2386, %v2383
    %v2504 = vpack.c.b16 %v2387, %v2384
    %v2505 = vpack.c.b16 %v2391, %v2388
    %v2506 = vpack.c.b16 %v2392, %v2389
    %v2507 = vpack.c.b16 %v2393, %v2390
    %v2508 = vpack.c.b16 %v2397, %v2394
    %v2509 = vpack.c.b16 %v2398, %v2395
    %v2510 = vpack.c.b16 %v2399, %v2396
    %v2511 = vpack.c.b16 %v2403, %v2400
    %v2512 = vpack.c.b16 %v2404, %v2401
    %v2513 = vpack.c.b16 %v2405, %v2402
    %v2514 = vpack.c.b16 %v2409, %v2406
    %v2515 = vpack.c.b16 %v2410, %v2407
    %v2516 = vpack.c.b16 %v2411, %v2408
    %v2517 = vpack.c.b16 %v2415, %v2412
    %v2518 = vpack.c.b16 %v2416, %v2413
    %v2519 = vpack.c.b16 %v2417, %v2414
    %v2520 = vpack.c.b16 %v2421, %v2418
    %v2521 = vpack.c.b16 %v2422, %v2419
    %v2522 = vpack.c.b16 %v2423, %v2420
    %v2523 = vpack.c.b16 %v2427, %v2424
    %v2524 = vpack.c.b16 %v2428, %v2425
    %v2525 = vpack.c.b16 %v2429, %v2426
    %v2526 = vpack.c.b16 %v2433, %v2430
    %v2527 = vpack.c.b16 %v2434, %v2431
    %v2528 = vpack.c.b16 %v2435, %v2432
    %v2529 = vpack.c.b16 %v2439, %v2436
    %v2530 = vpack.c.b16 %v2440, %v2437
    %v2531 = vpack.c.b16 %v2441, %v2438
    %v2532 = vpack.c.b16 %v2445, %v2442
    %v2533 = vpack.c.b16 %v2446, %v2443
    %v2534 = vpack.c.b16 %v2447, %v2444
    %v2535 = vpack.c.b16 %v2451, %v2448
    %v2536 = vpack.c.b16 %v2452, %v2449
    %v2537 = vpack.c.b16 %v2453, %v2450
    %v2538 = vpack.c.b16 %v2457, %v2454
    %v2539 = vpack.c.b16 %v2458, %v2455
    %v2540 = vpack.c.b16 %v2459, %v2456
    %v2541 = vpack.c.b16 %v2463, %v2460
    %v2542 = vpack.c.b16 %v2464, %v2461
    %v2543 = vpack.c.b16 %v2465, %v2462
    %v2544 = vpack.c.b16 %v2469, %v2466
    %v2545 = vpack.c.b16 %v2470, %v2467
    %v2546 = vpack.c.b16 %v2471, %v2468
    %v2547 = vpack.c.b16 %v2475, %v2472
    %v2548 = vpack.c.b16 %v2476, %v2473
    %v2549 = vpack.c.b16 %v2477, %v2474
    %2622 = vmatprep.subr.bf16.mxu0 %v2479
    %2623 = vmatpush1.bf16.msra.mxu0 %v2478
    %2624 = vmatprep.subr.bf16.mxu0 %v2482
    %2625 = vmatpush1.bf16.msra.mxu0 %v2481
    %2626 = vmatprep.subr.bf16.mxu0 %v2485
    %2627 = vmatpush1.bf16.msra.mxu0 %v2484
    %2628 = vmatprep.subr.bf16.mxu0 %v2488
    %2629 = vmatpush1.bf16.msra.mxu0 %v2487
    %2630 = vmatprep.subr.bf16.mxu0 %v2491
    %2631 = vmatpush1.bf16.msra.mxu0 %v2490
    %2632 = vmatprep.subr.bf16.mxu0 %v2494
    %2633 = vmatpush1.bf16.msra.mxu0 %v2493
    %2634 = vmatprep.subr.bf16.mxu0 %v2497
    %2635 = vmatpush1.bf16.msra.mxu0 %v2496
    %2636 = vmatprep.subr.bf16.mxu0 %v2500
    %2637 = vmatpush1.bf16.msra.mxu0 %v2499
    %2638 = vmatprep.subr.bf16.mxu0 %v2503
    %2639 = vmatpush1.bf16.msra.mxu0 %v2502
    %2640 = vmatprep.subr.bf16.mxu0 %v2506
    %2641 = vmatpush1.bf16.msra.mxu0 %v2505
    %2642 = vmatprep.subr.bf16.mxu0 %v2509
    %2643 = vmatpush1.bf16.msra.mxu0 %v2508
    %2644 = vmatprep.subr.bf16.mxu0 %v2512
    %2645 = vmatpush1.bf16.msra.mxu0 %v2511
    %2646 = vmatprep.subr.bf16.mxu0 %v2515
    %2647 = vmatpush1.bf16.msra.mxu0 %v2514
    %2648 = vmatprep.subr.bf16.mxu0 %v2518
    %2649 = vmatpush1.bf16.msra.mxu0 %v2517
    %2650 = vmatprep.subr.bf16.mxu0 %v2521
    %2651 = vmatpush1.bf16.msra.mxu0 %v2520
    %2652 = vmatprep.subr.bf16.mxu0 %v2524
    %2653 = vmatpush1.bf16.msra.mxu0 %v2523
    %2654 = vmatprep.mubr.bf16.mxu0 %v2210
    %2655 = vmatmul.mubr.bf16.gmra.mrb[0].mxu0 %v2198
    %v2656 = vpop.f32.mrb[0].mxu0
    %v2657 = vadd.f32 0.0, %v2656
    %v2658 = vpop.f32.mrb[0].mxu0
    %v2659 = vadd.f32 0.0, %v2658
    %v2660 = vpop.f32.mrb[0].mxu0
    %v2661 = vadd.f32 0.0, %v2660
    %v2662 = vpop.f32.mrb[0].mxu0
    %v2663 = vadd.f32 0.0, %v2662
    %2664 = vmatprep.mubr.bf16.mxu0 %v2228
    %2665 = vmatmul.mubr.bf16.gmra.mrb[0].mxu0 %v2225
    %v2666 = vpop.f32.mrb[0].mxu0
    %v2667 = vadd.f32 0.0, %v2666
    %v2668 = vpop.f32.mrb[0].mxu0
    %v2669 = vadd.f32 0.0, %v2668
    %v2670 = vpop.f32.mrb[0].mxu0
    %v2671 = vpop.f32.mrb[0].mxu0
    %2672 = vdwg.mxu0
    %2673 = vmatprep.subr.bf16.mxu0 %v2527
    %2674 = vmatpush1.bf16.msra.mxu0 %v2526
    %2675 = vmatprep.subr.bf16.mxu0 %v2530
    %2676 = vmatpush1.bf16.msra.mxu0 %v2529
    %2677 = vmatprep.subr.bf16.mxu0 %v2533
    %2678 = vmatpush1.bf16.msra.mxu0 %v2532
    %2679 = vmatprep.subr.bf16.mxu0 %v2536
    %2680 = vmatpush1.bf16.msra.mxu0 %v2535
    %2681 = vmatprep.subr.bf16.mxu0 %v2539
    %2682 = vmatpush1.bf16.msra.mxu0 %v2538
    %2683 = vmatprep.subr.bf16.mxu0 %v2542
    %2684 = vmatpush1.bf16.msra.mxu0 %v2541
    %2685 = vmatprep.subr.bf16.mxu0 %v2545
    %2686 = vmatpush1.bf16.msra.mxu0 %v2544
    %2687 = vmatprep.subr.bf16.mxu0 %v2548
    %2688 = vmatpush1.bf16.msra.mxu0 %v2547
    %2689 = vmatprep.subr.bf16.mxu0 0
    %2690 = vmatpush1.bf16.msra.mxu0 0
    %2691 = vmatprep.subr.bf16.mxu0 0
    %2692 = vmatpush1.bf16.msra.mxu0 0
    %2693 = vmatprep.subr.bf16.mxu0 0
    %2694 = vmatpush1.bf16.msra.mxu0 0
    %2695 = vmatprep.subr.bf16.mxu0 0
    %2696 = vmatpush1.bf16.msra.mxu0 0
    %2697 = vmatprep.subr.bf16.mxu0 0
    %2698 = vmatpush1.bf16.msra.mxu0 0
    %2699 = vmatprep.subr.bf16.mxu0 0
    %2700 = vmatpush1.bf16.msra.mxu0 0
    %2701 = vmatprep.subr.bf16.mxu0 0
    %2702 = vmatpush1.bf16.msra.mxu0 0
    %2703 = vmatprep.subr.bf16.mxu0 0
    %2704 = vmatpush1.bf16.msra.mxu0 0
    %2705 = vmatprep.mubr.bf16.mxu0 0
    %2706 = vmatmul.mubr.bf16.gmra.mrb[0].mxu0 %v2222
    %v2707 = vpop.f32.mrb[0].mxu0
    %v2708 = vadd.f32 %v2657, %v2707
    %v2709 = vpop.f32.mrb[0].mxu0
    %v2710 = vadd.f32 %v2659, %v2709
    %v2711 = vpop.f32.mrb[0].mxu0
    %v2712 = vadd.f32 %v2661, %v2711
    %v2713 = vpop.f32.mrb[0].mxu0
    %v2714 = vadd.f32 %v2663, %v2713
    %2715 = vmatprep.mubr.bf16.mxu0 0
    %2716 = vmatmul.mubr.bf16.gmra.mrb[0].mxu0 %v2231
    %v2717 = vpop.f32.mrb[0].mxu0
    %v2718 = vadd.f32 %v2667, %v2717
    %v2719 = vpop.f32.mrb[0].mxu0
    %v2720 = vadd.f32 %v2669, %v2719
    %v2721 = vpop.f32.mrb[0].mxu0
    %v2722 = vpop.f32.mrb[0].mxu0
    %2723 = vdwg.mxu0
    %2724 = vmatprep.subr.bf16.mxu0 0
    %2725 = vmatpush1.bf16.msra.mxu0 %v2480
    %2726 = vmatprep.subr.bf16.mxu0 0
    %2727 = vmatpush1.bf16.msra.mxu0 %v2483
    %2728 = vmatprep.subr.bf16.mxu0 0
    %2729 = vmatpush1.bf16.msra.mxu0 %v2486
    %2730 = vmatprep.subr.bf16.mxu0 0
    %2731 = vmatpush1.bf16.msra.mxu0 %v2489
    %2732 = vmatprep.subr.bf16.mxu0 0
    %2733 = vmatpush1.bf16.msra.mxu0 %v2492
    %2734 = vmatprep.subr.bf16.mxu0 0
    %2735 = vmatpush1.bf16.msra.mxu0 %v2495
    %2736 = vmatprep.subr.bf16.mxu0 0
    %2737 = vmatpush1.bf16.msra.mxu0 %v2498
    %2738 = vmatprep.subr.bf16.mxu0 0
    %2739 = vmatpush1.bf16.msra.mxu0 %v2501
    %2740 = vmatprep.subr.bf16.mxu0 0
    %2741 = vmatpush1.bf16.msra.mxu0 %v2504
    %2742 = vmatprep.subr.bf16.mxu0 0
    %2743 = vmatpush1.bf16.msra.mxu0 %v2507
    %2744 = vmatprep.subr.bf16.mxu0 0
    %2745 = vmatpush1.bf16.msra.mxu0 %v2510
    %2746 = vmatprep.subr.bf16.mxu0 0
    %2747 = vmatpush1.bf16.msra.mxu0 %v2513
    %2748 = vmatprep.subr.bf16.mxu0 0
    %2749 = vmatpush1.bf16.msra.mxu0 %v2516
    %2750 = vmatprep.subr.bf16.mxu0 0
    %2751 = vmatpush1.bf16.msra.mxu0 %v2519
    %2752 = vmatprep.subr.bf16.mxu0 0
    %2753 = vmatpush1.bf16.msra.mxu0 %v2522
    %2754 = vmatprep.subr.bf16.mxu0 0
    %2755 = vmatpush1.bf16.msra.mxu0 %v2525
    %2756 = vmatprep.mubr.bf16.mxu0 %v2210
    %2757 = vmatmul.mubr.bf16.gmra.mrb[0].mxu0 %v2198
    %v2758 = vpop.f32.mrb[0].mxu0
    %v2759 = vadd.f32 0.0, %v2758
    %v2760 = vpop.f32.mrb[0].mxu0
    %v2761 = vpop.f32.mrb[0].mxu0
    %v2762 = vadd.f32 0.0, %v2761
    %v2763 = vpop.f32.mrb[0].mxu0
    %2764 = vmatprep.mubr.bf16.mxu0 %v2228
    %2765 = vmatmul.mubr.bf16.gmra.mrb[0].mxu0 %v2225
    %v2766 = vpop.f32.mrb[0].mxu0
    %v2767 = vadd.f32 0.0, %v2766
    %v2768 = vpop.f32.mrb[0].mxu0
    %v2769 = vpop.f32.mrb[0].mxu0
    %v2770 = vpop.f32.mrb[0].mxu0
    %2771 = vdwg.mxu0
    %2772 = vmatprep.subr.bf16.mxu0 0
    %2773 = vmatpush1.bf16.msra.mxu0 %v2528
    %2774 = vmatprep.subr.bf16.mxu0 0
    %2775 = vmatpush1.bf16.msra.mxu0 %v2531
    %2776 = vmatprep.subr.bf16.mxu0 0
    %2777 = vmatpush1.bf16.msra.mxu0 %v2534
    %2778 = vmatprep.subr.bf16.mxu0 0
    %2779 = vmatpush1.bf16.msra.mxu0 %v2537
    %2780 = vmatprep.subr.bf16.mxu0 0
    %2781 = vmatpush1.bf16.msra.mxu0 %v2540
    %2782 = vmatprep.subr.bf16.mxu0 0
    %2783 = vmatpush1.bf16.msra.mxu0 %v2543
    %2784 = vmatprep.subr.bf16.mxu0 0
    %2785 = vmatpush1.bf16.msra.mxu0 %v2546
    %2786 = vmatprep.subr.bf16.mxu0 0
    %2787 = vmatpush1.bf16.msra.mxu0 %v2549
    %2788 = vmatprep.subr.bf16.mxu0 0
    %2789 = vmatpush1.bf16.msra.mxu0 0
    %2790 = vmatprep.subr.bf16.mxu0 0
    %2791 = vmatpush1.bf16.msra.mxu0 0
    %2792 = vmatprep.subr.bf16.mxu0 0
    %2793 = vmatpush1.bf16.msra.mxu0 0
    %2794 = vmatprep.subr.bf16.mxu0 0
    %2795 = vmatpush1.bf16.msra.mxu0 0
    %2796 = vmatprep.subr.bf16.mxu0 0
    %2797 = vmatpush1.bf16.msra.mxu0 0
    %2798 = vmatprep.subr.bf16.mxu0 0
    %2799 = vmatpush1.bf16.msra.mxu0 0
    %2800 = vmatprep.subr.bf16.mxu0 0
    %2801 = vmatpush1.bf16.msra.mxu0 0
    %2802 = vmatprep.subr.bf16.mxu0 0
    %2803 = vmatpush1.bf16.msra.mxu0 0
    %2804 = vmatprep.mubr.bf16.mxu0 0
    %2805 = vmatmul.mubr.bf16.gmra.mrb[0].mxu0 %v2222
    %v2806 = vpop.f32.mrb[0].mxu0
    %v2807 = vadd.f32 %v2759, %v2806
    %v2808 = vpop.f32.mrb[0].mxu0
    %v2809 = vpop.f32.mrb[0].mxu0
    %v2810 = vadd.f32 %v2762, %v2809
    %v2811 = vpop.f32.mrb[0].mxu0
    %2812 = vmatprep.mubr.bf16.mxu0 0
    %2813 = vmatmul.mubr.bf16.gmra.mrb[0].mxu0 %v2231
    %v2814 = vpop.f32.mrb[0].mxu0
    %v2815 = vadd.f32 %v2767, %v2814
    %v2816 = vpop.f32.mrb[0].mxu0
    %v2817 = vpop.f32.mrb[0].mxu0
    %v2818 = vpop.f32.mrb[0].mxu0
    %2819 = vdwg.mxu0
    %v2916 = vunpack.c.l.b16 %v1993
    %v2917 = vunpack.c.h.b16 %v1993
    %v2918 = vunpack.c.l.b16 %v1994
    %v2919 = vunpack.c.l.b16 %v1995
    %v2920 = vunpack.c.h.b16 %v1995
    %v2921 = vunpack.c.l.b16 %v1996
    %v2922 = vunpack.c.l.b16 %v1997
    %v2923 = vunpack.c.h.b16 %v1997
    %v2924 = vunpack.c.l.b16 %v1998
    %v2925 = vunpack.c.l.b16 %v1999
    %v2926 = vunpack.c.h.b16 %v1999
    %v2927 = vunpack.c.l.b16 %v2000
    %v2928 = vunpack.c.l.b16 %v2001
    %v2929 = vunpack.c.h.b16 %v2001
    %v2930 = vunpack.c.l.b16 %v2002
    %v2931 = vunpack.c.l.b16 %v2003
    %v2932 = vunpack.c.h.b16 %v2003
    %v2933 = vunpack.c.l.b16 %v2004
    %v2934 = vunpack.c.l.b16 %v2005
    %v2935 = vunpack.c.h.b16 %v2005
    %v2936 = vunpack.c.l.b16 %v2006
    %v2937 = vunpack.c.l.b16 %v2007
    %v2938 = vunpack.c.h.b16 %v2007
    %v2939 = vunpack.c.l.b16 %v2008
    %v2940 = vunpack.c.l.b16 %v2009
    %v2941 = vunpack.c.h.b16 %v2009
    %v2942 = vunpack.c.l.b16 %v2010
    %v2943 = vunpack.c.l.b16 %v2011
    %v2944 = vunpack.c.h.b16 %v2011
    %v2945 = vunpack.c.l.b16 %v2012
    %v2946 = vunpack.c.l.b16 %v2013
    %v2947 = vunpack.c.h.b16 %v2013
    %v2948 = vunpack.c.l.b16 %v2014
    %v2949 = vunpack.c.l.b16 %v2015
    %v2950 = vunpack.c.h.b16 %v2015
    %v2951 = vunpack.c.l.b16 %v2016
    %v2952 = vunpack.c.l.b16 %v2017
    %v2953 = vunpack.c.h.b16 %v2017
    %v2954 = vunpack.c.l.b16 %v2018
    %v2955 = vunpack.c.l.b16 %v2019
    %v2956 = vunpack.c.h.b16 %v2019
    %v2957 = vunpack.c.l.b16 %v2020
    %v2958 = vunpack.c.l.b16 %v2021
    %v2959 = vunpack.c.h.b16 %v2021
    %v2960 = vunpack.c.l.b16 %v2022
    %v2961 = vunpack.c.l.b16 %v2023
    %v2962 = vunpack.c.h.b16 %v2023
    %v2963 = vunpack.c.l.b16 %v2024
    %v2964 = vunpack.c.l.b16 %v2025
    %v2965 = vunpack.c.h.b16 %v2025
    %v2966 = vunpack.c.l.b16 %v2026
    %v2967 = vunpack.c.l.b16 %v2027
    %v2968 = vunpack.c.h.b16 %v2027
    %v2969 = vunpack.c.l.b16 %v2028
    %v2970 = vunpack.c.l.b16 %v2029
    %v2971 = vunpack.c.h.b16 %v2029
    %v2972 = vunpack.c.l.b16 %v2030
    %v2973 = vunpack.c.l.b16 %v2031
    %v2974 = vunpack.c.h.b16 %v2031
    %v2975 = vunpack.c.l.b16 %v2032
    %v2976 = vunpack.c.l.b16 %v2033
    %v2977 = vunpack.c.h.b16 %v2033
    %v2978 = vunpack.c.l.b16 %v2034
    %v2979 = vunpack.c.l.b16 %v2035
    %v2980 = vunpack.c.h.b16 %v2035
    %v2981 = vunpack.c.l.b16 %v2036
    %v2982 = vunpack.c.l.b16 %v2037
    %v2983 = vunpack.c.h.b16 %v2037
    %v2984 = vunpack.c.l.b16 %v2038
    %v2985 = vunpack.c.l.b16 %v2039
    %v2986 = vunpack.c.h.b16 %v2039
    %v2987 = vunpack.c.l.b16 %v2040
    %v2988 = vunpack.c.l.b16 %v2041
    %v2989 = vunpack.c.h.b16 %v2041
    %v2990 = vunpack.c.l.b16 %v2042
    %v2991 = vunpack.c.l.b16 %v2043
    %v2992 = vunpack.c.h.b16 %v2043
    %v2993 = vunpack.c.l.b16 %v2044
    %v2994 = vunpack.c.l.b16 %v2045
    %v2995 = vunpack.c.h.b16 %v2045
    %v2996 = vunpack.c.l.b16 %v2046
    %v2997 = vunpack.c.l.b16 %v2047
    %v2998 = vunpack.c.h.b16 %v2047
    %v2999 = vunpack.c.l.b16 %v2048
    %v3000 = vunpack.c.l.b16 %v2049
    %v3001 = vunpack.c.h.b16 %v2049
    %v3002 = vunpack.c.l.b16 %v2050
    %v3003 = vunpack.c.l.b16 %v2051
    %v3004 = vunpack.c.h.b16 %v2051
    %v3005 = vunpack.c.l.b16 %v2052
    %v3006 = vunpack.c.l.b16 %v2053
    %v3007 = vunpack.c.h.b16 %v2053
    %v3008 = vunpack.c.l.b16 %v2054
    %v3009 = vunpack.c.l.b16 %v2055
    %v3010 = vunpack.c.h.b16 %v2055
    %v3011 = vunpack.c.l.b16 %v2056
    %v3012 = vunpack.c.l.b16 %v2057
    %v3013 = vunpack.c.h.b16 %v2057
    %v3014 = vunpack.c.l.b16 %v2058
    %v3015 = vunpack.c.l.b16 %v2059
    %v3016 = vunpack.c.h.b16 %v2059
    %v3017 = vunpack.c.l.b16 %v2060
    %v3018 = vunpack.c.l.b16 %v2061
    %v3019 = vunpack.c.h.b16 %v2061
    %v3020 = vunpack.c.l.b16 %v2062
    %v3021 = vunpack.c.l.b16 %v2063
    %v3022 = vunpack.c.h.b16 %v2063
    %v3023 = vunpack.c.l.b16 %v2064
    %v3024 = vunpack.c.l.b16 %v2065
    %v3025 = vunpack.c.h.b16 %v2065
    %v3026 = vunpack.c.l.b16 %v2066
    %v3027 = vunpack.c.l.b16 %v2067
    %v3028 = vunpack.c.h.b16 %v2067
    %v3029 = vunpack.c.l.b16 %v2068
    %v3030 = vunpack.c.l.b16 %v2069
    %v3031 = vunpack.c.h.b16 %v2069
    %v3032 = vunpack.c.l.b16 %v2070
    %v3033 = vunpack.c.l.b16 %v2071
    %v3034 = vunpack.c.h.b16 %v2071
    %v3035 = vunpack.c.l.b16 %v2072
    %v3036 = vunpack.c.l.b16 %v2073
    %v3037 = vunpack.c.h.b16 %v2073
    %v3038 = vunpack.c.l.b16 %v2074
    %v3039 = vunpack.c.l.b16 %v2075
    %v3040 = vunpack.c.h.b16 %v2075
    %v3041 = vunpack.c.l.b16 %v2076
    %v3042 = vunpack.c.l.b16 %v2077
    %v3043 = vunpack.c.h.b16 %v2077
    %v3044 = vunpack.c.l.b16 %v2078
    %v3045 = vunpack.c.l.b16 %v2079
    %v3046 = vunpack.c.h.b16 %v2079
    %v3047 = vunpack.c.l.b16 %v2080
    %v3048 = vunpack.c.l.b16 %v2081
    %v3049 = vunpack.c.h.b16 %v2081
    %v3050 = vunpack.c.l.b16 %v2082
    %v3051 = vunpack.c.l.b16 %v2083
    %v3052 = vunpack.c.h.b16 %v2083
    %v3053 = vunpack.c.l.b16 %v2084
    %v3054 = vunpack.c.l.b16 %v2085
    %v3055 = vunpack.c.h.b16 %v2085
    %v3056 = vunpack.c.l.b16 %v2086
    %v3057 = vunpack.c.l.b16 %v2087
    %v3058 = vunpack.c.h.b16 %v2087
    %v3059 = vunpack.c.l.b16 %v2088
    %v3060 = vpack.c.b16 %v2919, %v2916
    %v3061 = vpack.c.b16 %v2920, %v2917
    %v3062 = vpack.c.b16 %v2921, %v2918
    %v3063 = vpack.c.b16 %v2925, %v2922
    %v3064 = vpack.c.b16 %v2926, %v2923
    %v3065 = vpack.c.b16 %v2927, %v2924
    %v3066 = vpack.c.b16 %v2931, %v2928
    %v3067 = vpack.c.b16 %v2932, %v2929
    %v3068 = vpack.c.b16 %v2933, %v2930
    %v3069 = vpack.c.b16 %v2937, %v2934
    %v3070 = vpack.c.b16 %v2938, %v2935
    %v3071 = vpack.c.b16 %v2939, %v2936
    %v3072 = vpack.c.b16 %v2943, %v2940
    %v3073 = vpack.c.b16 %v2944, %v2941
    %v3074 = vpack.c.b16 %v2945, %v2942
    %v3075 = vpack.c.b16 %v2949, %v2946
    %v3076 = vpack.c.b16 %v2950, %v2947
    %v3077 = vpack.c.b16 %v2951, %v2948
    %v3078 = vpack.c.b16 %v2955, %v2952
    %v3079 = vpack.c.b16 %v2956, %v2953
    %v3080 = vpack.c.b16 %v2957, %v2954
    %v3081 = vpack.c.b16 %v2961, %v2958
    %v3082 = vpack.c.b16 %v2962, %v2959
    %v3083 = vpack.c.b16 %v2963, %v2960
    %v3084 = vpack.c.b16 %v2967, %v2964
    %v3085 = vpack.c.b16 %v2968, %v2965
    %v3086 = vpack.c.b16 %v2969, %v2966
    %v3087 = vpack.c.b16 %v2973, %v2970
    %v3088 = vpack.c.b16 %v2974, %v2971
    %v3089 = vpack.c.b16 %v2975, %v2972
    %v3090 = vpack.c.b16 %v2979, %v2976
    %v3091 = vpack.c.b16 %v2980, %v2977
    %v3092 = vpack.c.b16 %v2981, %v2978
    %v3093 = vpack.c.b16 %v2985, %v2982
    %v3094 = vpack.c.b16 %v2986, %v2983
    %v3095 = vpack.c.b16 %v2987, %v2984
    %v3096 = vpack.c.b16 %v2991, %v2988
    %v3097 = vpack.c.b16 %v2992, %v2989
    %v3098 = vpack.c.b16 %v2993, %v2990
    %v3099 = vpack.c.b16 %v2997, %v2994
    %v3100 = vpack.c.b16 %v2998, %v2995
    %v3101 = vpack.c.b16 %v2999, %v2996
    %v3102 = vpack.c.b16 %v3003, %v3000
    %v3103 = vpack.c.b16 %v3004, %v3001
    %v3104 = vpack.c.b16 %v3005, %v3002
    %v3105 = vpack.c.b16 %v3009, %v3006
    %v3106 = vpack.c.b16 %v3010, %v3007
    %v3107 = vpack.c.b16 %v3011, %v3008
    %v3108 = vpack.c.b16 %v3015, %v3012
    %v3109 = vpack.c.b16 %v3016, %v3013
    %v3110 = vpack.c.b16 %v3017, %v3014
    %v3111 = vpack.c.b16 %v3021, %v3018
    %v3112 = vpack.c.b16 %v3022, %v3019
    %v3113 = vpack.c.b16 %v3023, %v3020
    %v3114 = vpack.c.b16 %v3027, %v3024
    %v3115 = vpack.c.b16 %v3028, %v3025
    %v3116 = vpack.c.b16 %v3029, %v3026
    %v3117 = vpack.c.b16 %v3033, %v3030
    %v3118 = vpack.c.b16 %v3034, %v3031
    %v3119 = vpack.c.b16 %v3035, %v3032
    %v3120 = vpack.c.b16 %v3039, %v3036
    %v3121 = vpack.c.b16 %v3040, %v3037
    %v3122 = vpack.c.b16 %v3041, %v3038
    %v3123 = vpack.c.b16 %v3045, %v3042
    %v3124 = vpack.c.b16 %v3046, %v3043
    %v3125 = vpack.c.b16 %v3047, %v3044
    %v3126 = vpack.c.b16 %v3051, %v3048
    %v3127 = vpack.c.b16 %v3052, %v3049
    %v3128 = vpack.c.b16 %v3053, %v3050
    %v3129 = vpack.c.b16 %v3057, %v3054
    %v3130 = vpack.c.b16 %v3058, %v3055
    %v3131 = vpack.c.b16 %v3059, %v3056
    %3204 = vmatprep.subr.bf16.mxu0 %v3061
    %3205 = vmatpush1.bf16.msra.mxu0 %v3060
    %3206 = vmatprep.subr.bf16.mxu0 %v3064
    %3207 = vmatpush1.bf16.msra.mxu0 %v3063
    %3208 = vmatprep.subr.bf16.mxu0 %v3067
    %3209 = vmatpush1.bf16.msra.mxu0 %v3066
    %3210 = vmatprep.subr.bf16.mxu0 %v3070
    %3211 = vmatpush1.bf16.msra.mxu0 %v3069
    %3212 = vmatprep.subr.bf16.mxu0 %v3073
    %3213 = vmatpush1.bf16.msra.mxu0 %v3072
    %3214 = vmatprep.subr.bf16.mxu0 %v3076
    %3215 = vmatpush1.bf16.msra.mxu0 %v3075
    %3216 = vmatprep.subr.bf16.mxu0 %v3079
    %3217 = vmatpush1.bf16.msra.mxu0 %v3078
    %3218 = vmatprep.subr.bf16.mxu0 %v3082
    %3219 = vmatpush1.bf16.msra.mxu0 %v3081
    %3220 = vmatprep.subr.bf16.mxu0 %v3085
    %3221 = vmatpush1.bf16.msra.mxu0 %v3084
    %3222 = vmatprep.subr.bf16.mxu0 %v3088
    %3223 = vmatpush1.bf16.msra.mxu0 %v3087
    %3224 = vmatprep.subr.bf16.mxu0 %v3091
    %3225 = vmatpush1.bf16.msra.mxu0 %v3090
    %3226 = vmatprep.subr.bf16.mxu0 %v3094
    %3227 = vmatpush1.bf16.msra.mxu0 %v3093
    %3228 = vmatprep.subr.bf16.mxu0 %v3097
    %3229 = vmatpush1.bf16.msra.mxu0 %v3096
    %3230 = vmatprep.subr.bf16.mxu0 %v3100
    %3231 = vmatpush1.bf16.msra.mxu0 %v3099
    %3232 = vmatprep.subr.bf16.mxu0 %v3103
    %3233 = vmatpush1.bf16.msra.mxu0 %v3102
    %3234 = vmatprep.subr.bf16.mxu0 %v3106
    %3235 = vmatpush1.bf16.msra.mxu0 %v3105
    %3236 = vmatprep.mubr.bf16.mxu0 %v1964
    %3237 = vmatmul.mubr.bf16.gmra.mrb[0].mxu0 %v1963
    %v3238 = vpop.f32.mrb[0].mxu0
    %v3239 = vadd.f32 %v2708, %v3238
    %v3240 = vpop.f32.mrb[0].mxu0
    %v3241 = vadd.f32 %v2710, %v3240
    %v3242 = vpop.f32.mrb[0].mxu0
    %v3243 = vadd.f32 %v2712, %v3242
    %v3244 = vpop.f32.mrb[0].mxu0
    %v3245 = vadd.f32 %v2714, %v3244
    %3246 = vmatprep.mubr.bf16.mxu0 %v1967
    %3247 = vmatmul.mubr.bf16.gmra.mrb[0].mxu0 %v1966
    %v3248 = vpop.f32.mrb[0].mxu0
    %v3249 = vadd.f32 %v2718, %v3248
    %v3250 = vpop.f32.mrb[0].mxu0
    %v3251 = vadd.f32 %v2720, %v3250
    %v3252 = vpop.f32.mrb[0].mxu0
    %v3253 = vpop.f32.mrb[0].mxu0
    %3254 = vdwg.mxu0
    %3255 = vmatprep.subr.bf16.mxu0 %v3109
    %3256 = vmatpush1.bf16.msra.mxu0 %v3108
    %3257 = vmatprep.subr.bf16.mxu0 %v3112
    %3258 = vmatpush1.bf16.msra.mxu0 %v3111
    %3259 = vmatprep.subr.bf16.mxu0 %v3115
    %3260 = vmatpush1.bf16.msra.mxu0 %v3114
    %3261 = vmatprep.subr.bf16.mxu0 %v3118
    %3262 = vmatpush1.bf16.msra.mxu0 %v3117
    %3263 = vmatprep.subr.bf16.mxu0 %v3121
    %3264 = vmatpush1.bf16.msra.mxu0 %v3120
    %3265 = vmatprep.subr.bf16.mxu0 %v3124
    %3266 = vmatpush1.bf16.msra.mxu0 %v3123
    %3267 = vmatprep.subr.bf16.mxu0 %v3127
    %3268 = vmatpush1.bf16.msra.mxu0 %v3126
    %3269 = vmatprep.subr.bf16.mxu0 %v3130
    %3270 = vmatpush1.bf16.msra.mxu0 %v3129
    %3271 = vmatprep.subr.bf16.mxu0 0
    %3272 = vmatpush1.bf16.msra.mxu0 0
    %3273 = vmatprep.subr.bf16.mxu0 0
    %3274 = vmatpush1.bf16.msra.mxu0 0
    %3275 = vmatprep.subr.bf16.mxu0 0
    %3276 = vmatpush1.bf16.msra.mxu0 0
    %3277 = vmatprep.subr.bf16.mxu0 0
    %3278 = vmatpush1.bf16.msra.mxu0 0
    %3279 = vmatprep.subr.bf16.mxu0 0
    %3280 = vmatpush1.bf16.msra.mxu0 0
    %3281 = vmatprep.subr.bf16.mxu0 0
    %3282 = vmatpush1.bf16.msra.mxu0 0
    %3283 = vmatprep.subr.bf16.mxu0 0
    %3284 = vmatpush1.bf16.msra.mxu0 0
    %3285 = vmatprep.subr.bf16.mxu0 0
    %3286 = vmatpush1.bf16.msra.mxu0 0
    %3287 = vmatprep.mubr.bf16.mxu0 0
    %3288 = vmatmul.mubr.bf16.gmra.mrb[0].mxu0 %v1965
    %v3289 = vpop.f32.mrb[0].mxu0
    %v3290 = vadd.f32 %v3239, %v3289
    %v3291 = vpop.f32.mrb[0].mxu0
    %v3292 = vadd.f32 %v3241, %v3291
    %v3293 = vpop.f32.mrb[0].mxu0
    %v3294 = vadd.f32 %v3243, %v3293
    %v3295 = vpop.f32.mrb[0].mxu0
    %v3296 = vadd.f32 %v3245, %v3295
    %3297 = vmatprep.mubr.bf16.mxu0 0
    %3298 = vmatmul.mubr.bf16.gmra.mrb[0].mxu0 %v1968
    %v3299 = vpop.f32.mrb[0].mxu0
    %v3300 = vadd.f32 %v3249, %v3299
    %v3301 = vpop.f32.mrb[0].mxu0
    %v3302 = vadd.f32 %v3251, %v3301
    %v3303 = vpop.f32.mrb[0].mxu0
    %v3304 = vpop.f32.mrb[0].mxu0
    %3305 = vdwg.mxu0
    %3306 = vmatprep.subr.bf16.mxu0 0
    %3307 = vmatpush1.bf16.msra.mxu0 %v3062
    %3308 = vmatprep.subr.bf16.mxu0 0
    %3309 = vmatpush1.bf16.msra.mxu0 %v3065
    %3310 = vmatprep.subr.bf16.mxu0 0
    %3311 = vmatpush1.bf16.msra.mxu0 %v3068
    %3312 = vmatprep.subr.bf16.mxu0 0
    %3313 = vmatpush1.bf16.msra.mxu0 %v3071
    %3314 = vmatprep.subr.bf16.mxu0 0
    %3315 = vmatpush1.bf16.msra.mxu0 %v3074
    %3316 = vmatprep.subr.bf16.mxu0 0
    %3317 = vmatpush1.bf16.msra.mxu0 %v3077
    %3318 = vmatprep.subr.bf16.mxu0 0
    %3319 = vmatpush1.bf16.msra.mxu0 %v3080
    %3320 = vmatprep.subr.bf16.mxu0 0
    %3321 = vmatpush1.bf16.msra.mxu0 %v3083
    %3322 = vmatprep.subr.bf16.mxu0 0
    %3323 = vmatpush1.bf16.msra.mxu0 %v3086
    %3324 = vmatprep.subr.bf16.mxu0 0
    %3325 = vmatpush1.bf16.msra.mxu0 %v3089
    %3326 = vmatprep.subr.bf16.mxu0 0
    %3327 = vmatpush1.bf16.msra.mxu0 %v3092
    %3328 = vmatprep.subr.bf16.mxu0 0
    %3329 = vmatpush1.bf16.msra.mxu0 %v3095
    %3330 = vmatprep.subr.bf16.mxu0 0
    %3331 = vmatpush1.bf16.msra.mxu0 %v3098
    %3332 = vmatprep.subr.bf16.mxu0 0
    %3333 = vmatpush1.bf16.msra.mxu0 %v3101
    %3334 = vmatprep.subr.bf16.mxu0 0
    %3335 = vmatpush1.bf16.msra.mxu0 %v3104
    %3336 = vmatprep.subr.bf16.mxu0 0
    %3337 = vmatpush1.bf16.msra.mxu0 %v3107
    %3338 = vmatprep.mubr.bf16.mxu0 %v1964
    %3339 = vmatmul.mubr.bf16.gmra.mrb[0].mxu0 %v1963
    %v3340 = vpop.f32.mrb[0].mxu0
    %v3341 = vadd.f32 %v2807, %v3340
    %v3342 = vpop.f32.mrb[0].mxu0
    %v3343 = vpop.f32.mrb[0].mxu0
    %v3344 = vadd.f32 %v2810, %v3343
    %v3345 = vpop.f32.mrb[0].mxu0
    %3346 = vmatprep.mubr.bf16.mxu0 %v1967
    %3347 = vmatmul.mubr.bf16.gmra.mrb[0].mxu0 %v1966
    %v3348 = vpop.f32.mrb[0].mxu0
    %v3349 = vadd.f32 %v2815, %v3348
    %v3350 = vpop.f32.mrb[0].mxu0
    %v3351 = vpop.f32.mrb[0].mxu0
    %v3352 = vpop.f32.mrb[0].mxu0
    %3353 = vdwg.mxu0
    %3354 = vmatprep.subr.bf16.mxu0 0
    %3355 = vmatpush1.bf16.msra.mxu0 %v3110
    %3356 = vmatprep.subr.bf16.mxu0 0
    %3357 = vmatpush1.bf16.msra.mxu0 %v3113
    %3358 = vmatprep.subr.bf16.mxu0 0
    %3359 = vmatpush1.bf16.msra.mxu0 %v3116
    %3360 = vmatprep.subr.bf16.mxu0 0
    %3361 = vmatpush1.bf16.msra.mxu0 %v3119
    %3362 = vmatprep.subr.bf16.mxu0 0
    %3363 = vmatpush1.bf16.msra.mxu0 %v3122
    %3364 = vmatprep.subr.bf16.mxu0 0
    %3365 = vmatpush1.bf16.msra.mxu0 %v3125
    %3366 = vmatprep.subr.bf16.mxu0 0
    %3367 = vmatpush1.bf16.msra.mxu0 %v3128
    %3368 = vmatprep.subr.bf16.mxu0 0
    %3369 = vmatpush1.bf16.msra.mxu0 %v3131
    %3370 = vmatprep.subr.bf16.mxu0 0
    %3371 = vmatpush1.bf16.msra.mxu0 0
    %3372 = vmatprep.subr.bf16.mxu0 0
    %3373 = vmatpush1.bf16.msra.mxu0 0
    %3374 = vmatprep.subr.bf16.mxu0 0
    %3375 = vmatpush1.bf16.msra.mxu0 0
    %3376 = vmatprep.subr.bf16.mxu0 0
    %3377 = vmatpush1.bf16.msra.mxu0 0
    %3378 = vmatprep.subr.bf16.mxu0 0
    %3379 = vmatpush1.bf16.msra.mxu0 0
    %3380 = vmatprep.subr.bf16.mxu0 0
    %3381 = vmatpush1.bf16.msra.mxu0 0
    %3382 = vmatprep.subr.bf16.mxu0 0
    %3383 = vmatpush1.bf16.msra.mxu0 0
    %3384 = vmatprep.subr.bf16.mxu0 0
    %3385 = vmatpush1.bf16.msra.mxu0 0
    %3386 = vmatprep.mubr.bf16.mxu0 0
    %3387 = vmatmul.mubr.bf16.gmra.mrb[0].mxu0 %v1965
    %v3388 = vpop.f32.mrb[0].mxu0
    %v3389 = vadd.f32 %v3341, %v3388
    %v3390 = vpop.f32.mrb[0].mxu0
    %v3391 = vpop.f32.mrb[0].mxu0
    %v3392 = vadd.f32 %v3344, %v3391
    %v3393 = vpop.f32.mrb[0].mxu0
    %3394 = vmatprep.mubr.bf16.mxu0 0
    %3395 = vmatmul.mubr.bf16.gmra.mrb[0].mxu0 %v1968
    %v3396 = vpop.f32.mrb[0].mxu0
    %v3397 = vadd.f32 %v3349, %v3396
    %v3398 = vpop.f32.mrb[0].mxu0
    %v3399 = vpop.f32.mrb[0].mxu0
    %v3400 = vpop.f32.mrb[0].mxu0
    %3401 = vdwg.mxu0
    %s3402 = scalar_lea.vmem %s2, 1152
    %v3403 = vld [vmem:[%s3402] sm:$0xff]
    %v3404 = vld [vmem:[%s3402 + $0x8] sm:$0xf]
    %v3405 = vld [vmem:[%s3402 + $0xc] sm:$0xff]
    %v3406 = vld [vmem:[%s3402 + $0x14] sm:$0xf]
    %v3407 = vld [vmem:[%s3402 + $0x18] sm:$0xff]
    %v3408 = vld [vmem:[%s3402 + $0x20] sm:$0xf]
    %v3409 = vld [vmem:[%s3402 + $0x24] sm:$0xff]
    %v3410 = vld [vmem:[%s3402 + $0x2c] sm:$0xf]
    %v3411 = vld [vmem:[%s3402 + $0x30] sm:$0xff]
    %v3412 = vld [vmem:[%s3402 + $0x38] sm:$0xf]
    %v3413 = vld [vmem:[%s3402 + $0x3c] sm:$0xff]
    %v3414 = vld [vmem:[%s3402 + $0x44] sm:$0xf]
    %v3415 = vld [vmem:[%s3402 + $0x48] sm:$0xff]
    %v3416 = vld [vmem:[%s3402 + $0x50] sm:$0xf]
    %v3417 = vld [vmem:[%s3402 + $0x54] sm:$0xff]
    %v3418 = vld [vmem:[%s3402 + $0x5c] sm:$0xf]
    %v3419 = vld [vmem:[%s3402 + $0x60] sm:$0xff]
    %v3420 = vld [vmem:[%s3402 + $0x68] sm:$0xf]
    %v3421 = vld [vmem:[%s3402 + $0x6c] sm:$0xff]
    %v3422 = vld [vmem:[%s3402 + $0x74] sm:$0xf]
    %v3423 = vld [vmem:[%s3402 + $0x78] sm:$0xff]
    %v3424 = vld [vmem:[%s3402 + $0x80] sm:$0xf]
    %v3425 = vld [vmem:[%s3402 + $0x84] sm:$0xff]
    %v3426 = vld [vmem:[%s3402 + $0x8c] sm:$0xf]
    %v3427 = vld [vmem:[%s3402 + $0x90] sm:$0xff]
    %v3428 = vld [vmem:[%s3402 + $0x98] sm:$0xf]
    %v3429 = vld [vmem:[%s3402 + $0x9c] sm:$0xff]
    %v3430 = vld [vmem:[%s3402 + $0xa4] sm:$0xf]
    %v3431 = vld [vmem:[%s3402 + $0xa8] sm:$0xff]
    %v3432 = vld [vmem:[%s3402 + $0xb0] sm:$0xf]
    %v3433 = vld [vmem:[%s3402 + $0xb4] sm:$0xff]
    %v3434 = vld [vmem:[%s3402 + $0xbc] sm:$0xf]
    %v3435 = vld [vmem:[%s3402 + $0xc0] sm:$0xff]
    %v3436 = vld [vmem:[%s3402 + $0xc8] sm:$0xf]
    %v3437 = vld [vmem:[%s3402 + $0xcc] sm:$0xff]
    %v3438 = vld [vmem:[%s3402 + $0xd4] sm:$0xf]
    %v3439 = vld [vmem:[%s3402 + $0xd8] sm:$0xff]
    %v3440 = vld [vmem:[%s3402 + $0xe0] sm:$0xf]
    %v3441 = vld [vmem:[%s3402 + $0xe4] sm:$0xff]
    %v3442 = vld [vmem:[%s3402 + $0xec] sm:$0xf]
    %v3443 = vld [vmem:[%s3402 + $0xf0] sm:$0xff]
    %v3444 = vld [vmem:[%s3402 + $0xf8] sm:$0xf]
    %v3445 = vld [vmem:[%s3402 + $0xfc] sm:$0xff]
    %v3446 = vld [vmem:[%s3402 + $0x104] sm:$0xf]
    %v3447 = vld [vmem:[%s3402 + $0x108] sm:$0xff]
    %v3448 = vld [vmem:[%s3402 + $0x110] sm:$0xf]
    %v3449 = vld [vmem:[%s3402 + $0x114] sm:$0xff]
    %v3450 = vld [vmem:[%s3402 + $0x11c] sm:$0xf]
    %v3451 = vld [vmem:[%s3402 + $0x120] sm:$0xff]
    %v3452 = vld [vmem:[%s3402 + $0x128] sm:$0xf]
    %v3453 = vld [vmem:[%s3402 + $0x12c] sm:$0xff]
    %v3454 = vld [vmem:[%s3402 + $0x134] sm:$0xf]
    %v3455 = vld [vmem:[%s3402 + $0x138] sm:$0xff]
    %v3456 = vld [vmem:[%s3402 + $0x140] sm:$0xf]
    %v3457 = vld [vmem:[%s3402 + $0x144] sm:$0xff]
    %v3458 = vld [vmem:[%s3402 + $0x14c] sm:$0xf]
    %v3459 = vld [vmem:[%s3402 + $0x150] sm:$0xff]
    %v3460 = vld [vmem:[%s3402 + $0x158] sm:$0xf]
    %v3461 = vld [vmem:[%s3402 + $0x15c] sm:$0xff]
    %v3462 = vld [vmem:[%s3402 + $0x164] sm:$0xf]
    %v3463 = vld [vmem:[%s3402 + $0x168] sm:$0xff]
    %v3464 = vld [vmem:[%s3402 + $0x170] sm:$0xf]
    %v3465 = vld [vmem:[%s3402 + $0x174] sm:$0xff]
    %v3466 = vld [vmem:[%s3402 + $0x17c] sm:$0xf]
    %v3467 = vld [vmem:[%s3402 + $0x180] sm:$0xff]
    %v3468 = vld [vmem:[%s3402 + $0x188] sm:$0xf]
    %v3469 = vld [vmem:[%s3402 + $0x18c] sm:$0xff]
    %v3470 = vld [vmem:[%s3402 + $0x194] sm:$0xf]
    %v3471 = vld [vmem:[%s3402 + $0x198] sm:$0xff]
    %v3472 = vld [vmem:[%s3402 + $0x1a0] sm:$0xf]
    %v3473 = vld [vmem:[%s3402 + $0x1a4] sm:$0xff]
    %v3474 = vld [vmem:[%s3402 + $0x1ac] sm:$0xf]
    %v3475 = vld [vmem:[%s3402 + $0x1b0] sm:$0xff]
    %v3476 = vld [vmem:[%s3402 + $0x1b8] sm:$0xf]
    %v3477 = vld [vmem:[%s3402 + $0x1bc] sm:$0xff]
    %v3478 = vld [vmem:[%s3402 + $0x1c4] sm:$0xf]
    %v3479 = vld [vmem:[%s3402 + $0x1c8] sm:$0xff]
    %v3480 = vld [vmem:[%s3402 + $0x1d0] sm:$0xf]
    %v3481 = vld [vmem:[%s3402 + $0x1d4] sm:$0xff]
    %v3482 = vld [vmem:[%s3402 + $0x1dc] sm:$0xf]
    %v3483 = vld [vmem:[%s3402 + $0x1e0] sm:$0xff]
    %v3484 = vld [vmem:[%s3402 + $0x1e8] sm:$0xf]
    %v3485 = vld [vmem:[%s3402 + $0x1ec] sm:$0xff]
    %v3486 = vld [vmem:[%s3402 + $0x1f4] sm:$0xf]
    %v3487 = vld [vmem:[%s3402 + $0x1f8] sm:$0xff]
    %v3488 = vld [vmem:[%s3402 + $0x200] sm:$0xf]
    %v3489 = vld [vmem:[%s3402 + $0x204] sm:$0xff]
    %v3490 = vld [vmem:[%s3402 + $0x20c] sm:$0xf]
    %v3491 = vld [vmem:[%s3402 + $0x210] sm:$0xff]
    %v3492 = vld [vmem:[%s3402 + $0x218] sm:$0xf]
    %v3493 = vld [vmem:[%s3402 + $0x21c] sm:$0xff]
    %v3494 = vld [vmem:[%s3402 + $0x224] sm:$0xf]
    %v3495 = vld [vmem:[%s3402 + $0x228] sm:$0xff]
    %v3496 = vld [vmem:[%s3402 + $0x230] sm:$0xf]
    %v3497 = vld [vmem:[%s3402 + $0x234] sm:$0xff]
    %v3498 = vld [vmem:[%s3402 + $0x23c] sm:$0xf]
    %vm3505 = vcmask 1046528
    %v3506 = vrot.slane %v1987, 1
    %v3507 = vrot.slane %v1990, 1
    %v3508 = vsel %vm3505, %v3506, %v3507
    %v3509 = vrot.slane %v1988, 1
    %v3510 = vrot.slane %v1991, 1
    %v3511 = vsel %vm3505, %v3509, %v3510
    %v3512 = vrot.slane %v1989, 1
    %v3513 = vrot.slane %v1992, 1
    %v3514 = vsel %vm3505, %v3512, %v3513
    %v3617 = vunpack.c.l.b16 %v3403
    %v3618 = vunpack.c.h.b16 %v3403
    %v3619 = vunpack.c.l.b16 %v3404
    %v3620 = vunpack.c.l.b16 %v3405
    %v3621 = vunpack.c.h.b16 %v3405
    %v3622 = vunpack.c.l.b16 %v3406
    %v3623 = vunpack.c.l.b16 %v3407
    %v3624 = vunpack.c.h.b16 %v3407
    %v3625 = vunpack.c.l.b16 %v3408
    %v3626 = vunpack.c.l.b16 %v3409
    %v3627 = vunpack.c.h.b16 %v3409
    %v3628 = vunpack.c.l.b16 %v3410
    %v3629 = vunpack.c.l.b16 %v3411
    %v3630 = vunpack.c.h.b16 %v3411
    %v3631 = vunpack.c.l.b16 %v3412
    %v3632 = vunpack.c.l.b16 %v3413
    %v3633 = vunpack.c.h.b16 %v3413
    %v3634 = vunpack.c.l.b16 %v3414
    %v3635 = vunpack.c.l.b16 %v3415
    %v3636 = vunpack.c.h.b16 %v3415
    %v3637 = vunpack.c.l.b16 %v3416
    %v3638 = vunpack.c.l.b16 %v3417
    %v3639 = vunpack.c.h.b16 %v3417
    %v3640 = vunpack.c.l.b16 %v3418
    %v3641 = vunpack.c.l.b16 %v3419
    %v3642 = vunpack.c.h.b16 %v3419
    %v3643 = vunpack.c.l.b16 %v3420
    %v3644 = vunpack.c.l.b16 %v3421
    %v3645 = vunpack.c.h.b16 %v3421
    %v3646 = vunpack.c.l.b16 %v3422
    %v3647 = vunpack.c.l.b16 %v3423
    %v3648 = vunpack.c.h.b16 %v3423
    %v3649 = vunpack.c.l.b16 %v3424
    %v3650 = vunpack.c.l.b16 %v3425
    %v3651 = vunpack.c.h.b16 %v3425
    %v3652 = vunpack.c.l.b16 %v3426
    %v3653 = vunpack.c.l.b16 %v3427
    %v3654 = vunpack.c.h.b16 %v3427
    %v3655 = vunpack.c.l.b16 %v3428
    %v3656 = vunpack.c.l.b16 %v3429
    %v3657 = vunpack.c.h.b16 %v3429
    %v3658 = vunpack.c.l.b16 %v3430
    %v3659 = vunpack.c.l.b16 %v3431
    %v3660 = vunpack.c.h.b16 %v3431
    %v3661 = vunpack.c.l.b16 %v3432
    %v3662 = vunpack.c.l.b16 %v3433
    %v3663 = vunpack.c.h.b16 %v3433
    %v3664 = vunpack.c.l.b16 %v3434
    %v3665 = vunpack.c.l.b16 %v3435
    %v3666 = vunpack.c.h.b16 %v3435
    %v3667 = vunpack.c.l.b16 %v3436
    %v3668 = vunpack.c.l.b16 %v3437
    %v3669 = vunpack.c.h.b16 %v3437
    %v3670 = vunpack.c.l.b16 %v3438
    %v3671 = vunpack.c.l.b16 %v3439
    %v3672 = vunpack.c.h.b16 %v3439
    %v3673 = vunpack.c.l.b16 %v3440
    %v3674 = vunpack.c.l.b16 %v3441
    %v3675 = vunpack.c.h.b16 %v3441
    %v3676 = vunpack.c.l.b16 %v3442
    %v3677 = vunpack.c.l.b16 %v3443
    %v3678 = vunpack.c.h.b16 %v3443
    %v3679 = vunpack.c.l.b16 %v3444
    %v3680 = vunpack.c.l.b16 %v3445
    %v3681 = vunpack.c.h.b16 %v3445
    %v3682 = vunpack.c.l.b16 %v3446
    %v3683 = vunpack.c.l.b16 %v3447
    %v3684 = vunpack.c.h.b16 %v3447
    %v3685 = vunpack.c.l.b16 %v3448
    %v3686 = vunpack.c.l.b16 %v3449
    %v3687 = vunpack.c.h.b16 %v3449
    %v3688 = vunpack.c.l.b16 %v3450
    %v3689 = vunpack.c.l.b16 %v3451
    %v3690 = vunpack.c.h.b16 %v3451
    %v3691 = vunpack.c.l.b16 %v3452
    %v3692 = vunpack.c.l.b16 %v3453
    %v3693 = vunpack.c.h.b16 %v3453
    %v3694 = vunpack.c.l.b16 %v3454
    %v3695 = vunpack.c.l.b16 %v3455
    %v3696 = vunpack.c.h.b16 %v3455
    %v3697 = vunpack.c.l.b16 %v3456
    %v3698 = vunpack.c.l.b16 %v3457
    %v3699 = vunpack.c.h.b16 %v3457
    %v3700 = vunpack.c.l.b16 %v3458
    %v3701 = vunpack.c.l.b16 %v3459
    %v3702 = vunpack.c.h.b16 %v3459
    %v3703 = vunpack.c.l.b16 %v3460
    %v3704 = vunpack.c.l.b16 %v3461
    %v3705 = vunpack.c.h.b16 %v3461
    %v3706 = vunpack.c.l.b16 %v3462
    %v3707 = vunpack.c.l.b16 %v3463
    %v3708 = vunpack.c.h.b16 %v3463
    %v3709 = vunpack.c.l.b16 %v3464
    %v3710 = vunpack.c.l.b16 %v3465
    %v3711 = vunpack.c.h.b16 %v3465
    %v3712 = vunpack.c.l.b16 %v3466
    %v3713 = vunpack.c.l.b16 %v3467
    %v3714 = vunpack.c.h.b16 %v3467
    %v3715 = vunpack.c.l.b16 %v3468
    %v3716 = vunpack.c.l.b16 %v3469
    %v3717 = vunpack.c.h.b16 %v3469
    %v3718 = vunpack.c.l.b16 %v3470
    %v3719 = vunpack.c.l.b16 %v3471
    %v3720 = vunpack.c.h.b16 %v3471
    %v3721 = vunpack.c.l.b16 %v3472
    %v3722 = vunpack.c.l.b16 %v3473
    %v3723 = vunpack.c.h.b16 %v3473
    %v3724 = vunpack.c.l.b16 %v3474
    %v3725 = vunpack.c.l.b16 %v3475
    %v3726 = vunpack.c.h.b16 %v3475
    %v3727 = vunpack.c.l.b16 %v3476
    %v3728 = vunpack.c.l.b16 %v3477
    %v3729 = vunpack.c.h.b16 %v3477
    %v3730 = vunpack.c.l.b16 %v3478
    %v3731 = vunpack.c.l.b16 %v3479
    %v3732 = vunpack.c.h.b16 %v3479
    %v3733 = vunpack.c.l.b16 %v3480
    %v3734 = vunpack.c.l.b16 %v3481
    %v3735 = vunpack.c.h.b16 %v3481
    %v3736 = vunpack.c.l.b16 %v3482
    %v3737 = vunpack.c.l.b16 %v3483
    %v3738 = vunpack.c.h.b16 %v3483
    %v3739 = vunpack.c.l.b16 %v3484
    %v3740 = vunpack.c.l.b16 %v3485
    %v3741 = vunpack.c.h.b16 %v3485
    %v3742 = vunpack.c.l.b16 %v3486
    %v3743 = vunpack.c.l.b16 %v3487
    %v3744 = vunpack.c.h.b16 %v3487
    %v3745 = vunpack.c.l.b16 %v3488
    %v3746 = vunpack.c.l.b16 %v3489
    %v3747 = vunpack.c.h.b16 %v3489
    %v3748 = vunpack.c.l.b16 %v3490
    %v3749 = vunpack.c.l.b16 %v3491
    %v3750 = vunpack.c.h.b16 %v3491
    %v3751 = vunpack.c.l.b16 %v3492
    %v3752 = vunpack.c.l.b16 %v3493
    %v3753 = vunpack.c.h.b16 %v3493
    %v3754 = vunpack.c.l.b16 %v3494
    %v3755 = vunpack.c.l.b16 %v3495
    %v3756 = vunpack.c.h.b16 %v3495
    %v3757 = vunpack.c.l.b16 %v3496
    %v3758 = vunpack.c.l.b16 %v3497
    %v3759 = vunpack.c.h.b16 %v3497
    %v3760 = vunpack.c.l.b16 %v3498
    %v3761 = vpack.c.b16 %v3620, %v3617
    %v3762 = vpack.c.b16 %v3621, %v3618
    %v3763 = vpack.c.b16 %v3622, %v3619
    %v3764 = vpack.c.b16 %v3626, %v3623
    %v3765 = vpack.c.b16 %v3627, %v3624
    %v3766 = vpack.c.b16 %v3628, %v3625
    %v3767 = vpack.c.b16 %v3632, %v3629
    %v3768 = vpack.c.b16 %v3633, %v3630
    %v3769 = vpack.c.b16 %v3634, %v3631
    %v3770 = vpack.c.b16 %v3638, %v3635
    %v3771 = vpack.c.b16 %v3639, %v3636
    %v3772 = vpack.c.b16 %v3640, %v3637
    %v3773 = vpack.c.b16 %v3644, %v3641
    %v3774 = vpack.c.b16 %v3645, %v3642
    %v3775 = vpack.c.b16 %v3646, %v3643
    %v3776 = vpack.c.b16 %v3650, %v3647
    %v3777 = vpack.c.b16 %v3651, %v3648
    %v3778 = vpack.c.b16 %v3652, %v3649
    %v3779 = vpack.c.b16 %v3656, %v3653
    %v3780 = vpack.c.b16 %v3657, %v3654
    %v3781 = vpack.c.b16 %v3658, %v3655
    %v3782 = vpack.c.b16 %v3662, %v3659
    %v3783 = vpack.c.b16 %v3663, %v3660
    %v3784 = vpack.c.b16 %v3664, %v3661
    %v3785 = vpack.c.b16 %v3668, %v3665
    %v3786 = vpack.c.b16 %v3669, %v3666
    %v3787 = vpack.c.b16 %v3670, %v3667
    %v3788 = vpack.c.b16 %v3674, %v3671
    %v3789 = vpack.c.b16 %v3675, %v3672
    %v3790 = vpack.c.b16 %v3676, %v3673
    %v3791 = vpack.c.b16 %v3680, %v3677
    %v3792 = vpack.c.b16 %v3681, %v3678
    %v3793 = vpack.c.b16 %v3682, %v3679
    %v3794 = vpack.c.b16 %v3686, %v3683
    %v3795 = vpack.c.b16 %v3687, %v3684
    %v3796 = vpack.c.b16 %v3688, %v3685
    %v3797 = vpack.c.b16 %v3692, %v3689
    %v3798 = vpack.c.b16 %v3693, %v3690
    %v3799 = vpack.c.b16 %v3694, %v3691
    %v3800 = vpack.c.b16 %v3698, %v3695
    %v3801 = vpack.c.b16 %v3699, %v3696
    %v3802 = vpack.c.b16 %v3700, %v3697
    %v3803 = vpack.c.b16 %v3704, %v3701
    %v3804 = vpack.c.b16 %v3705, %v3702
    %v3805 = vpack.c.b16 %v3706, %v3703
    %v3806 = vpack.c.b16 %v3710, %v3707
    %v3807 = vpack.c.b16 %v3711, %v3708
    %v3808 = vpack.c.b16 %v3712, %v3709
    %v3809 = vpack.c.b16 %v3716, %v3713
    %v3810 = vpack.c.b16 %v3717, %v3714
    %v3811 = vpack.c.b16 %v3718, %v3715
    %v3812 = vpack.c.b16 %v3722, %v3719
    %v3813 = vpack.c.b16 %v3723, %v3720
    %v3814 = vpack.c.b16 %v3724, %v3721
    %v3815 = vpack.c.b16 %v3728, %v3725
    %v3816 = vpack.c.b16 %v3729, %v3726
    %v3817 = vpack.c.b16 %v3730, %v3727
    %v3818 = vpack.c.b16 %v3734, %v3731
    %v3819 = vpack.c.b16 %v3735, %v3732
    %v3820 = vpack.c.b16 %v3736, %v3733
    %v3821 = vpack.c.b16 %v3740, %v3737
    %v3822 = vpack.c.b16 %v3741, %v3738
    %v3823 = vpack.c.b16 %v3742, %v3739
    %v3824 = vpack.c.b16 %v3746, %v3743
    %v3825 = vpack.c.b16 %v3747, %v3744
    %v3826 = vpack.c.b16 %v3748, %v3745
    %v3827 = vpack.c.b16 %v3752, %v3749
    %v3828 = vpack.c.b16 %v3753, %v3750
    %v3829 = vpack.c.b16 %v3754, %v3751
    %v3830 = vpack.c.b16 %v3758, %v3755
    %v3831 = vpack.c.b16 %v3759, %v3756
    %v3832 = vpack.c.b16 %v3760, %v3757
    %3905 = vmatprep.subr.bf16.mxu0 %v3762
    %3906 = vmatpush1.bf16.msra.mxu0 %v3761
    %3907 = vmatprep.subr.bf16.mxu0 %v3765
    %3908 = vmatpush1.bf16.msra.mxu0 %v3764
    %3909 = vmatprep.subr.bf16.mxu0 %v3768
    %3910 = vmatpush1.bf16.msra.mxu0 %v3767
    %3911 = vmatprep.subr.bf16.mxu0 %v3771
    %3912 = vmatpush1.bf16.msra.mxu0 %v3770
    %3913 = vmatprep.subr.bf16.mxu0 %v3774
    %3914 = vmatpush1.bf16.msra.mxu0 %v3773
    %3915 = vmatprep.subr.bf16.mxu0 %v3777
    %3916 = vmatpush1.bf16.msra.mxu0 %v3776
    %3917 = vmatprep.subr.bf16.mxu0 %v3780
    %3918 = vmatpush1.bf16.msra.mxu0 %v3779
    %3919 = vmatprep.subr.bf16.mxu0 %v3783
    %3920 = vmatpush1.bf16.msra.mxu0 %v3782
    %3921 = vmatprep.subr.bf16.mxu0 %v3786
    %3922 = vmatpush1.bf16.msra.mxu0 %v3785
    %3923 = vmatprep.subr.bf16.mxu0 %v3789
    %3924 = vmatpush1.bf16.msra.mxu0 %v3788
    %3925 = vmatprep.subr.bf16.mxu0 %v3792
    %3926 = vmatpush1.bf16.msra.mxu0 %v3791
    %3927 = vmatprep.subr.bf16.mxu0 %v3795
    %3928 = vmatpush1.bf16.msra.mxu0 %v3794
    %3929 = vmatprep.subr.bf16.mxu0 %v3798
    %3930 = vmatpush1.bf16.msra.mxu0 %v3797
    %3931 = vmatprep.subr.bf16.mxu0 %v3801
    %3932 = vmatpush1.bf16.msra.mxu0 %v3800
    %3933 = vmatprep.subr.bf16.mxu0 %v3804
    %3934 = vmatpush1.bf16.msra.mxu0 %v3803
    %3935 = vmatprep.subr.bf16.mxu0 %v3807
    %3936 = vmatpush1.bf16.msra.mxu0 %v3806
    %3937 = vmatprep.mubr.bf16.mxu0 %v3511
    %3938 = vmatmul.mubr.bf16.gmra.mrb[0].mxu0 %v3508
    %v3939 = vpop.f32.mrb[0].mxu0
    %v3940 = vadd.f32 0.0, %v3939
    %v3941 = vpop.f32.mrb[0].mxu0
    %v3942 = vadd.f32 0.0, %v3941
    %v3943 = vpop.f32.mrb[0].mxu0
    %v3944 = vadd.f32 0.0, %v3943
    %v3945 = vpop.f32.mrb[0].mxu0
    %v3946 = vadd.f32 0.0, %v3945
    %3947 = vmatprep.mubr.bf16.mxu0 %v3510
    %3948 = vmatmul.mubr.bf16.gmra.mrb[0].mxu0 %v3507
    %v3949 = vpop.f32.mrb[0].mxu0
    %v3950 = vadd.f32 0.0, %v3949
    %v3951 = vpop.f32.mrb[0].mxu0
    %v3952 = vadd.f32 0.0, %v3951
    %v3953 = vpop.f32.mrb[0].mxu0
    %v3954 = vpop.f32.mrb[0].mxu0
    %3955 = vdwg.mxu0
    %3956 = vmatprep.subr.bf16.mxu0 %v3810
    %3957 = vmatpush1.bf16.msra.mxu0 %v3809
    %3958 = vmatprep.subr.bf16.mxu0 %v3813
    %3959 = vmatpush1.bf16.msra.mxu0 %v3812
    %3960 = vmatprep.subr.bf16.mxu0 %v3816
    %3961 = vmatpush1.bf16.msra.mxu0 %v3815
    %3962 = vmatprep.subr.bf16.mxu0 %v3819
    %3963 = vmatpush1.bf16.msra.mxu0 %v3818
    %3964 = vmatprep.subr.bf16.mxu0 %v3822
    %3965 = vmatpush1.bf16.msra.mxu0 %v3821
    %3966 = vmatprep.subr.bf16.mxu0 %v3825
    %3967 = vmatpush1.bf16.msra.mxu0 %v3824
    %3968 = vmatprep.subr.bf16.mxu0 %v3828
    %3969 = vmatpush1.bf16.msra.mxu0 %v3827
    %3970 = vmatprep.subr.bf16.mxu0 %v3831
    %3971 = vmatpush1.bf16.msra.mxu0 %v3830
    %3972 = vmatprep.subr.bf16.mxu0 0
    %3973 = vmatpush1.bf16.msra.mxu0 0
    %3974 = vmatprep.subr.bf16.mxu0 0
    %3975 = vmatpush1.bf16.msra.mxu0 0
    %3976 = vmatprep.subr.bf16.mxu0 0
    %3977 = vmatpush1.bf16.msra.mxu0 0
    %3978 = vmatprep.subr.bf16.mxu0 0
    %3979 = vmatpush1.bf16.msra.mxu0 0
    %3980 = vmatprep.subr.bf16.mxu0 0
    %3981 = vmatpush1.bf16.msra.mxu0 0
    %3982 = vmatprep.subr.bf16.mxu0 0
    %3983 = vmatpush1.bf16.msra.mxu0 0
    %3984 = vmatprep.subr.bf16.mxu0 0
    %3985 = vmatpush1.bf16.msra.mxu0 0
    %3986 = vmatprep.subr.bf16.mxu0 0
    %3987 = vmatpush1.bf16.msra.mxu0 0
    %3988 = vmatprep.mubr.bf16.mxu0 0
    %3989 = vmatmul.mubr.bf16.gmra.mrb[0].mxu0 %v3514
    %v3990 = vpop.f32.mrb[0].mxu0
    %v3991 = vadd.f32 %v3940, %v3990
    %v3992 = vpop.f32.mrb[0].mxu0
    %v3993 = vadd.f32 %v3942, %v3992
    %v3994 = vpop.f32.mrb[0].mxu0
    %v3995 = vadd.f32 %v3944, %v3994
    %v3996 = vpop.f32.mrb[0].mxu0
    %v3997 = vadd.f32 %v3946, %v3996
    %3998 = vmatprep.mubr.bf16.mxu0 0
    %3999 = vmatmul.mubr.bf16.gmra.mrb[0].mxu0 %v3513
    %v4000 = vpop.f32.mrb[0].mxu0
    %v4001 = vadd.f32 %v3950, %v4000
    %v4002 = vpop.f32.mrb[0].mxu0
    %v4003 = vadd.f32 %v3952, %v4002
    %v4004 = vpop.f32.mrb[0].mxu0
    %v4005 = vpop.f32.mrb[0].mxu0
    %4006 = vdwg.mxu0
    %4007 = vmatprep.subr.bf16.mxu0 0
    %4008 = vmatpush1.bf16.msra.mxu0 %v3763
    %4009 = vmatprep.subr.bf16.mxu0 0
    %4010 = vmatpush1.bf16.msra.mxu0 %v3766
    %4011 = vmatprep.subr.bf16.mxu0 0
    %4012 = vmatpush1.bf16.msra.mxu0 %v3769
    %4013 = vmatprep.subr.bf16.mxu0 0
    %4014 = vmatpush1.bf16.msra.mxu0 %v3772
    %4015 = vmatprep.subr.bf16.mxu0 0
    %4016 = vmatpush1.bf16.msra.mxu0 %v3775
    %4017 = vmatprep.subr.bf16.mxu0 0
    %4018 = vmatpush1.bf16.msra.mxu0 %v3778
    %4019 = vmatprep.subr.bf16.mxu0 0
    %4020 = vmatpush1.bf16.msra.mxu0 %v3781
    %4021 = vmatprep.subr.bf16.mxu0 0
    %4022 = vmatpush1.bf16.msra.mxu0 %v3784
    %4023 = vmatprep.subr.bf16.mxu0 0
    %4024 = vmatpush1.bf16.msra.mxu0 %v3787
    %4025 = vmatprep.subr.bf16.mxu0 0
    %4026 = vmatpush1.bf16.msra.mxu0 %v3790
    %4027 = vmatprep.subr.bf16.mxu0 0
    %4028 = vmatpush1.bf16.msra.mxu0 %v3793
    %4029 = vmatprep.subr.bf16.mxu0 0
    %4030 = vmatpush1.bf16.msra.mxu0 %v3796
    %4031 = vmatprep.subr.bf16.mxu0 0
    %4032 = vmatpush1.bf16.msra.mxu0 %v3799
    %4033 = vmatprep.subr.bf16.mxu0 0
    %4034 = vmatpush1.bf16.msra.mxu0 %v3802
    %4035 = vmatprep.subr.bf16.mxu0 0
    %4036 = vmatpush1.bf16.msra.mxu0 %v3805
    %4037 = vmatprep.subr.bf16.mxu0 0
    %4038 = vmatpush1.bf16.msra.mxu0 %v3808
    %4039 = vmatprep.mubr.bf16.mxu0 %v3511
    %4040 = vmatmul.mubr.bf16.gmra.mrb[0].mxu0 %v3508
    %v4041 = vpop.f32.mrb[0].mxu0
    %v4042 = vadd.f32 0.0, %v4041
    %v4043 = vpop.f32.mrb[0].mxu0
    %v4044 = vpop.f32.mrb[0].mxu0
    %v4045 = vadd.f32 0.0, %v4044
    %v4046 = vpop.f32.mrb[0].mxu0
    %4047 = vmatprep.mubr.bf16.mxu0 %v3510
    %4048 = vmatmul.mubr.bf16.gmra.mrb[0].mxu0 %v3507
    %v4049 = vpop.f32.mrb[0].mxu0
    %v4050 = vadd.f32 0.0, %v4049
    %v4051 = vpop.f32.mrb[0].mxu0
    %v4052 = vpop.f32.mrb[0].mxu0
    %v4053 = vpop.f32.mrb[0].mxu0
    %4054 = vdwg.mxu0
    %4055 = vmatprep.subr.bf16.mxu0 0
    %4056 = vmatpush1.bf16.msra.mxu0 %v3811
    %4057 = vmatprep.subr.bf16.mxu0 0
    %4058 = vmatpush1.bf16.msra.mxu0 %v3814
    %4059 = vmatprep.subr.bf16.mxu0 0
    %4060 = vmatpush1.bf16.msra.mxu0 %v3817
    %4061 = vmatprep.subr.bf16.mxu0 0
    %4062 = vmatpush1.bf16.msra.mxu0 %v3820
    %4063 = vmatprep.subr.bf16.mxu0 0
    %4064 = vmatpush1.bf16.msra.mxu0 %v3823
    %4065 = vmatprep.subr.bf16.mxu0 0
    %4066 = vmatpush1.bf16.msra.mxu0 %v3826
    %4067 = vmatprep.subr.bf16.mxu0 0
    %4068 = vmatpush1.bf16.msra.mxu0 %v3829
    %4069 = vmatprep.subr.bf16.mxu0 0
    %4070 = vmatpush1.bf16.msra.mxu0 %v3832
    %4071 = vmatprep.subr.bf16.mxu0 0
    %4072 = vmatpush1.bf16.msra.mxu0 0
    %4073 = vmatprep.subr.bf16.mxu0 0
    %4074 = vmatpush1.bf16.msra.mxu0 0
    %4075 = vmatprep.subr.bf16.mxu0 0
    %4076 = vmatpush1.bf16.msra.mxu0 0
    %4077 = vmatprep.subr.bf16.mxu0 0
    %4078 = vmatpush1.bf16.msra.mxu0 0
    %4079 = vmatprep.subr.bf16.mxu0 0
    %4080 = vmatpush1.bf16.msra.mxu0 0
    %4081 = vmatprep.subr.bf16.mxu0 0
    %4082 = vmatpush1.bf16.msra.mxu0 0
    %4083 = vmatprep.subr.bf16.mxu0 0
    %4084 = vmatpush1.bf16.msra.mxu0 0
    %4085 = vmatprep.subr.bf16.mxu0 0
    %4086 = vmatpush1.bf16.msra.mxu0 0
    %4087 = vmatprep.mubr.bf16.mxu0 0
    %4088 = vmatmul.mubr.bf16.gmra.mrb[0].mxu0 %v3514
    %v4089 = vpop.f32.mrb[0].mxu0
    %v4090 = vadd.f32 %v4042, %v4089
    %v4091 = vpop.f32.mrb[0].mxu0
    %v4092 = vpop.f32.mrb[0].mxu0
    %v4093 = vadd.f32 %v4045, %v4092
    %v4094 = vpop.f32.mrb[0].mxu0
    %4095 = vmatprep.mubr.bf16.mxu0 0
    %4096 = vmatmul.mubr.bf16.gmra.mrb[0].mxu0 %v3513
    %v4097 = vpop.f32.mrb[0].mxu0
    %v4098 = vadd.f32 %v4050, %v4097
    %v4099 = vpop.f32.mrb[0].mxu0
    %v4100 = vpop.f32.mrb[0].mxu0
    %v4101 = vpop.f32.mrb[0].mxu0
    %4102 = vdwg.mxu0
    %v4103 = vadd.f32 %v3290, %v3991
    %v4104 = vadd.f32 %v3292, %v3993
    %v4105 = vadd.f32 %v3389, %v4090
    %v4106 = vadd.f32 %v3294, %v3995
    %v4107 = vadd.f32 %v3296, %v3997
    %v4108 = vadd.f32 %v3392, %v4093
    %v4109 = vadd.f32 %v3300, %v4001
    %v4110 = vadd.f32 %v3302, %v4003
    %v4111 = vadd.f32 %v3397, %v4098
    %v4113 = vlaneseq
    %v4114 = vshrl.u32 %v4113, 7
    %v4115 = vsub.s32 0, %v4114
    %v4116 = vrot.slane %v1953, %v4115
    %v4117 = vlaneseq
    %v4118 = vshrl.u32 %v4117, 7
    %v4119 = vsub.s32 1, %v4118
    %v4120 = vrot.slane %v1953, %v4119
    %v4121 = vlaneseq
    %v4122 = vshrl.u32 %v4121, 7
    %v4123 = vsub.s32 2, %v4122
    %v4124 = vrot.slane %v1953, %v4123
    %v4128 = vadd.f32 %v4103, %v4116
    %v4129 = vadd.f32 %v4104, %v4120
    %v4130 = vadd.f32 %v4105, %v4124
    %v4131 = vadd.f32 %v4106, %v4116
    %v4132 = vadd.f32 %v4107, %v4120
    %v4133 = vadd.f32 %v4108, %v4124
    %v4134 = vadd.f32 %v4109, %v4116
    %v4135 = vadd.f32 %v4110, %v4120
    %v4136 = vadd.f32 %v4111, %v4124
    %v4137 = vmax.f32 %v4128, 0.0
    %v4138 = vmax.f32 %v4129, 0.0
    %v4139 = vmax.f32 %v4130, 0.0
    %v4140 = vmax.f32 %v4131, 0.0
    %v4141 = vmax.f32 %v4132, 0.0
    %v4142 = vmax.f32 %v4133, 0.0
    %v4143 = vmax.f32 %v4134, 0.0
    %v4144 = vmax.f32 %v4135, 0.0
    %v4145 = vmax.f32 %v4136, 0.0
    %s4146 = scalar_lea.vmem %s2, 1728
    %v4147 = vld [vmem:[%s4146] sm:$0xff]
    %v4148 = vld [vmem:[%s4146 + $0x8] sm:$0xf]
    %v4149 = vld [vmem:[%s4146 + $0xc] sm:$0xff]
    %v4150 = vld [vmem:[%s4146 + $0x14] sm:$0xf]
    %v4151 = vld [vmem:[%s4146 + $0x18] sm:$0xff]
    %v4152 = vld [vmem:[%s4146 + $0x20] sm:$0xf]
    %v4153 = vld [vmem:[%s4146 + $0x24] sm:$0xff]
    %v4154 = vld [vmem:[%s4146 + $0x2c] sm:$0xf]
    %v4155 = vld [vmem:[%s4146 + $0x30] sm:$0xff]
    %v4156 = vld [vmem:[%s4146 + $0x38] sm:$0xf]
    %v4157 = vld [vmem:[%s4146 + $0x3c] sm:$0xff]
    %v4158 = vld [vmem:[%s4146 + $0x44] sm:$0xf]
    %v4159 = vld [vmem:[%s4146 + $0x48] sm:$0xff]
    %v4160 = vld [vmem:[%s4146 + $0x50] sm:$0xf]
    %v4161 = vld [vmem:[%s4146 + $0x54] sm:$0xff]
    %v4162 = vld [vmem:[%s4146 + $0x5c] sm:$0xf]
    %v4163 = vld [vmem:[%s4146 + $0x60] sm:$0xff]
    %v4164 = vld [vmem:[%s4146 + $0x68] sm:$0xf]
    %v4165 = vld [vmem:[%s4146 + $0x6c] sm:$0xff]
    %v4166 = vld [vmem:[%s4146 + $0x74] sm:$0xf]
    %v4167 = vld [vmem:[%s4146 + $0x78] sm:$0xff]
    %v4168 = vld [vmem:[%s4146 + $0x80] sm:$0xf]
    %v4169 = vld [vmem:[%s4146 + $0x84] sm:$0xff]
    %v4170 = vld [vmem:[%s4146 + $0x8c] sm:$0xf]
    %v4171 = vld [vmem:[%s4146 + $0x90] sm:$0xff]
    %v4172 = vld [vmem:[%s4146 + $0x98] sm:$0xf]
    %v4173 = vld [vmem:[%s4146 + $0x9c] sm:$0xff]
    %v4174 = vld [vmem:[%s4146 + $0xa4] sm:$0xf]
    %v4175 = vld [vmem:[%s4146 + $0xa8] sm:$0xff]
    %v4176 = vld [vmem:[%s4146 + $0xb0] sm:$0xf]
    %v4177 = vld [vmem:[%s4146 + $0xb4] sm:$0xff]
    %v4178 = vld [vmem:[%s4146 + $0xbc] sm:$0xf]
    %v4179 = vld [vmem:[%s4146 + $0xc0] sm:$0xff]
    %v4180 = vld [vmem:[%s4146 + $0xc8] sm:$0xf]
    %v4181 = vld [vmem:[%s4146 + $0xcc] sm:$0xff]
    %v4182 = vld [vmem:[%s4146 + $0xd4] sm:$0xf]
    %v4183 = vld [vmem:[%s4146 + $0xd8] sm:$0xff]
    %v4184 = vld [vmem:[%s4146 + $0xe0] sm:$0xf]
    %v4185 = vld [vmem:[%s4146 + $0xe4] sm:$0xff]
    %v4186 = vld [vmem:[%s4146 + $0xec] sm:$0xf]
    %v4187 = vld [vmem:[%s4146 + $0xf0] sm:$0xff]
    %v4188 = vld [vmem:[%s4146 + $0xf8] sm:$0xf]
    %v4189 = vld [vmem:[%s4146 + $0xfc] sm:$0xff]
    %v4190 = vld [vmem:[%s4146 + $0x104] sm:$0xf]
    %v4191 = vld [vmem:[%s4146 + $0x108] sm:$0xff]
    %v4192 = vld [vmem:[%s4146 + $0x110] sm:$0xf]
    %v4193 = vld [vmem:[%s4146 + $0x114] sm:$0xff]
    %v4194 = vld [vmem:[%s4146 + $0x11c] sm:$0xf]
    %v4195 = vld [vmem:[%s4146 + $0x120] sm:$0xff]
    %v4196 = vld [vmem:[%s4146 + $0x128] sm:$0xf]
    %v4197 = vld [vmem:[%s4146 + $0x12c] sm:$0xff]
    %v4198 = vld [vmem:[%s4146 + $0x134] sm:$0xf]
    %v4199 = vld [vmem:[%s4146 + $0x138] sm:$0xff]
    %v4200 = vld [vmem:[%s4146 + $0x140] sm:$0xf]
    %v4201 = vld [vmem:[%s4146 + $0x144] sm:$0xff]
    %v4202 = vld [vmem:[%s4146 + $0x14c] sm:$0xf]
    %v4203 = vld [vmem:[%s4146 + $0x150] sm:$0xff]
    %v4204 = vld [vmem:[%s4146 + $0x158] sm:$0xf]
    %v4205 = vld [vmem:[%s4146 + $0x15c] sm:$0xff]
    %v4206 = vld [vmem:[%s4146 + $0x164] sm:$0xf]
    %v4207 = vld [vmem:[%s4146 + $0x168] sm:$0xff]
    %v4208 = vld [vmem:[%s4146 + $0x170] sm:$0xf]
    %v4209 = vld [vmem:[%s4146 + $0x174] sm:$0xff]
    %v4210 = vld [vmem:[%s4146 + $0x17c] sm:$0xf]
    %v4211 = vld [vmem:[%s4146 + $0x180] sm:$0xff]
    %v4212 = vld [vmem:[%s4146 + $0x188] sm:$0xf]
    %v4213 = vld [vmem:[%s4146 + $0x18c] sm:$0xff]
    %v4214 = vld [vmem:[%s4146 + $0x194] sm:$0xf]
    %v4215 = vld [vmem:[%s4146 + $0x198] sm:$0xff]
    %v4216 = vld [vmem:[%s4146 + $0x1a0] sm:$0xf]
    %v4217 = vld [vmem:[%s4146 + $0x1a4] sm:$0xff]
    %v4218 = vld [vmem:[%s4146 + $0x1ac] sm:$0xf]
    %v4219 = vld [vmem:[%s4146 + $0x1b0] sm:$0xff]
    %v4220 = vld [vmem:[%s4146 + $0x1b8] sm:$0xf]
    %v4221 = vld [vmem:[%s4146 + $0x1bc] sm:$0xff]
    %v4222 = vld [vmem:[%s4146 + $0x1c4] sm:$0xf]
    %v4223 = vld [vmem:[%s4146 + $0x1c8] sm:$0xff]
    %v4224 = vld [vmem:[%s4146 + $0x1d0] sm:$0xf]
    %v4225 = vld [vmem:[%s4146 + $0x1d4] sm:$0xff]
    %v4226 = vld [vmem:[%s4146 + $0x1dc] sm:$0xf]
    %v4227 = vld [vmem:[%s4146 + $0x1e0] sm:$0xff]
    %v4228 = vld [vmem:[%s4146 + $0x1e8] sm:$0xf]
    %v4229 = vld [vmem:[%s4146 + $0x1ec] sm:$0xff]
    %v4230 = vld [vmem:[%s4146 + $0x1f4] sm:$0xf]
    %v4231 = vld [vmem:[%s4146 + $0x1f8] sm:$0xff]
    %v4232 = vld [vmem:[%s4146 + $0x200] sm:$0xf]
    %v4233 = vld [vmem:[%s4146 + $0x204] sm:$0xff]
    %v4234 = vld [vmem:[%s4146 + $0x20c] sm:$0xf]
    %v4235 = vld [vmem:[%s4146 + $0x210] sm:$0xff]
    %v4236 = vld [vmem:[%s4146 + $0x218] sm:$0xf]
    %v4237 = vld [vmem:[%s4146 + $0x21c] sm:$0xff]
    %v4238 = vld [vmem:[%s4146 + $0x224] sm:$0xf]
    %v4239 = vld [vmem:[%s4146 + $0x228] sm:$0xff]
    %v4240 = vld [vmem:[%s4146 + $0x230] sm:$0xf]
    %v4241 = vld [vmem:[%s4146 + $0x234] sm:$0xff]
    %v4242 = vld [vmem:[%s4146 + $0x23c] sm:$0xf]
    %s4243 = scalar_lea.vmem %s2, 2304
    %v4244 = vld [vmem:[%s4243] sm:$0xff]
    %v4245 = vld [vmem:[%s4243 + $0x8] sm:$0xf]
    %v4246 = vld [vmem:[%s4243 + $0xc] sm:$0xff]
    %v4247 = vld [vmem:[%s4243 + $0x14] sm:$0xf]
    %v4248 = vld [vmem:[%s4243 + $0x18] sm:$0xff]
    %v4249 = vld [vmem:[%s4243 + $0x20] sm:$0xf]
    %v4250 = vld [vmem:[%s4243 + $0x24] sm:$0xff]
    %v4251 = vld [vmem:[%s4243 + $0x2c] sm:$0xf]
    %v4252 = vld [vmem:[%s4243 + $0x30] sm:$0xff]
    %v4253 = vld [vmem:[%s4243 + $0x38] sm:$0xf]
    %v4254 = vld [vmem:[%s4243 + $0x3c] sm:$0xff]
    %v4255 = vld [vmem:[%s4243 + $0x44] sm:$0xf]
    %v4256 = vld [vmem:[%s4243 + $0x48] sm:$0xff]
    %v4257 = vld [vmem:[%s4243 + $0x50] sm:$0xf]
    %v4258 = vld [vmem:[%s4243 + $0x54] sm:$0xff]
    %v4259 = vld [vmem:[%s4243 + $0x5c] sm:$0xf]
    %v4260 = vld [vmem:[%s4243 + $0x60] sm:$0xff]
    %v4261 = vld [vmem:[%s4243 + $0x68] sm:$0xf]
    %v4262 = vld [vmem:[%s4243 + $0x6c] sm:$0xff]
    %v4263 = vld [vmem:[%s4243 + $0x74] sm:$0xf]
    %v4264 = vld [vmem:[%s4243 + $0x78] sm:$0xff]
    %v4265 = vld [vmem:[%s4243 + $0x80] sm:$0xf]
    %v4266 = vld [vmem:[%s4243 + $0x84] sm:$0xff]
    %v4267 = vld [vmem:[%s4243 + $0x8c] sm:$0xf]
    %v4268 = vld [vmem:[%s4243 + $0x90] sm:$0xff]
    %v4269 = vld [vmem:[%s4243 + $0x98] sm:$0xf]
    %v4270 = vld [vmem:[%s4243 + $0x9c] sm:$0xff]
    %v4271 = vld [vmem:[%s4243 + $0xa4] sm:$0xf]
    %v4272 = vld [vmem:[%s4243 + $0xa8] sm:$0xff]
    %v4273 = vld [vmem:[%s4243 + $0xb0] sm:$0xf]
    %v4274 = vld [vmem:[%s4243 + $0xb4] sm:$0xff]
    %v4275 = vld [vmem:[%s4243 + $0xbc] sm:$0xf]
    %v4276 = vld [vmem:[%s4243 + $0xc0] sm:$0xff]
    %v4277 = vld [vmem:[%s4243 + $0xc8] sm:$0xf]
    %v4278 = vld [vmem:[%s4243 + $0xcc] sm:$0xff]
    %v4279 = vld [vmem:[%s4243 + $0xd4] sm:$0xf]
    %v4280 = vld [vmem:[%s4243 + $0xd8] sm:$0xff]
    %v4281 = vld [vmem:[%s4243 + $0xe0] sm:$0xf]
    %v4282 = vld [vmem:[%s4243 + $0xe4] sm:$0xff]
    %v4283 = vld [vmem:[%s4243 + $0xec] sm:$0xf]
    %v4284 = vld [vmem:[%s4243 + $0xf0] sm:$0xff]
    %v4285 = vld [vmem:[%s4243 + $0xf8] sm:$0xf]
    %v4286 = vld [vmem:[%s4243 + $0xfc] sm:$0xff]
    %v4287 = vld [vmem:[%s4243 + $0x104] sm:$0xf]
    %v4288 = vld [vmem:[%s4243 + $0x108] sm:$0xff]
    %v4289 = vld [vmem:[%s4243 + $0x110] sm:$0xf]
    %v4290 = vld [vmem:[%s4243 + $0x114] sm:$0xff]
    %v4291 = vld [vmem:[%s4243 + $0x11c] sm:$0xf]
    %v4292 = vld [vmem:[%s4243 + $0x120] sm:$0xff]
    %v4293 = vld [vmem:[%s4243 + $0x128] sm:$0xf]
    %v4294 = vld [vmem:[%s4243 + $0x12c] sm:$0xff]
    %v4295 = vld [vmem:[%s4243 + $0x134] sm:$0xf]
    %v4296 = vld [vmem:[%s4243 + $0x138] sm:$0xff]
    %v4297 = vld [vmem:[%s4243 + $0x140] sm:$0xf]
    %v4298 = vld [vmem:[%s4243 + $0x144] sm:$0xff]
    %v4299 = vld [vmem:[%s4243 + $0x14c] sm:$0xf]
    %v4300 = vld [vmem:[%s4243 + $0x150] sm:$0xff]
    %v4301 = vld [vmem:[%s4243 + $0x158] sm:$0xf]
    %v4302 = vld [vmem:[%s4243 + $0x15c] sm:$0xff]
    %v4303 = vld [vmem:[%s4243 + $0x164] sm:$0xf]
    %v4304 = vld [vmem:[%s4243 + $0x168] sm:$0xff]
    %v4305 = vld [vmem:[%s4243 + $0x170] sm:$0xf]
    %v4306 = vld [vmem:[%s4243 + $0x174] sm:$0xff]
    %v4307 = vld [vmem:[%s4243 + $0x17c] sm:$0xf]
    %v4308 = vld [vmem:[%s4243 + $0x180] sm:$0xff]
    %v4309 = vld [vmem:[%s4243 + $0x188] sm:$0xf]
    %v4310 = vld [vmem:[%s4243 + $0x18c] sm:$0xff]
    %v4311 = vld [vmem:[%s4243 + $0x194] sm:$0xf]
    %v4312 = vld [vmem:[%s4243 + $0x198] sm:$0xff]
    %v4313 = vld [vmem:[%s4243 + $0x1a0] sm:$0xf]
    %v4314 = vld [vmem:[%s4243 + $0x1a4] sm:$0xff]
    %v4315 = vld [vmem:[%s4243 + $0x1ac] sm:$0xf]
    %v4316 = vld [vmem:[%s4243 + $0x1b0] sm:$0xff]
    %v4317 = vld [vmem:[%s4243 + $0x1b8] sm:$0xf]
    %v4318 = vld [vmem:[%s4243 + $0x1bc] sm:$0xff]
    %v4319 = vld [vmem:[%s4243 + $0x1c4] sm:$0xf]
    %v4320 = vld [vmem:[%s4243 + $0x1c8] sm:$0xff]
    %v4321 = vld [vmem:[%s4243 + $0x1d0] sm:$0xf]
    %v4322 = vld [vmem:[%s4243 + $0x1d4] sm:$0xff]
    %v4323 = vld [vmem:[%s4243 + $0x1dc] sm:$0xf]
    %v4324 = vld [vmem:[%s4243 + $0x1e0] sm:$0xff]
    %v4325 = vld [vmem:[%s4243 + $0x1e8] sm:$0xf]
    %v4326 = vld [vmem:[%s4243 + $0x1ec] sm:$0xff]
    %v4327 = vld [vmem:[%s4243 + $0x1f4] sm:$0xf]
    %v4328 = vld [vmem:[%s4243 + $0x1f8] sm:$0xff]
    %v4329 = vld [vmem:[%s4243 + $0x200] sm:$0xf]
    %v4330 = vld [vmem:[%s4243 + $0x204] sm:$0xff]
    %v4331 = vld [vmem:[%s4243 + $0x20c] sm:$0xf]
    %v4332 = vld [vmem:[%s4243 + $0x210] sm:$0xff]
    %v4333 = vld [vmem:[%s4243 + $0x218] sm:$0xf]
    %v4334 = vld [vmem:[%s4243 + $0x21c] sm:$0xff]
    %v4335 = vld [vmem:[%s4243 + $0x224] sm:$0xf]
    %v4336 = vld [vmem:[%s4243 + $0x228] sm:$0xff]
    %v4337 = vld [vmem:[%s4243 + $0x230] sm:$0xf]
    %v4338 = vld [vmem:[%s4243 + $0x234] sm:$0xff]
    %v4339 = vld [vmem:[%s4243 + $0x23c] sm:$0xf]
    %v4436 = vunpack.c.l.b16 %v4244
    %v4437 = vunpack.c.h.b16 %v4244
    %v4438 = vunpack.c.l.b16 %v4245
    %v4439 = vunpack.c.l.b16 %v4246
    %v4440 = vunpack.c.h.b16 %v4246
    %v4441 = vunpack.c.l.b16 %v4247
    %v4442 = vunpack.c.l.b16 %v4248
    %v4443 = vunpack.c.h.b16 %v4248
    %v4444 = vunpack.c.l.b16 %v4249
    %v4445 = vunpack.c.l.b16 %v4250
    %v4446 = vunpack.c.h.b16 %v4250
    %v4447 = vunpack.c.l.b16 %v4251
    %v4448 = vunpack.c.l.b16 %v4252
    %v4449 = vunpack.c.h.b16 %v4252
    %v4450 = vunpack.c.l.b16 %v4253
    %v4451 = vunpack.c.l.b16 %v4254
    %v4452 = vunpack.c.h.b16 %v4254
    %v4453 = vunpack.c.l.b16 %v4255
    %v4454 = vunpack.c.l.b16 %v4256
    %v4455 = vunpack.c.h.b16 %v4256
    %v4456 = vunpack.c.l.b16 %v4257
    %v4457 = vunpack.c.l.b16 %v4258
    %v4458 = vunpack.c.h.b16 %v4258
    %v4459 = vunpack.c.l.b16 %v4259
    %v4460 = vunpack.c.l.b16 %v4260
    %v4461 = vunpack.c.h.b16 %v4260
    %v4462 = vunpack.c.l.b16 %v4261
    %v4463 = vunpack.c.l.b16 %v4262
    %v4464 = vunpack.c.h.b16 %v4262
    %v4465 = vunpack.c.l.b16 %v4263
    %v4466 = vunpack.c.l.b16 %v4264
    %v4467 = vunpack.c.h.b16 %v4264
    %v4468 = vunpack.c.l.b16 %v4265
    %v4469 = vunpack.c.l.b16 %v4266
    %v4470 = vunpack.c.h.b16 %v4266
    %v4471 = vunpack.c.l.b16 %v4267
    %v4472 = vunpack.c.l.b16 %v4268
    %v4473 = vunpack.c.h.b16 %v4268
    %v4474 = vunpack.c.l.b16 %v4269
    %v4475 = vunpack.c.l.b16 %v4270
    %v4476 = vunpack.c.h.b16 %v4270
    %v4477 = vunpack.c.l.b16 %v4271
    %v4478 = vunpack.c.l.b16 %v4272
    %v4479 = vunpack.c.h.b16 %v4272
    %v4480 = vunpack.c.l.b16 %v4273
    %v4481 = vunpack.c.l.b16 %v4274
    %v4482 = vunpack.c.h.b16 %v4274
    %v4483 = vunpack.c.l.b16 %v4275
    %v4484 = vunpack.c.l.b16 %v4276
    %v4485 = vunpack.c.h.b16 %v4276
    %v4486 = vunpack.c.l.b16 %v4277
    %v4487 = vunpack.c.l.b16 %v4278
    %v4488 = vunpack.c.h.b16 %v4278
    %v4489 = vunpack.c.l.b16 %v4279
    %v4490 = vunpack.c.l.b16 %v4280
    %v4491 = vunpack.c.h.b16 %v4280
    %v4492 = vunpack.c.l.b16 %v4281
    %v4493 = vunpack.c.l.b16 %v4282
    %v4494 = vunpack.c.h.b16 %v4282
    %v4495 = vunpack.c.l.b16 %v4283
    %v4496 = vunpack.c.l.b16 %v4284
    %v4497 = vunpack.c.h.b16 %v4284
    %v4498 = vunpack.c.l.b16 %v4285
    %v4499 = vunpack.c.l.b16 %v4286
    %v4500 = vunpack.c.h.b16 %v4286
    %v4501 = vunpack.c.l.b16 %v4287
    %v4502 = vunpack.c.l.b16 %v4288
    %v4503 = vunpack.c.h.b16 %v4288
    %v4504 = vunpack.c.l.b16 %v4289
    %v4505 = vunpack.c.l.b16 %v4290
    %v4506 = vunpack.c.h.b16 %v4290
    %v4507 = vunpack.c.l.b16 %v4291
    %v4508 = vunpack.c.l.b16 %v4292
    %v4509 = vunpack.c.h.b16 %v4292
    %v4510 = vunpack.c.l.b16 %v4293
    %v4511 = vunpack.c.l.b16 %v4294
    %v4512 = vunpack.c.h.b16 %v4294
    %v4513 = vunpack.c.l.b16 %v4295
    %v4514 = vunpack.c.l.b16 %v4296
    %v4515 = vunpack.c.h.b16 %v4296
    %v4516 = vunpack.c.l.b16 %v4297
    %v4517 = vunpack.c.l.b16 %v4298
    %v4518 = vunpack.c.h.b16 %v4298
    %v4519 = vunpack.c.l.b16 %v4299
    %v4520 = vunpack.c.l.b16 %v4300
    %v4521 = vunpack.c.h.b16 %v4300
    %v4522 = vunpack.c.l.b16 %v4301
    %v4523 = vunpack.c.l.b16 %v4302
    %v4524 = vunpack.c.h.b16 %v4302
    %v4525 = vunpack.c.l.b16 %v4303
    %v4526 = vunpack.c.l.b16 %v4304
    %v4527 = vunpack.c.h.b16 %v4304
    %v4528 = vunpack.c.l.b16 %v4305
    %v4529 = vunpack.c.l.b16 %v4306
    %v4530 = vunpack.c.h.b16 %v4306
    %v4531 = vunpack.c.l.b16 %v4307
    %v4532 = vunpack.c.l.b16 %v4308
    %v4533 = vunpack.c.h.b16 %v4308
    %v4534 = vunpack.c.l.b16 %v4309
    %v4535 = vunpack.c.l.b16 %v4310
    %v4536 = vunpack.c.h.b16 %v4310
    %v4537 = vunpack.c.l.b16 %v4311
    %v4538 = vunpack.c.l.b16 %v4312
    %v4539 = vunpack.c.h.b16 %v4312
    %v4540 = vunpack.c.l.b16 %v4313
    %v4541 = vunpack.c.l.b16 %v4314
    %v4542 = vunpack.c.h.b16 %v4314
    %v4543 = vunpack.c.l.b16 %v4315
    %v4544 = vunpack.c.l.b16 %v4316
    %v4545 = vunpack.c.h.b16 %v4316
    %v4546 = vunpack.c.l.b16 %v4317
    %v4547 = vunpack.c.l.b16 %v4318
    %v4548 = vunpack.c.h.b16 %v4318
    %v4549 = vunpack.c.l.b16 %v4319
    %v4550 = vunpack.c.l.b16 %v4320
    %v4551 = vunpack.c.h.b16 %v4320
    %v4552 = vunpack.c.l.b16 %v4321
    %v4553 = vunpack.c.l.b16 %v4322
    %v4554 = vunpack.c.h.b16 %v4322
    %v4555 = vunpack.c.l.b16 %v4323
    %v4556 = vunpack.c.l.b16 %v4324
    %v4557 = vunpack.c.h.b16 %v4324
    %v4558 = vunpack.c.l.b16 %v4325
    %v4559 = vunpack.c.l.b16 %v4326
    %v4560 = vunpack.c.h.b16 %v4326
    %v4561 = vunpack.c.l.b16 %v4327
    %v4562 = vunpack.c.l.b16 %v4328
    %v4563 = vunpack.c.h.b16 %v4328
    %v4564 = vunpack.c.l.b16 %v4329
    %v4565 = vunpack.c.l.b16 %v4330
    %v4566 = vunpack.c.h.b16 %v4330
    %v4567 = vunpack.c.l.b16 %v4331
    %v4568 = vunpack.c.l.b16 %v4332
    %v4569 = vunpack.c.h.b16 %v4332
    %v4570 = vunpack.c.l.b16 %v4333
    %v4571 = vunpack.c.l.b16 %v4334
    %v4572 = vunpack.c.h.b16 %v4334
    %v4573 = vunpack.c.l.b16 %v4335
    %v4574 = vunpack.c.l.b16 %v4336
    %v4575 = vunpack.c.h.b16 %v4336
    %v4576 = vunpack.c.l.b16 %v4337
    %v4577 = vunpack.c.l.b16 %v4338
    %v4578 = vunpack.c.h.b16 %v4338
    %v4579 = vunpack.c.l.b16 %v4339
    %v4580 = vpack.c.b16 %v4439, %v4436
    %v4581 = vpack.c.b16 %v4440, %v4437
    %v4582 = vpack.c.b16 %v4441, %v4438
    %v4583 = vpack.c.b16 %v4445, %v4442
    %v4584 = vpack.c.b16 %v4446, %v4443
    %v4585 = vpack.c.b16 %v4447, %v4444
    %v4586 = vpack.c.b16 %v4451, %v4448
    %v4587 = vpack.c.b16 %v4452, %v4449
    %v4588 = vpack.c.b16 %v4453, %v4450
    %v4589 = vpack.c.b16 %v4457, %v4454
    %v4590 = vpack.c.b16 %v4458, %v4455
    %v4591 = vpack.c.b16 %v4459, %v4456
    %v4592 = vpack.c.b16 %v4463, %v4460
    %v4593 = vpack.c.b16 %v4464, %v4461
    %v4594 = vpack.c.b16 %v4465, %v4462
    %v4595 = vpack.c.b16 %v4469, %v4466
    %v4596 = vpack.c.b16 %v4470, %v4467
    %v4597 = vpack.c.b16 %v4471, %v4468
    %v4598 = vpack.c.b16 %v4475, %v4472
    %v4599 = vpack.c.b16 %v4476, %v4473
    %v4600 = vpack.c.b16 %v4477, %v4474
    %v4601 = vpack.c.b16 %v4481, %v4478
    %v4602 = vpack.c.b16 %v4482, %v4479
    %v4603 = vpack.c.b16 %v4483, %v4480
    %v4604 = vpack.c.b16 %v4487, %v4484
    %v4605 = vpack.c.b16 %v4488, %v4485
    %v4606 = vpack.c.b16 %v4489, %v4486
    %v4607 = vpack.c.b16 %v4493, %v4490
    %v4608 = vpack.c.b16 %v4494, %v4491
    %v4609 = vpack.c.b16 %v4495, %v4492
    %v4610 = vpack.c.b16 %v4499, %v4496
    %v4611 = vpack.c.b16 %v4500, %v4497
    %v4612 = vpack.c.b16 %v4501, %v4498
    %v4613 = vpack.c.b16 %v4505, %v4502
    %v4614 = vpack.c.b16 %v4506, %v4503
    %v4615 = vpack.c.b16 %v4507, %v4504
    %v4616 = vpack.c.b16 %v4511, %v4508
    %v4617 = vpack.c.b16 %v4512, %v4509
    %v4618 = vpack.c.b16 %v4513, %v4510
    %v4619 = vpack.c.b16 %v4517, %v4514
    %v4620 = vpack.c.b16 %v4518, %v4515
    %v4621 = vpack.c.b16 %v4519, %v4516
    %v4622 = vpack.c.b16 %v4523, %v4520
    %v4623 = vpack.c.b16 %v4524, %v4521
    %v4624 = vpack.c.b16 %v4525, %v4522
    %v4625 = vpack.c.b16 %v4529, %v4526
    %v4626 = vpack.c.b16 %v4530, %v4527
    %v4627 = vpack.c.b16 %v4531, %v4528
    %v4628 = vpack.c.b16 %v4535, %v4532
    %v4629 = vpack.c.b16 %v4536, %v4533
    %v4630 = vpack.c.b16 %v4537, %v4534
    %v4631 = vpack.c.b16 %v4541, %v4538
    %v4632 = vpack.c.b16 %v4542, %v4539
    %v4633 = vpack.c.b16 %v4543, %v4540
    %v4634 = vpack.c.b16 %v4547, %v4544
    %v4635 = vpack.c.b16 %v4548, %v4545
    %v4636 = vpack.c.b16 %v4549, %v4546
    %v4637 = vpack.c.b16 %v4553, %v4550
    %v4638 = vpack.c.b16 %v4554, %v4551
    %v4639 = vpack.c.b16 %v4555, %v4552
    %v4640 = vpack.c.b16 %v4559, %v4556
    %v4641 = vpack.c.b16 %v4560, %v4557
    %v4642 = vpack.c.b16 %v4561, %v4558
    %v4643 = vpack.c.b16 %v4565, %v4562
    %v4644 = vpack.c.b16 %v4566, %v4563
    %v4645 = vpack.c.b16 %v4567, %v4564
    %v4646 = vpack.c.b16 %v4571, %v4568
    %v4647 = vpack.c.b16 %v4572, %v4569
    %v4648 = vpack.c.b16 %v4573, %v4570
    %v4649 = vpack.c.b16 %v4577, %v4574
    %v4650 = vpack.c.b16 %v4578, %v4575
    %v4651 = vpack.c.b16 %v4579, %v4576
    %4724 = vmatprep.subr.bf16.mxu0 %v4581
    %4725 = vmatpush1.bf16.msra.mxu0 %v4580
    %4726 = vmatprep.subr.bf16.mxu0 %v4584
    %4727 = vmatpush1.bf16.msra.mxu0 %v4583
    %4728 = vmatprep.subr.bf16.mxu0 %v4587
    %4729 = vmatpush1.bf16.msra.mxu0 %v4586
    %4730 = vmatprep.subr.bf16.mxu0 %v4590
    %4731 = vmatpush1.bf16.msra.mxu0 %v4589
    %4732 = vmatprep.subr.bf16.mxu0 %v4593
    %4733 = vmatpush1.bf16.msra.mxu0 %v4592
    %4734 = vmatprep.subr.bf16.mxu0 %v4596
    %4735 = vmatpush1.bf16.msra.mxu0 %v4595
    %4736 = vmatprep.subr.bf16.mxu0 %v4599
    %4737 = vmatpush1.bf16.msra.mxu0 %v4598
    %4738 = vmatprep.subr.bf16.mxu0 %v4602
    %4739 = vmatpush1.bf16.msra.mxu0 %v4601
    %4740 = vmatprep.subr.bf16.mxu0 %v4605
    %4741 = vmatpush1.bf16.msra.mxu0 %v4604
    %4742 = vmatprep.subr.bf16.mxu0 %v4608
    %4743 = vmatpush1.bf16.msra.mxu0 %v4607
    %4744 = vmatprep.subr.bf16.mxu0 %v4611
    %4745 = vmatpush1.bf16.msra.mxu0 %v4610
    %4746 = vmatprep.subr.bf16.mxu0 %v4614
    %4747 = vmatpush1.bf16.msra.mxu0 %v4613
    %4748 = vmatprep.subr.bf16.mxu0 %v4617
    %4749 = vmatpush1.bf16.msra.mxu0 %v4616
    %4750 = vmatprep.subr.bf16.mxu0 %v4620
    %4751 = vmatpush1.bf16.msra.mxu0 %v4619
    %4752 = vmatprep.subr.bf16.mxu0 %v4623
    %4753 = vmatpush1.bf16.msra.mxu0 %v4622
    %4754 = vmatprep.subr.bf16.mxu0 %v4626
    %4755 = vmatpush1.bf16.msra.mxu0 %v4625
    %4756 = vmatprep.mubr.bf16.mxu0 %v2210
    %4757 = vmatmul.mubr.bf16.gmra.mrb[0].mxu0 %v2198
    %v4758 = vpop.f32.mrb[0].mxu0
    %v4759 = vadd.f32 0.0, %v4758
    %v4760 = vpop.f32.mrb[0].mxu0
    %v4761 = vadd.f32 0.0, %v4760
    %v4762 = vpop.f32.mrb[0].mxu0
    %v4763 = vadd.f32 0.0, %v4762
    %v4764 = vpop.f32.mrb[0].mxu0
    %v4765 = vadd.f32 0.0, %v4764
    %4766 = vmatprep.mubr.bf16.mxu0 %v2228
    %4767 = vmatmul.mubr.bf16.gmra.mrb[0].mxu0 %v2225
    %v4768 = vpop.f32.mrb[0].mxu0
    %v4769 = vadd.f32 0.0, %v4768
    %v4770 = vpop.f32.mrb[0].mxu0
    %v4771 = vadd.f32 0.0, %v4770
    %v4772 = vpop.f32.mrb[0].mxu0
    %v4773 = vpop.f32.mrb[0].mxu0
    %4774 = vdwg.mxu0
    %4775 = vmatprep.subr.bf16.mxu0 %v4629
    %4776 = vmatpush1.bf16.msra.mxu0 %v4628
    %4777 = vmatprep.subr.bf16.mxu0 %v4632
    %4778 = vmatpush1.bf16.msra.mxu0 %v4631
    %4779 = vmatprep.subr.bf16.mxu0 %v4635
    %4780 = vmatpush1.bf16.msra.mxu0 %v4634
    %4781 = vmatprep.subr.bf16.mxu0 %v4638
    %4782 = vmatpush1.bf16.msra.mxu0 %v4637
    %4783 = vmatprep.subr.bf16.mxu0 %v4641
    %4784 = vmatpush1.bf16.msra.mxu0 %v4640
    %4785 = vmatprep.subr.bf16.mxu0 %v4644
    %4786 = vmatpush1.bf16.msra.mxu0 %v4643
    %4787 = vmatprep.subr.bf16.mxu0 %v4647
    %4788 = vmatpush1.bf16.msra.mxu0 %v4646
    %4789 = vmatprep.subr.bf16.mxu0 %v4650
    %4790 = vmatpush1.bf16.msra.mxu0 %v4649
    %4791 = vmatprep.subr.bf16.mxu0 0
    %4792 = vmatpush1.bf16.msra.mxu0 0
    %4793 = vmatprep.subr.bf16.mxu0 0
    %4794 = vmatpush1.bf16.msra.mxu0 0
    %4795 = vmatprep.subr.bf16.mxu0 0
    %4796 = vmatpush1.bf16.msra.mxu0 0
    %4797 = vmatprep.subr.bf16.mxu0 0
    %4798 = vmatpush1.bf16.msra.mxu0 0
    %4799 = vmatprep.subr.bf16.mxu0 0
    %4800 = vmatpush1.bf16.msra.mxu0 0
    %4801 = vmatprep.subr.bf16.mxu0 0
    %4802 = vmatpush1.bf16.msra.mxu0 0
    %4803 = vmatprep.subr.bf16.mxu0 0
    %4804 = vmatpush1.bf16.msra.mxu0 0
    %4805 = vmatprep.subr.bf16.mxu0 0
    %4806 = vmatpush1.bf16.msra.mxu0 0
    %4807 = vmatprep.mubr.bf16.mxu0 0
    %4808 = vmatmul.mubr.bf16.gmra.mrb[0].mxu0 %v2222
    %v4809 = vpop.f32.mrb[0].mxu0
    %v4810 = vadd.f32 %v4759, %v4809
    %v4811 = vpop.f32.mrb[0].mxu0
    %v4812 = vadd.f32 %v4761, %v4811
    %v4813 = vpop.f32.mrb[0].mxu0
    %v4814 = vadd.f32 %v4763, %v4813
    %v4815 = vpop.f32.mrb[0].mxu0
    %v4816 = vadd.f32 %v4765, %v4815
    %4817 = vmatprep.mubr.bf16.mxu0 0
    %4818 = vmatmul.mubr.bf16.gmra.mrb[0].mxu0 %v2231
    %v4819 = vpop.f32.mrb[0].mxu0
    %v4820 = vadd.f32 %v4769, %v4819
    %v4821 = vpop.f32.mrb[0].mxu0
    %v4822 = vadd.f32 %v4771, %v4821
    %v4823 = vpop.f32.mrb[0].mxu0
    %v4824 = vpop.f32.mrb[0].mxu0
    %4825 = vdwg.mxu0
    %4826 = vmatprep.subr.bf16.mxu0 0
    %4827 = vmatpush1.bf16.msra.mxu0 %v4582
    %4828 = vmatprep.subr.bf16.mxu0 0
    %4829 = vmatpush1.bf16.msra.mxu0 %v4585
    %4830 = vmatprep.subr.bf16.mxu0 0
    %4831 = vmatpush1.bf16.msra.mxu0 %v4588
    %4832 = vmatprep.subr.bf16.mxu0 0
    %4833 = vmatpush1.bf16.msra.mxu0 %v4591
    %4834 = vmatprep.subr.bf16.mxu0 0
    %4835 = vmatpush1.bf16.msra.mxu0 %v4594
    %4836 = vmatprep.subr.bf16.mxu0 0
    %4837 = vmatpush1.bf16.msra.mxu0 %v4597
    %4838 = vmatprep.subr.bf16.mxu0 0
    %4839 = vmatpush1.bf16.msra.mxu0 %v4600
    %4840 = vmatprep.subr.bf16.mxu0 0
    %4841 = vmatpush1.bf16.msra.mxu0 %v4603
    %4842 = vmatprep.subr.bf16.mxu0 0
    %4843 = vmatpush1.bf16.msra.mxu0 %v4606
    %4844 = vmatprep.subr.bf16.mxu0 0
    %4845 = vmatpush1.bf16.msra.mxu0 %v4609
    %4846 = vmatprep.subr.bf16.mxu0 0
    %4847 = vmatpush1.bf16.msra.mxu0 %v4612
    %4848 = vmatprep.subr.bf16.mxu0 0
    %4849 = vmatpush1.bf16.msra.mxu0 %v4615
    %4850 = vmatprep.subr.bf16.mxu0 0
    %4851 = vmatpush1.bf16.msra.mxu0 %v4618
    %4852 = vmatprep.subr.bf16.mxu0 0
    %4853 = vmatpush1.bf16.msra.mxu0 %v4621
    %4854 = vmatprep.subr.bf16.mxu0 0
    %4855 = vmatpush1.bf16.msra.mxu0 %v4624
    %4856 = vmatprep.subr.bf16.mxu0 0
    %4857 = vmatpush1.bf16.msra.mxu0 %v4627
    %4858 = vmatprep.mubr.bf16.mxu0 %v2210
    %4859 = vmatmul.mubr.bf16.gmra.mrb[0].mxu0 %v2198
    %v4860 = vpop.f32.mrb[0].mxu0
    %v4861 = vadd.f32 0.0, %v4860
    %v4862 = vpop.f32.mrb[0].mxu0
    %v4863 = vpop.f32.mrb[0].mxu0
    %v4864 = vadd.f32 0.0, %v4863
    %v4865 = vpop.f32.mrb[0].mxu0
    %4866 = vmatprep.mubr.bf16.mxu0 %v2228
    %4867 = vmatmul.mubr.bf16.gmra.mrb[0].mxu0 %v2225
    %v4868 = vpop.f32.mrb[0].mxu0
    %v4869 = vadd.f32 0.0, %v4868
    %v4870 = vpop.f32.mrb[0].mxu0
    %v4871 = vpop.f32.mrb[0].mxu0
    %v4872 = vpop.f32.mrb[0].mxu0
    %4873 = vdwg.mxu0
    %4874 = vmatprep.subr.bf16.mxu0 0
    %4875 = vmatpush1.bf16.msra.mxu0 %v4630
    %4876 = vmatprep.subr.bf16.mxu0 0
    %4877 = vmatpush1.bf16.msra.mxu0 %v4633
    %4878 = vmatprep.subr.bf16.mxu0 0
    %4879 = vmatpush1.bf16.msra.mxu0 %v4636
    %4880 = vmatprep.subr.bf16.mxu0 0
    %4881 = vmatpush1.bf16.msra.mxu0 %v4639
    %4882 = vmatprep.subr.bf16.mxu0 0
    %4883 = vmatpush1.bf16.msra.mxu0 %v4642
    %4884 = vmatprep.subr.bf16.mxu0 0
    %4885 = vmatpush1.bf16.msra.mxu0 %v4645
    %4886 = vmatprep.subr.bf16.mxu0 0
    %4887 = vmatpush1.bf16.msra.mxu0 %v4648
    %4888 = vmatprep.subr.bf16.mxu0 0
    %4889 = vmatpush1.bf16.msra.mxu0 %v4651
    %4890 = vmatprep.subr.bf16.mxu0 0
    %4891 = vmatpush1.bf16.msra.mxu0 0
    %4892 = vmatprep.subr.bf16.mxu0 0
    %4893 = vmatpush1.bf16.msra.mxu0 0
    %4894 = vmatprep.subr.bf16.mxu0 0
    %4895 = vmatpush1.bf16.msra.mxu0 0
    %4896 = vmatprep.subr.bf16.mxu0 0
    %4897 = vmatpush1.bf16.msra.mxu0 0
    %4898 = vmatprep.subr.bf16.mxu0 0
    %4899 = vmatpush1.bf16.msra.mxu0 0
    %4900 = vmatprep.subr.bf16.mxu0 0
    %4901 = vmatpush1.bf16.msra.mxu0 0
    %4902 = vmatprep.subr.bf16.mxu0 0
    %4903 = vmatpush1.bf16.msra.mxu0 0
    %4904 = vmatprep.subr.bf16.mxu0 0
    %4905 = vmatpush1.bf16.msra.mxu0 0
    %4906 = vmatprep.mubr.bf16.mxu0 0
    %4907 = vmatmul.mubr.bf16.gmra.mrb[0].mxu0 %v2222
    %v4908 = vpop.f32.mrb[0].mxu0
    %v4909 = vadd.f32 %v4861, %v4908
    %v4910 = vpop.f32.mrb[0].mxu0
    %v4911 = vpop.f32.mrb[0].mxu0
    %v4912 = vadd.f32 %v4864, %v4911
    %v4913 = vpop.f32.mrb[0].mxu0
    %4914 = vmatprep.mubr.bf16.mxu0 0
    %4915 = vmatmul.mubr.bf16.gmra.mrb[0].mxu0 %v2231
    %v4916 = vpop.f32.mrb[0].mxu0
    %v4917 = vadd.f32 %v4869, %v4916
    %v4918 = vpop.f32.mrb[0].mxu0
    %v4919 = vpop.f32.mrb[0].mxu0
    %v4920 = vpop.f32.mrb[0].mxu0
    %4921 = vdwg.mxu0
    %v5018 = vunpack.c.l.b16 %v4147
    %v5019 = vunpack.c.h.b16 %v4147
    %v5020 = vunpack.c.l.b16 %v4148
    %v5021 = vunpack.c.l.b16 %v4149
    %v5022 = vunpack.c.h.b16 %v4149
    %v5023 = vunpack.c.l.b16 %v4150
    %v5024 = vunpack.c.l.b16 %v4151
    %v5025 = vunpack.c.h.b16 %v4151
    %v5026 = vunpack.c.l.b16 %v4152
    %v5027 = vunpack.c.l.b16 %v4153
    %v5028 = vunpack.c.h.b16 %v4153
    %v5029 = vunpack.c.l.b16 %v4154
    %v5030 = vunpack.c.l.b16 %v4155
    %v5031 = vunpack.c.h.b16 %v4155
    %v5032 = vunpack.c.l.b16 %v4156
    %v5033 = vunpack.c.l.b16 %v4157
    %v5034 = vunpack.c.h.b16 %v4157
    %v5035 = vunpack.c.l.b16 %v4158
    %v5036 = vunpack.c.l.b16 %v4159
    %v5037 = vunpack.c.h.b16 %v4159
    %v5038 = vunpack.c.l.b16 %v4160
    %v5039 = vunpack.c.l.b16 %v4161
    %v5040 = vunpack.c.h.b16 %v4161
    %v5041 = vunpack.c.l.b16 %v4162
    %v5042 = vunpack.c.l.b16 %v4163
    %v5043 = vunpack.c.h.b16 %v4163
    %v5044 = vunpack.c.l.b16 %v4164
    %v5045 = vunpack.c.l.b16 %v4165
    %v5046 = vunpack.c.h.b16 %v4165
    %v5047 = vunpack.c.l.b16 %v4166
    %v5048 = vunpack.c.l.b16 %v4167
    %v5049 = vunpack.c.h.b16 %v4167
    %v5050 = vunpack.c.l.b16 %v4168
    %v5051 = vunpack.c.l.b16 %v4169
    %v5052 = vunpack.c.h.b16 %v4169
    %v5053 = vunpack.c.l.b16 %v4170
    %v5054 = vunpack.c.l.b16 %v4171
    %v5055 = vunpack.c.h.b16 %v4171
    %v5056 = vunpack.c.l.b16 %v4172
    %v5057 = vunpack.c.l.b16 %v4173
    %v5058 = vunpack.c.h.b16 %v4173
    %v5059 = vunpack.c.l.b16 %v4174
    %v5060 = vunpack.c.l.b16 %v4175
    %v5061 = vunpack.c.h.b16 %v4175
    %v5062 = vunpack.c.l.b16 %v4176
    %v5063 = vunpack.c.l.b16 %v4177
    %v5064 = vunpack.c.h.b16 %v4177
    %v5065 = vunpack.c.l.b16 %v4178
    %v5066 = vunpack.c.l.b16 %v4179
    %v5067 = vunpack.c.h.b16 %v4179
    %v5068 = vunpack.c.l.b16 %v4180
    %v5069 = vunpack.c.l.b16 %v4181
    %v5070 = vunpack.c.h.b16 %v4181
    %v5071 = vunpack.c.l.b16 %v4182
    %v5072 = vunpack.c.l.b16 %v4183
    %v5073 = vunpack.c.h.b16 %v4183
    %v5074 = vunpack.c.l.b16 %v4184
    %v5075 = vunpack.c.l.b16 %v4185
    %v5076 = vunpack.c.h.b16 %v4185
    %v5077 = vunpack.c.l.b16 %v4186
    %v5078 = vunpack.c.l.b16 %v4187
    %v5079 = vunpack.c.h.b16 %v4187
    %v5080 = vunpack.c.l.b16 %v4188
    %v5081 = vunpack.c.l.b16 %v4189
    %v5082 = vunpack.c.h.b16 %v4189
    %v5083 = vunpack.c.l.b16 %v4190
    %v5084 = vunpack.c.l.b16 %v4191
    %v5085 = vunpack.c.h.b16 %v4191
    %v5086 = vunpack.c.l.b16 %v4192
    %v5087 = vunpack.c.l.b16 %v4193
    %v5088 = vunpack.c.h.b16 %v4193
    %v5089 = vunpack.c.l.b16 %v4194
    %v5090 = vunpack.c.l.b16 %v4195
    %v5091 = vunpack.c.h.b16 %v4195
    %v5092 = vunpack.c.l.b16 %v4196
    %v5093 = vunpack.c.l.b16 %v4197
    %v5094 = vunpack.c.h.b16 %v4197
    %v5095 = vunpack.c.l.b16 %v4198
    %v5096 = vunpack.c.l.b16 %v4199
    %v5097 = vunpack.c.h.b16 %v4199
    %v5098 = vunpack.c.l.b16 %v4200
    %v5099 = vunpack.c.l.b16 %v4201
    %v5100 = vunpack.c.h.b16 %v4201
    %v5101 = vunpack.c.l.b16 %v4202
    %v5102 = vunpack.c.l.b16 %v4203
    %v5103 = vunpack.c.h.b16 %v4203
    %v5104 = vunpack.c.l.b16 %v4204
    %v5105 = vunpack.c.l.b16 %v4205
    %v5106 = vunpack.c.h.b16 %v4205
    %v5107 = vunpack.c.l.b16 %v4206
    %v5108 = vunpack.c.l.b16 %v4207
    %v5109 = vunpack.c.h.b16 %v4207
    %v5110 = vunpack.c.l.b16 %v4208
    %v5111 = vunpack.c.l.b16 %v4209
    %v5112 = vunpack.c.h.b16 %v4209
    %v5113 = vunpack.c.l.b16 %v4210
    %v5114 = vunpack.c.l.b16 %v4211
    %v5115 = vunpack.c.h.b16 %v4211
    %v5116 = vunpack.c.l.b16 %v4212
    %v5117 = vunpack.c.l.b16 %v4213
    %v5118 = vunpack.c.h.b16 %v4213
    %v5119 = vunpack.c.l.b16 %v4214
    %v5120 = vunpack.c.l.b16 %v4215
    %v5121 = vunpack.c.h.b16 %v4215
    %v5122 = vunpack.c.l.b16 %v4216
    %v5123 = vunpack.c.l.b16 %v4217
    %v5124 = vunpack.c.h.b16 %v4217
    %v5125 = vunpack.c.l.b16 %v4218
    %v5126 = vunpack.c.l.b16 %v4219
    %v5127 = vunpack.c.h.b16 %v4219
    %v5128 = vunpack.c.l.b16 %v4220
    %v5129 = vunpack.c.l.b16 %v4221
    %v5130 = vunpack.c.h.b16 %v4221
    %v5131 = vunpack.c.l.b16 %v4222
    %v5132 = vunpack.c.l.b16 %v4223
    %v5133 = vunpack.c.h.b16 %v4223
    %v5134 = vunpack.c.l.b16 %v4224
    %v5135 = vunpack.c.l.b16 %v4225
    %v5136 = vunpack.c.h.b16 %v4225
    %v5137 = vunpack.c.l.b16 %v4226
    %v5138 = vunpack.c.l.b16 %v4227
    %v5139 = vunpack.c.h.b16 %v4227
    %v5140 = vunpack.c.l.b16 %v4228
    %v5141 = vunpack.c.l.b16 %v4229
    %v5142 = vunpack.c.h.b16 %v4229
    %v5143 = vunpack.c.l.b16 %v4230
    %v5144 = vunpack.c.l.b16 %v4231
    %v5145 = vunpack.c.h.b16 %v4231
    %v5146 = vunpack.c.l.b16 %v4232
    %v5147 = vunpack.c.l.b16 %v4233
    %v5148 = vunpack.c.h.b16 %v4233
    %v5149 = vunpack.c.l.b16 %v4234
    %v5150 = vunpack.c.l.b16 %v4235
    %v5151 = vunpack.c.h.b16 %v4235
    %v5152 = vunpack.c.l.b16 %v4236
    %v5153 = vunpack.c.l.b16 %v4237
    %v5154 = vunpack.c.h.b16 %v4237
    %v5155 = vunpack.c.l.b16 %v4238
    %v5156 = vunpack.c.l.b16 %v4239
    %v5157 = vunpack.c.h.b16 %v4239
    %v5158 = vunpack.c.l.b16 %v4240
    %v5159 = vunpack.c.l.b16 %v4241
    %v5160 = vunpack.c.h.b16 %v4241
    %v5161 = vunpack.c.l.b16 %v4242
    %v5162 = vpack.c.b16 %v5021, %v5018
    %v5163 = vpack.c.b16 %v5022, %v5019
    %v5164 = vpack.c.b16 %v5023, %v5020
    %v5165 = vpack.c.b16 %v5027, %v5024
    %v5166 = vpack.c.b16 %v5028, %v5025
    %v5167 = vpack.c.b16 %v5029, %v5026
    %v5168 = vpack.c.b16 %v5033, %v5030
    %v5169 = vpack.c.b16 %v5034, %v5031
    %v5170 = vpack.c.b16 %v5035, %v5032
    %v5171 = vpack.c.b16 %v5039, %v5036
    %v5172 = vpack.c.b16 %v5040, %v5037
    %v5173 = vpack.c.b16 %v5041, %v5038
    %v5174 = vpack.c.b16 %v5045, %v5042
    %v5175 = vpack.c.b16 %v5046, %v5043
    %v5176 = vpack.c.b16 %v5047, %v5044
    %v5177 = vpack.c.b16 %v5051, %v5048
    %v5178 = vpack.c.b16 %v5052, %v5049
    %v5179 = vpack.c.b16 %v5053, %v5050
    %v5180 = vpack.c.b16 %v5057, %v5054
    %v5181 = vpack.c.b16 %v5058, %v5055
    %v5182 = vpack.c.b16 %v5059, %v5056
    %v5183 = vpack.c.b16 %v5063, %v5060
    %v5184 = vpack.c.b16 %v5064, %v5061
    %v5185 = vpack.c.b16 %v5065, %v5062
    %v5186 = vpack.c.b16 %v5069, %v5066
    %v5187 = vpack.c.b16 %v5070, %v5067
    %v5188 = vpack.c.b16 %v5071, %v5068
    %v5189 = vpack.c.b16 %v5075, %v5072
    %v5190 = vpack.c.b16 %v5076, %v5073
    %v5191 = vpack.c.b16 %v5077, %v5074
    %v5192 = vpack.c.b16 %v5081, %v5078
    %v5193 = vpack.c.b16 %v5082, %v5079
    %v5194 = vpack.c.b16 %v5083, %v5080
    %v5195 = vpack.c.b16 %v5087, %v5084
    %v5196 = vpack.c.b16 %v5088, %v5085
    %v5197 = vpack.c.b16 %v5089, %v5086
    %v5198 = vpack.c.b16 %v5093, %v5090
    %v5199 = vpack.c.b16 %v5094, %v5091
    %v5200 = vpack.c.b16 %v5095, %v5092
    %v5201 = vpack.c.b16 %v5099, %v5096
    %v5202 = vpack.c.b16 %v5100, %v5097
    %v5203 = vpack.c.b16 %v5101, %v5098
    %v5204 = vpack.c.b16 %v5105, %v5102
    %v5205 = vpack.c.b16 %v5106, %v5103
    %v5206 = vpack.c.b16 %v5107, %v5104
    %v5207 = vpack.c.b16 %v5111, %v5108
    %v5208 = vpack.c.b16 %v5112, %v5109
    %v5209 = vpack.c.b16 %v5113, %v5110
    %v5210 = vpack.c.b16 %v5117, %v5114
    %v5211 = vpack.c.b16 %v5118, %v5115
    %v5212 = vpack.c.b16 %v5119, %v5116
    %v5213 = vpack.c.b16 %v5123, %v5120
    %v5214 = vpack.c.b16 %v5124, %v5121
    %v5215 = vpack.c.b16 %v5125, %v5122
    %v5216 = vpack.c.b16 %v5129, %v5126
    %v5217 = vpack.c.b16 %v5130, %v5127
    %v5218 = vpack.c.b16 %v5131, %v5128
    %v5219 = vpack.c.b16 %v5135, %v5132
    %v5220 = vpack.c.b16 %v5136, %v5133
    %v5221 = vpack.c.b16 %v5137, %v5134
    %v5222 = vpack.c.b16 %v5141, %v5138
    %v5223 = vpack.c.b16 %v5142, %v5139
    %v5224 = vpack.c.b16 %v5143, %v5140
    %v5225 = vpack.c.b16 %v5147, %v5144
    %v5226 = vpack.c.b16 %v5148, %v5145
    %v5227 = vpack.c.b16 %v5149, %v5146
    %v5228 = vpack.c.b16 %v5153, %v5150
    %v5229 = vpack.c.b16 %v5154, %v5151
    %v5230 = vpack.c.b16 %v5155, %v5152
    %v5231 = vpack.c.b16 %v5159, %v5156
    %v5232 = vpack.c.b16 %v5160, %v5157
    %v5233 = vpack.c.b16 %v5161, %v5158
    %5306 = vmatprep.subr.bf16.mxu0 %v5163
    %5307 = vmatpush1.bf16.msra.mxu0 %v5162
    %5308 = vmatprep.subr.bf16.mxu0 %v5166
    %5309 = vmatpush1.bf16.msra.mxu0 %v5165
    %5310 = vmatprep.subr.bf16.mxu0 %v5169
    %5311 = vmatpush1.bf16.msra.mxu0 %v5168
    %5312 = vmatprep.subr.bf16.mxu0 %v5172
    %5313 = vmatpush1.bf16.msra.mxu0 %v5171
    %5314 = vmatprep.subr.bf16.mxu0 %v5175
    %5315 = vmatpush1.bf16.msra.mxu0 %v5174
    %5316 = vmatprep.subr.bf16.mxu0 %v5178
    %5317 = vmatpush1.bf16.msra.mxu0 %v5177
    %5318 = vmatprep.subr.bf16.mxu0 %v5181
    %5319 = vmatpush1.bf16.msra.mxu0 %v5180
    %5320 = vmatprep.subr.bf16.mxu0 %v5184
    %5321 = vmatpush1.bf16.msra.mxu0 %v5183
    %5322 = vmatprep.subr.bf16.mxu0 %v5187
    %5323 = vmatpush1.bf16.msra.mxu0 %v5186
    %5324 = vmatprep.subr.bf16.mxu0 %v5190
    %5325 = vmatpush1.bf16.msra.mxu0 %v5189
    %5326 = vmatprep.subr.bf16.mxu0 %v5193
    %5327 = vmatpush1.bf16.msra.mxu0 %v5192
    %5328 = vmatprep.subr.bf16.mxu0 %v5196
    %5329 = vmatpush1.bf16.msra.mxu0 %v5195
    %5330 = vmatprep.subr.bf16.mxu0 %v5199
    %5331 = vmatpush1.bf16.msra.mxu0 %v5198
    %5332 = vmatprep.subr.bf16.mxu0 %v5202
    %5333 = vmatpush1.bf16.msra.mxu0 %v5201
    %5334 = vmatprep.subr.bf16.mxu0 %v5205
    %5335 = vmatpush1.bf16.msra.mxu0 %v5204
    %5336 = vmatprep.subr.bf16.mxu0 %v5208
    %5337 = vmatpush1.bf16.msra.mxu0 %v5207
    %5338 = vmatprep.mubr.bf16.mxu0 %v1964
    %5339 = vmatmul.mubr.bf16.gmra.mrb[0].mxu0 %v1963
    %v5340 = vpop.f32.mrb[0].mxu0
    %v5341 = vadd.f32 %v4810, %v5340
    %v5342 = vpop.f32.mrb[0].mxu0
    %v5343 = vadd.f32 %v4812, %v5342
    %v5344 = vpop.f32.mrb[0].mxu0
    %v5345 = vadd.f32 %v4814, %v5344
    %v5346 = vpop.f32.mrb[0].mxu0
    %v5347 = vadd.f32 %v4816, %v5346
    %5348 = vmatprep.mubr.bf16.mxu0 %v1967
    %5349 = vmatmul.mubr.bf16.gmra.mrb[0].mxu0 %v1966
    %v5350 = vpop.f32.mrb[0].mxu0
    %v5351 = vadd.f32 %v4820, %v5350
    %v5352 = vpop.f32.mrb[0].mxu0
    %v5353 = vadd.f32 %v4822, %v5352
    %v5354 = vpop.f32.mrb[0].mxu0
    %v5355 = vpop.f32.mrb[0].mxu0
    %5356 = vdwg.mxu0
    %5357 = vmatprep.subr.bf16.mxu0 %v5211
    %5358 = vmatpush1.bf16.msra.mxu0 %v5210
    %5359 = vmatprep.subr.bf16.mxu0 %v5214
    %5360 = vmatpush1.bf16.msra.mxu0 %v5213
    %5361 = vmatprep.subr.bf16.mxu0 %v5217
    %5362 = vmatpush1.bf16.msra.mxu0 %v5216
    %5363 = vmatprep.subr.bf16.mxu0 %v5220
    %5364 = vmatpush1.bf16.msra.mxu0 %v5219
    %5365 = vmatprep.subr.bf16.mxu0 %v5223
    %5366 = vmatpush1.bf16.msra.mxu0 %v5222
    %5367 = vmatprep.subr.bf16.mxu0 %v5226
    %5368 = vmatpush1.bf16.msra.mxu0 %v5225
    %5369 = vmatprep.subr.bf16.mxu0 %v5229
    %5370 = vmatpush1.bf16.msra.mxu0 %v5228
    %5371 = vmatprep.subr.bf16.mxu0 %v5232
    %5372 = vmatpush1.bf16.msra.mxu0 %v5231
    %5373 = vmatprep.subr.bf16.mxu0 0
    %5374 = vmatpush1.bf16.msra.mxu0 0
    %5375 = vmatprep.subr.bf16.mxu0 0
    %5376 = vmatpush1.bf16.msra.mxu0 0
    %5377 = vmatprep.subr.bf16.mxu0 0
    %5378 = vmatpush1.bf16.msra.mxu0 0
    %5379 = vmatprep.subr.bf16.mxu0 0
    %5380 = vmatpush1.bf16.msra.mxu0 0
    %5381 = vmatprep.subr.bf16.mxu0 0
    %5382 = vmatpush1.bf16.msra.mxu0 0
    %5383 = vmatprep.subr.bf16.mxu0 0
    %5384 = vmatpush1.bf16.msra.mxu0 0
    %5385 = vmatprep.subr.bf16.mxu0 0
    %5386 = vmatpush1.bf16.msra.mxu0 0
    %5387 = vmatprep.subr.bf16.mxu0 0
    %5388 = vmatpush1.bf16.msra.mxu0 0
    %5389 = vmatprep.mubr.bf16.mxu0 0
    %5390 = vmatmul.mubr.bf16.gmra.mrb[0].mxu0 %v1965
    %v5391 = vpop.f32.mrb[0].mxu0
    %v5392 = vadd.f32 %v5341, %v5391
    %v5393 = vpop.f32.mrb[0].mxu0
    %v5394 = vadd.f32 %v5343, %v5393
    %v5395 = vpop.f32.mrb[0].mxu0
    %v5396 = vadd.f32 %v5345, %v5395
    %v5397 = vpop.f32.mrb[0].mxu0
    %v5398 = vadd.f32 %v5347, %v5397
    %5399 = vmatprep.mubr.bf16.mxu0 0
    %5400 = vmatmul.mubr.bf16.gmra.mrb[0].mxu0 %v1968
    %v5401 = vpop.f32.mrb[0].mxu0
    %v5402 = vadd.f32 %v5351, %v5401
    %v5403 = vpop.f32.mrb[0].mxu0
    %v5404 = vadd.f32 %v5353, %v5403
    %v5405 = vpop.f32.mrb[0].mxu0
    %v5406 = vpop.f32.mrb[0].mxu0
    %5407 = vdwg.mxu0
    %5408 = vmatprep.subr.bf16.mxu0 0
    %5409 = vmatpush1.bf16.msra.mxu0 %v5164
    %5410 = vmatprep.subr.bf16.mxu0 0
    %5411 = vmatpush1.bf16.msra.mxu0 %v5167
    %5412 = vmatprep.subr.bf16.mxu0 0
    %5413 = vmatpush1.bf16.msra.mxu0 %v5170
    %5414 = vmatprep.subr.bf16.mxu0 0
    %5415 = vmatpush1.bf16.msra.mxu0 %v5173
    %5416 = vmatprep.subr.bf16.mxu0 0
    %5417 = vmatpush1.bf16.msra.mxu0 %v5176
    %5418 = vmatprep.subr.bf16.mxu0 0
    %5419 = vmatpush1.bf16.msra.mxu0 %v5179
    %5420 = vmatprep.subr.bf16.mxu0 0
    %5421 = vmatpush1.bf16.msra.mxu0 %v5182
    %5422 = vmatprep.subr.bf16.mxu0 0
    %5423 = vmatpush1.bf16.msra.mxu0 %v5185
    %5424 = vmatprep.subr.bf16.mxu0 0
    %5425 = vmatpush1.bf16.msra.mxu0 %v5188
    %5426 = vmatprep.subr.bf16.mxu0 0
    %5427 = vmatpush1.bf16.msra.mxu0 %v5191
    %5428 = vmatprep.subr.bf16.mxu0 0
    %5429 = vmatpush1.bf16.msra.mxu0 %v5194
    %5430 = vmatprep.subr.bf16.mxu0 0
    %5431 = vmatpush1.bf16.msra.mxu0 %v5197
    %5432 = vmatprep.subr.bf16.mxu0 0
    %5433 = vmatpush1.bf16.msra.mxu0 %v5200
    %5434 = vmatprep.subr.bf16.mxu0 0
    %5435 = vmatpush1.bf16.msra.mxu0 %v5203
    %5436 = vmatprep.subr.bf16.mxu0 0
    %5437 = vmatpush1.bf16.msra.mxu0 %v5206
    %5438 = vmatprep.subr.bf16.mxu0 0
    %5439 = vmatpush1.bf16.msra.mxu0 %v5209
    %5440 = vmatprep.mubr.bf16.mxu0 %v1964
    %5441 = vmatmul.mubr.bf16.gmra.mrb[0].mxu0 %v1963
    %v5442 = vpop.f32.mrb[0].mxu0
    %v5443 = vadd.f32 %v4909, %v5442
    %v5444 = vpop.f32.mrb[0].mxu0
    %v5445 = vpop.f32.mrb[0].mxu0
    %v5446 = vadd.f32 %v4912, %v5445
    %v5447 = vpop.f32.mrb[0].mxu0
    %5448 = vmatprep.mubr.bf16.mxu0 %v1967
    %5449 = vmatmul.mubr.bf16.gmra.mrb[0].mxu0 %v1966
    %v5450 = vpop.f32.mrb[0].mxu0
    %v5451 = vadd.f32 %v4917, %v5450
    %v5452 = vpop.f32.mrb[0].mxu0
    %v5453 = vpop.f32.mrb[0].mxu0
    %v5454 = vpop.f32.mrb[0].mxu0
    %5455 = vdwg.mxu0
    %5456 = vmatprep.subr.bf16.mxu0 0
    %5457 = vmatpush1.bf16.msra.mxu0 %v5212
    %5458 = vmatprep.subr.bf16.mxu0 0
    %5459 = vmatpush1.bf16.msra.mxu0 %v5215
    %5460 = vmatprep.subr.bf16.mxu0 0
    %5461 = vmatpush1.bf16.msra.mxu0 %v5218
    %5462 = vmatprep.subr.bf16.mxu0 0
    %5463 = vmatpush1.bf16.msra.mxu0 %v5221
    %5464 = vmatprep.subr.bf16.mxu0 0
    %5465 = vmatpush1.bf16.msra.mxu0 %v5224
    %5466 = vmatprep.subr.bf16.mxu0 0
    %5467 = vmatpush1.bf16.msra.mxu0 %v5227
    %5468 = vmatprep.subr.bf16.mxu0 0
    %5469 = vmatpush1.bf16.msra.mxu0 %v5230
    %5470 = vmatprep.subr.bf16.mxu0 0
    %5471 = vmatpush1.bf16.msra.mxu0 %v5233
    %5472 = vmatprep.subr.bf16.mxu0 0
    %5473 = vmatpush1.bf16.msra.mxu0 0
    %5474 = vmatprep.subr.bf16.mxu0 0
    %5475 = vmatpush1.bf16.msra.mxu0 0
    %5476 = vmatprep.subr.bf16.mxu0 0
    %5477 = vmatpush1.bf16.msra.mxu0 0
    %5478 = vmatprep.subr.bf16.mxu0 0
    %5479 = vmatpush1.bf16.msra.mxu0 0
    %5480 = vmatprep.subr.bf16.mxu0 0
    %5481 = vmatpush1.bf16.msra.mxu0 0
    %5482 = vmatprep.subr.bf16.mxu0 0
    %5483 = vmatpush1.bf16.msra.mxu0 0
    %5484 = vmatprep.subr.bf16.mxu0 0
    %5485 = vmatpush1.bf16.msra.mxu0 0
    %5486 = vmatprep.subr.bf16.mxu0 0
    %5487 = vmatpush1.bf16.msra.mxu0 0
    %5488 = vmatprep.mubr.bf16.mxu0 0
    %5489 = vmatmul.mubr.bf16.gmra.mrb[0].mxu0 %v1965
    %v5490 = vpop.f32.mrb[0].mxu0
    %v5491 = vadd.f32 %v5443, %v5490
    %v5492 = vpop.f32.mrb[0].mxu0
    %v5493 = vpop.f32.mrb[0].mxu0
    %v5494 = vadd.f32 %v5446, %v5493
    %v5495 = vpop.f32.mrb[0].mxu0
    %5496 = vmatprep.mubr.bf16.mxu0 0
    %5497 = vmatmul.mubr.bf16.gmra.mrb[0].mxu0 %v1968
    %v5498 = vpop.f32.mrb[0].mxu0
    %v5499 = vadd.f32 %v5451, %v5498
    %v5500 = vpop.f32.mrb[0].mxu0
    %v5501 = vpop.f32.mrb[0].mxu0
    %v5502 = vpop.f32.mrb[0].mxu0
    %5503 = vdwg.mxu0
    %s5504 = scalar_lea.vmem %s2, 2880
    %v5505 = vld [vmem:[%s5504] sm:$0xff]
    %v5506 = vld [vmem:[%s5504 + $0x8] sm:$0xf]
    %v5507 = vld [vmem:[%s5504 + $0xc] sm:$0xff]
    %v5508 = vld [vmem:[%s5504 + $0x14] sm:$0xf]
    %v5509 = vld [vmem:[%s5504 + $0x18] sm:$0xff]
    %v5510 = vld [vmem:[%s5504 + $0x20] sm:$0xf]
    %v5511 = vld [vmem:[%s5504 + $0x24] sm:$0xff]
    %v5512 = vld [vmem:[%s5504 + $0x2c] sm:$0xf]
    %v5513 = vld [vmem:[%s5504 + $0x30] sm:$0xff]
    %v5514 = vld [vmem:[%s5504 + $0x38] sm:$0xf]
    %v5515 = vld [vmem:[%s5504 + $0x3c] sm:$0xff]
    %v5516 = vld [vmem:[%s5504 + $0x44] sm:$0xf]
    %v5517 = vld [vmem:[%s5504 + $0x48] sm:$0xff]
    %v5518 = vld [vmem:[%s5504 + $0x50] sm:$0xf]
    %v5519 = vld [vmem:[%s5504 + $0x54] sm:$0xff]
    %v5520 = vld [vmem:[%s5504 + $0x5c] sm:$0xf]
    %v5521 = vld [vmem:[%s5504 + $0x60] sm:$0xff]
    %v5522 = vld [vmem:[%s5504 + $0x68] sm:$0xf]
    %v5523 = vld [vmem:[%s5504 + $0x6c] sm:$0xff]
    %v5524 = vld [vmem:[%s5504 + $0x74] sm:$0xf]
    %v5525 = vld [vmem:[%s5504 + $0x78] sm:$0xff]
    %v5526 = vld [vmem:[%s5504 + $0x80] sm:$0xf]
    %v5527 = vld [vmem:[%s5504 + $0x84] sm:$0xff]
    %v5528 = vld [vmem:[%s5504 + $0x8c] sm:$0xf]
    %v5529 = vld [vmem:[%s5504 + $0x90] sm:$0xff]
    %v5530 = vld [vmem:[%s5504 + $0x98] sm:$0xf]
    %v5531 = vld [vmem:[%s5504 + $0x9c] sm:$0xff]
    %v5532 = vld [vmem:[%s5504 + $0xa4] sm:$0xf]
    %v5533 = vld [vmem:[%s5504 + $0xa8] sm:$0xff]
    %v5534 = vld [vmem:[%s5504 + $0xb0] sm:$0xf]
    %v5535 = vld [vmem:[%s5504 + $0xb4] sm:$0xff]
    %v5536 = vld [vmem:[%s5504 + $0xbc] sm:$0xf]
    %v5537 = vld [vmem:[%s5504 + $0xc0] sm:$0xff]
    %v5538 = vld [vmem:[%s5504 + $0xc8] sm:$0xf]
    %v5539 = vld [vmem:[%s5504 + $0xcc] sm:$0xff]
    %v5540 = vld [vmem:[%s5504 + $0xd4] sm:$0xf]
    %v5541 = vld [vmem:[%s5504 + $0xd8] sm:$0xff]
    %v5542 = vld [vmem:[%s5504 + $0xe0] sm:$0xf]
    %v5543 = vld [vmem:[%s5504 + $0xe4] sm:$0xff]
    %v5544 = vld [vmem:[%s5504 + $0xec] sm:$0xf]
    %v5545 = vld [vmem:[%s5504 + $0xf0] sm:$0xff]
    %v5546 = vld [vmem:[%s5504 + $0xf8] sm:$0xf]
    %v5547 = vld [vmem:[%s5504 + $0xfc] sm:$0xff]
    %v5548 = vld [vmem:[%s5504 + $0x104] sm:$0xf]
    %v5549 = vld [vmem:[%s5504 + $0x108] sm:$0xff]
    %v5550 = vld [vmem:[%s5504 + $0x110] sm:$0xf]
    %v5551 = vld [vmem:[%s5504 + $0x114] sm:$0xff]
    %v5552 = vld [vmem:[%s5504 + $0x11c] sm:$0xf]
    %v5553 = vld [vmem:[%s5504 + $0x120] sm:$0xff]
    %v5554 = vld [vmem:[%s5504 + $0x128] sm:$0xf]
    %v5555 = vld [vmem:[%s5504 + $0x12c] sm:$0xff]
    %v5556 = vld [vmem:[%s5504 + $0x134] sm:$0xf]
    %v5557 = vld [vmem:[%s5504 + $0x138] sm:$0xff]
    %v5558 = vld [vmem:[%s5504 + $0x140] sm:$0xf]
    %v5559 = vld [vmem:[%s5504 + $0x144] sm:$0xff]
    %v5560 = vld [vmem:[%s5504 + $0x14c] sm:$0xf]
    %v5561 = vld [vmem:[%s5504 + $0x150] sm:$0xff]
    %v5562 = vld [vmem:[%s5504 + $0x158] sm:$0xf]
    %v5563 = vld [vmem:[%s5504 + $0x15c] sm:$0xff]
    %v5564 = vld [vmem:[%s5504 + $0x164] sm:$0xf]
    %v5565 = vld [vmem:[%s5504 + $0x168] sm:$0xff]
    %v5566 = vld [vmem:[%s5504 + $0x170] sm:$0xf]
    %v5567 = vld [vmem:[%s5504 + $0x174] sm:$0xff]
    %v5568 = vld [vmem:[%s5504 + $0x17c] sm:$0xf]
    %v5569 = vld [vmem:[%s5504 + $0x180] sm:$0xff]
    %v5570 = vld [vmem:[%s5504 + $0x188] sm:$0xf]
    %v5571 = vld [vmem:[%s5504 + $0x18c] sm:$0xff]
    %v5572 = vld [vmem:[%s5504 + $0x194] sm:$0xf]
    %v5573 = vld [vmem:[%s5504 + $0x198] sm:$0xff]
    %v5574 = vld [vmem:[%s5504 + $0x1a0] sm:$0xf]
    %v5575 = vld [vmem:[%s5504 + $0x1a4] sm:$0xff]
    %v5576 = vld [vmem:[%s5504 + $0x1ac] sm:$0xf]
    %v5577 = vld [vmem:[%s5504 + $0x1b0] sm:$0xff]
    %v5578 = vld [vmem:[%s5504 + $0x1b8] sm:$0xf]
    %v5579 = vld [vmem:[%s5504 + $0x1bc] sm:$0xff]
    %v5580 = vld [vmem:[%s5504 + $0x1c4] sm:$0xf]
    %v5581 = vld [vmem:[%s5504 + $0x1c8] sm:$0xff]
    %v5582 = vld [vmem:[%s5504 + $0x1d0] sm:$0xf]
    %v5583 = vld [vmem:[%s5504 + $0x1d4] sm:$0xff]
    %v5584 = vld [vmem:[%s5504 + $0x1dc] sm:$0xf]
    %v5585 = vld [vmem:[%s5504 + $0x1e0] sm:$0xff]
    %v5586 = vld [vmem:[%s5504 + $0x1e8] sm:$0xf]
    %v5587 = vld [vmem:[%s5504 + $0x1ec] sm:$0xff]
    %v5588 = vld [vmem:[%s5504 + $0x1f4] sm:$0xf]
    %v5589 = vld [vmem:[%s5504 + $0x1f8] sm:$0xff]
    %v5590 = vld [vmem:[%s5504 + $0x200] sm:$0xf]
    %v5591 = vld [vmem:[%s5504 + $0x204] sm:$0xff]
    %v5592 = vld [vmem:[%s5504 + $0x20c] sm:$0xf]
    %v5593 = vld [vmem:[%s5504 + $0x210] sm:$0xff]
    %v5594 = vld [vmem:[%s5504 + $0x218] sm:$0xf]
    %v5595 = vld [vmem:[%s5504 + $0x21c] sm:$0xff]
    %v5596 = vld [vmem:[%s5504 + $0x224] sm:$0xf]
    %v5597 = vld [vmem:[%s5504 + $0x228] sm:$0xff]
    %v5598 = vld [vmem:[%s5504 + $0x230] sm:$0xf]
    %v5599 = vld [vmem:[%s5504 + $0x234] sm:$0xff]
    %v5600 = vld [vmem:[%s5504 + $0x23c] sm:$0xf]
    %v5697 = vunpack.c.l.b16 %v5505
    %v5698 = vunpack.c.h.b16 %v5505
    %v5699 = vunpack.c.l.b16 %v5506
    %v5700 = vunpack.c.l.b16 %v5507
    %v5701 = vunpack.c.h.b16 %v5507
    %v5702 = vunpack.c.l.b16 %v5508
    %v5703 = vunpack.c.l.b16 %v5509
    %v5704 = vunpack.c.h.b16 %v5509
    %v5705 = vunpack.c.l.b16 %v5510
    %v5706 = vunpack.c.l.b16 %v5511
    %v5707 = vunpack.c.h.b16 %v5511
    %v5708 = vunpack.c.l.b16 %v5512
    %v5709 = vunpack.c.l.b16 %v5513
    %v5710 = vunpack.c.h.b16 %v5513
    %v5711 = vunpack.c.l.b16 %v5514
    %v5712 = vunpack.c.l.b16 %v5515
    %v5713 = vunpack.c.h.b16 %v5515
    %v5714 = vunpack.c.l.b16 %v5516
    %v5715 = vunpack.c.l.b16 %v5517
    %v5716 = vunpack.c.h.b16 %v5517
    %v5717 = vunpack.c.l.b16 %v5518
    %v5718 = vunpack.c.l.b16 %v5519
    %v5719 = vunpack.c.h.b16 %v5519
    %v5720 = vunpack.c.l.b16 %v5520
    %v5721 = vunpack.c.l.b16 %v5521
    %v5722 = vunpack.c.h.b16 %v5521
    %v5723 = vunpack.c.l.b16 %v5522
    %v5724 = vunpack.c.l.b16 %v5523
    %v5725 = vunpack.c.h.b16 %v5523
    %v5726 = vunpack.c.l.b16 %v5524
    %v5727 = vunpack.c.l.b16 %v5525
    %v5728 = vunpack.c.h.b16 %v5525
    %v5729 = vunpack.c.l.b16 %v5526
    %v5730 = vunpack.c.l.b16 %v5527
    %v5731 = vunpack.c.h.b16 %v5527
    %v5732 = vunpack.c.l.b16 %v5528
    %v5733 = vunpack.c.l.b16 %v5529
    %v5734 = vunpack.c.h.b16 %v5529
    %v5735 = vunpack.c.l.b16 %v5530
    %v5736 = vunpack.c.l.b16 %v5531
    %v5737 = vunpack.c.h.b16 %v5531
    %v5738 = vunpack.c.l.b16 %v5532
    %v5739 = vunpack.c.l.b16 %v5533
    %v5740 = vunpack.c.h.b16 %v5533
    %v5741 = vunpack.c.l.b16 %v5534
    %v5742 = vunpack.c.l.b16 %v5535
    %v5743 = vunpack.c.h.b16 %v5535
    %v5744 = vunpack.c.l.b16 %v5536
    %v5745 = vunpack.c.l.b16 %v5537
    %v5746 = vunpack.c.h.b16 %v5537
    %v5747 = vunpack.c.l.b16 %v5538
    %v5748 = vunpack.c.l.b16 %v5539
    %v5749 = vunpack.c.h.b16 %v5539
    %v5750 = vunpack.c.l.b16 %v5540
    %v5751 = vunpack.c.l.b16 %v5541
    %v5752 = vunpack.c.h.b16 %v5541
    %v5753 = vunpack.c.l.b16 %v5542
    %v5754 = vunpack.c.l.b16 %v5543
    %v5755 = vunpack.c.h.b16 %v5543
    %v5756 = vunpack.c.l.b16 %v5544
    %v5757 = vunpack.c.l.b16 %v5545
    %v5758 = vunpack.c.h.b16 %v5545
    %v5759 = vunpack.c.l.b16 %v5546
    %v5760 = vunpack.c.l.b16 %v5547
    %v5761 = vunpack.c.h.b16 %v5547
    %v5762 = vunpack.c.l.b16 %v5548
    %v5763 = vunpack.c.l.b16 %v5549
    %v5764 = vunpack.c.h.b16 %v5549
    %v5765 = vunpack.c.l.b16 %v5550
    %v5766 = vunpack.c.l.b16 %v5551
    %v5767 = vunpack.c.h.b16 %v5551
    %v5768 = vunpack.c.l.b16 %v5552
    %v5769 = vunpack.c.l.b16 %v5553
    %v5770 = vunpack.c.h.b16 %v5553
    %v5771 = vunpack.c.l.b16 %v5554
    %v5772 = vunpack.c.l.b16 %v5555
    %v5773 = vunpack.c.h.b16 %v5555
    %v5774 = vunpack.c.l.b16 %v5556
    %v5775 = vunpack.c.l.b16 %v5557
    %v5776 = vunpack.c.h.b16 %v5557
    %v5777 = vunpack.c.l.b16 %v5558
    %v5778 = vunpack.c.l.b16 %v5559
    %v5779 = vunpack.c.h.b16 %v5559
    %v5780 = vunpack.c.l.b16 %v5560
    %v5781 = vunpack.c.l.b16 %v5561
    %v5782 = vunpack.c.h.b16 %v5561
    %v5783 = vunpack.c.l.b16 %v5562
    %v5784 = vunpack.c.l.b16 %v5563
    %v5785 = vunpack.c.h.b16 %v5563
    %v5786 = vunpack.c.l.b16 %v5564
    %v5787 = vunpack.c.l.b16 %v5565
    %v5788 = vunpack.c.h.b16 %v5565
    %v5789 = vunpack.c.l.b16 %v5566
    %v5790 = vunpack.c.l.b16 %v5567
    %v5791 = vunpack.c.h.b16 %v5567
    %v5792 = vunpack.c.l.b16 %v5568
    %v5793 = vunpack.c.l.b16 %v5569
    %v5794 = vunpack.c.h.b16 %v5569
    %v5795 = vunpack.c.l.b16 %v5570
    %v5796 = vunpack.c.l.b16 %v5571
    %v5797 = vunpack.c.h.b16 %v5571
    %v5798 = vunpack.c.l.b16 %v5572
    %v5799 = vunpack.c.l.b16 %v5573
    %v5800 = vunpack.c.h.b16 %v5573
    %v5801 = vunpack.c.l.b16 %v5574
    %v5802 = vunpack.c.l.b16 %v5575
    %v5803 = vunpack.c.h.b16 %v5575
    %v5804 = vunpack.c.l.b16 %v5576
    %v5805 = vunpack.c.l.b16 %v5577
    %v5806 = vunpack.c.h.b16 %v5577
    %v5807 = vunpack.c.l.b16 %v5578
    %v5808 = vunpack.c.l.b16 %v5579
    %v5809 = vunpack.c.h.b16 %v5579
    %v5810 = vunpack.c.l.b16 %v5580
    %v5811 = vunpack.c.l.b16 %v5581
    %v5812 = vunpack.c.h.b16 %v5581
    %v5813 = vunpack.c.l.b16 %v5582
    %v5814 = vunpack.c.l.b16 %v5583
    %v5815 = vunpack.c.h.b16 %v5583
    %v5816 = vunpack.c.l.b16 %v5584
    %v5817 = vunpack.c.l.b16 %v5585
    %v5818 = vunpack.c.h.b16 %v5585
    %v5819 = vunpack.c.l.b16 %v5586
    %v5820 = vunpack.c.l.b16 %v5587
    %v5821 = vunpack.c.h.b16 %v5587
    %v5822 = vunpack.c.l.b16 %v5588
    %v5823 = vunpack.c.l.b16 %v5589
    %v5824 = vunpack.c.h.b16 %v5589
    %v5825 = vunpack.c.l.b16 %v5590
    %v5826 = vunpack.c.l.b16 %v5591
    %v5827 = vunpack.c.h.b16 %v5591
    %v5828 = vunpack.c.l.b16 %v5592
    %v5829 = vunpack.c.l.b16 %v5593
    %v5830 = vunpack.c.h.b16 %v5593
    %v5831 = vunpack.c.l.b16 %v5594
    %v5832 = vunpack.c.l.b16 %v5595
    %v5833 = vunpack.c.h.b16 %v5595
    %v5834 = vunpack.c.l.b16 %v5596
    %v5835 = vunpack.c.l.b16 %v5597
    %v5836 = vunpack.c.h.b16 %v5597
    %v5837 = vunpack.c.l.b16 %v5598
    %v5838 = vunpack.c.l.b16 %v5599
    %v5839 = vunpack.c.h.b16 %v5599
    %v5840 = vunpack.c.l.b16 %v5600
    %v5841 = vpack.c.b16 %v5700, %v5697
    %v5842 = vpack.c.b16 %v5701, %v5698
    %v5843 = vpack.c.b16 %v5702, %v5699
    %v5844 = vpack.c.b16 %v5706, %v5703
    %v5845 = vpack.c.b16 %v5707, %v5704
    %v5846 = vpack.c.b16 %v5708, %v5705
    %v5847 = vpack.c.b16 %v5712, %v5709
    %v5848 = vpack.c.b16 %v5713, %v5710
    %v5849 = vpack.c.b16 %v5714, %v5711
    %v5850 = vpack.c.b16 %v5718, %v5715
    %v5851 = vpack.c.b16 %v5719, %v5716
    %v5852 = vpack.c.b16 %v5720, %v5717
    %v5853 = vpack.c.b16 %v5724, %v5721
    %v5854 = vpack.c.b16 %v5725, %v5722
    %v5855 = vpack.c.b16 %v5726, %v5723
    %v5856 = vpack.c.b16 %v5730, %v5727
    %v5857 = vpack.c.b16 %v5731, %v5728
    %v5858 = vpack.c.b16 %v5732, %v5729
    %v5859 = vpack.c.b16 %v5736, %v5733
    %v5860 = vpack.c.b16 %v5737, %v5734
    %v5861 = vpack.c.b16 %v5738, %v5735
    %v5862 = vpack.c.b16 %v5742, %v5739
    %v5863 = vpack.c.b16 %v5743, %v5740
    %v5864 = vpack.c.b16 %v5744, %v5741
    %v5865 = vpack.c.b16 %v5748, %v5745
    %v5866 = vpack.c.b16 %v5749, %v5746
    %v5867 = vpack.c.b16 %v5750, %v5747
    %v5868 = vpack.c.b16 %v5754, %v5751
    %v5869 = vpack.c.b16 %v5755, %v5752
    %v5870 = vpack.c.b16 %v5756, %v5753
    %v5871 = vpack.c.b16 %v5760, %v5757
    %v5872 = vpack.c.b16 %v5761, %v5758
    %v5873 = vpack.c.b16 %v5762, %v5759
    %v5874 = vpack.c.b16 %v5766, %v5763
    %v5875 = vpack.c.b16 %v5767, %v5764
    %v5876 = vpack.c.b16 %v5768, %v5765
    %v5877 = vpack.c.b16 %v5772, %v5769
    %v5878 = vpack.c.b16 %v5773, %v5770
    %v5879 = vpack.c.b16 %v5774, %v5771
    %v5880 = vpack.c.b16 %v5778, %v5775
    %v5881 = vpack.c.b16 %v5779, %v5776
    %v5882 = vpack.c.b16 %v5780, %v5777
    %v5883 = vpack.c.b16 %v5784, %v5781
    %v5884 = vpack.c.b16 %v5785, %v5782
    %v5885 = vpack.c.b16 %v5786, %v5783
    %v5886 = vpack.c.b16 %v5790, %v5787
    %v5887 = vpack.c.b16 %v5791, %v5788
    %v5888 = vpack.c.b16 %v5792, %v5789
    %v5889 = vpack.c.b16 %v5796, %v5793
    %v5890 = vpack.c.b16 %v5797, %v5794
    %v5891 = vpack.c.b16 %v5798, %v5795
    %v5892 = vpack.c.b16 %v5802, %v5799
    %v5893 = vpack.c.b16 %v5803, %v5800
    %v5894 = vpack.c.b16 %v5804, %v5801
    %v5895 = vpack.c.b16 %v5808, %v5805
    %v5896 = vpack.c.b16 %v5809, %v5806
    %v5897 = vpack.c.b16 %v5810, %v5807
    %v5898 = vpack.c.b16 %v5814, %v5811
    %v5899 = vpack.c.b16 %v5815, %v5812
    %v5900 = vpack.c.b16 %v5816, %v5813
    %v5901 = vpack.c.b16 %v5820, %v5817
    %v5902 = vpack.c.b16 %v5821, %v5818
    %v5903 = vpack.c.b16 %v5822, %v5819
    %v5904 = vpack.c.b16 %v5826, %v5823
    %v5905 = vpack.c.b16 %v5827, %v5824
    %v5906 = vpack.c.b16 %v5828, %v5825
    %v5907 = vpack.c.b16 %v5832, %v5829
    %v5908 = vpack.c.b16 %v5833, %v5830
    %v5909 = vpack.c.b16 %v5834, %v5831
    %v5910 = vpack.c.b16 %v5838, %v5835
    %v5911 = vpack.c.b16 %v5839, %v5836
    %v5912 = vpack.c.b16 %v5840, %v5837
    %5985 = vmatprep.subr.bf16.mxu0 %v5842
    %5986 = vmatpush1.bf16.msra.mxu0 %v5841
    %5987 = vmatprep.subr.bf16.mxu0 %v5845
    %5988 = vmatpush1.bf16.msra.mxu0 %v5844
    %5989 = vmatprep.subr.bf16.mxu0 %v5848
    %5990 = vmatpush1.bf16.msra.mxu0 %v5847
    %5991 = vmatprep.subr.bf16.mxu0 %v5851
    %5992 = vmatpush1.bf16.msra.mxu0 %v5850
    %5993 = vmatprep.subr.bf16.mxu0 %v5854
    %5994 = vmatpush1.bf16.msra.mxu0 %v5853
    %5995 = vmatprep.subr.bf16.mxu0 %v5857
    %5996 = vmatpush1.bf16.msra.mxu0 %v5856
    %5997 = vmatprep.subr.bf16.mxu0 %v5860
    %5998 = vmatpush1.bf16.msra.mxu0 %v5859
    %5999 = vmatprep.subr.bf16.mxu0 %v5863
    %6000 = vmatpush1.bf16.msra.mxu0 %v5862
    %6001 = vmatprep.subr.bf16.mxu0 %v5866
    %6002 = vmatpush1.bf16.msra.mxu0 %v5865
    %6003 = vmatprep.subr.bf16.mxu0 %v5869
    %6004 = vmatpush1.bf16.msra.mxu0 %v5868
    %6005 = vmatprep.subr.bf16.mxu0 %v5872
    %6006 = vmatpush1.bf16.msra.mxu0 %v5871
    %6007 = vmatprep.subr.bf16.mxu0 %v5875
    %6008 = vmatpush1.bf16.msra.mxu0 %v5874
    %6009 = vmatprep.subr.bf16.mxu0 %v5878
    %6010 = vmatpush1.bf16.msra.mxu0 %v5877
    %6011 = vmatprep.subr.bf16.mxu0 %v5881
    %6012 = vmatpush1.bf16.msra.mxu0 %v5880
    %6013 = vmatprep.subr.bf16.mxu0 %v5884
    %6014 = vmatpush1.bf16.msra.mxu0 %v5883
    %6015 = vmatprep.subr.bf16.mxu0 %v5887
    %6016 = vmatpush1.bf16.msra.mxu0 %v5886
    %6017 = vmatprep.mubr.bf16.mxu0 %v3511
    %6018 = vmatmul.mubr.bf16.gmra.mrb[0].mxu0 %v3508
    %v6019 = vpop.f32.mrb[0].mxu0
    %v6020 = vadd.f32 0.0, %v6019
    %v6021 = vpop.f32.mrb[0].mxu0
    %v6022 = vadd.f32 0.0, %v6021
    %v6023 = vpop.f32.mrb[0].mxu0
    %v6024 = vadd.f32 0.0, %v6023
    %v6025 = vpop.f32.mrb[0].mxu0
    %v6026 = vadd.f32 0.0, %v6025
    %6027 = vmatprep.mubr.bf16.mxu0 %v3510
    %6028 = vmatmul.mubr.bf16.gmra.mrb[0].mxu0 %v3507
    %v6029 = vpop.f32.mrb[0].mxu0
    %v6030 = vadd.f32 0.0, %v6029
    %v6031 = vpop.f32.mrb[0].mxu0
    %v6032 = vadd.f32 0.0, %v6031
    %v6033 = vpop.f32.mrb[0].mxu0
    %v6034 = vpop.f32.mrb[0].mxu0
    %6035 = vdwg.mxu0
    %6036 = vmatprep.subr.bf16.mxu0 %v5890
    %6037 = vmatpush1.bf16.msra.mxu0 %v5889
    %6038 = vmatprep.subr.bf16.mxu0 %v5893
    %6039 = vmatpush1.bf16.msra.mxu0 %v5892
    %6040 = vmatprep.subr.bf16.mxu0 %v5896
    %6041 = vmatpush1.bf16.msra.mxu0 %v5895
    %6042 = vmatprep.subr.bf16.mxu0 %v5899
    %6043 = vmatpush1.bf16.msra.mxu0 %v5898
    %6044 = vmatprep.subr.bf16.mxu0 %v5902
    %6045 = vmatpush1.bf16.msra.mxu0 %v5901
    %6046 = vmatprep.subr.bf16.mxu0 %v5905
    %6047 = vmatpush1.bf16.msra.mxu0 %v5904
    %6048 = vmatprep.subr.bf16.mxu0 %v5908
    %6049 = vmatpush1.bf16.msra.mxu0 %v5907
    %6050 = vmatprep.subr.bf16.mxu0 %v5911
    %6051 = vmatpush1.bf16.msra.mxu0 %v5910
    %6052 = vmatprep.subr.bf16.mxu0 0
    %6053 = vmatpush1.bf16.msra.mxu0 0
    %6054 = vmatprep.subr.bf16.mxu0 0
    %6055 = vmatpush1.bf16.msra.mxu0 0
    %6056 = vmatprep.subr.bf16.mxu0 0
    %6057 = vmatpush1.bf16.msra.mxu0 0
    %6058 = vmatprep.subr.bf16.mxu0 0
    %6059 = vmatpush1.bf16.msra.mxu0 0
    %6060 = vmatprep.subr.bf16.mxu0 0
    %6061 = vmatpush1.bf16.msra.mxu0 0
    %6062 = vmatprep.subr.bf16.mxu0 0
    %6063 = vmatpush1.bf16.msra.mxu0 0
    %6064 = vmatprep.subr.bf16.mxu0 0
    %6065 = vmatpush1.bf16.msra.mxu0 0
    %6066 = vmatprep.subr.bf16.mxu0 0
    %6067 = vmatpush1.bf16.msra.mxu0 0
    %6068 = vmatprep.mubr.bf16.mxu0 0
    %6069 = vmatmul.mubr.bf16.gmra.mrb[0].mxu0 %v3514
    %v6070 = vpop.f32.mrb[0].mxu0
    %v6071 = vadd.f32 %v6020, %v6070
    %v6072 = vpop.f32.mrb[0].mxu0
    %v6073 = vadd.f32 %v6022, %v6072
    %v6074 = vpop.f32.mrb[0].mxu0
    %v6075 = vadd.f32 %v6024, %v6074
    %v6076 = vpop.f32.mrb[0].mxu0
    %v6077 = vadd.f32 %v6026, %v6076
    %6078 = vmatprep.mubr.bf16.mxu0 0
    %6079 = vmatmul.mubr.bf16.gmra.mrb[0].mxu0 %v3513
    %v6080 = vpop.f32.mrb[0].mxu0
    %v6081 = vadd.f32 %v6030, %v6080
    %v6082 = vpop.f32.mrb[0].mxu0
    %v6083 = vadd.f32 %v6032, %v6082
    %v6084 = vpop.f32.mrb[0].mxu0
    %v6085 = vpop.f32.mrb[0].mxu0
    %6086 = vdwg.mxu0
    %6087 = vmatprep.subr.bf16.mxu0 0
    %6088 = vmatpush1.bf16.msra.mxu0 %v5843
    %6089 = vmatprep.subr.bf16.mxu0 0
    %6090 = vmatpush1.bf16.msra.mxu0 %v5846
    %6091 = vmatprep.subr.bf16.mxu0 0
    %6092 = vmatpush1.bf16.msra.mxu0 %v5849
    %6093 = vmatprep.subr.bf16.mxu0 0
    %6094 = vmatpush1.bf16.msra.mxu0 %v5852
    %6095 = vmatprep.subr.bf16.mxu0 0
    %6096 = vmatpush1.bf16.msra.mxu0 %v5855
    %6097 = vmatprep.subr.bf16.mxu0 0
    %6098 = vmatpush1.bf16.msra.mxu0 %v5858
    %6099 = vmatprep.subr.bf16.mxu0 0
    %6100 = vmatpush1.bf16.msra.mxu0 %v5861
    %6101 = vmatprep.subr.bf16.mxu0 0
    %6102 = vmatpush1.bf16.msra.mxu0 %v5864
    %6103 = vmatprep.subr.bf16.mxu0 0
    %6104 = vmatpush1.bf16.msra.mxu0 %v5867
    %6105 = vmatprep.subr.bf16.mxu0 0
    %6106 = vmatpush1.bf16.msra.mxu0 %v5870
    %6107 = vmatprep.subr.bf16.mxu0 0
    %6108 = vmatpush1.bf16.msra.mxu0 %v5873
    %6109 = vmatprep.subr.bf16.mxu0 0
    %6110 = vmatpush1.bf16.msra.mxu0 %v5876
    %6111 = vmatprep.subr.bf16.mxu0 0
    %6112 = vmatpush1.bf16.msra.mxu0 %v5879
    %6113 = vmatprep.subr.bf16.mxu0 0
    %6114 = vmatpush1.bf16.msra.mxu0 %v5882
    %6115 = vmatprep.subr.bf16.mxu0 0
    %6116 = vmatpush1.bf16.msra.mxu0 %v5885
    %6117 = vmatprep.subr.bf16.mxu0 0
    %6118 = vmatpush1.bf16.msra.mxu0 %v5888
    %6119 = vmatprep.mubr.bf16.mxu0 %v3511
    %6120 = vmatmul.mubr.bf16.gmra.mrb[0].mxu0 %v3508
    %v6121 = vpop.f32.mrb[0].mxu0
    %v6122 = vadd.f32 0.0, %v6121
    %v6123 = vpop.f32.mrb[0].mxu0
    %v6124 = vpop.f32.mrb[0].mxu0
    %v6125 = vadd.f32 0.0, %v6124
    %v6126 = vpop.f32.mrb[0].mxu0
    %6127 = vmatprep.mubr.bf16.mxu0 %v3510
    %6128 = vmatmul.mubr.bf16.gmra.mrb[0].mxu0 %v3507
    %v6129 = vpop.f32.mrb[0].mxu0
    %v6130 = vadd.f32 0.0, %v6129
    %v6131 = vpop.f32.mrb[0].mxu0
    %v6132 = vpop.f32.mrb[0].mxu0
    %v6133 = vpop.f32.mrb[0].mxu0
    %6134 = vdwg.mxu0
    %6135 = vmatprep.subr.bf16.mxu0 0
    %6136 = vmatpush1.bf16.msra.mxu0 %v5891
    %6137 = vmatprep.subr.bf16.mxu0 0
    %6138 = vmatpush1.bf16.msra.mxu0 %v5894
    %6139 = vmatprep.subr.bf16.mxu0 0
    %6140 = vmatpush1.bf16.msra.mxu0 %v5897
    %6141 = vmatprep.subr.bf16.mxu0 0
    %6142 = vmatpush1.bf16.msra.mxu0 %v5900
    %6143 = vmatprep.subr.bf16.mxu0 0
    %6144 = vmatpush1.bf16.msra.mxu0 %v5903
    %6145 = vmatprep.subr.bf16.mxu0 0
    %6146 = vmatpush1.bf16.msra.mxu0 %v5906
    %6147 = vmatprep.subr.bf16.mxu0 0
    %6148 = vmatpush1.bf16.msra.mxu0 %v5909
    %6149 = vmatprep.subr.bf16.mxu0 0
    %6150 = vmatpush1.bf16.msra.mxu0 %v5912
    %6151 = vmatprep.subr.bf16.mxu0 0
    %6152 = vmatpush1.bf16.msra.mxu0 0
    %6153 = vmatprep.subr.bf16.mxu0 0
    %6154 = vmatpush1.bf16.msra.mxu0 0
    %6155 = vmatprep.subr.bf16.mxu0 0
    %6156 = vmatpush1.bf16.msra.mxu0 0
    %6157 = vmatprep.subr.bf16.mxu0 0
    %6158 = vmatpush1.bf16.msra.mxu0 0
    %6159 = vmatprep.subr.bf16.mxu0 0
    %6160 = vmatpush1.bf16.msra.mxu0 0
    %6161 = vmatprep.subr.bf16.mxu0 0
    %6162 = vmatpush1.bf16.msra.mxu0 0
    %6163 = vmatprep.subr.bf16.mxu0 0
    %6164 = vmatpush1.bf16.msra.mxu0 0
    %6165 = vmatprep.subr.bf16.mxu0 0
    %6166 = vmatpush1.bf16.msra.mxu0 0
    %6167 = vmatprep.mubr.bf16.mxu0 0
    %6168 = vmatmul.mubr.bf16.gmra.mrb[0].mxu0 %v3514
    %v6169 = vpop.f32.mrb[0].mxu0
    %v6170 = vadd.f32 %v6122, %v6169
    %v6171 = vpop.f32.mrb[0].mxu0
    %v6172 = vpop.f32.mrb[0].mxu0
    %v6173 = vadd.f32 %v6125, %v6172
    %v6174 = vpop.f32.mrb[0].mxu0
    %6175 = vmatprep.mubr.bf16.mxu0 0
    %6176 = vmatmul.mubr.bf16.gmra.mrb[0].mxu0 %v3513
    %v6177 = vpop.f32.mrb[0].mxu0
    %v6178 = vadd.f32 %v6130, %v6177
    %v6179 = vpop.f32.mrb[0].mxu0
    %v6180 = vpop.f32.mrb[0].mxu0
    %v6181 = vpop.f32.mrb[0].mxu0
    %6182 = vdwg.mxu0
    %v6183 = vadd.f32 %v5392, %v6071
    %v6184 = vadd.f32 %v5394, %v6073
    %v6185 = vadd.f32 %v5491, %v6170
    %v6186 = vadd.f32 %v5396, %v6075
    %v6187 = vadd.f32 %v5398, %v6077
    %v6188 = vadd.f32 %v5494, %v6173
    %v6189 = vadd.f32 %v5402, %v6081
    %v6190 = vadd.f32 %v5404, %v6083
    %v6191 = vadd.f32 %v5499, %v6178
    %v6192 = vadd.f32 %v6183, %v4116
    %v6193 = vadd.f32 %v6184, %v4120
    %v6194 = vadd.f32 %v6185, %v4124
    %v6195 = vadd.f32 %v6186, %v4116
    %v6196 = vadd.f32 %v6187, %v4120
    %v6197 = vadd.f32 %v6188, %v4124
    %v6198 = vadd.f32 %v6189, %v4116
    %v6199 = vadd.f32 %v6190, %v4120
    %v6200 = vadd.f32 %v6191, %v4124
    %v6201 = vmax.f32 %v6192, 0.0
    %v6202 = vmax.f32 %v6193, 0.0
    %v6203 = vmax.f32 %v6194, 0.0
    %v6204 = vmax.f32 %v6195, 0.0
    %v6205 = vmax.f32 %v6196, 0.0
    %v6206 = vmax.f32 %v6197, 0.0
    %v6207 = vmax.f32 %v6198, 0.0
    %v6208 = vmax.f32 %v6199, 0.0
    %v6209 = vmax.f32 %v6200, 0.0
    %v6210 = vmax.f32 %v4137, %v6201
    %v6211 = vmax.f32 %v4138, %v6202
    %v6212 = vmax.f32 %v4139, %v6203
    %v6213 = vmax.f32 %v4140, %v6204
    %v6214 = vmax.f32 %v4141, %v6205
    %v6215 = vmax.f32 %v4142, %v6206
    %v6216 = vmax.f32 %v4143, %v6207
    %v6217 = vmax.f32 %v4144, %v6208
    %v6218 = vmax.f32 %v4145, %v6209
    %v6219 = vpack.c.bf16 %v6213, %v6210
    %v6220 = vpack.c.bf16 %v6214, %v6211
    %v6221 = vpack.c.bf16 %v6215, %v6212
    %v6222 = vpack.c.bf16 %v6216, %v6216
    %v6223 = vpack.c.bf16 %v6217, %v6217
    %v6224 = vpack.c.bf16 %v6218, %v6218
    %v6225 = vld [vmem:[%s5] sm:$0xf]
    %v6226 = vld [vmem:[%s5 + $0x4] sm:$0x7]
    %v6229 = vunpack.c.l.b16 %v6225
    %v6230 = vunpack.c.l.b16 %v6226
    %v6231 = vpack.c.b16 %v6230, %v6229
    %vm6232 = vcmask 179200
    %v6234 = vsel %vm6232, %v6231, 0
    %vm6236 = vcmask 1042432
    %v6238 = vsel %vm6236, %v6222, 0
    %v6241 = vsel %vm6236, %v6223, 0
    %v6244 = vsel %vm6236, %v6224, 0
    %6246 = vmatprep.subr.bf16.mxu0 %v6220
    %6247 = vmatpush1.bf16.msra.mxu0 %v6219
    %6248 = vmatprep.subr.bf16.mxu0 %v6241
    %6249 = vmatpush1.bf16.msra.mxu0 %v6238
    %6250 = vmatprep.subr.bf16.mxu0 0
    %6251 = vmatpush1.bf16.msra.mxu0 0
    %6252 = vmatprep.subr.bf16.mxu0 0
    %6253 = vmatpush1.bf16.msra.mxu0 0
    %6254 = vmatprep.subr.bf16.mxu0 0
    %6255 = vmatpush1.bf16.msra.mxu0 0
    %6256 = vmatprep.subr.bf16.mxu0 0
    %6257 = vmatpush1.bf16.msra.mxu0 0
    %6258 = vmatprep.subr.bf16.mxu0 0
    %6259 = vmatpush1.bf16.msra.mxu0 0
    %6260 = vmatprep.subr.bf16.mxu0 0
    %6261 = vmatpush1.bf16.msra.mxu0 0
    %6262 = vmatprep.subr.bf16.mxu0 0
    %6263 = vmatpush1.bf16.msra.mxu0 0
    %6264 = vmatprep.subr.bf16.mxu0 0
    %6265 = vmatpush1.bf16.msra.mxu0 0
    %6266 = vmatprep.subr.bf16.mxu0 0
    %6267 = vmatpush1.bf16.msra.mxu0 0
    %6268 = vmatprep.subr.bf16.mxu0 0
    %6269 = vmatpush1.bf16.msra.mxu0 0
    %6270 = vmatprep.subr.bf16.mxu0 0
    %6271 = vmatpush1.bf16.msra.mxu0 0
    %6272 = vmatprep.subr.bf16.mxu0 0
    %6273 = vmatpush1.bf16.msra.mxu0 0
    %6274 = vmatprep.subr.bf16.mxu0 0
    %6275 = vmatpush1.bf16.msra.mxu0 0
    %6276 = vmatprep.subr.bf16.mxu0 0
    %6277 = vmatpush1.bf16.msra.mxu0 0
    %6278 = vmatprep.mubr.bf16.mxu0 0
    %6279 = vmatmul.mubr.bf16.gmra.mrb[0].mxu0 %v6234
    %v6280 = vpop.f32.mrb[0].mxu0
    %v6281 = vadd.f32 0.0, %v6280
    %v6282 = vpop.f32.mrb[0].mxu0
    %v6283 = vadd.f32 0.0, %v6282
    %v6284 = vpop.f32.mrb[0].mxu0
    %v6285 = vadd.f32 0.0, %v6284
    %v6286 = vpop.f32.mrb[0].mxu0
    %v6287 = vadd.f32 0.0, %v6286
    %6288 = vdwg.mxu0
    %6289 = vmatprep.subr.bf16.mxu0 0
    %6290 = vmatpush1.bf16.msra.mxu0 %v6221
    %6291 = vmatprep.subr.bf16.mxu0 0
    %6292 = vmatpush1.bf16.msra.mxu0 %v6244
    %6293 = vmatprep.subr.bf16.mxu0 0
    %6294 = vmatpush1.bf16.msra.mxu0 0
    %6295 = vmatprep.subr.bf16.mxu0 0
    %6296 = vmatpush1.bf16.msra.mxu0 0
    %6297 = vmatprep.subr.bf16.mxu0 0
    %6298 = vmatpush1.bf16.msra.mxu0 0
    %6299 = vmatprep.subr.bf16.mxu0 0
    %6300 = vmatpush1.bf16.msra.mxu0 0
    %6301 = vmatprep.subr.bf16.mxu0 0
    %6302 = vmatpush1.bf16.msra.mxu0 0
    %6303 = vmatprep.subr.bf16.mxu0 0
    %6304 = vmatpush1.bf16.msra.mxu0 0
    %6305 = vmatprep.subr.bf16.mxu0 0
    %6306 = vmatpush1.bf16.msra.mxu0 0
    %6307 = vmatprep.subr.bf16.mxu0 0
    %6308 = vmatpush1.bf16.msra.mxu0 0
    %6309 = vmatprep.subr.bf16.mxu0 0
    %6310 = vmatpush1.bf16.msra.mxu0 0
    %6311 = vmatprep.subr.bf16.mxu0 0
    %6312 = vmatpush1.bf16.msra.mxu0 0
    %6313 = vmatprep.subr.bf16.mxu0 0
    %6314 = vmatpush1.bf16.msra.mxu0 0
    %6315 = vmatprep.subr.bf16.mxu0 0
    %6316 = vmatpush1.bf16.msra.mxu0 0
    %6317 = vmatprep.subr.bf16.mxu0 0
    %6318 = vmatpush1.bf16.msra.mxu0 0
    %6319 = vmatprep.subr.bf16.mxu0 0
    %6320 = vmatpush1.bf16.msra.mxu0 0
    %6321 = vmatprep.mubr.bf16.mxu0 0
    %6322 = vmatmul.mubr.bf16.gmra.mrb[0].mxu0 %v6234
    %v6323 = vpop.f32.mrb[0].mxu0
    %v6324 = vadd.f32 0.0, %v6323
    %v6325 = vpop.f32.mrb[0].mxu0
    %v6326 = vpop.f32.mrb[0].mxu0
    %v6327 = vadd.f32 0.0, %v6326
    %v6328 = vpop.f32.mrb[0].mxu0
    %6329 = vdwg.mxu0
    %s6330 = scalar_lea.vmem %s5, 8
    %v6331 = vld [vmem:[%s6330] sm:$0xf]
    %v6332 = vld [vmem:[%s6330 + $0x4] sm:$0x7]
    %v6335 = vunpack.c.l.b16 %v6331
    %v6336 = vunpack.c.l.b16 %v6332
    %v6337 = vpack.c.b16 %v6336, %v6335
    %v6339 = vsel %vm6232, %v6337, 0
    %6341 = vmatprep.subr.bf16.mxu0 %v6220
    %6342 = vmatpush1.bf16.msra.mxu0 %v6219
    %6343 = vmatprep.subr.bf16.mxu0 %v6241
    %6344 = vmatpush1.bf16.msra.mxu0 %v6238
    %6345 = vmatprep.subr.bf16.mxu0 0
    %6346 = vmatpush1.bf16.msra.mxu0 0
    %6347 = vmatprep.subr.bf16.mxu0 0
    %6348 = vmatpush1.bf16.msra.mxu0 0
    %6349 = vmatprep.subr.bf16.mxu0 0
    %6350 = vmatpush1.bf16.msra.mxu0 0
    %6351 = vmatprep.subr.bf16.mxu0 0
    %6352 = vmatpush1.bf16.msra.mxu0 0
    %6353 = vmatprep.subr.bf16.mxu0 0
    %6354 = vmatpush1.bf16.msra.mxu0 0
    %6355 = vmatprep.subr.bf16.mxu0 0
    %6356 = vmatpush1.bf16.msra.mxu0 0
    %6357 = vmatprep.subr.bf16.mxu0 0
    %6358 = vmatpush1.bf16.msra.mxu0 0
    %6359 = vmatprep.subr.bf16.mxu0 0
    %6360 = vmatpush1.bf16.msra.mxu0 0
    %6361 = vmatprep.subr.bf16.mxu0 0
    %6362 = vmatpush1.bf16.msra.mxu0 0
    %6363 = vmatprep.subr.bf16.mxu0 0
    %6364 = vmatpush1.bf16.msra.mxu0 0
    %6365 = vmatprep.subr.bf16.mxu0 0
    %6366 = vmatpush1.bf16.msra.mxu0 0
    %6367 = vmatprep.subr.bf16.mxu0 0
    %6368 = vmatpush1.bf16.msra.mxu0 0
    %6369 = vmatprep.subr.bf16.mxu0 0
    %6370 = vmatpush1.bf16.msra.mxu0 0
    %6371 = vmatprep.subr.bf16.mxu0 0
    %6372 = vmatpush1.bf16.msra.mxu0 0
    %6373 = vmatprep.mubr.bf16.mxu0 0
    %6374 = vmatmul.mubr.bf16.gmra.mrb[0].mxu0 %v6339
    %v6375 = vpop.f32.mrb[0].mxu0
    %v6376 = vadd.f32 0.0, %v6375
    %v6377 = vpop.f32.mrb[0].mxu0
    %v6378 = vadd.f32 0.0, %v6377
    %v6379 = vpop.f32.mrb[0].mxu0
    %v6380 = vadd.f32 0.0, %v6379
    %v6381 = vpop.f32.mrb[0].mxu0
    %v6382 = vadd.f32 0.0, %v6381
    %6383 = vdwg.mxu0
    %6384 = vmatprep.subr.bf16.mxu0 0
    %6385 = vmatpush1.bf16.msra.mxu0 %v6221
    %6386 = vmatprep.subr.bf16.mxu0 0
    %6387 = vmatpush1.bf16.msra.mxu0 %v6244
    %6388 = vmatprep.subr.bf16.mxu0 0
    %6389 = vmatpush1.bf16.msra.mxu0 0
    %6390 = vmatprep.subr.bf16.mxu0 0
    %6391 = vmatpush1.bf16.msra.mxu0 0
    %6392 = vmatprep.subr.bf16.mxu0 0
    %6393 = vmatpush1.bf16.msra.mxu0 0
    %6394 = vmatprep.subr.bf16.mxu0 0
    %6395 = vmatpush1.bf16.msra.mxu0 0
    %6396 = vmatprep.subr.bf16.mxu0 0
    %6397 = vmatpush1.bf16.msra.mxu0 0
    %6398 = vmatprep.subr.bf16.mxu0 0
    %6399 = vmatpush1.bf16.msra.mxu0 0
    %6400 = vmatprep.subr.bf16.mxu0 0
    %6401 = vmatpush1.bf16.msra.mxu0 0
    %6402 = vmatprep.subr.bf16.mxu0 0
    %6403 = vmatpush1.bf16.msra.mxu0 0
    %6404 = vmatprep.subr.bf16.mxu0 0
    %6405 = vmatpush1.bf16.msra.mxu0 0
    %6406 = vmatprep.subr.bf16.mxu0 0
    %6407 = vmatpush1.bf16.msra.mxu0 0
    %6408 = vmatprep.subr.bf16.mxu0 0
    %6409 = vmatpush1.bf16.msra.mxu0 0
    %6410 = vmatprep.subr.bf16.mxu0 0
    %6411 = vmatpush1.bf16.msra.mxu0 0
    %6412 = vmatprep.subr.bf16.mxu0 0
    %6413 = vmatpush1.bf16.msra.mxu0 0
    %6414 = vmatprep.subr.bf16.mxu0 0
    %6415 = vmatpush1.bf16.msra.mxu0 0
    %6416 = vmatprep.mubr.bf16.mxu0 0
    %6417 = vmatmul.mubr.bf16.gmra.mrb[0].mxu0 %v6339
    %v6418 = vpop.f32.mrb[0].mxu0
    %v6419 = vadd.f32 0.0, %v6418
    %v6420 = vpop.f32.mrb[0].mxu0
    %v6421 = vpop.f32.mrb[0].mxu0
    %v6422 = vadd.f32 0.0, %v6421
    %v6423 = vpop.f32.mrb[0].mxu0
    %6424 = vdwg.mxu0
    %v6425 = vmax.f32 %v6281, %v6376
    %v6426 = vmax.f32 %v6283, %v6378
    %v6427 = vmax.f32 %v6324, %v6419
    %v6428 = vmax.f32 %v6285, %v6380
    %v6429 = vmax.f32 %v6287, %v6382
    %v6430 = vmax.f32 %v6327, %v6422
    %6437 = vrot.lane.b32.xlu0 %v6425, 64
    %v6438 = vpop.permute.xlu0 %6437
    %6439 = vrot.lane.b32.xlu0 %v6426, 64
    %v6440 = vpop.permute.xlu0 %6439
    %6441 = vrot.lane.b32.xlu0 %v6427, 64
    %v6442 = vpop.permute.xlu0 %6441
    %6443 = vrot.lane.b32.xlu0 %v6428, 64
    %v6444 = vpop.permute.xlu0 %6443
    %6445 = vrot.lane.b32.xlu0 %v6429, 64
    %v6446 = vpop.permute.xlu0 %6445
    %6447 = vrot.lane.b32.xlu0 %v6430, 64
    %v6448 = vpop.permute.xlu0 %6447
    %v6449 = vsel %vm75, %v6438, %v6440
    %v6450 = vsel %vm75, %v6440, %v6442
    %v6451 = vsel %vm75, %v6444, %v6446
    %v6452 = vsel %vm75, %v6446, %v6448
    %vm6459 = vcmask 1048064
    %6460 = vst.msk [vmem:[#allocation4] sm:$0xff] %vm6459, %v6438
    %6461 = vst [vmem:[#allocation4 + $0x8] sm:$0xff] %v6449
    %6462 = vst [vmem:[#allocation4 + $0x10] sm:$0xff] %v6450
    %vm6463 = vcmask 1046016
    %6464 = vst.msk [vmem:[#allocation4 + $0x20] sm:$0x3f] %vm6463, %v6444
    %6465 = vst [vmem:[#allocation4 + $0x28] sm:$0x3f] %v6451
    %6466 = vst [vmem:[#allocation4 + $0x30] sm:$0x3f] %v6452
    %v6467 = vld [vmem:[#allocation4] sm:$0xff]
    %v6468 = vld [vmem:[#allocation4 + $0x8] sm:$0xff]
    %v6469 = vld [vmem:[#allocation4 + $0x10] sm:$0xff]
    %v6470 = vld [vmem:[#allocation4 + $0x18] sm:$0xff]
    %v6471 = vld [vmem:[#allocation4 + $0x20] sm:$0xf]
    %v6472 = vld [vmem:[#allocation4 + $0x28] sm:$0xf]
    %v6473 = vld [vmem:[#allocation4 + $0x30] sm:$0xf]
    %v6474 = vld [vmem:[#allocation4 + $0x38] sm:$0xf]
    %v6475 = vpack.c.bf16 %v6471, %v6467
    %v6476 = vpack.c.bf16 %v6472, %v6468
    %v6477 = vpack.c.bf16 %v6473, %v6469
    %v6478 = vpack.c.bf16 %v6474, %v6470
    %v6479 = vld [vmem:[%s3] sm:$0xff]
    %v6480 = vld [vmem:[%s3 + $0x8] sm:$0xf]
    %v6481 = vld [vmem:[%s3 + $0xc] sm:$0xff]
    %v6482 = vld [vmem:[%s3 + $0x14] sm:$0xf]
    %v6483 = vld [vmem:[%s3 + $0x18] sm:$0xff]
    %v6484 = vld [vmem:[%s3 + $0x20] sm:$0xf]
    %v6485 = vld [vmem:[%s3 + $0x24] sm:$0xff]
    %v6486 = vld [vmem:[%s3 + $0x2c] sm:$0xf]
    %v6487 = vld [vmem:[%s3 + $0x30] sm:$0xff]
    %v6488 = vld [vmem:[%s3 + $0x38] sm:$0xf]
    %v6489 = vld [vmem:[%s3 + $0x3c] sm:$0xff]
    %v6490 = vld [vmem:[%s3 + $0x44] sm:$0xf]
    %v6491 = vld [vmem:[%s3 + $0x48] sm:$0xff]
    %v6492 = vld [vmem:[%s3 + $0x50] sm:$0xf]
    %v6493 = vld [vmem:[%s3 + $0x54] sm:$0xff]
    %v6494 = vld [vmem:[%s3 + $0x5c] sm:$0xf]
    %v6495 = vld [vmem:[%s3 + $0x60] sm:$0xff]
    %v6496 = vld [vmem:[%s3 + $0x68] sm:$0xf]
    %v6497 = vld [vmem:[%s3 + $0x6c] sm:$0xff]
    %v6498 = vld [vmem:[%s3 + $0x74] sm:$0xf]
    %v6499 = vld [vmem:[%s3 + $0x78] sm:$0xff]
    %v6500 = vld [vmem:[%s3 + $0x80] sm:$0xf]
    %v6501 = vld [vmem:[%s3 + $0x84] sm:$0xff]
    %v6502 = vld [vmem:[%s3 + $0x8c] sm:$0xf]
    %v6503 = vld [vmem:[%s3 + $0x90] sm:$0xff]
    %v6504 = vld [vmem:[%s3 + $0x98] sm:$0xf]
    %v6505 = vld [vmem:[%s3 + $0x9c] sm:$0xff]
    %v6506 = vld [vmem:[%s3 + $0xa4] sm:$0xf]
    %v6507 = vld [vmem:[%s3 + $0xa8] sm:$0xff]
    %v6508 = vld [vmem:[%s3 + $0xb0] sm:$0xf]
    %v6509 = vld [vmem:[%s3 + $0xb4] sm:$0xff]
    %v6510 = vld [vmem:[%s3 + $0xbc] sm:$0xf]
    %v6511 = vld [vmem:[%s3 + $0xc0] sm:$0xff]
    %v6512 = vld [vmem:[%s3 + $0xc8] sm:$0xf]
    %v6513 = vld [vmem:[%s3 + $0xcc] sm:$0xff]
    %v6514 = vld [vmem:[%s3 + $0xd4] sm:$0xf]
    %v6515 = vld [vmem:[%s3 + $0xd8] sm:$0xff]
    %v6516 = vld [vmem:[%s3 + $0xe0] sm:$0xf]
    %v6517 = vld [vmem:[%s3 + $0xe4] sm:$0xff]
    %v6518 = vld [vmem:[%s3 + $0xec] sm:$0xf]
    %v6519 = vld [vmem:[%s3 + $0xf0] sm:$0xff]
    %v6520 = vld [vmem:[%s3 + $0xf8] sm:$0xf]
    %v6521 = vld [vmem:[%s3 + $0xfc] sm:$0xff]
    %v6522 = vld [vmem:[%s3 + $0x104] sm:$0xf]
    %v6523 = vld [vmem:[%s3 + $0x108] sm:$0xff]
    %v6524 = vld [vmem:[%s3 + $0x110] sm:$0xf]
    %v6525 = vld [vmem:[%s3 + $0x114] sm:$0xff]
    %v6526 = vld [vmem:[%s3 + $0x11c] sm:$0xf]
    %v6527 = vld [vmem:[%s3 + $0x120] sm:$0xff]
    %v6528 = vld [vmem:[%s3 + $0x128] sm:$0xf]
    %v6529 = vld [vmem:[%s3 + $0x12c] sm:$0xff]
    %v6530 = vld [vmem:[%s3 + $0x134] sm:$0xf]
    %v6531 = vld [vmem:[%s3 + $0x138] sm:$0xff]
    %v6532 = vld [vmem:[%s3 + $0x140] sm:$0xf]
    %v6533 = vld [vmem:[%s3 + $0x144] sm:$0xff]
    %v6534 = vld [vmem:[%s3 + $0x14c] sm:$0xf]
    %v6535 = vld [vmem:[%s3 + $0x150] sm:$0xff]
    %v6536 = vld [vmem:[%s3 + $0x158] sm:$0xf]
    %v6537 = vld [vmem:[%s3 + $0x15c] sm:$0xff]
    %v6538 = vld [vmem:[%s3 + $0x164] sm:$0xf]
    %v6539 = vld [vmem:[%s3 + $0x168] sm:$0xff]
    %v6540 = vld [vmem:[%s3 + $0x170] sm:$0xf]
    %v6541 = vld [vmem:[%s3 + $0x174] sm:$0xff]
    %v6542 = vld [vmem:[%s3 + $0x17c] sm:$0xf]
    %v6543 = vld [vmem:[%s3 + $0x180] sm:$0xff]
    %v6544 = vld [vmem:[%s3 + $0x188] sm:$0xf]
    %v6545 = vld [vmem:[%s3 + $0x18c] sm:$0xff]
    %v6546 = vld [vmem:[%s3 + $0x194] sm:$0xf]
    %v6547 = vld [vmem:[%s3 + $0x198] sm:$0xff]
    %v6548 = vld [vmem:[%s3 + $0x1a0] sm:$0xf]
    %v6549 = vld [vmem:[%s3 + $0x1a4] sm:$0xff]
    %v6550 = vld [vmem:[%s3 + $0x1ac] sm:$0xf]
    %v6551 = vld [vmem:[%s3 + $0x1b0] sm:$0xff]
    %v6552 = vld [vmem:[%s3 + $0x1b8] sm:$0xf]
    %v6553 = vld [vmem:[%s3 + $0x1bc] sm:$0xff]
    %v6554 = vld [vmem:[%s3 + $0x1c4] sm:$0xf]
    %v6555 = vld [vmem:[%s3 + $0x1c8] sm:$0xff]
    %v6556 = vld [vmem:[%s3 + $0x1d0] sm:$0xf]
    %v6557 = vld [vmem:[%s3 + $0x1d4] sm:$0xff]
    %v6558 = vld [vmem:[%s3 + $0x1dc] sm:$0xf]
    %v6559 = vld [vmem:[%s3 + $0x1e0] sm:$0xff]
    %v6560 = vld [vmem:[%s3 + $0x1e8] sm:$0xf]
    %v6561 = vld [vmem:[%s3 + $0x1ec] sm:$0xff]
    %v6562 = vld [vmem:[%s3 + $0x1f4] sm:$0xf]
    %v6563 = vld [vmem:[%s3 + $0x1f8] sm:$0xff]
    %v6564 = vld [vmem:[%s3 + $0x200] sm:$0xf]
    %v6565 = vld [vmem:[%s3 + $0x204] sm:$0xff]
    %v6566 = vld [vmem:[%s3 + $0x20c] sm:$0xf]
    %v6567 = vld [vmem:[%s3 + $0x210] sm:$0xff]
    %v6568 = vld [vmem:[%s3 + $0x218] sm:$0xf]
    %v6569 = vld [vmem:[%s3 + $0x21c] sm:$0xff]
    %v6570 = vld [vmem:[%s3 + $0x224] sm:$0xf]
    %v6571 = vld [vmem:[%s3 + $0x228] sm:$0xff]
    %v6572 = vld [vmem:[%s3 + $0x230] sm:$0xf]
    %v6573 = vld [vmem:[%s3 + $0x234] sm:$0xff]
    %v6574 = vld [vmem:[%s3 + $0x23c] sm:$0xf]
    %v6575 = vld [vmem:[%s3 + $0x240] sm:$0xff]
    %v6576 = vld [vmem:[%s3 + $0x248] sm:$0xf]
    %v6577 = vld [vmem:[%s3 + $0x24c] sm:$0xff]
    %v6578 = vld [vmem:[%s3 + $0x254] sm:$0xf]
    %v6579 = vld [vmem:[%s3 + $0x258] sm:$0xff]
    %v6580 = vld [vmem:[%s3 + $0x260] sm:$0xf]
    %v6581 = vld [vmem:[%s3 + $0x264] sm:$0xff]
    %v6582 = vld [vmem:[%s3 + $0x26c] sm:$0xf]
    %v6583 = vld [vmem:[%s3 + $0x270] sm:$0xff]
    %v6584 = vld [vmem:[%s3 + $0x278] sm:$0xf]
    %v6585 = vld [vmem:[%s3 + $0x27c] sm:$0xff]
    %v6586 = vld [vmem:[%s3 + $0x284] sm:$0xf]
    %v6587 = vld [vmem:[%s3 + $0x288] sm:$0xff]
    %v6588 = vld [vmem:[%s3 + $0x290] sm:$0xf]
    %v6589 = vld [vmem:[%s3 + $0x294] sm:$0xff]
    %v6590 = vld [vmem:[%s3 + $0x29c] sm:$0xf]
    %v6591 = vld [vmem:[#allocation4] sm:$0xfe]
    %v6592 = vld [vmem:[#allocation4 + $0x8] sm:$0xfe]
    %v6593 = vld [vmem:[#allocation4 + $0x10] sm:$0xfe]
    %v6594 = vld [vmem:[#allocation4 + $0x18] sm:$0xfe]
    %v6595 = vld [vmem:[#allocation4 + $0x20] sm:$0x1f]
    %v6596 = vld [vmem:[#allocation4 + $0x28] sm:$0x1f]
    %v6597 = vld [vmem:[#allocation4 + $0x30] sm:$0x1f]
    %v6598 = vld [vmem:[#allocation4 + $0x38] sm:$0x1f]
    %v6599 = vpack.c.bf16 %v6595, %v6591
    %v6600 = vpack.c.bf16 %v6596, %v6592
    %v6601 = vpack.c.bf16 %v6597, %v6593
    %v6602 = vpack.c.bf16 %v6598, %v6594
    %s6603 = scalar_lea.vmem %s3, 672
    %v6604 = vld [vmem:[%s6603] sm:$0xff]
    %v6605 = vld [vmem:[%s6603 + $0x8] sm:$0xf]
    %v6606 = vld [vmem:[%s6603 + $0xc] sm:$0xff]
    %v6607 = vld [vmem:[%s6603 + $0x14] sm:$0xf]
    %v6608 = vld [vmem:[%s6603 + $0x18] sm:$0xff]
    %v6609 = vld [vmem:[%s6603 + $0x20] sm:$0xf]
    %v6610 = vld [vmem:[%s6603 + $0x24] sm:$0xff]
    %v6611 = vld [vmem:[%s6603 + $0x2c] sm:$0xf]
    %v6612 = vld [vmem:[%s6603 + $0x30] sm:$0xff]
    %v6613 = vld [vmem:[%s6603 + $0x38] sm:$0xf]
    %v6614 = vld [vmem:[%s6603 + $0x3c] sm:$0xff]
    %v6615 = vld [vmem:[%s6603 + $0x44] sm:$0xf]
    %v6616 = vld [vmem:[%s6603 + $0x48] sm:$0xff]
    %v6617 = vld [vmem:[%s6603 + $0x50] sm:$0xf]
    %v6618 = vld [vmem:[%s6603 + $0x54] sm:$0xff]
    %v6619 = vld [vmem:[%s6603 + $0x5c] sm:$0xf]
    %v6620 = vld [vmem:[%s6603 + $0x60] sm:$0xff]
    %v6621 = vld [vmem:[%s6603 + $0x68] sm:$0xf]
    %v6622 = vld [vmem:[%s6603 + $0x6c] sm:$0xff]
    %v6623 = vld [vmem:[%s6603 + $0x74] sm:$0xf]
    %v6624 = vld [vmem:[%s6603 + $0x78] sm:$0xff]
    %v6625 = vld [vmem:[%s6603 + $0x80] sm:$0xf]
    %v6626 = vld [vmem:[%s6603 + $0x84] sm:$0xff]
    %v6627 = vld [vmem:[%s6603 + $0x8c] sm:$0xf]
    %v6628 = vld [vmem:[%s6603 + $0x90] sm:$0xff]
    %v6629 = vld [vmem:[%s6603 + $0x98] sm:$0xf]
    %v6630 = vld [vmem:[%s6603 + $0x9c] sm:$0xff]
    %v6631 = vld [vmem:[%s6603 + $0xa4] sm:$0xf]
    %v6632 = vld [vmem:[%s6603 + $0xa8] sm:$0xff]
    %v6633 = vld [vmem:[%s6603 + $0xb0] sm:$0xf]
    %v6634 = vld [vmem:[%s6603 + $0xb4] sm:$0xff]
    %v6635 = vld [vmem:[%s6603 + $0xbc] sm:$0xf]
    %v6636 = vld [vmem:[%s6603 + $0xc0] sm:$0xff]
    %v6637 = vld [vmem:[%s6603 + $0xc8] sm:$0xf]
    %v6638 = vld [vmem:[%s6603 + $0xcc] sm:$0xff]
    %v6639 = vld [vmem:[%s6603 + $0xd4] sm:$0xf]
    %v6640 = vld [vmem:[%s6603 + $0xd8] sm:$0xff]
    %v6641 = vld [vmem:[%s6603 + $0xe0] sm:$0xf]
    %v6642 = vld [vmem:[%s6603 + $0xe4] sm:$0xff]
    %v6643 = vld [vmem:[%s6603 + $0xec] sm:$0xf]
    %v6644 = vld [vmem:[%s6603 + $0xf0] sm:$0xff]
    %v6645 = vld [vmem:[%s6603 + $0xf8] sm:$0xf]
    %v6646 = vld [vmem:[%s6603 + $0xfc] sm:$0xff]
    %v6647 = vld [vmem:[%s6603 + $0x104] sm:$0xf]
    %v6648 = vld [vmem:[%s6603 + $0x108] sm:$0xff]
    %v6649 = vld [vmem:[%s6603 + $0x110] sm:$0xf]
    %v6650 = vld [vmem:[%s6603 + $0x114] sm:$0xff]
    %v6651 = vld [vmem:[%s6603 + $0x11c] sm:$0xf]
    %v6652 = vld [vmem:[%s6603 + $0x120] sm:$0xff]
    %v6653 = vld [vmem:[%s6603 + $0x128] sm:$0xf]
    %v6654 = vld [vmem:[%s6603 + $0x12c] sm:$0xff]
    %v6655 = vld [vmem:[%s6603 + $0x134] sm:$0xf]
    %v6656 = vld [vmem:[%s6603 + $0x138] sm:$0xff]
    %v6657 = vld [vmem:[%s6603 + $0x140] sm:$0xf]
    %v6658 = vld [vmem:[%s6603 + $0x144] sm:$0xff]
    %v6659 = vld [vmem:[%s6603 + $0x14c] sm:$0xf]
    %v6660 = vld [vmem:[%s6603 + $0x150] sm:$0xff]
    %v6661 = vld [vmem:[%s6603 + $0x158] sm:$0xf]
    %v6662 = vld [vmem:[%s6603 + $0x15c] sm:$0xff]
    %v6663 = vld [vmem:[%s6603 + $0x164] sm:$0xf]
    %v6664 = vld [vmem:[%s6603 + $0x168] sm:$0xff]
    %v6665 = vld [vmem:[%s6603 + $0x170] sm:$0xf]
    %v6666 = vld [vmem:[%s6603 + $0x174] sm:$0xff]
    %v6667 = vld [vmem:[%s6603 + $0x17c] sm:$0xf]
    %v6668 = vld [vmem:[%s6603 + $0x180] sm:$0xff]
    %v6669 = vld [vmem:[%s6603 + $0x188] sm:$0xf]
    %v6670 = vld [vmem:[%s6603 + $0x18c] sm:$0xff]
    %v6671 = vld [vmem:[%s6603 + $0x194] sm:$0xf]
    %v6672 = vld [vmem:[%s6603 + $0x198] sm:$0xff]
    %v6673 = vld [vmem:[%s6603 + $0x1a0] sm:$0xf]
    %v6674 = vld [vmem:[%s6603 + $0x1a4] sm:$0xff]
    %v6675 = vld [vmem:[%s6603 + $0x1ac] sm:$0xf]
    %v6676 = vld [vmem:[%s6603 + $0x1b0] sm:$0xff]
    %v6677 = vld [vmem:[%s6603 + $0x1b8] sm:$0xf]
    %v6678 = vld [vmem:[%s6603 + $0x1bc] sm:$0xff]
    %v6679 = vld [vmem:[%s6603 + $0x1c4] sm:$0xf]
    %v6680 = vld [vmem:[%s6603 + $0x1c8] sm:$0xff]
    %v6681 = vld [vmem:[%s6603 + $0x1d0] sm:$0xf]
    %v6682 = vld [vmem:[%s6603 + $0x1d4] sm:$0xff]
    %v6683 = vld [vmem:[%s6603 + $0x1dc] sm:$0xf]
    %v6684 = vld [vmem:[%s6603 + $0x1e0] sm:$0xff]
    %v6685 = vld [vmem:[%s6603 + $0x1e8] sm:$0xf]
    %v6686 = vld [vmem:[%s6603 + $0x1ec] sm:$0xff]
    %v6687 = vld [vmem:[%s6603 + $0x1f4] sm:$0xf]
    %v6688 = vld [vmem:[%s6603 + $0x1f8] sm:$0xff]
    %v6689 = vld [vmem:[%s6603 + $0x200] sm:$0xf]
    %v6690 = vld [vmem:[%s6603 + $0x204] sm:$0xff]
    %v6691 = vld [vmem:[%s6603 + $0x20c] sm:$0xf]
    %v6692 = vld [vmem:[%s6603 + $0x210] sm:$0xff]
    %v6693 = vld [vmem:[%s6603 + $0x218] sm:$0xf]
    %v6694 = vld [vmem:[%s6603 + $0x21c] sm:$0xff]
    %v6695 = vld [vmem:[%s6603 + $0x224] sm:$0xf]
    %v6696 = vld [vmem:[%s6603 + $0x228] sm:$0xff]
    %v6697 = vld [vmem:[%s6603 + $0x230] sm:$0xf]
    %v6698 = vld [vmem:[%s6603 + $0x234] sm:$0xff]
    %v6699 = vld [vmem:[%s6603 + $0x23c] sm:$0xf]
    %v6700 = vld [vmem:[%s6603 + $0x240] sm:$0xff]
    %v6701 = vld [vmem:[%s6603 + $0x248] sm:$0xf]
    %v6702 = vld [vmem:[%s6603 + $0x24c] sm:$0xff]
    %v6703 = vld [vmem:[%s6603 + $0x254] sm:$0xf]
    %v6704 = vld [vmem:[%s6603 + $0x258] sm:$0xff]
    %v6705 = vld [vmem:[%s6603 + $0x260] sm:$0xf]
    %v6706 = vld [vmem:[%s6603 + $0x264] sm:$0xff]
    %v6707 = vld [vmem:[%s6603 + $0x26c] sm:$0xf]
    %v6708 = vld [vmem:[%s6603 + $0x270] sm:$0xff]
    %v6709 = vld [vmem:[%s6603 + $0x278] sm:$0xf]
    %v6710 = vld [vmem:[%s6603 + $0x27c] sm:$0xff]
    %v6711 = vld [vmem:[%s6603 + $0x284] sm:$0xf]
    %v6712 = vld [vmem:[%s6603 + $0x288] sm:$0xff]
    %v6713 = vld [vmem:[%s6603 + $0x290] sm:$0xf]
    %v6714 = vld [vmem:[%s6603 + $0x294] sm:$0xff]
    %v6715 = vld [vmem:[%s6603 + $0x29c] sm:$0xf]
    %v6717 = vshrl.u32 %v6599, 16
    %v6719 = vshll.u32 %v6599, 16
    %v6721 = vrot.slane %v6719, 1
    %v6722 = vor.u32 %v6717, %v6721
    %v6724 = vshrl.u32 %v6600, 16
    %v6726 = vshll.u32 %v6600, 16
    %v6728 = vrot.slane %v6726, 1
    %v6729 = vor.u32 %v6724, %v6728
    %v6731 = vshrl.u32 %v6601, 16
    %v6733 = vshll.u32 %v6601, 16
    %v6735 = vrot.slane %v6733, 1
    %v6736 = vor.u32 %v6731, %v6735
    %v6738 = vshrl.u32 %v6602, 16
    %v6740 = vshll.u32 %v6602, 16
    %v6742 = vrot.slane %v6740, 1
    %v6743 = vor.u32 %v6738, %v6742
    %v6859 = vunpack.c.l.b16 %v6604
    %v6860 = vunpack.c.h.b16 %v6604
    %v6861 = vunpack.c.l.b16 %v6605
    %v6862 = vunpack.c.l.b16 %v6606
    %v6863 = vunpack.c.h.b16 %v6606
    %v6864 = vunpack.c.l.b16 %v6607
    %v6865 = vunpack.c.l.b16 %v6608
    %v6866 = vunpack.c.h.b16 %v6608
    %v6867 = vunpack.c.l.b16 %v6609
    %v6868 = vunpack.c.l.b16 %v6610
    %v6869 = vunpack.c.h.b16 %v6610
    %v6870 = vunpack.c.l.b16 %v6611
    %v6871 = vunpack.c.l.b16 %v6612
    %v6872 = vunpack.c.h.b16 %v6612
    %v6873 = vunpack.c.l.b16 %v6613
    %v6874 = vunpack.c.l.b16 %v6614
    %v6875 = vunpack.c.h.b16 %v6614
    %v6876 = vunpack.c.l.b16 %v6615
    %v6877 = vunpack.c.l.b16 %v6616
    %v6878 = vunpack.c.h.b16 %v6616
    %v6879 = vunpack.c.l.b16 %v6617
    %v6880 = vunpack.c.l.b16 %v6618
    %v6881 = vunpack.c.h.b16 %v6618
    %v6882 = vunpack.c.l.b16 %v6619
    %v6883 = vunpack.c.l.b16 %v6620
    %v6884 = vunpack.c.h.b16 %v6620
    %v6885 = vunpack.c.l.b16 %v6621
    %v6886 = vunpack.c.l.b16 %v6622
    %v6887 = vunpack.c.h.b16 %v6622
    %v6888 = vunpack.c.l.b16 %v6623
    %v6889 = vunpack.c.l.b16 %v6624
    %v6890 = vunpack.c.h.b16 %v6624
    %v6891 = vunpack.c.l.b16 %v6625
    %v6892 = vunpack.c.l.b16 %v6626
    %v6893 = vunpack.c.h.b16 %v6626
    %v6894 = vunpack.c.l.b16 %v6627
    %v6895 = vunpack.c.l.b16 %v6628
    %v6896 = vunpack.c.h.b16 %v6628
    %v6897 = vunpack.c.l.b16 %v6629
    %v6898 = vunpack.c.l.b16 %v6630
    %v6899 = vunpack.c.h.b16 %v6630
    %v6900 = vunpack.c.l.b16 %v6631
    %v6901 = vunpack.c.l.b16 %v6632
    %v6902 = vunpack.c.h.b16 %v6632
    %v6903 = vunpack.c.l.b16 %v6633
    %v6904 = vunpack.c.l.b16 %v6634
    %v6905 = vunpack.c.h.b16 %v6634
    %v6906 = vunpack.c.l.b16 %v6635
    %v6907 = vunpack.c.l.b16 %v6636
    %v6908 = vunpack.c.h.b16 %v6636
    %v6909 = vunpack.c.l.b16 %v6637
    %v6910 = vunpack.c.l.b16 %v6638
    %v6911 = vunpack.c.h.b16 %v6638
    %v6912 = vunpack.c.l.b16 %v6639
    %v6913 = vunpack.c.l.b16 %v6640
    %v6914 = vunpack.c.h.b16 %v6640
    %v6915 = vunpack.c.l.b16 %v6641
    %v6916 = vunpack.c.l.b16 %v6642
    %v6917 = vunpack.c.h.b16 %v6642
    %v6918 = vunpack.c.l.b16 %v6643
    %v6919 = vunpack.c.l.b16 %v6644
    %v6920 = vunpack.c.h.b16 %v6644
    %v6921 = vunpack.c.l.b16 %v6645
    %v6922 = vunpack.c.l.b16 %v6646
    %v6923 = vunpack.c.h.b16 %v6646
    %v6924 = vunpack.c.l.b16 %v6647
    %v6925 = vunpack.c.l.b16 %v6648
    %v6926 = vunpack.c.h.b16 %v6648
    %v6927 = vunpack.c.l.b16 %v6649
    %v6928 = vunpack.c.l.b16 %v6650
    %v6929 = vunpack.c.h.b16 %v6650
    %v6930 = vunpack.c.l.b16 %v6651
    %v6931 = vunpack.c.l.b16 %v6652
    %v6932 = vunpack.c.h.b16 %v6652
    %v6933 = vunpack.c.l.b16 %v6653
    %v6934 = vunpack.c.l.b16 %v6654
    %v6935 = vunpack.c.h.b16 %v6654
    %v6936 = vunpack.c.l.b16 %v6655
    %v6937 = vunpack.c.l.b16 %v6656
    %v6938 = vunpack.c.h.b16 %v6656
    %v6939 = vunpack.c.l.b16 %v6657
    %v6940 = vunpack.c.l.b16 %v6658
    %v6941 = vunpack.c.h.b16 %v6658
    %v6942 = vunpack.c.l.b16 %v6659
    %v6943 = vunpack.c.l.b16 %v6660
    %v6944 = vunpack.c.h.b16 %v6660
    %v6945 = vunpack.c.l.b16 %v6661
    %v6946 = vunpack.c.l.b16 %v6662
    %v6947 = vunpack.c.h.b16 %v6662
    %v6948 = vunpack.c.l.b16 %v6663
    %v6949 = vunpack.c.l.b16 %v6664
    %v6950 = vunpack.c.h.b16 %v6664
    %v6951 = vunpack.c.l.b16 %v6665
    %v6952 = vunpack.c.l.b16 %v6666
    %v6953 = vunpack.c.h.b16 %v6666
    %v6954 = vunpack.c.l.b16 %v6667
    %v6955 = vunpack.c.l.b16 %v6668
    %v6956 = vunpack.c.h.b16 %v6668
    %v6957 = vunpack.c.l.b16 %v6669
    %v6958 = vunpack.c.l.b16 %v6670
    %v6959 = vunpack.c.h.b16 %v6670
    %v6960 = vunpack.c.l.b16 %v6671
    %v6961 = vunpack.c.l.b16 %v6672
    %v6962 = vunpack.c.h.b16 %v6672
    %v6963 = vunpack.c.l.b16 %v6673
    %v6964 = vunpack.c.l.b16 %v6674
    %v6965 = vunpack.c.h.b16 %v6674
    %v6966 = vunpack.c.l.b16 %v6675
    %v6967 = vunpack.c.l.b16 %v6676
    %v6968 = vunpack.c.h.b16 %v6676
    %v6969 = vunpack.c.l.b16 %v6677
    %v6970 = vunpack.c.l.b16 %v6678
    %v6971 = vunpack.c.h.b16 %v6678
    %v6972 = vunpack.c.l.b16 %v6679
    %v6973 = vunpack.c.l.b16 %v6680
    %v6974 = vunpack.c.h.b16 %v6680
    %v6975 = vunpack.c.l.b16 %v6681
    %v6976 = vunpack.c.l.b16 %v6682
    %v6977 = vunpack.c.h.b16 %v6682
    %v6978 = vunpack.c.l.b16 %v6683
    %v6979 = vunpack.c.l.b16 %v6684
    %v6980 = vunpack.c.h.b16 %v6684
    %v6981 = vunpack.c.l.b16 %v6685
    %v6982 = vunpack.c.l.b16 %v6686
    %v6983 = vunpack.c.h.b16 %v6686
    %v6984 = vunpack.c.l.b16 %v6687
    %v6985 = vunpack.c.l.b16 %v6688
    %v6986 = vunpack.c.h.b16 %v6688
    %v6987 = vunpack.c.l.b16 %v6689
    %v6988 = vunpack.c.l.b16 %v6690
    %v6989 = vunpack.c.h.b16 %v6690
    %v6990 = vunpack.c.l.b16 %v6691
    %v6991 = vunpack.c.l.b16 %v6692
    %v6992 = vunpack.c.h.b16 %v6692
    %v6993 = vunpack.c.l.b16 %v6693
    %v6994 = vunpack.c.l.b16 %v6694
    %v6995 = vunpack.c.h.b16 %v6694
    %v6996 = vunpack.c.l.b16 %v6695
    %v6997 = vunpack.c.l.b16 %v6696
    %v6998 = vunpack.c.h.b16 %v6696
    %v6999 = vunpack.c.l.b16 %v6697
    %v7000 = vunpack.c.l.b16 %v6698
    %v7001 = vunpack.c.h.b16 %v6698
    %v7002 = vunpack.c.l.b16 %v6699
    %v7003 = vunpack.c.l.b16 %v6700
    %v7004 = vunpack.c.h.b16 %v6700
    %v7005 = vunpack.c.l.b16 %v6701
    %v7006 = vunpack.c.l.b16 %v6702
    %v7007 = vunpack.c.h.b16 %v6702
    %v7008 = vunpack.c.l.b16 %v6703
    %v7009 = vunpack.c.l.b16 %v6704
    %v7010 = vunpack.c.h.b16 %v6704
    %v7011 = vunpack.c.l.b16 %v6705
    %v7012 = vunpack.c.l.b16 %v6706
    %v7013 = vunpack.c.h.b16 %v6706
    %v7014 = vunpack.c.l.b16 %v6707
    %v7015 = vunpack.c.l.b16 %v6708
    %v7016 = vunpack.c.h.b16 %v6708
    %v7017 = vunpack.c.l.b16 %v6709
    %v7018 = vunpack.c.l.b16 %v6710
    %v7019 = vunpack.c.h.b16 %v6710
    %v7020 = vunpack.c.l.b16 %v6711
    %v7021 = vunpack.c.l.b16 %v6712
    %v7022 = vunpack.c.h.b16 %v6712
    %v7023 = vunpack.c.l.b16 %v6713
    %v7024 = vunpack.c.l.b16 %v6714
    %v7025 = vunpack.c.h.b16 %v6714
    %v7026 = vunpack.c.l.b16 %v6715
    %v7027 = vpack.c.b16 %v6862, %v6859
    %v7028 = vpack.c.b16 %v6863, %v6860
    %v7029 = vpack.c.b16 %v6864, %v6861
    %v7030 = vpack.c.b16 %v6868, %v6865
    %v7031 = vpack.c.b16 %v6869, %v6866
    %v7032 = vpack.c.b16 %v6870, %v6867
    %v7033 = vpack.c.b16 %v6874, %v6871
    %v7034 = vpack.c.b16 %v6875, %v6872
    %v7035 = vpack.c.b16 %v6876, %v6873
    %v7036 = vpack.c.b16 %v6880, %v6877
    %v7037 = vpack.c.b16 %v6881, %v6878
    %v7038 = vpack.c.b16 %v6882, %v6879
    %v7039 = vpack.c.b16 %v6886, %v6883
    %v7040 = vpack.c.b16 %v6887, %v6884
    %v7041 = vpack.c.b16 %v6888, %v6885
    %v7042 = vpack.c.b16 %v6892, %v6889
    %v7043 = vpack.c.b16 %v6893, %v6890
    %v7044 = vpack.c.b16 %v6894, %v6891
    %v7045 = vpack.c.b16 %v6898, %v6895
    %v7046 = vpack.c.b16 %v6899, %v6896
    %v7047 = vpack.c.b16 %v6900, %v6897
    %v7048 = vpack.c.b16 %v6904, %v6901
    %v7049 = vpack.c.b16 %v6905, %v6902
    %v7050 = vpack.c.b16 %v6906, %v6903
    %v7051 = vpack.c.b16 %v6910, %v6907
    %v7052 = vpack.c.b16 %v6911, %v6908
    %v7053 = vpack.c.b16 %v6912, %v6909
    %v7054 = vpack.c.b16 %v6916, %v6913
    %v7055 = vpack.c.b16 %v6917, %v6914
    %v7056 = vpack.c.b16 %v6918, %v6915
    %v7057 = vpack.c.b16 %v6922, %v6919
    %v7058 = vpack.c.b16 %v6923, %v6920
    %v7059 = vpack.c.b16 %v6924, %v6921
    %v7060 = vpack.c.b16 %v6928, %v6925
    %v7061 = vpack.c.b16 %v6929, %v6926
    %v7062 = vpack.c.b16 %v6930, %v6927
    %v7063 = vpack.c.b16 %v6934, %v6931
    %v7064 = vpack.c.b16 %v6935, %v6932
    %v7065 = vpack.c.b16 %v6936, %v6933
    %v7066 = vpack.c.b16 %v6940, %v6937
    %v7067 = vpack.c.b16 %v6941, %v6938
    %v7068 = vpack.c.b16 %v6942, %v6939
    %v7069 = vpack.c.b16 %v6946, %v6943
    %v7070 = vpack.c.b16 %v6947, %v6944
    %v7071 = vpack.c.b16 %v6948, %v6945
    %v7072 = vpack.c.b16 %v6952, %v6949
    %v7073 = vpack.c.b16 %v6953, %v6950
    %v7074 = vpack.c.b16 %v6954, %v6951
    %v7075 = vpack.c.b16 %v6958, %v6955
    %v7076 = vpack.c.b16 %v6959, %v6956
    %v7077 = vpack.c.b16 %v6960, %v6957
    %v7078 = vpack.c.b16 %v6964, %v6961
    %v7079 = vpack.c.b16 %v6965, %v6962
    %v7080 = vpack.c.b16 %v6966, %v6963
    %v7081 = vpack.c.b16 %v6970, %v6967
    %v7082 = vpack.c.b16 %v6971, %v6968
    %v7083 = vpack.c.b16 %v6972, %v6969
    %v7084 = vpack.c.b16 %v6976, %v6973
    %v7085 = vpack.c.b16 %v6977, %v6974
    %v7086 = vpack.c.b16 %v6978, %v6975
    %v7087 = vpack.c.b16 %v6982, %v6979
    %v7088 = vpack.c.b16 %v6983, %v6980
    %v7089 = vpack.c.b16 %v6984, %v6981
    %v7090 = vpack.c.b16 %v6988, %v6985
    %v7091 = vpack.c.b16 %v6989, %v6986
    %v7092 = vpack.c.b16 %v6990, %v6987
    %v7093 = vpack.c.b16 %v6994, %v6991
    %v7094 = vpack.c.b16 %v6995, %v6992
    %v7095 = vpack.c.b16 %v6996, %v6993
    %v7096 = vpack.c.b16 %v7000, %v6997
    %v7097 = vpack.c.b16 %v7001, %v6998
    %v7098 = vpack.c.b16 %v7002, %v6999
    %v7099 = vpack.c.b16 %v7006, %v7003
    %v7100 = vpack.c.b16 %v7007, %v7004
    %v7101 = vpack.c.b16 %v7008, %v7005
    %v7102 = vpack.c.b16 %v7012, %v7009
    %v7103 = vpack.c.b16 %v7013, %v7010
    %v7104 = vpack.c.b16 %v7014, %v7011
    %v7105 = vpack.c.b16 %v7018, %v7015
    %v7106 = vpack.c.b16 %v7019, %v7016
    %v7107 = vpack.c.b16 %v7020, %v7017
    %v7108 = vpack.c.b16 %v7024, %v7021
    %v7109 = vpack.c.b16 %v7025, %v7022
    %v7110 = vpack.c.b16 %v7026, %v7023
    %v7196 = vsel %vm75, %v6743, 0
    %7198 = vmatprep.subr.bf16.mxu0 %v7028
    %7199 = vmatpush1.bf16.msra.mxu0 %v7027
    %7200 = vmatprep.subr.bf16.mxu0 %v7031
    %7201 = vmatpush1.bf16.msra.mxu0 %v7030
    %7202 = vmatprep.subr.bf16.mxu0 %v7034
    %7203 = vmatpush1.bf16.msra.mxu0 %v7033
    %7204 = vmatprep.subr.bf16.mxu0 %v7037
    %7205 = vmatpush1.bf16.msra.mxu0 %v7036
    %7206 = vmatprep.subr.bf16.mxu0 %v7040
    %7207 = vmatpush1.bf16.msra.mxu0 %v7039
    %7208 = vmatprep.subr.bf16.mxu0 %v7043
    %7209 = vmatpush1.bf16.msra.mxu0 %v7042
    %7210 = vmatprep.subr.bf16.mxu0 %v7046
    %7211 = vmatpush1.bf16.msra.mxu0 %v7045
    %7212 = vmatprep.subr.bf16.mxu0 %v7049
    %7213 = vmatpush1.bf16.msra.mxu0 %v7048
    %7214 = vmatprep.subr.bf16.mxu0 %v7052
    %7215 = vmatpush1.bf16.msra.mxu0 %v7051
    %7216 = vmatprep.subr.bf16.mxu0 %v7055
    %7217 = vmatpush1.bf16.msra.mxu0 %v7054
    %7218 = vmatprep.subr.bf16.mxu0 %v7058
    %7219 = vmatpush1.bf16.msra.mxu0 %v7057
    %7220 = vmatprep.subr.bf16.mxu0 %v7061
    %7221 = vmatpush1.bf16.msra.mxu0 %v7060
    %7222 = vmatprep.subr.bf16.mxu0 %v7064
    %7223 = vmatpush1.bf16.msra.mxu0 %v7063
    %7224 = vmatprep.subr.bf16.mxu0 %v7067
    %7225 = vmatpush1.bf16.msra.mxu0 %v7066
    %7226 = vmatprep.subr.bf16.mxu0 %v7070
    %7227 = vmatpush1.bf16.msra.mxu0 %v7069
    %7228 = vmatprep.subr.bf16.mxu0 %v7073
    %7229 = vmatpush1.bf16.msra.mxu0 %v7072
    %7230 = vmatprep.mubr.bf16.mxu0 %v6729
    %7231 = vmatmul.mubr.bf16.gmra.mrb[0].mxu0 %v6722
    %v7232 = vpop.f32.mrb[0].mxu0
    %v7233 = vadd.f32 0.0, %v7232
    %v7234 = vpop.f32.mrb[0].mxu0
    %v7235 = vadd.f32 0.0, %v7234
    %v7236 = vpop.f32.mrb[0].mxu0
    %v7237 = vadd.f32 0.0, %v7236
    %v7238 = vpop.f32.mrb[0].mxu0
    %v7239 = vadd.f32 0.0, %v7238
    %7240 = vdwg.mxu0
    %7241 = vmatprep.subr.bf16.mxu0 %v7076
    %7242 = vmatpush1.bf16.msra.mxu0 %v7075
    %7243 = vmatprep.subr.bf16.mxu0 %v7079
    %7244 = vmatpush1.bf16.msra.mxu0 %v7078
    %7245 = vmatprep.subr.bf16.mxu0 %v7082
    %7246 = vmatpush1.bf16.msra.mxu0 %v7081
    %7247 = vmatprep.subr.bf16.mxu0 %v7085
    %7248 = vmatpush1.bf16.msra.mxu0 %v7084
    %7249 = vmatprep.subr.bf16.mxu0 %v7088
    %7250 = vmatpush1.bf16.msra.mxu0 %v7087
    %7251 = vmatprep.subr.bf16.mxu0 %v7091
    %7252 = vmatpush1.bf16.msra.mxu0 %v7090
    %7253 = vmatprep.subr.bf16.mxu0 %v7094
    %7254 = vmatpush1.bf16.msra.mxu0 %v7093
    %7255 = vmatprep.subr.bf16.mxu0 %v7097
    %7256 = vmatpush1.bf16.msra.mxu0 %v7096
    %7257 = vmatprep.subr.bf16.mxu0 %v7100
    %7258 = vmatpush1.bf16.msra.mxu0 %v7099
    %7259 = vmatprep.subr.bf16.mxu0 %v7103
    %7260 = vmatpush1.bf16.msra.mxu0 %v7102
    %7261 = vmatprep.subr.bf16.mxu0 %v7106
    %7262 = vmatpush1.bf16.msra.mxu0 %v7105
    %7263 = vmatprep.subr.bf16.mxu0 %v7109
    %7264 = vmatpush1.bf16.msra.mxu0 %v7108
    %7265 = vmatprep.subr.bf16.mxu0 0
    %7266 = vmatpush1.bf16.msra.mxu0 0
    %7267 = vmatprep.subr.bf16.mxu0 0
    %7268 = vmatpush1.bf16.msra.mxu0 0
    %7269 = vmatprep.subr.bf16.mxu0 0
    %7270 = vmatpush1.bf16.msra.mxu0 0
    %7271 = vmatprep.subr.bf16.mxu0 0
    %7272 = vmatpush1.bf16.msra.mxu0 0
    %7273 = vmatprep.mubr.bf16.mxu0 %v7196
    %7274 = vmatmul.mubr.bf16.gmra.mrb[0].mxu0 %v6736
    %v7275 = vpop.f32.mrb[0].mxu0
    %v7276 = vadd.f32 %v7233, %v7275
    %v7277 = vpop.f32.mrb[0].mxu0
    %v7278 = vadd.f32 %v7235, %v7277
    %v7279 = vpop.f32.mrb[0].mxu0
    %v7280 = vadd.f32 %v7237, %v7279
    %v7281 = vpop.f32.mrb[0].mxu0
    %v7282 = vadd.f32 %v7239, %v7281
    %7283 = vdwg.mxu0
    %7284 = vmatprep.subr.bf16.mxu0 0
    %7285 = vmatpush1.bf16.msra.mxu0 %v7029
    %7286 = vmatprep.subr.bf16.mxu0 0
    %7287 = vmatpush1.bf16.msra.mxu0 %v7032
    %7288 = vmatprep.subr.bf16.mxu0 0
    %7289 = vmatpush1.bf16.msra.mxu0 %v7035
    %7290 = vmatprep.subr.bf16.mxu0 0
    %7291 = vmatpush1.bf16.msra.mxu0 %v7038
    %7292 = vmatprep.subr.bf16.mxu0 0
    %7293 = vmatpush1.bf16.msra.mxu0 %v7041
    %7294 = vmatprep.subr.bf16.mxu0 0
    %7295 = vmatpush1.bf16.msra.mxu0 %v7044
    %7296 = vmatprep.subr.bf16.mxu0 0
    %7297 = vmatpush1.bf16.msra.mxu0 %v7047
    %7298 = vmatprep.subr.bf16.mxu0 0
    %7299 = vmatpush1.bf16.msra.mxu0 %v7050
    %7300 = vmatprep.subr.bf16.mxu0 0
    %7301 = vmatpush1.bf16.msra.mxu0 %v7053
    %7302 = vmatprep.subr.bf16.mxu0 0
    %7303 = vmatpush1.bf16.msra.mxu0 %v7056
    %7304 = vmatprep.subr.bf16.mxu0 0
    %7305 = vmatpush1.bf16.msra.mxu0 %v7059
    %7306 = vmatprep.subr.bf16.mxu0 0
    %7307 = vmatpush1.bf16.msra.mxu0 %v7062
    %7308 = vmatprep.subr.bf16.mxu0 0
    %7309 = vmatpush1.bf16.msra.mxu0 %v7065
    %7310 = vmatprep.subr.bf16.mxu0 0
    %7311 = vmatpush1.bf16.msra.mxu0 %v7068
    %7312 = vmatprep.subr.bf16.mxu0 0
    %7313 = vmatpush1.bf16.msra.mxu0 %v7071
    %7314 = vmatprep.subr.bf16.mxu0 0
    %7315 = vmatpush1.bf16.msra.mxu0 %v7074
    %7316 = vmatprep.mubr.bf16.mxu0 %v6729
    %7317 = vmatmul.mubr.bf16.gmra.mrb[0].mxu0 %v6722
    %v7318 = vpop.f32.mrb[0].mxu0
    %v7319 = vadd.f32 0.0, %v7318
    %v7320 = vpop.f32.mrb[0].mxu0
    %v7321 = vpop.f32.mrb[0].mxu0
    %v7322 = vadd.f32 0.0, %v7321
    %v7323 = vpop.f32.mrb[0].mxu0
    %7324 = vdwg.mxu0
    %7325 = vmatprep.subr.bf16.mxu0 0
    %7326 = vmatpush1.bf16.msra.mxu0 %v7077
    %7327 = vmatprep.subr.bf16.mxu0 0
    %7328 = vmatpush1.bf16.msra.mxu0 %v7080
    %7329 = vmatprep.subr.bf16.mxu0 0
    %7330 = vmatpush1.bf16.msra.mxu0 %v7083
    %7331 = vmatprep.subr.bf16.mxu0 0
    %7332 = vmatpush1.bf16.msra.mxu0 %v7086
    %7333 = vmatprep.subr.bf16.mxu0 0
    %7334 = vmatpush1.bf16.msra.mxu0 %v7089
    %7335 = vmatprep.subr.bf16.mxu0 0
    %7336 = vmatpush1.bf16.msra.mxu0 %v7092
    %7337 = vmatprep.subr.bf16.mxu0 0
    %7338 = vmatpush1.bf16.msra.mxu0 %v7095
    %7339 = vmatprep.subr.bf16.mxu0 0
    %7340 = vmatpush1.bf16.msra.mxu0 %v7098
    %7341 = vmatprep.subr.bf16.mxu0 0
    %7342 = vmatpush1.bf16.msra.mxu0 %v7101
    %7343 = vmatprep.subr.bf16.mxu0 0
    %7344 = vmatpush1.bf16.msra.mxu0 %v7104
    %7345 = vmatprep.subr.bf16.mxu0 0
    %7346 = vmatpush1.bf16.msra.mxu0 %v7107
    %7347 = vmatprep.subr.bf16.mxu0 0
    %7348 = vmatpush1.bf16.msra.mxu0 %v7110
    %7349 = vmatprep.subr.bf16.mxu0 0
    %7350 = vmatpush1.bf16.msra.mxu0 0
    %7351 = vmatprep.subr.bf16.mxu0 0
    %7352 = vmatpush1.bf16.msra.mxu0 0
    %7353 = vmatprep.subr.bf16.mxu0 0
    %7354 = vmatpush1.bf16.msra.mxu0 0
    %7355 = vmatprep.subr.bf16.mxu0 0
    %7356 = vmatpush1.bf16.msra.mxu0 0
    %7357 = vmatprep.mubr.bf16.mxu0 %v7196
    %7358 = vmatmul.mubr.bf16.gmra.mrb[0].mxu0 %v6736
    %v7359 = vpop.f32.mrb[0].mxu0
    %v7360 = vadd.f32 %v7319, %v7359
    %v7361 = vpop.f32.mrb[0].mxu0
    %v7362 = vpop.f32.mrb[0].mxu0
    %v7363 = vadd.f32 %v7322, %v7362
    %v7364 = vpop.f32.mrb[0].mxu0
    %7365 = vdwg.mxu0
    %v7478 = vunpack.c.l.b16 %v6479
    %v7479 = vunpack.c.h.b16 %v6479
    %v7480 = vunpack.c.l.b16 %v6480
    %v7481 = vunpack.c.l.b16 %v6481
    %v7482 = vunpack.c.h.b16 %v6481
    %v7483 = vunpack.c.l.b16 %v6482
    %v7484 = vunpack.c.l.b16 %v6483
    %v7485 = vunpack.c.h.b16 %v6483
    %v7486 = vunpack.c.l.b16 %v6484
    %v7487 = vunpack.c.l.b16 %v6485
    %v7488 = vunpack.c.h.b16 %v6485
    %v7489 = vunpack.c.l.b16 %v6486
    %v7490 = vunpack.c.l.b16 %v6487
    %v7491 = vunpack.c.h.b16 %v6487
    %v7492 = vunpack.c.l.b16 %v6488
    %v7493 = vunpack.c.l.b16 %v6489
    %v7494 = vunpack.c.h.b16 %v6489
    %v7495 = vunpack.c.l.b16 %v6490
    %v7496 = vunpack.c.l.b16 %v6491
    %v7497 = vunpack.c.h.b16 %v6491
    %v7498 = vunpack.c.l.b16 %v6492
    %v7499 = vunpack.c.l.b16 %v6493
    %v7500 = vunpack.c.h.b16 %v6493
    %v7501 = vunpack.c.l.b16 %v6494
    %v7502 = vunpack.c.l.b16 %v6495
    %v7503 = vunpack.c.h.b16 %v6495
    %v7504 = vunpack.c.l.b16 %v6496
    %v7505 = vunpack.c.l.b16 %v6497
    %v7506 = vunpack.c.h.b16 %v6497
    %v7507 = vunpack.c.l.b16 %v6498
    %v7508 = vunpack.c.l.b16 %v6499
    %v7509 = vunpack.c.h.b16 %v6499
    %v7510 = vunpack.c.l.b16 %v6500
    %v7511 = vunpack.c.l.b16 %v6501
    %v7512 = vunpack.c.h.b16 %v6501
    %v7513 = vunpack.c.l.b16 %v6502
    %v7514 = vunpack.c.l.b16 %v6503
    %v7515 = vunpack.c.h.b16 %v6503
    %v7516 = vunpack.c.l.b16 %v6504
    %v7517 = vunpack.c.l.b16 %v6505
    %v7518 = vunpack.c.h.b16 %v6505
    %v7519 = vunpack.c.l.b16 %v6506
    %v7520 = vunpack.c.l.b16 %v6507
    %v7521 = vunpack.c.h.b16 %v6507
    %v7522 = vunpack.c.l.b16 %v6508
    %v7523 = vunpack.c.l.b16 %v6509
    %v7524 = vunpack.c.h.b16 %v6509
    %v7525 = vunpack.c.l.b16 %v6510
    %v7526 = vunpack.c.l.b16 %v6511
    %v7527 = vunpack.c.h.b16 %v6511
    %v7528 = vunpack.c.l.b16 %v6512
    %v7529 = vunpack.c.l.b16 %v6513
    %v7530 = vunpack.c.h.b16 %v6513
    %v7531 = vunpack.c.l.b16 %v6514
    %v7532 = vunpack.c.l.b16 %v6515
    %v7533 = vunpack.c.h.b16 %v6515
    %v7534 = vunpack.c.l.b16 %v6516
    %v7535 = vunpack.c.l.b16 %v6517
    %v7536 = vunpack.c.h.b16 %v6517
    %v7537 = vunpack.c.l.b16 %v6518
    %v7538 = vunpack.c.l.b16 %v6519
    %v7539 = vunpack.c.h.b16 %v6519
    %v7540 = vunpack.c.l.b16 %v6520
    %v7541 = vunpack.c.l.b16 %v6521
    %v7542 = vunpack.c.h.b16 %v6521
    %v7543 = vunpack.c.l.b16 %v6522
    %v7544 = vunpack.c.l.b16 %v6523
    %v7545 = vunpack.c.h.b16 %v6523
    %v7546 = vunpack.c.l.b16 %v6524
    %v7547 = vunpack.c.l.b16 %v6525
    %v7548 = vunpack.c.h.b16 %v6525
    %v7549 = vunpack.c.l.b16 %v6526
    %v7550 = vunpack.c.l.b16 %v6527
    %v7551 = vunpack.c.h.b16 %v6527
    %v7552 = vunpack.c.l.b16 %v6528
    %v7553 = vunpack.c.l.b16 %v6529
    %v7554 = vunpack.c.h.b16 %v6529
    %v7555 = vunpack.c.l.b16 %v6530
    %v7556 = vunpack.c.l.b16 %v6531
    %v7557 = vunpack.c.h.b16 %v6531
    %v7558 = vunpack.c.l.b16 %v6532
    %v7559 = vunpack.c.l.b16 %v6533
    %v7560 = vunpack.c.h.b16 %v6533
    %v7561 = vunpack.c.l.b16 %v6534
    %v7562 = vunpack.c.l.b16 %v6535
    %v7563 = vunpack.c.h.b16 %v6535
    %v7564 = vunpack.c.l.b16 %v6536
    %v7565 = vunpack.c.l.b16 %v6537
    %v7566 = vunpack.c.h.b16 %v6537
    %v7567 = vunpack.c.l.b16 %v6538
    %v7568 = vunpack.c.l.b16 %v6539
    %v7569 = vunpack.c.h.b16 %v6539
    %v7570 = vunpack.c.l.b16 %v6540
    %v7571 = vunpack.c.l.b16 %v6541
    %v7572 = vunpack.c.h.b16 %v6541
    %v7573 = vunpack.c.l.b16 %v6542
    %v7574 = vunpack.c.l.b16 %v6543
    %v7575 = vunpack.c.h.b16 %v6543
    %v7576 = vunpack.c.l.b16 %v6544
    %v7577 = vunpack.c.l.b16 %v6545
    %v7578 = vunpack.c.h.b16 %v6545
    %v7579 = vunpack.c.l.b16 %v6546
    %v7580 = vunpack.c.l.b16 %v6547
    %v7581 = vunpack.c.h.b16 %v6547
    %v7582 = vunpack.c.l.b16 %v6548
    %v7583 = vunpack.c.l.b16 %v6549
    %v7584 = vunpack.c.h.b16 %v6549
    %v7585 = vunpack.c.l.b16 %v6550
    %v7586 = vunpack.c.l.b16 %v6551
    %v7587 = vunpack.c.h.b16 %v6551
    %v7588 = vunpack.c.l.b16 %v6552
    %v7589 = vunpack.c.l.b16 %v6553
    %v7590 = vunpack.c.h.b16 %v6553
    %v7591 = vunpack.c.l.b16 %v6554
    %v7592 = vunpack.c.l.b16 %v6555
    %v7593 = vunpack.c.h.b16 %v6555
    %v7594 = vunpack.c.l.b16 %v6556
    %v7595 = vunpack.c.l.b16 %v6557
    %v7596 = vunpack.c.h.b16 %v6557
    %v7597 = vunpack.c.l.b16 %v6558
    %v7598 = vunpack.c.l.b16 %v6559
    %v7599 = vunpack.c.h.b16 %v6559
    %v7600 = vunpack.c.l.b16 %v6560
    %v7601 = vunpack.c.l.b16 %v6561
    %v7602 = vunpack.c.h.b16 %v6561
    %v7603 = vunpack.c.l.b16 %v6562
    %v7604 = vunpack.c.l.b16 %v6563
    %v7605 = vunpack.c.h.b16 %v6563
    %v7606 = vunpack.c.l.b16 %v6564
    %v7607 = vunpack.c.l.b16 %v6565
    %v7608 = vunpack.c.h.b16 %v6565
    %v7609 = vunpack.c.l.b16 %v6566
    %v7610 = vunpack.c.l.b16 %v6567
    %v7611 = vunpack.c.h.b16 %v6567
    %v7612 = vunpack.c.l.b16 %v6568
    %v7613 = vunpack.c.l.b16 %v6569
    %v7614 = vunpack.c.h.b16 %v6569
    %v7615 = vunpack.c.l.b16 %v6570
    %v7616 = vunpack.c.l.b16 %v6571
    %v7617 = vunpack.c.h.b16 %v6571
    %v7618 = vunpack.c.l.b16 %v6572
    %v7619 = vunpack.c.l.b16 %v6573
    %v7620 = vunpack.c.h.b16 %v6573
    %v7621 = vunpack.c.l.b16 %v6574
    %v7622 = vunpack.c.l.b16 %v6575
    %v7623 = vunpack.c.h.b16 %v6575
    %v7624 = vunpack.c.l.b16 %v6576
    %v7625 = vunpack.c.l.b16 %v6577
    %v7626 = vunpack.c.h.b16 %v6577
    %v7627 = vunpack.c.l.b16 %v6578
    %v7628 = vunpack.c.l.b16 %v6579
    %v7629 = vunpack.c.h.b16 %v6579
    %v7630 = vunpack.c.l.b16 %v6580
    %v7631 = vunpack.c.l.b16 %v6581
    %v7632 = vunpack.c.h.b16 %v6581
    %v7633 = vunpack.c.l.b16 %v6582
    %v7634 = vunpack.c.l.b16 %v6583
    %v7635 = vunpack.c.h.b16 %v6583
    %v7636 = vunpack.c.l.b16 %v6584
    %v7637 = vunpack.c.l.b16 %v6585
    %v7638 = vunpack.c.h.b16 %v6585
    %v7639 = vunpack.c.l.b16 %v6586
    %v7640 = vunpack.c.l.b16 %v6587
    %v7641 = vunpack.c.h.b16 %v6587
    %v7642 = vunpack.c.l.b16 %v6588
    %v7643 = vunpack.c.l.b16 %v6589
    %v7644 = vunpack.c.h.b16 %v6589
    %v7645 = vunpack.c.l.b16 %v6590
    %v7646 = vpack.c.b16 %v7481, %v7478
    %v7647 = vpack.c.b16 %v7482, %v7479
    %v7648 = vpack.c.b16 %v7483, %v7480
    %v7649 = vpack.c.b16 %v7487, %v7484
    %v7650 = vpack.c.b16 %v7488, %v7485
    %v7651 = vpack.c.b16 %v7489, %v7486
    %v7652 = vpack.c.b16 %v7493, %v7490
    %v7653 = vpack.c.b16 %v7494, %v7491
    %v7654 = vpack.c.b16 %v7495, %v7492
    %v7655 = vpack.c.b16 %v7499, %v7496
    %v7656 = vpack.c.b16 %v7500, %v7497
    %v7657 = vpack.c.b16 %v7501, %v7498
    %v7658 = vpack.c.b16 %v7505, %v7502
    %v7659 = vpack.c.b16 %v7506, %v7503
    %v7660 = vpack.c.b16 %v7507, %v7504
    %v7661 = vpack.c.b16 %v7511, %v7508
    %v7662 = vpack.c.b16 %v7512, %v7509
    %v7663 = vpack.c.b16 %v7513, %v7510
    %v7664 = vpack.c.b16 %v7517, %v7514
    %v7665 = vpack.c.b16 %v7518, %v7515
    %v7666 = vpack.c.b16 %v7519, %v7516
    %v7667 = vpack.c.b16 %v7523, %v7520
    %v7668 = vpack.c.b16 %v7524, %v7521
    %v7669 = vpack.c.b16 %v7525, %v7522
    %v7670 = vpack.c.b16 %v7529, %v7526
    %v7671 = vpack.c.b16 %v7530, %v7527
    %v7672 = vpack.c.b16 %v7531, %v7528
    %v7673 = vpack.c.b16 %v7535, %v7532
    %v7674 = vpack.c.b16 %v7536, %v7533
    %v7675 = vpack.c.b16 %v7537, %v7534
    %v7676 = vpack.c.b16 %v7541, %v7538
    %v7677 = vpack.c.b16 %v7542, %v7539
    %v7678 = vpack.c.b16 %v7543, %v7540
    %v7679 = vpack.c.b16 %v7547, %v7544
    %v7680 = vpack.c.b16 %v7548, %v7545
    %v7681 = vpack.c.b16 %v7549, %v7546
    %v7682 = vpack.c.b16 %v7553, %v7550
    %v7683 = vpack.c.b16 %v7554, %v7551
    %v7684 = vpack.c.b16 %v7555, %v7552
    %v7685 = vpack.c.b16 %v7559, %v7556
    %v7686 = vpack.c.b16 %v7560, %v7557
    %v7687 = vpack.c.b16 %v7561, %v7558
    %v7688 = vpack.c.b16 %v7565, %v7562
    %v7689 = vpack.c.b16 %v7566, %v7563
    %v7690 = vpack.c.b16 %v7567, %v7564
    %v7691 = vpack.c.b16 %v7571, %v7568
    %v7692 = vpack.c.b16 %v7572, %v7569
    %v7693 = vpack.c.b16 %v7573, %v7570
    %v7694 = vpack.c.b16 %v7577, %v7574
    %v7695 = vpack.c.b16 %v7578, %v7575
    %v7696 = vpack.c.b16 %v7579, %v7576
    %v7697 = vpack.c.b16 %v7583, %v7580
    %v7698 = vpack.c.b16 %v7584, %v7581
    %v7699 = vpack.c.b16 %v7585, %v7582
    %v7700 = vpack.c.b16 %v7589, %v7586
    %v7701 = vpack.c.b16 %v7590, %v7587
    %v7702 = vpack.c.b16 %v7591, %v7588
    %v7703 = vpack.c.b16 %v7595, %v7592
    %v7704 = vpack.c.b16 %v7596, %v7593
    %v7705 = vpack.c.b16 %v7597, %v7594
    %v7706 = vpack.c.b16 %v7601, %v7598
    %v7707 = vpack.c.b16 %v7602, %v7599
    %v7708 = vpack.c.b16 %v7603, %v7600
    %v7709 = vpack.c.b16 %v7607, %v7604
    %v7710 = vpack.c.b16 %v7608, %v7605
    %v7711 = vpack.c.b16 %v7609, %v7606
    %v7712 = vpack.c.b16 %v7613, %v7610
    %v7713 = vpack.c.b16 %v7614, %v7611
    %v7714 = vpack.c.b16 %v7615, %v7612
    %v7715 = vpack.c.b16 %v7619, %v7616
    %v7716 = vpack.c.b16 %v7620, %v7617
    %v7717 = vpack.c.b16 %v7621, %v7618
    %v7718 = vpack.c.b16 %v7625, %v7622
    %v7719 = vpack.c.b16 %v7626, %v7623
    %v7720 = vpack.c.b16 %v7627, %v7624
    %v7721 = vpack.c.b16 %v7631, %v7628
    %v7722 = vpack.c.b16 %v7632, %v7629
    %v7723 = vpack.c.b16 %v7633, %v7630
    %v7724 = vpack.c.b16 %v7637, %v7634
    %v7725 = vpack.c.b16 %v7638, %v7635
    %v7726 = vpack.c.b16 %v7639, %v7636
    %v7727 = vpack.c.b16 %v7643, %v7640
    %v7728 = vpack.c.b16 %v7644, %v7641
    %v7729 = vpack.c.b16 %v7645, %v7642
    %v7815 = vsel %vm75, %v6478, 0
    %7817 = vmatprep.subr.bf16.mxu0 %v7647
    %7818 = vmatpush1.bf16.msra.mxu0 %v7646
    %7819 = vmatprep.subr.bf16.mxu0 %v7650
    %7820 = vmatpush1.bf16.msra.mxu0 %v7649
    %7821 = vmatprep.subr.bf16.mxu0 %v7653
    %7822 = vmatpush1.bf16.msra.mxu0 %v7652
    %7823 = vmatprep.subr.bf16.mxu0 %v7656
    %7824 = vmatpush1.bf16.msra.mxu0 %v7655
    %7825 = vmatprep.subr.bf16.mxu0 %v7659
    %7826 = vmatpush1.bf16.msra.mxu0 %v7658
    %7827 = vmatprep.subr.bf16.mxu0 %v7662
    %7828 = vmatpush1.bf16.msra.mxu0 %v7661
    %7829 = vmatprep.subr.bf16.mxu0 %v7665
    %7830 = vmatpush1.bf16.msra.mxu0 %v7664
    %7831 = vmatprep.subr.bf16.mxu0 %v7668
    %7832 = vmatpush1.bf16.msra.mxu0 %v7667
    %7833 = vmatprep.subr.bf16.mxu0 %v7671
    %7834 = vmatpush1.bf16.msra.mxu0 %v7670
    %7835 = vmatprep.subr.bf16.mxu0 %v7674
    %7836 = vmatpush1.bf16.msra.mxu0 %v7673
    %7837 = vmatprep.subr.bf16.mxu0 %v7677
    %7838 = vmatpush1.bf16.msra.mxu0 %v7676
    %7839 = vmatprep.subr.bf16.mxu0 %v7680
    %7840 = vmatpush1.bf16.msra.mxu0 %v7679
    %7841 = vmatprep.subr.bf16.mxu0 %v7683
    %7842 = vmatpush1.bf16.msra.mxu0 %v7682
    %7843 = vmatprep.subr.bf16.mxu0 %v7686
    %7844 = vmatpush1.bf16.msra.mxu0 %v7685
    %7845 = vmatprep.subr.bf16.mxu0 %v7689
    %7846 = vmatpush1.bf16.msra.mxu0 %v7688
    %7847 = vmatprep.subr.bf16.mxu0 %v7692
    %7848 = vmatpush1.bf16.msra.mxu0 %v7691
    %7849 = vmatprep.mubr.bf16.mxu0 %v6476
    %7850 = vmatmul.mubr.bf16.gmra.mrb[0].mxu0 %v6475
    %v7851 = vpop.f32.mrb[0].mxu0
    %v7852 = vadd.f32 %v7276, %v7851
    %v7853 = vpop.f32.mrb[0].mxu0
    %v7854 = vadd.f32 %v7278, %v7853
    %v7855 = vpop.f32.mrb[0].mxu0
    %v7856 = vadd.f32 %v7280, %v7855
    %v7857 = vpop.f32.mrb[0].mxu0
    %v7858 = vadd.f32 %v7282, %v7857
    %7859 = vdwg.mxu0
    %7860 = vmatprep.subr.bf16.mxu0 %v7695
    %7861 = vmatpush1.bf16.msra.mxu0 %v7694
    %7862 = vmatprep.subr.bf16.mxu0 %v7698
    %7863 = vmatpush1.bf16.msra.mxu0 %v7697
    %7864 = vmatprep.subr.bf16.mxu0 %v7701
    %7865 = vmatpush1.bf16.msra.mxu0 %v7700
    %7866 = vmatprep.subr.bf16.mxu0 %v7704
    %7867 = vmatpush1.bf16.msra.mxu0 %v7703
    %7868 = vmatprep.subr.bf16.mxu0 %v7707
    %7869 = vmatpush1.bf16.msra.mxu0 %v7706
    %7870 = vmatprep.subr.bf16.mxu0 %v7710
    %7871 = vmatpush1.bf16.msra.mxu0 %v7709
    %7872 = vmatprep.subr.bf16.mxu0 %v7713
    %7873 = vmatpush1.bf16.msra.mxu0 %v7712
    %7874 = vmatprep.subr.bf16.mxu0 %v7716
    %7875 = vmatpush1.bf16.msra.mxu0 %v7715
    %7876 = vmatprep.subr.bf16.mxu0 %v7719
    %7877 = vmatpush1.bf16.msra.mxu0 %v7718
    %7878 = vmatprep.subr.bf16.mxu0 %v7722
    %7879 = vmatpush1.bf16.msra.mxu0 %v7721
    %7880 = vmatprep.subr.bf16.mxu0 %v7725
    %7881 = vmatpush1.bf16.msra.mxu0 %v7724
    %7882 = vmatprep.subr.bf16.mxu0 %v7728
    %7883 = vmatpush1.bf16.msra.mxu0 %v7727
    %7884 = vmatprep.subr.bf16.mxu0 0
    %7885 = vmatpush1.bf16.msra.mxu0 0
    %7886 = vmatprep.subr.bf16.mxu0 0
    %7887 = vmatpush1.bf16.msra.mxu0 0
    %7888 = vmatprep.subr.bf16.mxu0 0
    %7889 = vmatpush1.bf16.msra.mxu0 0
    %7890 = vmatprep.subr.bf16.mxu0 0
    %7891 = vmatpush1.bf16.msra.mxu0 0
    %7892 = vmatprep.mubr.bf16.mxu0 %v7815
    %7893 = vmatmul.mubr.bf16.gmra.mrb[0].mxu0 %v6477
    %v7894 = vpop.f32.mrb[0].mxu0
    %v7895 = vadd.f32 %v7852, %v7894
    %v7896 = vpop.f32.mrb[0].mxu0
    %v7897 = vadd.f32 %v7854, %v7896
    %v7898 = vpop.f32.mrb[0].mxu0
    %v7899 = vadd.f32 %v7856, %v7898
    %v7900 = vpop.f32.mrb[0].mxu0
    %v7901 = vadd.f32 %v7858, %v7900
    %7902 = vdwg.mxu0
    %7903 = vmatprep.subr.bf16.mxu0 0
    %7904 = vmatpush1.bf16.msra.mxu0 %v7648
    %7905 = vmatprep.subr.bf16.mxu0 0
    %7906 = vmatpush1.bf16.msra.mxu0 %v7651
    %7907 = vmatprep.subr.bf16.mxu0 0
    %7908 = vmatpush1.bf16.msra.mxu0 %v7654
    %7909 = vmatprep.subr.bf16.mxu0 0
    %7910 = vmatpush1.bf16.msra.mxu0 %v7657
    %7911 = vmatprep.subr.bf16.mxu0 0
    %7912 = vmatpush1.bf16.msra.mxu0 %v7660
    %7913 = vmatprep.subr.bf16.mxu0 0
    %7914 = vmatpush1.bf16.msra.mxu0 %v7663
    %7915 = vmatprep.subr.bf16.mxu0 0
    %7916 = vmatpush1.bf16.msra.mxu0 %v7666
    %7917 = vmatprep.subr.bf16.mxu0 0
    %7918 = vmatpush1.bf16.msra.mxu0 %v7669
    %7919 = vmatprep.subr.bf16.mxu0 0
    %7920 = vmatpush1.bf16.msra.mxu0 %v7672
    %7921 = vmatprep.subr.bf16.mxu0 0
    %7922 = vmatpush1.bf16.msra.mxu0 %v7675
    %7923 = vmatprep.subr.bf16.mxu0 0
    %7924 = vmatpush1.bf16.msra.mxu0 %v7678
    %7925 = vmatprep.subr.bf16.mxu0 0
    %7926 = vmatpush1.bf16.msra.mxu0 %v7681
    %7927 = vmatprep.subr.bf16.mxu0 0
    %7928 = vmatpush1.bf16.msra.mxu0 %v7684
    %7929 = vmatprep.subr.bf16.mxu0 0
    %7930 = vmatpush1.bf16.msra.mxu0 %v7687
    %7931 = vmatprep.subr.bf16.mxu0 0
    %7932 = vmatpush1.bf16.msra.mxu0 %v7690
    %7933 = vmatprep.subr.bf16.mxu0 0
    %7934 = vmatpush1.bf16.msra.mxu0 %v7693
    %7935 = vmatprep.mubr.bf16.mxu0 %v6476
    %7936 = vmatmul.mubr.bf16.gmra.mrb[0].mxu0 %v6475
    %v7937 = vpop.f32.mrb[0].mxu0
    %v7938 = vadd.f32 %v7360, %v7937
    %v7939 = vpop.f32.mrb[0].mxu0
    %v7940 = vpop.f32.mrb[0].mxu0
    %v7941 = vadd.f32 %v7363, %v7940
    %v7942 = vpop.f32.mrb[0].mxu0
    %7943 = vdwg.mxu0
    %7944 = vmatprep.subr.bf16.mxu0 0
    %7945 = vmatpush1.bf16.msra.mxu0 %v7696
    %7946 = vmatprep.subr.bf16.mxu0 0
    %7947 = vmatpush1.bf16.msra.mxu0 %v7699
    %7948 = vmatprep.subr.bf16.mxu0 0
    %7949 = vmatpush1.bf16.msra.mxu0 %v7702
    %7950 = vmatprep.subr.bf16.mxu0 0
    %7951 = vmatpush1.bf16.msra.mxu0 %v7705
    %7952 = vmatprep.subr.bf16.mxu0 0
    %7953 = vmatpush1.bf16.msra.mxu0 %v7708
    %7954 = vmatprep.subr.bf16.mxu0 0
    %7955 = vmatpush1.bf16.msra.mxu0 %v7711
    %7956 = vmatprep.subr.bf16.mxu0 0
    %7957 = vmatpush1.bf16.msra.mxu0 %v7714
    %7958 = vmatprep.subr.bf16.mxu0 0
    %7959 = vmatpush1.bf16.msra.mxu0 %v7717
    %7960 = vmatprep.subr.bf16.mxu0 0
    %7961 = vmatpush1.bf16.msra.mxu0 %v7720
    %7962 = vmatprep.subr.bf16.mxu0 0
    %7963 = vmatpush1.bf16.msra.mxu0 %v7723
    %7964 = vmatprep.subr.bf16.mxu0 0
    %7965 = vmatpush1.bf16.msra.mxu0 %v7726
    %7966 = vmatprep.subr.bf16.mxu0 0
    %7967 = vmatpush1.bf16.msra.mxu0 %v7729
    %7968 = vmatprep.subr.bf16.mxu0 0
    %7969 = vmatpush1.bf16.msra.mxu0 0
    %7970 = vmatprep.subr.bf16.mxu0 0
    %7971 = vmatpush1.bf16.msra.mxu0 0
    %7972 = vmatprep.subr.bf16.mxu0 0
    %7973 = vmatpush1.bf16.msra.mxu0 0
    %7974 = vmatprep.subr.bf16.mxu0 0
    %7975 = vmatpush1.bf16.msra.mxu0 0
    %7976 = vmatprep.mubr.bf16.mxu0 %v7815
    %7977 = vmatmul.mubr.bf16.gmra.mrb[0].mxu0 %v6477
    %v7978 = vpop.f32.mrb[0].mxu0
    %v7979 = vadd.f32 %v7938, %v7978
    %v7980 = vpop.f32.mrb[0].mxu0
    %v7981 = vpop.f32.mrb[0].mxu0
    %v7982 = vadd.f32 %v7941, %v7981
    %v7983 = vpop.f32.mrb[0].mxu0
    %7984 = vdwg.mxu0
    %v7985 = vld [vmem:[#allocation4] sm:$0xfc]
    %v7986 = vld [vmem:[#allocation4 + $0x8] sm:$0xfc]
    %v7987 = vld [vmem:[#allocation4 + $0x10] sm:$0xfc]
    %v7988 = vld [vmem:[#allocation4 + $0x18] sm:$0xfc]
    %v7989 = vld [vmem:[#allocation4 + $0x20] sm:$0x3f]
    %v7990 = vld [vmem:[#allocation4 + $0x28] sm:$0x3f]
    %v7991 = vld [vmem:[#allocation4 + $0x30] sm:$0x3f]
    %v7992 = vld [vmem:[#allocation4 + $0x38] sm:$0x3f]
    %v7993 = vpack.c.bf16 %v7989, %v7985
    %v7994 = vpack.c.bf16 %v7990, %v7986
    %v7995 = vpack.c.bf16 %v7991, %v7987
    %v7996 = vpack.c.bf16 %v7992, %v7988
    %s7997 = scalar_lea.vmem %s3, 1344
    %v7998 = vld [vmem:[%s7997] sm:$0xff]
    %v7999 = vld [vmem:[%s7997 + $0x8] sm:$0xf]
    %v8000 = vld [vmem:[%s7997 + $0xc] sm:$0xff]
    %v8001 = vld [vmem:[%s7997 + $0x14] sm:$0xf]
    %v8002 = vld [vmem:[%s7997 + $0x18] sm:$0xff]
    %v8003 = vld [vmem:[%s7997 + $0x20] sm:$0xf]
    %v8004 = vld [vmem:[%s7997 + $0x24] sm:$0xff]
    %v8005 = vld [vmem:[%s7997 + $0x2c] sm:$0xf]
    %v8006 = vld [vmem:[%s7997 + $0x30] sm:$0xff]
    %v8007 = vld [vmem:[%s7997 + $0x38] sm:$0xf]
    %v8008 = vld [vmem:[%s7997 + $0x3c] sm:$0xff]
    %v8009 = vld [vmem:[%s7997 + $0x44] sm:$0xf]
    %v8010 = vld [vmem:[%s7997 + $0x48] sm:$0xff]
    %v8011 = vld [vmem:[%s7997 + $0x50] sm:$0xf]
    %v8012 = vld [vmem:[%s7997 + $0x54] sm:$0xff]
    %v8013 = vld [vmem:[%s7997 + $0x5c] sm:$0xf]
    %v8014 = vld [vmem:[%s7997 + $0x60] sm:$0xff]
    %v8015 = vld [vmem:[%s7997 + $0x68] sm:$0xf]
    %v8016 = vld [vmem:[%s7997 + $0x6c] sm:$0xff]
    %v8017 = vld [vmem:[%s7997 + $0x74] sm:$0xf]
    %v8018 = vld [vmem:[%s7997 + $0x78] sm:$0xff]
    %v8019 = vld [vmem:[%s7997 + $0x80] sm:$0xf]
    %v8020 = vld [vmem:[%s7997 + $0x84] sm:$0xff]
    %v8021 = vld [vmem:[%s7997 + $0x8c] sm:$0xf]
    %v8022 = vld [vmem:[%s7997 + $0x90] sm:$0xff]
    %v8023 = vld [vmem:[%s7997 + $0x98] sm:$0xf]
    %v8024 = vld [vmem:[%s7997 + $0x9c] sm:$0xff]
    %v8025 = vld [vmem:[%s7997 + $0xa4] sm:$0xf]
    %v8026 = vld [vmem:[%s7997 + $0xa8] sm:$0xff]
    %v8027 = vld [vmem:[%s7997 + $0xb0] sm:$0xf]
    %v8028 = vld [vmem:[%s7997 + $0xb4] sm:$0xff]
    %v8029 = vld [vmem:[%s7997 + $0xbc] sm:$0xf]
    %v8030 = vld [vmem:[%s7997 + $0xc0] sm:$0xff]
    %v8031 = vld [vmem:[%s7997 + $0xc8] sm:$0xf]
    %v8032 = vld [vmem:[%s7997 + $0xcc] sm:$0xff]
    %v8033 = vld [vmem:[%s7997 + $0xd4] sm:$0xf]
    %v8034 = vld [vmem:[%s7997 + $0xd8] sm:$0xff]
    %v8035 = vld [vmem:[%s7997 + $0xe0] sm:$0xf]
    %v8036 = vld [vmem:[%s7997 + $0xe4] sm:$0xff]
    %v8037 = vld [vmem:[%s7997 + $0xec] sm:$0xf]
    %v8038 = vld [vmem:[%s7997 + $0xf0] sm:$0xff]
    %v8039 = vld [vmem:[%s7997 + $0xf8] sm:$0xf]
    %v8040 = vld [vmem:[%s7997 + $0xfc] sm:$0xff]
    %v8041 = vld [vmem:[%s7997 + $0x104] sm:$0xf]
    %v8042 = vld [vmem:[%s7997 + $0x108] sm:$0xff]
    %v8043 = vld [vmem:[%s7997 + $0x110] sm:$0xf]
    %v8044 = vld [vmem:[%s7997 + $0x114] sm:$0xff]
    %v8045 = vld [vmem:[%s7997 + $0x11c] sm:$0xf]
    %v8046 = vld [vmem:[%s7997 + $0x120] sm:$0xff]
    %v8047 = vld [vmem:[%s7997 + $0x128] sm:$0xf]
    %v8048 = vld [vmem:[%s7997 + $0x12c] sm:$0xff]
    %v8049 = vld [vmem:[%s7997 + $0x134] sm:$0xf]
    %v8050 = vld [vmem:[%s7997 + $0x138] sm:$0xff]
    %v8051 = vld [vmem:[%s7997 + $0x140] sm:$0xf]
    %v8052 = vld [vmem:[%s7997 + $0x144] sm:$0xff]
    %v8053 = vld [vmem:[%s7997 + $0x14c] sm:$0xf]
    %v8054 = vld [vmem:[%s7997 + $0x150] sm:$0xff]
    %v8055 = vld [vmem:[%s7997 + $0x158] sm:$0xf]
    %v8056 = vld [vmem:[%s7997 + $0x15c] sm:$0xff]
    %v8057 = vld [vmem:[%s7997 + $0x164] sm:$0xf]
    %v8058 = vld [vmem:[%s7997 + $0x168] sm:$0xff]
    %v8059 = vld [vmem:[%s7997 + $0x170] sm:$0xf]
    %v8060 = vld [vmem:[%s7997 + $0x174] sm:$0xff]
    %v8061 = vld [vmem:[%s7997 + $0x17c] sm:$0xf]
    %v8062 = vld [vmem:[%s7997 + $0x180] sm:$0xff]
    %v8063 = vld [vmem:[%s7997 + $0x188] sm:$0xf]
    %v8064 = vld [vmem:[%s7997 + $0x18c] sm:$0xff]
    %v8065 = vld [vmem:[%s7997 + $0x194] sm:$0xf]
    %v8066 = vld [vmem:[%s7997 + $0x198] sm:$0xff]
    %v8067 = vld [vmem:[%s7997 + $0x1a0] sm:$0xf]
    %v8068 = vld [vmem:[%s7997 + $0x1a4] sm:$0xff]
    %v8069 = vld [vmem:[%s7997 + $0x1ac] sm:$0xf]
    %v8070 = vld [vmem:[%s7997 + $0x1b0] sm:$0xff]
    %v8071 = vld [vmem:[%s7997 + $0x1b8] sm:$0xf]
    %v8072 = vld [vmem:[%s7997 + $0x1bc] sm:$0xff]
    %v8073 = vld [vmem:[%s7997 + $0x1c4] sm:$0xf]
    %v8074 = vld [vmem:[%s7997 + $0x1c8] sm:$0xff]
    %v8075 = vld [vmem:[%s7997 + $0x1d0] sm:$0xf]
    %v8076 = vld [vmem:[%s7997 + $0x1d4] sm:$0xff]
    %v8077 = vld [vmem:[%s7997 + $0x1dc] sm:$0xf]
    %v8078 = vld [vmem:[%s7997 + $0x1e0] sm:$0xff]
    %v8079 = vld [vmem:[%s7997 + $0x1e8] sm:$0xf]
    %v8080 = vld [vmem:[%s7997 + $0x1ec] sm:$0xff]
    %v8081 = vld [vmem:[%s7997 + $0x1f4] sm:$0xf]
    %v8082 = vld [vmem:[%s7997 + $0x1f8] sm:$0xff]
    %v8083 = vld [vmem:[%s7997 + $0x200] sm:$0xf]
    %v8084 = vld [vmem:[%s7997 + $0x204] sm:$0xff]
    %v8085 = vld [vmem:[%s7997 + $0x20c] sm:$0xf]
    %v8086 = vld [vmem:[%s7997 + $0x210] sm:$0xff]
    %v8087 = vld [vmem:[%s7997 + $0x218] sm:$0xf]
    %v8088 = vld [vmem:[%s7997 + $0x21c] sm:$0xff]
    %v8089 = vld [vmem:[%s7997 + $0x224] sm:$0xf]
    %v8090 = vld [vmem:[%s7997 + $0x228] sm:$0xff]
    %v8091 = vld [vmem:[%s7997 + $0x230] sm:$0xf]
    %v8092 = vld [vmem:[%s7997 + $0x234] sm:$0xff]
    %v8093 = vld [vmem:[%s7997 + $0x23c] sm:$0xf]
    %v8094 = vld [vmem:[%s7997 + $0x240] sm:$0xff]
    %v8095 = vld [vmem:[%s7997 + $0x248] sm:$0xf]
    %v8096 = vld [vmem:[%s7997 + $0x24c] sm:$0xff]
    %v8097 = vld [vmem:[%s7997 + $0x254] sm:$0xf]
    %v8098 = vld [vmem:[%s7997 + $0x258] sm:$0xff]
    %v8099 = vld [vmem:[%s7997 + $0x260] sm:$0xf]
    %v8100 = vld [vmem:[%s7997 + $0x264] sm:$0xff]
    %v8101 = vld [vmem:[%s7997 + $0x26c] sm:$0xf]
    %v8102 = vld [vmem:[%s7997 + $0x270] sm:$0xff]
    %v8103 = vld [vmem:[%s7997 + $0x278] sm:$0xf]
    %v8104 = vld [vmem:[%s7997 + $0x27c] sm:$0xff]
    %v8105 = vld [vmem:[%s7997 + $0x284] sm:$0xf]
    %v8106 = vld [vmem:[%s7997 + $0x288] sm:$0xff]
    %v8107 = vld [vmem:[%s7997 + $0x290] sm:$0xf]
    %v8108 = vld [vmem:[%s7997 + $0x294] sm:$0xff]
    %v8109 = vld [vmem:[%s7997 + $0x29c] sm:$0xf]
    %v8114 = vrot.slane %v7993, 1
    %v8115 = vrot.slane %v7994, 1
    %v8116 = vrot.slane %v7995, 1
    %v8117 = vrot.slane %v7996, 1
    %v8233 = vunpack.c.l.b16 %v7998
    %v8234 = vunpack.c.h.b16 %v7998
    %v8235 = vunpack.c.l.b16 %v7999
    %v8236 = vunpack.c.l.b16 %v8000
    %v8237 = vunpack.c.h.b16 %v8000
    %v8238 = vunpack.c.l.b16 %v8001
    %v8239 = vunpack.c.l.b16 %v8002
    %v8240 = vunpack.c.h.b16 %v8002
    %v8241 = vunpack.c.l.b16 %v8003
    %v8242 = vunpack.c.l.b16 %v8004
    %v8243 = vunpack.c.h.b16 %v8004
    %v8244 = vunpack.c.l.b16 %v8005
    %v8245 = vunpack.c.l.b16 %v8006
    %v8246 = vunpack.c.h.b16 %v8006
    %v8247 = vunpack.c.l.b16 %v8007
    %v8248 = vunpack.c.l.b16 %v8008
    %v8249 = vunpack.c.h.b16 %v8008
    %v8250 = vunpack.c.l.b16 %v8009
    %v8251 = vunpack.c.l.b16 %v8010
    %v8252 = vunpack.c.h.b16 %v8010
    %v8253 = vunpack.c.l.b16 %v8011
    %v8254 = vunpack.c.l.b16 %v8012
    %v8255 = vunpack.c.h.b16 %v8012
    %v8256 = vunpack.c.l.b16 %v8013
    %v8257 = vunpack.c.l.b16 %v8014
    %v8258 = vunpack.c.h.b16 %v8014
    %v8259 = vunpack.c.l.b16 %v8015
    %v8260 = vunpack.c.l.b16 %v8016
    %v8261 = vunpack.c.h.b16 %v8016
    %v8262 = vunpack.c.l.b16 %v8017
    %v8263 = vunpack.c.l.b16 %v8018
    %v8264 = vunpack.c.h.b16 %v8018
    %v8265 = vunpack.c.l.b16 %v8019
    %v8266 = vunpack.c.l.b16 %v8020
    %v8267 = vunpack.c.h.b16 %v8020
    %v8268 = vunpack.c.l.b16 %v8021
    %v8269 = vunpack.c.l.b16 %v8022
    %v8270 = vunpack.c.h.b16 %v8022
    %v8271 = vunpack.c.l.b16 %v8023
    %v8272 = vunpack.c.l.b16 %v8024
    %v8273 = vunpack.c.h.b16 %v8024
    %v8274 = vunpack.c.l.b16 %v8025
    %v8275 = vunpack.c.l.b16 %v8026
    %v8276 = vunpack.c.h.b16 %v8026
    %v8277 = vunpack.c.l.b16 %v8027
    %v8278 = vunpack.c.l.b16 %v8028
    %v8279 = vunpack.c.h.b16 %v8028
    %v8280 = vunpack.c.l.b16 %v8029
    %v8281 = vunpack.c.l.b16 %v8030
    %v8282 = vunpack.c.h.b16 %v8030
    %v8283 = vunpack.c.l.b16 %v8031
    %v8284 = vunpack.c.l.b16 %v8032
    %v8285 = vunpack.c.h.b16 %v8032
    %v8286 = vunpack.c.l.b16 %v8033
    %v8287 = vunpack.c.l.b16 %v8034
    %v8288 = vunpack.c.h.b16 %v8034
    %v8289 = vunpack.c.l.b16 %v8035
    %v8290 = vunpack.c.l.b16 %v8036
    %v8291 = vunpack.c.h.b16 %v8036
    %v8292 = vunpack.c.l.b16 %v8037
    %v8293 = vunpack.c.l.b16 %v8038
    %v8294 = vunpack.c.h.b16 %v8038
    %v8295 = vunpack.c.l.b16 %v8039
    %v8296 = vunpack.c.l.b16 %v8040
    %v8297 = vunpack.c.h.b16 %v8040
    %v8298 = vunpack.c.l.b16 %v8041
    %v8299 = vunpack.c.l.b16 %v8042
    %v8300 = vunpack.c.h.b16 %v8042
    %v8301 = vunpack.c.l.b16 %v8043
    %v8302 = vunpack.c.l.b16 %v8044
    %v8303 = vunpack.c.h.b16 %v8044
    %v8304 = vunpack.c.l.b16 %v8045
    %v8305 = vunpack.c.l.b16 %v8046
    %v8306 = vunpack.c.h.b16 %v8046
    %v8307 = vunpack.c.l.b16 %v8047
    %v8308 = vunpack.c.l.b16 %v8048
    %v8309 = vunpack.c.h.b16 %v8048
    %v8310 = vunpack.c.l.b16 %v8049
    %v8311 = vunpack.c.l.b16 %v8050
    %v8312 = vunpack.c.h.b16 %v8050
    %v8313 = vunpack.c.l.b16 %v8051
    %v8314 = vunpack.c.l.b16 %v8052
    %v8315 = vunpack.c.h.b16 %v8052
    %v8316 = vunpack.c.l.b16 %v8053
    %v8317 = vunpack.c.l.b16 %v8054
    %v8318 = vunpack.c.h.b16 %v8054
    %v8319 = vunpack.c.l.b16 %v8055
    %v8320 = vunpack.c.l.b16 %v8056
    %v8321 = vunpack.c.h.b16 %v8056
    %v8322 = vunpack.c.l.b16 %v8057
    %v8323 = vunpack.c.l.b16 %v8058
    %v8324 = vunpack.c.h.b16 %v8058
    %v8325 = vunpack.c.l.b16 %v8059
    %v8326 = vunpack.c.l.b16 %v8060
    %v8327 = vunpack.c.h.b16 %v8060
    %v8328 = vunpack.c.l.b16 %v8061
    %v8329 = vunpack.c.l.b16 %v8062
    %v8330 = vunpack.c.h.b16 %v8062
    %v8331 = vunpack.c.l.b16 %v8063
    %v8332 = vunpack.c.l.b16 %v8064
    %v8333 = vunpack.c.h.b16 %v8064
    %v8334 = vunpack.c.l.b16 %v8065
    %v8335 = vunpack.c.l.b16 %v8066
    %v8336 = vunpack.c.h.b16 %v8066
    %v8337 = vunpack.c.l.b16 %v8067
    %v8338 = vunpack.c.l.b16 %v8068
    %v8339 = vunpack.c.h.b16 %v8068
    %v8340 = vunpack.c.l.b16 %v8069
    %v8341 = vunpack.c.l.b16 %v8070
    %v8342 = vunpack.c.h.b16 %v8070
    %v8343 = vunpack.c.l.b16 %v8071
    %v8344 = vunpack.c.l.b16 %v8072
    %v8345 = vunpack.c.h.b16 %v8072
    %v8346 = vunpack.c.l.b16 %v8073
    %v8347 = vunpack.c.l.b16 %v8074
    %v8348 = vunpack.c.h.b16 %v8074
    %v8349 = vunpack.c.l.b16 %v8075
    %v8350 = vunpack.c.l.b16 %v8076
    %v8351 = vunpack.c.h.b16 %v8076
    %v8352 = vunpack.c.l.b16 %v8077
    %v8353 = vunpack.c.l.b16 %v8078
    %v8354 = vunpack.c.h.b16 %v8078
    %v8355 = vunpack.c.l.b16 %v8079
    %v8356 = vunpack.c.l.b16 %v8080
    %v8357 = vunpack.c.h.b16 %v8080
    %v8358 = vunpack.c.l.b16 %v8081
    %v8359 = vunpack.c.l.b16 %v8082
    %v8360 = vunpack.c.h.b16 %v8082
    %v8361 = vunpack.c.l.b16 %v8083
    %v8362 = vunpack.c.l.b16 %v8084
    %v8363 = vunpack.c.h.b16 %v8084
    %v8364 = vunpack.c.l.b16 %v8085
    %v8365 = vunpack.c.l.b16 %v8086
    %v8366 = vunpack.c.h.b16 %v8086
    %v8367 = vunpack.c.l.b16 %v8087
    %v8368 = vunpack.c.l.b16 %v8088
    %v8369 = vunpack.c.h.b16 %v8088
    %v8370 = vunpack.c.l.b16 %v8089
    %v8371 = vunpack.c.l.b16 %v8090
    %v8372 = vunpack.c.h.b16 %v8090
    %v8373 = vunpack.c.l.b16 %v8091
    %v8374 = vunpack.c.l.b16 %v8092
    %v8375 = vunpack.c.h.b16 %v8092
    %v8376 = vunpack.c.l.b16 %v8093
    %v8377 = vunpack.c.l.b16 %v8094
    %v8378 = vunpack.c.h.b16 %v8094
    %v8379 = vunpack.c.l.b16 %v8095
    %v8380 = vunpack.c.l.b16 %v8096
    %v8381 = vunpack.c.h.b16 %v8096
    %v8382 = vunpack.c.l.b16 %v8097
    %v8383 = vunpack.c.l.b16 %v8098
    %v8384 = vunpack.c.h.b16 %v8098
    %v8385 = vunpack.c.l.b16 %v8099
    %v8386 = vunpack.c.l.b16 %v8100
    %v8387 = vunpack.c.h.b16 %v8100
    %v8388 = vunpack.c.l.b16 %v8101
    %v8389 = vunpack.c.l.b16 %v8102
    %v8390 = vunpack.c.h.b16 %v8102
    %v8391 = vunpack.c.l.b16 %v8103
    %v8392 = vunpack.c.l.b16 %v8104
    %v8393 = vunpack.c.h.b16 %v8104
    %v8394 = vunpack.c.l.b16 %v8105
    %v8395 = vunpack.c.l.b16 %v8106
    %v8396 = vunpack.c.h.b16 %v8106
    %v8397 = vunpack.c.l.b16 %v8107
    %v8398 = vunpack.c.l.b16 %v8108
    %v8399 = vunpack.c.h.b16 %v8108
    %v8400 = vunpack.c.l.b16 %v8109
    %v8401 = vpack.c.b16 %v8236, %v8233
    %v8402 = vpack.c.b16 %v8237, %v8234
    %v8403 = vpack.c.b16 %v8238, %v8235
    %v8404 = vpack.c.b16 %v8242, %v8239
    %v8405 = vpack.c.b16 %v8243, %v8240
    %v8406 = vpack.c.b16 %v8244, %v8241
    %v8407 = vpack.c.b16 %v8248, %v8245
    %v8408 = vpack.c.b16 %v8249, %v8246
    %v8409 = vpack.c.b16 %v8250, %v8247
    %v8410 = vpack.c.b16 %v8254, %v8251
    %v8411 = vpack.c.b16 %v8255, %v8252
    %v8412 = vpack.c.b16 %v8256, %v8253
    %v8413 = vpack.c.b16 %v8260, %v8257
    %v8414 = vpack.c.b16 %v8261, %v8258
    %v8415 = vpack.c.b16 %v8262, %v8259
    %v8416 = vpack.c.b16 %v8266, %v8263
    %v8417 = vpack.c.b16 %v8267, %v8264
    %v8418 = vpack.c.b16 %v8268, %v8265
    %v8419 = vpack.c.b16 %v8272, %v8269
    %v8420 = vpack.c.b16 %v8273, %v8270
    %v8421 = vpack.c.b16 %v8274, %v8271
    %v8422 = vpack.c.b16 %v8278, %v8275
    %v8423 = vpack.c.b16 %v8279, %v8276
    %v8424 = vpack.c.b16 %v8280, %v8277
    %v8425 = vpack.c.b16 %v8284, %v8281
    %v8426 = vpack.c.b16 %v8285, %v8282
    %v8427 = vpack.c.b16 %v8286, %v8283
    %v8428 = vpack.c.b16 %v8290, %v8287
    %v8429 = vpack.c.b16 %v8291, %v8288
    %v8430 = vpack.c.b16 %v8292, %v8289
    %v8431 = vpack.c.b16 %v8296, %v8293
    %v8432 = vpack.c.b16 %v8297, %v8294
    %v8433 = vpack.c.b16 %v8298, %v8295
    %v8434 = vpack.c.b16 %v8302, %v8299
    %v8435 = vpack.c.b16 %v8303, %v8300
    %v8436 = vpack.c.b16 %v8304, %v8301
    %v8437 = vpack.c.b16 %v8308, %v8305
    %v8438 = vpack.c.b16 %v8309, %v8306
    %v8439 = vpack.c.b16 %v8310, %v8307
    %v8440 = vpack.c.b16 %v8314, %v8311
    %v8441 = vpack.c.b16 %v8315, %v8312
    %v8442 = vpack.c.b16 %v8316, %v8313
    %v8443 = vpack.c.b16 %v8320, %v8317
    %v8444 = vpack.c.b16 %v8321, %v8318
    %v8445 = vpack.c.b16 %v8322, %v8319
    %v8446 = vpack.c.b16 %v8326, %v8323
    %v8447 = vpack.c.b16 %v8327, %v8324
    %v8448 = vpack.c.b16 %v8328, %v8325
    %v8449 = vpack.c.b16 %v8332, %v8329
    %v8450 = vpack.c.b16 %v8333, %v8330
    %v8451 = vpack.c.b16 %v8334, %v8331
    %v8452 = vpack.c.b16 %v8338, %v8335
    %v8453 = vpack.c.b16 %v8339, %v8336
    %v8454 = vpack.c.b16 %v8340, %v8337
    %v8455 = vpack.c.b16 %v8344, %v8341
    %v8456 = vpack.c.b16 %v8345, %v8342
    %v8457 = vpack.c.b16 %v8346, %v8343
    %v8458 = vpack.c.b16 %v8350, %v8347
    %v8459 = vpack.c.b16 %v8351, %v8348
    %v8460 = vpack.c.b16 %v8352, %v8349
    %v8461 = vpack.c.b16 %v8356, %v8353
    %v8462 = vpack.c.b16 %v8357, %v8354
    %v8463 = vpack.c.b16 %v8358, %v8355
    %v8464 = vpack.c.b16 %v8362, %v8359
    %v8465 = vpack.c.b16 %v8363, %v8360
    %v8466 = vpack.c.b16 %v8364, %v8361
    %v8467 = vpack.c.b16 %v8368, %v8365
    %v8468 = vpack.c.b16 %v8369, %v8366
    %v8469 = vpack.c.b16 %v8370, %v8367
    %v8470 = vpack.c.b16 %v8374, %v8371
    %v8471 = vpack.c.b16 %v8375, %v8372
    %v8472 = vpack.c.b16 %v8376, %v8373
    %v8473 = vpack.c.b16 %v8380, %v8377
    %v8474 = vpack.c.b16 %v8381, %v8378
    %v8475 = vpack.c.b16 %v8382, %v8379
    %v8476 = vpack.c.b16 %v8386, %v8383
    %v8477 = vpack.c.b16 %v8387, %v8384
    %v8478 = vpack.c.b16 %v8388, %v8385
    %v8479 = vpack.c.b16 %v8392, %v8389
    %v8480 = vpack.c.b16 %v8393, %v8390
    %v8481 = vpack.c.b16 %v8394, %v8391
    %v8482 = vpack.c.b16 %v8398, %v8395
    %v8483 = vpack.c.b16 %v8399, %v8396
    %v8484 = vpack.c.b16 %v8400, %v8397
    %v8570 = vsel %vm75, %v8117, 0
    %8572 = vmatprep.subr.bf16.mxu0 %v8402
    %8573 = vmatpush1.bf16.msra.mxu0 %v8401
    %8574 = vmatprep.subr.bf16.mxu0 %v8405
    %8575 = vmatpush1.bf16.msra.mxu0 %v8404
    %8576 = vmatprep.subr.bf16.mxu0 %v8408
    %8577 = vmatpush1.bf16.msra.mxu0 %v8407
    %8578 = vmatprep.subr.bf16.mxu0 %v8411
    %8579 = vmatpush1.bf16.msra.mxu0 %v8410
    %8580 = vmatprep.subr.bf16.mxu0 %v8414
    %8581 = vmatpush1.bf16.msra.mxu0 %v8413
    %8582 = vmatprep.subr.bf16.mxu0 %v8417
    %8583 = vmatpush1.bf16.msra.mxu0 %v8416
    %8584 = vmatprep.subr.bf16.mxu0 %v8420
    %8585 = vmatpush1.bf16.msra.mxu0 %v8419
    %8586 = vmatprep.subr.bf16.mxu0 %v8423
    %8587 = vmatpush1.bf16.msra.mxu0 %v8422
    %8588 = vmatprep.subr.bf16.mxu0 %v8426
    %8589 = vmatpush1.bf16.msra.mxu0 %v8425
    %8590 = vmatprep.subr.bf16.mxu0 %v8429
    %8591 = vmatpush1.bf16.msra.mxu0 %v8428
    %8592 = vmatprep.subr.bf16.mxu0 %v8432
    %8593 = vmatpush1.bf16.msra.mxu0 %v8431
    %8594 = vmatprep.subr.bf16.mxu0 %v8435
    %8595 = vmatpush1.bf16.msra.mxu0 %v8434
    %8596 = vmatprep.subr.bf16.mxu0 %v8438
    %8597 = vmatpush1.bf16.msra.mxu0 %v8437
    %8598 = vmatprep.subr.bf16.mxu0 %v8441
    %8599 = vmatpush1.bf16.msra.mxu0 %v8440
    %8600 = vmatprep.subr.bf16.mxu0 %v8444
    %8601 = vmatpush1.bf16.msra.mxu0 %v8443
    %8602 = vmatprep.subr.bf16.mxu0 %v8447
    %8603 = vmatpush1.bf16.msra.mxu0 %v8446
    %8604 = vmatprep.mubr.bf16.mxu0 %v8115
    %8605 = vmatmul.mubr.bf16.gmra.mrb[0].mxu0 %v8114
    %v8606 = vpop.f32.mrb[0].mxu0
    %v8607 = vadd.f32 0.0, %v8606
    %v8608 = vpop.f32.mrb[0].mxu0
    %v8609 = vadd.f32 0.0, %v8608
    %v8610 = vpop.f32.mrb[0].mxu0
    %v8611 = vadd.f32 0.0, %v8610
    %v8612 = vpop.f32.mrb[0].mxu0
    %v8613 = vadd.f32 0.0, %v8612
    %8614 = vdwg.mxu0
    %8615 = vmatprep.subr.bf16.mxu0 %v8450
    %8616 = vmatpush1.bf16.msra.mxu0 %v8449
    %8617 = vmatprep.subr.bf16.mxu0 %v8453
    %8618 = vmatpush1.bf16.msra.mxu0 %v8452
    %8619 = vmatprep.subr.bf16.mxu0 %v8456
    %8620 = vmatpush1.bf16.msra.mxu0 %v8455
    %8621 = vmatprep.subr.bf16.mxu0 %v8459
    %8622 = vmatpush1.bf16.msra.mxu0 %v8458
    %8623 = vmatprep.subr.bf16.mxu0 %v8462
    %8624 = vmatpush1.bf16.msra.mxu0 %v8461
    %8625 = vmatprep.subr.bf16.mxu0 %v8465
    %8626 = vmatpush1.bf16.msra.mxu0 %v8464
    %8627 = vmatprep.subr.bf16.mxu0 %v8468
    %8628 = vmatpush1.bf16.msra.mxu0 %v8467
    %8629 = vmatprep.subr.bf16.mxu0 %v8471
    %8630 = vmatpush1.bf16.msra.mxu0 %v8470
    %8631 = vmatprep.subr.bf16.mxu0 %v8474
    %8632 = vmatpush1.bf16.msra.mxu0 %v8473
    %8633 = vmatprep.subr.bf16.mxu0 %v8477
    %8634 = vmatpush1.bf16.msra.mxu0 %v8476
    %8635 = vmatprep.subr.bf16.mxu0 %v8480
    %8636 = vmatpush1.bf16.msra.mxu0 %v8479
    %8637 = vmatprep.subr.bf16.mxu0 %v8483
    %8638 = vmatpush1.bf16.msra.mxu0 %v8482
    %8639 = vmatprep.subr.bf16.mxu0 0
    %8640 = vmatpush1.bf16.msra.mxu0 0
    %8641 = vmatprep.subr.bf16.mxu0 0
    %8642 = vmatpush1.bf16.msra.mxu0 0
    %8643 = vmatprep.subr.bf16.mxu0 0
    %8644 = vmatpush1.bf16.msra.mxu0 0
    %8645 = vmatprep.subr.bf16.mxu0 0
    %8646 = vmatpush1.bf16.msra.mxu0 0
    %8647 = vmatprep.mubr.bf16.mxu0 %v8570
    %8648 = vmatmul.mubr.bf16.gmra.mrb[0].mxu0 %v8116
    %v8649 = vpop.f32.mrb[0].mxu0
    %v8650 = vadd.f32 %v8607, %v8649
    %v8651 = vpop.f32.mrb[0].mxu0
    %v8652 = vadd.f32 %v8609, %v8651
    %v8653 = vpop.f32.mrb[0].mxu0
    %v8654 = vadd.f32 %v8611, %v8653
    %v8655 = vpop.f32.mrb[0].mxu0
    %v8656 = vadd.f32 %v8613, %v8655
    %8657 = vdwg.mxu0
    %8658 = vmatprep.subr.bf16.mxu0 0
    %8659 = vmatpush1.bf16.msra.mxu0 %v8403
    %8660 = vmatprep.subr.bf16.mxu0 0
    %8661 = vmatpush1.bf16.msra.mxu0 %v8406
    %8662 = vmatprep.subr.bf16.mxu0 0
    %8663 = vmatpush1.bf16.msra.mxu0 %v8409
    %8664 = vmatprep.subr.bf16.mxu0 0
    %8665 = vmatpush1.bf16.msra.mxu0 %v8412
    %8666 = vmatprep.subr.bf16.mxu0 0
    %8667 = vmatpush1.bf16.msra.mxu0 %v8415
    %8668 = vmatprep.subr.bf16.mxu0 0
    %8669 = vmatpush1.bf16.msra.mxu0 %v8418
    %8670 = vmatprep.subr.bf16.mxu0 0
    %8671 = vmatpush1.bf16.msra.mxu0 %v8421
    %8672 = vmatprep.subr.bf16.mxu0 0
    %8673 = vmatpush1.bf16.msra.mxu0 %v8424
    %8674 = vmatprep.subr.bf16.mxu0 0
    %8675 = vmatpush1.bf16.msra.mxu0 %v8427
    %8676 = vmatprep.subr.bf16.mxu0 0
    %8677 = vmatpush1.bf16.msra.mxu0 %v8430
    %8678 = vmatprep.subr.bf16.mxu0 0
    %8679 = vmatpush1.bf16.msra.mxu0 %v8433
    %8680 = vmatprep.subr.bf16.mxu0 0
    %8681 = vmatpush1.bf16.msra.mxu0 %v8436
    %8682 = vmatprep.subr.bf16.mxu0 0
    %8683 = vmatpush1.bf16.msra.mxu0 %v8439
    %8684 = vmatprep.subr.bf16.mxu0 0
    %8685 = vmatpush1.bf16.msra.mxu0 %v8442
    %8686 = vmatprep.subr.bf16.mxu0 0
    %8687 = vmatpush1.bf16.msra.mxu0 %v8445
    %8688 = vmatprep.subr.bf16.mxu0 0
    %8689 = vmatpush1.bf16.msra.mxu0 %v8448
    %8690 = vmatprep.mubr.bf16.mxu0 %v8115
    %8691 = vmatmul.mubr.bf16.gmra.mrb[0].mxu0 %v8114
    %v8692 = vpop.f32.mrb[0].mxu0
    %v8693 = vadd.f32 0.0, %v8692
    %v8694 = vpop.f32.mrb[0].mxu0
    %v8695 = vpop.f32.mrb[0].mxu0
    %v8696 = vadd.f32 0.0, %v8695
    %v8697 = vpop.f32.mrb[0].mxu0
    %8698 = vdwg.mxu0
    %8699 = vmatprep.subr.bf16.mxu0 0
    %8700 = vmatpush1.bf16.msra.mxu0 %v8451
    %8701 = vmatprep.subr.bf16.mxu0 0
    %8702 = vmatpush1.bf16.msra.mxu0 %v8454
    %8703 = vmatprep.subr.bf16.mxu0 0
    %8704 = vmatpush1.bf16.msra.mxu0 %v8457
    %8705 = vmatprep.subr.bf16.mxu0 0
    %8706 = vmatpush1.bf16.msra.mxu0 %v8460
    %8707 = vmatprep.subr.bf16.mxu0 0
    %8708 = vmatpush1.bf16.msra.mxu0 %v8463
    %8709 = vmatprep.subr.bf16.mxu0 0
    %8710 = vmatpush1.bf16.msra.mxu0 %v8466
    %8711 = vmatprep.subr.bf16.mxu0 0
    %8712 = vmatpush1.bf16.msra.mxu0 %v8469
    %8713 = vmatprep.subr.bf16.mxu0 0
    %8714 = vmatpush1.bf16.msra.mxu0 %v8472
    %8715 = vmatprep.subr.bf16.mxu0 0
    %8716 = vmatpush1.bf16.msra.mxu0 %v8475
    %8717 = vmatprep.subr.bf16.mxu0 0
    %8718 = vmatpush1.bf16.msra.mxu0 %v8478
    %8719 = vmatprep.subr.bf16.mxu0 0
    %8720 = vmatpush1.bf16.msra.mxu0 %v8481
    %8721 = vmatprep.subr.bf16.mxu0 0
    %8722 = vmatpush1.bf16.msra.mxu0 %v8484
    %8723 = vmatprep.subr.bf16.mxu0 0
    %8724 = vmatpush1.bf16.msra.mxu0 0
    %8725 = vmatprep.subr.bf16.mxu0 0
    %8726 = vmatpush1.bf16.msra.mxu0 0
    %8727 = vmatprep.subr.bf16.mxu0 0
    %8728 = vmatpush1.bf16.msra.mxu0 0
    %8729 = vmatprep.subr.bf16.mxu0 0
    %8730 = vmatpush1.bf16.msra.mxu0 0
    %8731 = vmatprep.mubr.bf16.mxu0 %v8570
    %8732 = vmatmul.mubr.bf16.gmra.mrb[0].mxu0 %v8116
    %v8733 = vpop.f32.mrb[0].mxu0
    %v8734 = vadd.f32 %v8693, %v8733
    %v8735 = vpop.f32.mrb[0].mxu0
    %v8736 = vpop.f32.mrb[0].mxu0
    %v8737 = vadd.f32 %v8696, %v8736
    %v8738 = vpop.f32.mrb[0].mxu0
    %8739 = vdwg.mxu0
    %v8740 = vadd.f32 %v7895, %v8650
    %v8741 = vadd.f32 %v7897, %v8652
    %v8742 = vadd.f32 %v7979, %v8734
    %v8743 = vadd.f32 %v7899, %v8654
    %v8744 = vadd.f32 %v7901, %v8656
    %v8745 = vadd.f32 %v7982, %v8737
    %v8746 = vld [vmem:[%s9] sm:$0x7]
    %v8748 = vlaneseq
    %v8749 = vshrl.u32 %v8748, 7
    %v8750 = vsub.s32 0, %v8749
    %v8751 = vrot.slane %v8746, %v8750
    %v8752 = vlaneseq
    %v8753 = vshrl.u32 %v8752, 7
    %v8754 = vsub.s32 1, %v8753
    %v8755 = vrot.slane %v8746, %v8754
    %v8756 = vlaneseq
    %v8757 = vshrl.u32 %v8756, 7
    %v8758 = vsub.s32 2, %v8757
    %v8759 = vrot.slane %v8746, %v8758
    %v8763 = vadd.f32 %v8740, %v8751
    %v8764 = vadd.f32 %v8741, %v8755
    %v8765 = vadd.f32 %v8742, %v8759
    %v8766 = vadd.f32 %v8743, %v8751
    %v8767 = vadd.f32 %v8744, %v8755
    %v8768 = vadd.f32 %v8745, %v8759
    %v8769 = vmax.f32 %v8763, 0.0
    %v8770 = vmax.f32 %v8764, 0.0
    %v8771 = vmax.f32 %v8765, 0.0
    %v8772 = vmax.f32 %v8766, 0.0
    %v8773 = vmax.f32 %v8767, 0.0
    %v8774 = vmax.f32 %v8768, 0.0
    %v8775 = vpack.c.bf16 %v8772, %v8769
    %v8776 = vpack.c.bf16 %v8773, %v8770
    %v8777 = vpack.c.bf16 %v8774, %v8771
    %v8778 = vld [vmem:[%s6] sm:$0x1]
    %vm8779 = vcmask 97280
    %v8781 = vsel %vm8779, %v8778, 0
    %vm8783 = vcmask 1045504
    %v8785 = vsel %vm8783, %v8775, 0
    %v8788 = vsel %vm8783, %v8776, 0
    %v8791 = vsel %vm8783, %v8777, 0
    %8793 = vmatprep.subr.bf16.mxu0 %v8788
    %8794 = vmatpush1.bf16.msra.mxu0 %v8785
    %8795 = vmatprep.subr.bf16.mxu0 0
    %8796 = vmatpush1.bf16.msra.mxu0 0
    %8797 = vmatprep.subr.bf16.mxu0 0
    %8798 = vmatpush1.bf16.msra.mxu0 0
    %8799 = vmatprep.subr.bf16.mxu0 0
    %8800 = vmatpush1.bf16.msra.mxu0 0
    %8801 = vmatprep.subr.bf16.mxu0 0
    %8802 = vmatpush1.bf16.msra.mxu0 0
    %8803 = vmatprep.subr.bf16.mxu0 0
    %8804 = vmatpush1.bf16.msra.mxu0 0
    %8805 = vmatprep.subr.bf16.mxu0 0
    %8806 = vmatpush1.bf16.msra.mxu0 0
    %8807 = vmatprep.subr.bf16.mxu0 0
    %8808 = vmatpush1.bf16.msra.mxu0 0
    %8809 = vmatprep.subr.bf16.mxu0 0
    %8810 = vmatpush1.bf16.msra.mxu0 0
    %8811 = vmatprep.subr.bf16.mxu0 0
    %8812 = vmatpush1.bf16.msra.mxu0 0
    %8813 = vmatprep.subr.bf16.mxu0 0
    %8814 = vmatpush1.bf16.msra.mxu0 0
    %8815 = vmatprep.subr.bf16.mxu0 0
    %8816 = vmatpush1.bf16.msra.mxu0 0
    %8817 = vmatprep.subr.bf16.mxu0 0
    %8818 = vmatpush1.bf16.msra.mxu0 0
    %8819 = vmatprep.subr.bf16.mxu0 0
    %8820 = vmatpush1.bf16.msra.mxu0 0
    %8821 = vmatprep.subr.bf16.mxu0 0
    %8822 = vmatpush1.bf16.msra.mxu0 0
    %8823 = vmatprep.subr.bf16.mxu0 0
    %8824 = vmatpush1.bf16.msra.mxu0 0
    %8825 = vmatprep.mubr.bf16.mxu0 0
    %8826 = vmatmul.mubr.bf16.gmra.mrb[0].mxu0 %v8781
    %v8827 = vpop.f32.mrb[0].mxu0
    %v8828 = vadd.f32 0.0, %v8827
    %v8829 = vpop.f32.mrb[0].mxu0
    %v8830 = vadd.f32 0.0, %v8829
    %v8831 = vpop.f32.mrb[0].mxu0
    %v8832 = vpop.f32.mrb[0].mxu0
    %8833 = vdwg.mxu0
    %8834 = vmatprep.subr.bf16.mxu0 0
    %8835 = vmatpush1.bf16.msra.mxu0 %v8791
    %8836 = vmatprep.subr.bf16.mxu0 0
    %8837 = vmatpush1.bf16.msra.mxu0 0
    %8838 = vmatprep.subr.bf16.mxu0 0
    %8839 = vmatpush1.bf16.msra.mxu0 0
    %8840 = vmatprep.subr.bf16.mxu0 0
    %8841 = vmatpush1.bf16.msra.mxu0 0
    %8842 = vmatprep.subr.bf16.mxu0 0
    %8843 = vmatpush1.bf16.msra.mxu0 0
    %8844 = vmatprep.subr.bf16.mxu0 0
    %8845 = vmatpush1.bf16.msra.mxu0 0
    %8846 = vmatprep.subr.bf16.mxu0 0
    %8847 = vmatpush1.bf16.msra.mxu0 0
    %8848 = vmatprep.subr.bf16.mxu0 0
    %8849 = vmatpush1.bf16.msra.mxu0 0
    %8850 = vmatprep.subr.bf16.mxu0 0
    %8851 = vmatpush1.bf16.msra.mxu0 0
    %8852 = vmatprep.subr.bf16.mxu0 0
    %8853 = vmatpush1.bf16.msra.mxu0 0
    %8854 = vmatprep.subr.bf16.mxu0 0
    %8855 = vmatpush1.bf16.msra.mxu0 0
    %8856 = vmatprep.subr.bf16.mxu0 0
    %8857 = vmatpush1.bf16.msra.mxu0 0
    %8858 = vmatprep.subr.bf16.mxu0 0
    %8859 = vmatpush1.bf16.msra.mxu0 0
    %8860 = vmatprep.subr.bf16.mxu0 0
    %8861 = vmatpush1.bf16.msra.mxu0 0
    %8862 = vmatprep.subr.bf16.mxu0 0
    %8863 = vmatpush1.bf16.msra.mxu0 0
    %8864 = vmatprep.subr.bf16.mxu0 0
    %8865 = vmatpush1.bf16.msra.mxu0 0
    %8866 = vmatprep.mubr.bf16.mxu0 0
    %8867 = vmatmul.mubr.bf16.gmra.mrb[0].mxu0 %v8781
    %v8868 = vpop.f32.mrb[0].mxu0
    %v8869 = vadd.f32 0.0, %v8868
    %v8870 = vpop.f32.mrb[0].mxu0
    %v8871 = vpop.f32.mrb[0].mxu0
    %v8872 = vpop.f32.mrb[0].mxu0
    %8873 = vdwg.mxu0
    %v8874 = vpack.c.bf16 %v8828, %v8828
    %v8875 = vpack.c.bf16 %v8830, %v8830
    %v8876 = vpack.c.bf16 %v8869, %v8869
    %v8877 = vld [vmem:[%s10] sm:$0xff]
    %v8878 = vld [vmem:[%s10 + $0x8] sm:$0xff]
    %v8879 = vld [vmem:[%s10 + $0x10] sm:$0xff]
    %v8880 = vld [vmem:[%s10 + $0x18] sm:$0xff]
    %v8881 = vld [vmem:[%s10 + $0x20] sm:$0xff]
    %v8882 = vld [vmem:[%s10 + $0x28] sm:$0xff]
    %v8883 = vld [vmem:[%s10 + $0x30] sm:$0xff]
    %v8884 = vld [vmem:[%s10 + $0x38] sm:$0xff]
    %v8885 = vld [vmem:[%s10 + $0x40] sm:$0xff]
    %v8886 = vld [vmem:[%s10 + $0x48] sm:$0xff]
    %v8887 = vld [vmem:[%s10 + $0x50] sm:$0xff]
    %v8888 = vld [vmem:[%s10 + $0x58] sm:$0xff]
    %v8889 = vld [vmem:[%s10 + $0x60] sm:$0xff]
    %v8890 = vld [vmem:[%s10 + $0x68] sm:$0xff]
    %v8891 = vld [vmem:[%s10 + $0x70] sm:$0xff]
    %v8892 = vld [vmem:[%s10 + $0x78] sm:$0xff]
    %v8893 = vld [vmem:[%s10 + $0x80] sm:$0xff]
    %v8894 = vld [vmem:[%s10 + $0x88] sm:$0xff]
    %v8895 = vld [vmem:[%s10 + $0x90] sm:$0xff]
    %v8896 = vld [vmem:[%s10 + $0x98] sm:$0xff]
    %v8897 = vld [vmem:[%s10 + $0xa0] sm:$0xff]
    %v8898 = vld [vmem:[%s10 + $0xa8] sm:$0xff]
    %v8899 = vld [vmem:[%s10 + $0xb0] sm:$0xff]
    %v8900 = vld [vmem:[%s10 + $0xb8] sm:$0xff]
    %v8901 = vld [vmem:[%s10 + $0xc0] sm:$0xff]
    %v8902 = vld [vmem:[%s10 + $0xc8] sm:$0xff]
    %v8903 = vld [vmem:[%s10 + $0xd0] sm:$0xff]
    %v8904 = vld [vmem:[%s10 + $0xd8] sm:$0xff]
    %v8905 = vld [vmem:[%s10 + $0xe0] sm:$0xff]
    %v8906 = vld [vmem:[%s10 + $0xe8] sm:$0xff]
    %v8907 = vld [vmem:[%s10 + $0xf0] sm:$0xff]
    %v8908 = vld [vmem:[%s10 + $0xf8] sm:$0xff]
    %v8909 = vld [vmem:[%s10 + $0x100] sm:$0xff]
    %v8910 = vld [vmem:[%s10 + $0x108] sm:$0xff]
    %v8911 = vld [vmem:[%s10 + $0x110] sm:$0xff]
    %v8912 = vld [vmem:[%s10 + $0x118] sm:$0xff]
    %v8913 = vld [vmem:[%s10 + $0x120] sm:$0xff]
    %v8914 = vld [vmem:[%s10 + $0x128] sm:$0xff]
    %v8915 = vld [vmem:[%s10 + $0x130] sm:$0xff]
    %v8916 = vld [vmem:[%s10 + $0x138] sm:$0xff]
    %s8917 = scalar_lea.vmem %s6, 1
    %v8918 = vld [vmem:[%s8917] sm:$0x1]
    %v8920 = vsel %vm8779, %v8918, 0
    %8922 = vmatprep.subr.bf16.mxu0 %v8788
    %8923 = vmatpush1.bf16.msra.mxu0 %v8785
    %8924 = vmatprep.subr.bf16.mxu0 0
    %8925 = vmatpush1.bf16.msra.mxu0 0
    %8926 = vmatprep.subr.bf16.mxu0 0
    %8927 = vmatpush1.bf16.msra.mxu0 0
    %8928 = vmatprep.subr.bf16.mxu0 0
    %8929 = vmatpush1.bf16.msra.mxu0 0
    %8930 = vmatprep.subr.bf16.mxu0 0
    %8931 = vmatpush1.bf16.msra.mxu0 0
    %8932 = vmatprep.subr.bf16.mxu0 0
    %8933 = vmatpush1.bf16.msra.mxu0 0
    %8934 = vmatprep.subr.bf16.mxu0 0
    %8935 = vmatpush1.bf16.msra.mxu0 0
    %8936 = vmatprep.subr.bf16.mxu0 0
    %8937 = vmatpush1.bf16.msra.mxu0 0
    %8938 = vmatprep.subr.bf16.mxu0 0
    %8939 = vmatpush1.bf16.msra.mxu0 0
    %8940 = vmatprep.subr.bf16.mxu0 0
    %8941 = vmatpush1.bf16.msra.mxu0 0
    %8942 = vmatprep.subr.bf16.mxu0 0
    %8943 = vmatpush1.bf16.msra.mxu0 0
    %8944 = vmatprep.subr.bf16.mxu0 0
    %8945 = vmatpush1.bf16.msra.mxu0 0
    %8946 = vmatprep.subr.bf16.mxu0 0
    %8947 = vmatpush1.bf16.msra.mxu0 0
    %8948 = vmatprep.subr.bf16.mxu0 0
    %8949 = vmatpush1.bf16.msra.mxu0 0
    %8950 = vmatprep.subr.bf16.mxu0 0
    %8951 = vmatpush1.bf16.msra.mxu0 0
    %8952 = vmatprep.subr.bf16.mxu0 0
    %8953 = vmatpush1.bf16.msra.mxu0 0
    %8954 = vmatprep.mubr.bf16.mxu0 0
    %8955 = vmatmul.mubr.bf16.gmra.mrb[0].mxu0 %v8920
    %v8956 = vpop.f32.mrb[0].mxu0
    %v8957 = vadd.f32 0.0, %v8956
    %v8958 = vpop.f32.mrb[0].mxu0
    %v8959 = vadd.f32 0.0, %v8958
    %v8960 = vpop.f32.mrb[0].mxu0
    %v8961 = vpop.f32.mrb[0].mxu0
    %8962 = vdwg.mxu0
    %8963 = vmatprep.subr.bf16.mxu0 0
    %8964 = vmatpush1.bf16.msra.mxu0 %v8791
    %8965 = vmatprep.subr.bf16.mxu0 0
    %8966 = vmatpush1.bf16.msra.mxu0 0
    %8967 = vmatprep.subr.bf16.mxu0 0
    %8968 = vmatpush1.bf16.msra.mxu0 0
    %8969 = vmatprep.subr.bf16.mxu0 0
    %8970 = vmatpush1.bf16.msra.mxu0 0
    %8971 = vmatprep.subr.bf16.mxu0 0
    %8972 = vmatpush1.bf16.msra.mxu0 0
    %8973 = vmatprep.subr.bf16.mxu0 0
    %8974 = vmatpush1.bf16.msra.mxu0 0
    %8975 = vmatprep.subr.bf16.mxu0 0
    %8976 = vmatpush1.bf16.msra.mxu0 0
    %8977 = vmatprep.subr.bf16.mxu0 0
    %8978 = vmatpush1.bf16.msra.mxu0 0
    %8979 = vmatprep.subr.bf16.mxu0 0
    %8980 = vmatpush1.bf16.msra.mxu0 0
    %8981 = vmatprep.subr.bf16.mxu0 0
    %8982 = vmatpush1.bf16.msra.mxu0 0
    %8983 = vmatprep.subr.bf16.mxu0 0
    %8984 = vmatpush1.bf16.msra.mxu0 0
    %8985 = vmatprep.subr.bf16.mxu0 0
    %8986 = vmatpush1.bf16.msra.mxu0 0
    %8987 = vmatprep.subr.bf16.mxu0 0
    %8988 = vmatpush1.bf16.msra.mxu0 0
    %8989 = vmatprep.subr.bf16.mxu0 0
    %8990 = vmatpush1.bf16.msra.mxu0 0
    %8991 = vmatprep.subr.bf16.mxu0 0
    %8992 = vmatpush1.bf16.msra.mxu0 0
    %8993 = vmatprep.subr.bf16.mxu0 0
    %8994 = vmatpush1.bf16.msra.mxu0 0
    %8995 = vmatprep.mubr.bf16.mxu0 0
    %8996 = vmatmul.mubr.bf16.gmra.mrb[0].mxu0 %v8920
    %v8997 = vpop.f32.mrb[0].mxu0
    %v8998 = vadd.f32 0.0, %v8997
    %v8999 = vpop.f32.mrb[0].mxu0
    %v9000 = vpop.f32.mrb[0].mxu0
    %v9001 = vpop.f32.mrb[0].mxu0
    %9002 = vdwg.mxu0
    %v9003 = vpack.c.bf16 %v8957, %v8957
    %v9004 = vpack.c.bf16 %v8959, %v8959
    %v9005 = vpack.c.bf16 %v8998, %v8998
    %s9006 = scalar_lea.vmem %s10, 320
    %v9007 = vld [vmem:[%s9006] sm:$0xff]
    %v9008 = vld [vmem:[%s9006 + $0x8] sm:$0xff]
    %v9009 = vld [vmem:[%s9006 + $0x10] sm:$0xff]
    %v9010 = vld [vmem:[%s9006 + $0x18] sm:$0xff]
    %v9011 = vld [vmem:[%s9006 + $0x20] sm:$0xff]
    %v9012 = vld [vmem:[%s9006 + $0x28] sm:$0xff]
    %v9013 = vld [vmem:[%s9006 + $0x30] sm:$0xff]
    %v9014 = vld [vmem:[%s9006 + $0x38] sm:$0xff]
    %v9015 = vld [vmem:[%s9006 + $0x40] sm:$0xff]
    %v9016 = vld [vmem:[%s9006 + $0x48] sm:$0xff]
    %v9017 = vld [vmem:[%s9006 + $0x50] sm:$0xff]
    %v9018 = vld [vmem:[%s9006 + $0x58] sm:$0xff]
    %v9019 = vld [vmem:[%s9006 + $0x60] sm:$0xff]
    %v9020 = vld [vmem:[%s9006 + $0x68] sm:$0xff]
    %v9021 = vld [vmem:[%s9006 + $0x70] sm:$0xff]
    %v9022 = vld [vmem:[%s9006 + $0x78] sm:$0xff]
    %v9023 = vld [vmem:[%s9006 + $0x80] sm:$0xff]
    %v9024 = vld [vmem:[%s9006 + $0x88] sm:$0xff]
    %v9025 = vld [vmem:[%s9006 + $0x90] sm:$0xff]
    %v9026 = vld [vmem:[%s9006 + $0x98] sm:$0xff]
    %v9027 = vld [vmem:[%s9006 + $0xa0] sm:$0xff]
    %v9028 = vld [vmem:[%s9006 + $0xa8] sm:$0xff]
    %v9029 = vld [vmem:[%s9006 + $0xb0] sm:$0xff]
    %v9030 = vld [vmem:[%s9006 + $0xb8] sm:$0xff]
    %v9031 = vld [vmem:[%s9006 + $0xc0] sm:$0xff]
    %v9032 = vld [vmem:[%s9006 + $0xc8] sm:$0xff]
    %v9033 = vld [vmem:[%s9006 + $0xd0] sm:$0xff]
    %v9034 = vld [vmem:[%s9006 + $0xd8] sm:$0xff]
    %v9035 = vld [vmem:[%s9006 + $0xe0] sm:$0xff]
    %v9036 = vld [vmem:[%s9006 + $0xe8] sm:$0xff]
    %v9037 = vld [vmem:[%s9006 + $0xf0] sm:$0xff]
    %v9038 = vld [vmem:[%s9006 + $0xf8] sm:$0xff]
    %v9039 = vld [vmem:[%s9006 + $0x100] sm:$0xff]
    %v9040 = vld [vmem:[%s9006 + $0x108] sm:$0xff]
    %v9041 = vld [vmem:[%s9006 + $0x110] sm:$0xff]
    %v9042 = vld [vmem:[%s9006 + $0x118] sm:$0xff]
    %v9043 = vld [vmem:[%s9006 + $0x120] sm:$0xff]
    %v9044 = vld [vmem:[%s9006 + $0x128] sm:$0xff]
    %v9045 = vld [vmem:[%s9006 + $0x130] sm:$0xff]
    %v9046 = vld [vmem:[%s9006 + $0x138] sm:$0xff]
    %v9087 = vunpack.c.l.b16 %v9007
    %v9088 = vunpack.c.h.b16 %v9007
    %v9089 = vunpack.c.l.b16 %v9008
    %v9090 = vunpack.c.h.b16 %v9008
    %v9091 = vunpack.c.l.b16 %v9009
    %v9092 = vunpack.c.h.b16 %v9009
    %v9093 = vunpack.c.l.b16 %v9010
    %v9094 = vunpack.c.h.b16 %v9010
    %v9095 = vunpack.c.l.b16 %v9011
    %v9096 = vunpack.c.h.b16 %v9011
    %v9097 = vunpack.c.l.b16 %v9012
    %v9098 = vunpack.c.h.b16 %v9012
    %v9099 = vunpack.c.l.b16 %v9013
    %v9100 = vunpack.c.h.b16 %v9013
    %v9101 = vunpack.c.l.b16 %v9014
    %v9102 = vunpack.c.h.b16 %v9014
    %v9103 = vunpack.c.l.b16 %v9015
    %v9104 = vunpack.c.h.b16 %v9015
    %v9105 = vunpack.c.l.b16 %v9016
    %v9106 = vunpack.c.h.b16 %v9016
    %v9107 = vunpack.c.l.b16 %v9017
    %v9108 = vunpack.c.h.b16 %v9017
    %v9109 = vunpack.c.l.b16 %v9018
    %v9110 = vunpack.c.h.b16 %v9018
    %v9111 = vunpack.c.l.b16 %v9019
    %v9112 = vunpack.c.h.b16 %v9019
    %v9113 = vunpack.c.l.b16 %v9020
    %v9114 = vunpack.c.h.b16 %v9020
    %v9115 = vunpack.c.l.b16 %v9021
    %v9116 = vunpack.c.h.b16 %v9021
    %v9117 = vunpack.c.l.b16 %v9022
    %v9118 = vunpack.c.h.b16 %v9022
    %v9119 = vunpack.c.l.b16 %v9023
    %v9120 = vunpack.c.h.b16 %v9023
    %v9121 = vunpack.c.l.b16 %v9024
    %v9122 = vunpack.c.h.b16 %v9024
    %v9123 = vunpack.c.l.b16 %v9025
    %v9124 = vunpack.c.h.b16 %v9025
    %v9125 = vunpack.c.l.b16 %v9026
    %v9126 = vunpack.c.h.b16 %v9026
    %v9127 = vunpack.c.l.b16 %v9027
    %v9128 = vunpack.c.h.b16 %v9027
    %v9129 = vunpack.c.l.b16 %v9028
    %v9130 = vunpack.c.h.b16 %v9028
    %v9131 = vunpack.c.l.b16 %v9029
    %v9132 = vunpack.c.h.b16 %v9029
    %v9133 = vunpack.c.l.b16 %v9030
    %v9134 = vunpack.c.h.b16 %v9030
    %v9135 = vunpack.c.l.b16 %v9031
    %v9136 = vunpack.c.h.b16 %v9031
    %v9137 = vunpack.c.l.b16 %v9032
    %v9138 = vunpack.c.h.b16 %v9032
    %v9139 = vunpack.c.l.b16 %v9033
    %v9140 = vunpack.c.h.b16 %v9033
    %v9141 = vunpack.c.l.b16 %v9034
    %v9142 = vunpack.c.h.b16 %v9034
    %v9143 = vunpack.c.l.b16 %v9035
    %v9144 = vunpack.c.h.b16 %v9035
    %v9145 = vunpack.c.l.b16 %v9036
    %v9146 = vunpack.c.h.b16 %v9036
    %v9147 = vunpack.c.l.b16 %v9037
    %v9148 = vunpack.c.h.b16 %v9037
    %v9149 = vunpack.c.l.b16 %v9038
    %v9150 = vunpack.c.h.b16 %v9038
    %v9151 = vunpack.c.l.b16 %v9039
    %v9152 = vunpack.c.h.b16 %v9039
    %v9153 = vunpack.c.l.b16 %v9040
    %v9154 = vunpack.c.h.b16 %v9040
    %v9155 = vunpack.c.l.b16 %v9041
    %v9156 = vunpack.c.h.b16 %v9041
    %v9157 = vunpack.c.l.b16 %v9042
    %v9158 = vunpack.c.h.b16 %v9042
    %v9159 = vunpack.c.l.b16 %v9043
    %v9160 = vunpack.c.h.b16 %v9043
    %v9161 = vunpack.c.l.b16 %v9044
    %v9162 = vunpack.c.h.b16 %v9044
    %v9163 = vunpack.c.l.b16 %v9045
    %v9164 = vunpack.c.h.b16 %v9045
    %v9165 = vunpack.c.l.b16 %v9046
    %v9166 = vunpack.c.h.b16 %v9046
    %v9167 = vpack.c.b16 %v9089, %v9087
    %v9168 = vpack.c.b16 %v9090, %v9088
    %v9169 = vpack.c.b16 %v9093, %v9091
    %v9170 = vpack.c.b16 %v9094, %v9092
    %v9171 = vpack.c.b16 %v9097, %v9095
    %v9172 = vpack.c.b16 %v9098, %v9096
    %v9173 = vpack.c.b16 %v9101, %v9099
    %v9174 = vpack.c.b16 %v9102, %v9100
    %v9175 = vpack.c.b16 %v9105, %v9103
    %v9176 = vpack.c.b16 %v9106, %v9104
    %v9177 = vpack.c.b16 %v9109, %v9107
    %v9178 = vpack.c.b16 %v9110, %v9108
    %v9179 = vpack.c.b16 %v9113, %v9111
    %v9180 = vpack.c.b16 %v9114, %v9112
    %v9181 = vpack.c.b16 %v9117, %v9115
    %v9182 = vpack.c.b16 %v9118, %v9116
    %v9183 = vpack.c.b16 %v9121, %v9119
    %v9184 = vpack.c.b16 %v9122, %v9120
    %v9185 = vpack.c.b16 %v9125, %v9123
    %v9186 = vpack.c.b16 %v9126, %v9124
    %v9187 = vpack.c.b16 %v9129, %v9127
    %v9188 = vpack.c.b16 %v9130, %v9128
    %v9189 = vpack.c.b16 %v9133, %v9131
    %v9190 = vpack.c.b16 %v9134, %v9132
    %v9191 = vpack.c.b16 %v9137, %v9135
    %v9192 = vpack.c.b16 %v9138, %v9136
    %v9193 = vpack.c.b16 %v9141, %v9139
    %v9194 = vpack.c.b16 %v9142, %v9140
    %v9195 = vpack.c.b16 %v9145, %v9143
    %v9196 = vpack.c.b16 %v9146, %v9144
    %v9197 = vpack.c.b16 %v9149, %v9147
    %v9198 = vpack.c.b16 %v9150, %v9148
    %v9199 = vpack.c.b16 %v9153, %v9151
    %v9200 = vpack.c.b16 %v9154, %v9152
    %v9201 = vpack.c.b16 %v9157, %v9155
    %v9202 = vpack.c.b16 %v9158, %v9156
    %v9203 = vpack.c.b16 %v9161, %v9159
    %v9204 = vpack.c.b16 %v9162, %v9160
    %v9205 = vpack.c.b16 %v9165, %v9163
    %v9206 = vpack.c.b16 %v9166, %v9164
    %v9248 = vsel %vm75, %v9005, 0
    %9250 = vmatprep.subr.bf16.mxu0 %v9168
    %9251 = vmatpush1.bf16.msra.mxu0 %v9167
    %9252 = vmatprep.subr.bf16.mxu0 %v9170
    %9253 = vmatpush1.bf16.msra.mxu0 %v9169
    %9254 = vmatprep.subr.bf16.mxu0 %v9172
    %9255 = vmatpush1.bf16.msra.mxu0 %v9171
    %9256 = vmatprep.subr.bf16.mxu0 %v9174
    %9257 = vmatpush1.bf16.msra.mxu0 %v9173
    %9258 = vmatprep.subr.bf16.mxu0 %v9176
    %9259 = vmatpush1.bf16.msra.mxu0 %v9175
    %9260 = vmatprep.subr.bf16.mxu0 %v9178
    %9261 = vmatpush1.bf16.msra.mxu0 %v9177
    %9262 = vmatprep.subr.bf16.mxu0 %v9180
    %9263 = vmatpush1.bf16.msra.mxu0 %v9179
    %9264 = vmatprep.subr.bf16.mxu0 %v9182
    %9265 = vmatpush1.bf16.msra.mxu0 %v9181
    %9266 = vmatprep.subr.bf16.mxu0 %v9184
    %9267 = vmatpush1.bf16.msra.mxu0 %v9183
    %9268 = vmatprep.subr.bf16.mxu0 %v9186
    %9269 = vmatpush1.bf16.msra.mxu0 %v9185
    %9270 = vmatprep.subr.bf16.mxu0 %v9188
    %9271 = vmatpush1.bf16.msra.mxu0 %v9187
    %9272 = vmatprep.subr.bf16.mxu0 %v9190
    %9273 = vmatpush1.bf16.msra.mxu0 %v9189
    %9274 = vmatprep.subr.bf16.mxu0 %v9192
    %9275 = vmatpush1.bf16.msra.mxu0 %v9191
    %9276 = vmatprep.subr.bf16.mxu0 %v9194
    %9277 = vmatpush1.bf16.msra.mxu0 %v9193
    %9278 = vmatprep.subr.bf16.mxu0 %v9196
    %9279 = vmatpush1.bf16.msra.mxu0 %v9195
    %9280 = vmatprep.subr.bf16.mxu0 %v9198
    %9281 = vmatpush1.bf16.msra.mxu0 %v9197
    %9282 = vmatprep.mubr.bf16.mxu0 %v9004
    %9283 = vmatmul.mubr.bf16.gmra.mrb[0].mxu0 %v9003
    %v9284 = vpop.f32.mrb[0].mxu0
    %v9285 = vadd.f32 0.0, %v9284
    %v9286 = vpop.f32.mrb[0].mxu0
    %v9287 = vadd.f32 0.0, %v9286
    %v9288 = vpop.f32.mrb[0].mxu0
    %v9289 = vpop.f32.mrb[0].mxu0
    %9290 = vdwg.mxu0
    %9291 = vmatprep.subr.bf16.mxu0 %v9200
    %9292 = vmatpush1.bf16.msra.mxu0 %v9199
    %9293 = vmatprep.subr.bf16.mxu0 %v9202
    %9294 = vmatpush1.bf16.msra.mxu0 %v9201
    %9295 = vmatprep.subr.bf16.mxu0 %v9204
    %9296 = vmatpush1.bf16.msra.mxu0 %v9203
    %9297 = vmatprep.subr.bf16.mxu0 %v9206
    %9298 = vmatpush1.bf16.msra.mxu0 %v9205
    %9299 = vmatprep.subr.bf16.mxu0 0
    %9300 = vmatpush1.bf16.msra.mxu0 0
    %9301 = vmatprep.subr.bf16.mxu0 0
    %9302 = vmatpush1.bf16.msra.mxu0 0
    %9303 = vmatprep.subr.bf16.mxu0 0
    %9304 = vmatpush1.bf16.msra.mxu0 0
    %9305 = vmatprep.subr.bf16.mxu0 0
    %9306 = vmatpush1.bf16.msra.mxu0 0
    %9307 = vmatprep.subr.bf16.mxu0 0
    %9308 = vmatpush1.bf16.msra.mxu0 0
    %9309 = vmatprep.subr.bf16.mxu0 0
    %9310 = vmatpush1.bf16.msra.mxu0 0
    %9311 = vmatprep.subr.bf16.mxu0 0
    %9312 = vmatpush1.bf16.msra.mxu0 0
    %9313 = vmatprep.subr.bf16.mxu0 0
    %9314 = vmatpush1.bf16.msra.mxu0 0
    %9315 = vmatprep.subr.bf16.mxu0 0
    %9316 = vmatpush1.bf16.msra.mxu0 0
    %9317 = vmatprep.subr.bf16.mxu0 0
    %9318 = vmatpush1.bf16.msra.mxu0 0
    %9319 = vmatprep.subr.bf16.mxu0 0
    %9320 = vmatpush1.bf16.msra.mxu0 0
    %9321 = vmatprep.subr.bf16.mxu0 0
    %9322 = vmatpush1.bf16.msra.mxu0 0
    %9323 = vmatprep.mubr.bf16.mxu0 0
    %9324 = vmatmul.mubr.bf16.gmra.mrb[0].mxu0 %v9248
    %v9325 = vpop.f32.mrb[0].mxu0
    %v9326 = vadd.f32 %v9285, %v9325
    %v9327 = vpop.f32.mrb[0].mxu0
    %v9328 = vadd.f32 %v9287, %v9327
    %v9329 = vpop.f32.mrb[0].mxu0
    %v9330 = vpop.f32.mrb[0].mxu0
    %9331 = vdwg.mxu0
    %v9372 = vunpack.c.l.b16 %v8877
    %v9373 = vunpack.c.h.b16 %v8877
    %v9374 = vunpack.c.l.b16 %v8878
    %v9375 = vunpack.c.h.b16 %v8878
    %v9376 = vunpack.c.l.b16 %v8879
    %v9377 = vunpack.c.h.b16 %v8879
    %v9378 = vunpack.c.l.b16 %v8880
    %v9379 = vunpack.c.h.b16 %v8880
    %v9380 = vunpack.c.l.b16 %v8881
    %v9381 = vunpack.c.h.b16 %v8881
    %v9382 = vunpack.c.l.b16 %v8882
    %v9383 = vunpack.c.h.b16 %v8882
    %v9384 = vunpack.c.l.b16 %v8883
    %v9385 = vunpack.c.h.b16 %v8883
    %v9386 = vunpack.c.l.b16 %v8884
    %v9387 = vunpack.c.h.b16 %v8884
    %v9388 = vunpack.c.l.b16 %v8885
    %v9389 = vunpack.c.h.b16 %v8885
    %v9390 = vunpack.c.l.b16 %v8886
    %v9391 = vunpack.c.h.b16 %v8886
    %v9392 = vunpack.c.l.b16 %v8887
    %v9393 = vunpack.c.h.b16 %v8887
    %v9394 = vunpack.c.l.b16 %v8888
    %v9395 = vunpack.c.h.b16 %v8888
    %v9396 = vunpack.c.l.b16 %v8889
    %v9397 = vunpack.c.h.b16 %v8889
    %v9398 = vunpack.c.l.b16 %v8890
    %v9399 = vunpack.c.h.b16 %v8890
    %v9400 = vunpack.c.l.b16 %v8891
    %v9401 = vunpack.c.h.b16 %v8891
    %v9402 = vunpack.c.l.b16 %v8892
    %v9403 = vunpack.c.h.b16 %v8892
    %v9404 = vunpack.c.l.b16 %v8893
    %v9405 = vunpack.c.h.b16 %v8893
    %v9406 = vunpack.c.l.b16 %v8894
    %v9407 = vunpack.c.h.b16 %v8894
    %v9408 = vunpack.c.l.b16 %v8895
    %v9409 = vunpack.c.h.b16 %v8895
    %v9410 = vunpack.c.l.b16 %v8896
    %v9411 = vunpack.c.h.b16 %v8896
    %v9412 = vunpack.c.l.b16 %v8897
    %v9413 = vunpack.c.h.b16 %v8897
    %v9414 = vunpack.c.l.b16 %v8898
    %v9415 = vunpack.c.h.b16 %v8898
    %v9416 = vunpack.c.l.b16 %v8899
    %v9417 = vunpack.c.h.b16 %v8899
    %v9418 = vunpack.c.l.b16 %v8900
    %v9419 = vunpack.c.h.b16 %v8900
    %v9420 = vunpack.c.l.b16 %v8901
    %v9421 = vunpack.c.h.b16 %v8901
    %v9422 = vunpack.c.l.b16 %v8902
    %v9423 = vunpack.c.h.b16 %v8902
    %v9424 = vunpack.c.l.b16 %v8903
    %v9425 = vunpack.c.h.b16 %v8903
    %v9426 = vunpack.c.l.b16 %v8904
    %v9427 = vunpack.c.h.b16 %v8904
    %v9428 = vunpack.c.l.b16 %v8905
    %v9429 = vunpack.c.h.b16 %v8905
    %v9430 = vunpack.c.l.b16 %v8906
    %v9431 = vunpack.c.h.b16 %v8906
    %v9432 = vunpack.c.l.b16 %v8907
    %v9433 = vunpack.c.h.b16 %v8907
    %v9434 = vunpack.c.l.b16 %v8908
    %v9435 = vunpack.c.h.b16 %v8908
    %v9436 = vunpack.c.l.b16 %v8909
    %v9437 = vunpack.c.h.b16 %v8909
    %v9438 = vunpack.c.l.b16 %v8910
    %v9439 = vunpack.c.h.b16 %v8910
    %v9440 = vunpack.c.l.b16 %v8911
    %v9441 = vunpack.c.h.b16 %v8911
    %v9442 = vunpack.c.l.b16 %v8912
    %v9443 = vunpack.c.h.b16 %v8912
    %v9444 = vunpack.c.l.b16 %v8913
    %v9445 = vunpack.c.h.b16 %v8913
    %v9446 = vunpack.c.l.b16 %v8914
    %v9447 = vunpack.c.h.b16 %v8914
    %v9448 = vunpack.c.l.b16 %v8915
    %v9449 = vunpack.c.h.b16 %v8915
    %v9450 = vunpack.c.l.b16 %v8916
    %v9451 = vunpack.c.h.b16 %v8916
    %v9452 = vpack.c.b16 %v9374, %v9372
    %v9453 = vpack.c.b16 %v9375, %v9373
    %v9454 = vpack.c.b16 %v9378, %v9376
    %v9455 = vpack.c.b16 %v9379, %v9377
    %v9456 = vpack.c.b16 %v9382, %v9380
    %v9457 = vpack.c.b16 %v9383, %v9381
    %v9458 = vpack.c.b16 %v9386, %v9384
    %v9459 = vpack.c.b16 %v9387, %v9385
    %v9460 = vpack.c.b16 %v9390, %v9388
    %v9461 = vpack.c.b16 %v9391, %v9389
    %v9462 = vpack.c.b16 %v9394, %v9392
    %v9463 = vpack.c.b16 %v9395, %v9393
    %v9464 = vpack.c.b16 %v9398, %v9396
    %v9465 = vpack.c.b16 %v9399, %v9397
    %v9466 = vpack.c.b16 %v9402, %v9400
    %v9467 = vpack.c.b16 %v9403, %v9401
    %v9468 = vpack.c.b16 %v9406, %v9404
    %v9469 = vpack.c.b16 %v9407, %v9405
    %v9470 = vpack.c.b16 %v9410, %v9408
    %v9471 = vpack.c.b16 %v9411, %v9409
    %v9472 = vpack.c.b16 %v9414, %v9412
    %v9473 = vpack.c.b16 %v9415, %v9413
    %v9474 = vpack.c.b16 %v9418, %v9416
    %v9475 = vpack.c.b16 %v9419, %v9417
    %v9476 = vpack.c.b16 %v9422, %v9420
    %v9477 = vpack.c.b16 %v9423, %v9421
    %v9478 = vpack.c.b16 %v9426, %v9424
    %v9479 = vpack.c.b16 %v9427, %v9425
    %v9480 = vpack.c.b16 %v9430, %v9428
    %v9481 = vpack.c.b16 %v9431, %v9429
    %v9482 = vpack.c.b16 %v9434, %v9432
    %v9483 = vpack.c.b16 %v9435, %v9433
    %v9484 = vpack.c.b16 %v9438, %v9436
    %v9485 = vpack.c.b16 %v9439, %v9437
    %v9486 = vpack.c.b16 %v9442, %v9440
    %v9487 = vpack.c.b16 %v9443, %v9441
    %v9488 = vpack.c.b16 %v9446, %v9444
    %v9489 = vpack.c.b16 %v9447, %v9445
    %v9490 = vpack.c.b16 %v9450, %v9448
    %v9491 = vpack.c.b16 %v9451, %v9449
    %v9533 = vsel %vm75, %v8876, 0
    %9535 = vmatprep.subr.bf16.mxu0 %v9453
    %9536 = vmatpush1.bf16.msra.mxu0 %v9452
    %9537 = vmatprep.subr.bf16.mxu0 %v9455
    %9538 = vmatpush1.bf16.msra.mxu0 %v9454
    %9539 = vmatprep.subr.bf16.mxu0 %v9457
    %9540 = vmatpush1.bf16.msra.mxu0 %v9456
    %9541 = vmatprep.subr.bf16.mxu0 %v9459
    %9542 = vmatpush1.bf16.msra.mxu0 %v9458
    %9543 = vmatprep.subr.bf16.mxu0 %v9461
    %9544 = vmatpush1.bf16.msra.mxu0 %v9460
    %9545 = vmatprep.subr.bf16.mxu0 %v9463
    %9546 = vmatpush1.bf16.msra.mxu0 %v9462
    %9547 = vmatprep.subr.bf16.mxu0 %v9465
    %9548 = vmatpush1.bf16.msra.mxu0 %v9464
    %9549 = vmatprep.subr.bf16.mxu0 %v9467
    %9550 = vmatpush1.bf16.msra.mxu0 %v9466
    %9551 = vmatprep.subr.bf16.mxu0 %v9469
    %9552 = vmatpush1.bf16.msra.mxu0 %v9468
    %9553 = vmatprep.subr.bf16.mxu0 %v9471
    %9554 = vmatpush1.bf16.msra.mxu0 %v9470
    %9555 = vmatprep.subr.bf16.mxu0 %v9473
    %9556 = vmatpush1.bf16.msra.mxu0 %v9472
    %9557 = vmatprep.subr.bf16.mxu0 %v9475
    %9558 = vmatpush1.bf16.msra.mxu0 %v9474
    %9559 = vmatprep.subr.bf16.mxu0 %v9477
    %9560 = vmatpush1.bf16.msra.mxu0 %v9476
    %9561 = vmatprep.subr.bf16.mxu0 %v9479
    %9562 = vmatpush1.bf16.msra.mxu0 %v9478
    %9563 = vmatprep.subr.bf16.mxu0 %v9481
    %9564 = vmatpush1.bf16.msra.mxu0 %v9480
    %9565 = vmatprep.subr.bf16.mxu0 %v9483
    %9566 = vmatpush1.bf16.msra.mxu0 %v9482
    %9567 = vmatprep.mubr.bf16.mxu0 %v8875
    %9568 = vmatmul.mubr.bf16.gmra.mrb[0].mxu0 %v8874
    %v9569 = vpop.f32.mrb[0].mxu0
    %v9570 = vadd.f32 %v9326, %v9569
    %v9571 = vpop.f32.mrb[0].mxu0
    %v9572 = vadd.f32 %v9328, %v9571
    %v9573 = vpop.f32.mrb[0].mxu0
    %v9574 = vpop.f32.mrb[0].mxu0
    %9575 = vdwg.mxu0
    %9576 = vmatprep.subr.bf16.mxu0 %v9485
    %9577 = vmatpush1.bf16.msra.mxu0 %v9484
    %9578 = vmatprep.subr.bf16.mxu0 %v9487
    %9579 = vmatpush1.bf16.msra.mxu0 %v9486
    %9580 = vmatprep.subr.bf16.mxu0 %v9489
    %9581 = vmatpush1.bf16.msra.mxu0 %v9488
    %9582 = vmatprep.subr.bf16.mxu0 %v9491
    %9583 = vmatpush1.bf16.msra.mxu0 %v9490
    %9584 = vmatprep.subr.bf16.mxu0 0
    %9585 = vmatpush1.bf16.msra.mxu0 0
    %9586 = vmatprep.subr.bf16.mxu0 0
    %9587 = vmatpush1.bf16.msra.mxu0 0
    %9588 = vmatprep.subr.bf16.mxu0 0
    %9589 = vmatpush1.bf16.msra.mxu0 0
    %9590 = vmatprep.subr.bf16.mxu0 0
    %9591 = vmatpush1.bf16.msra.mxu0 0
    %9592 = vmatprep.subr.bf16.mxu0 0
    %9593 = vmatpush1.bf16.msra.mxu0 0
    %9594 = vmatprep.subr.bf16.mxu0 0
    %9595 = vmatpush1.bf16.msra.mxu0 0
    %9596 = vmatprep.subr.bf16.mxu0 0
    %9597 = vmatpush1.bf16.msra.mxu0 0
    %9598 = vmatprep.subr.bf16.mxu0 0
    %9599 = vmatpush1.bf16.msra.mxu0 0
    %9600 = vmatprep.subr.bf16.mxu0 0
    %9601 = vmatpush1.bf16.msra.mxu0 0
    %9602 = vmatprep.subr.bf16.mxu0 0
    %9603 = vmatpush1.bf16.msra.mxu0 0
    %9604 = vmatprep.subr.bf16.mxu0 0
    %9605 = vmatpush1.bf16.msra.mxu0 0
    %9606 = vmatprep.subr.bf16.mxu0 0
    %9607 = vmatpush1.bf16.msra.mxu0 0
    %9608 = vmatprep.mubr.bf16.mxu0 0
    %9609 = vmatmul.mubr.bf16.gmra.mrb[0].mxu0 %v9533
    %v9610 = vpop.f32.mrb[0].mxu0
    %v9611 = vadd.f32 %v9570, %v9610
    %v9612 = vpop.f32.mrb[0].mxu0
    %v9613 = vadd.f32 %v9572, %v9612
    %v9614 = vpop.f32.mrb[0].mxu0
    %v9615 = vpop.f32.mrb[0].mxu0
    %9616 = vdwg.mxu0
    %s9617 = scalar_lea.vmem %s6, 2
    %v9618 = vld [vmem:[%s9617] sm:$0x1]
    %v9620 = vsel %vm8779, %v9618, 0
    %9622 = vmatprep.subr.bf16.mxu0 %v8788
    %9623 = vmatpush1.bf16.msra.mxu0 %v8785
    %9624 = vmatprep.subr.bf16.mxu0 0
    %9625 = vmatpush1.bf16.msra.mxu0 0
    %9626 = vmatprep.subr.bf16.mxu0 0
    %9627 = vmatpush1.bf16.msra.mxu0 0
    %9628 = vmatprep.subr.bf16.mxu0 0
    %9629 = vmatpush1.bf16.msra.mxu0 0
    %9630 = vmatprep.subr.bf16.mxu0 0
    %9631 = vmatpush1.bf16.msra.mxu0 0
    %9632 = vmatprep.subr.bf16.mxu0 0
    %9633 = vmatpush1.bf16.msra.mxu0 0
    %9634 = vmatprep.subr.bf16.mxu0 0
    %9635 = vmatpush1.bf16.msra.mxu0 0
    %9636 = vmatprep.subr.bf16.mxu0 0
    %9637 = vmatpush1.bf16.msra.mxu0 0
    %9638 = vmatprep.subr.bf16.mxu0 0
    %9639 = vmatpush1.bf16.msra.mxu0 0
    %9640 = vmatprep.subr.bf16.mxu0 0
    %9641 = vmatpush1.bf16.msra.mxu0 0
    %9642 = vmatprep.subr.bf16.mxu0 0
    %9643 = vmatpush1.bf16.msra.mxu0 0
    %9644 = vmatprep.subr.bf16.mxu0 0
    %9645 = vmatpush1.bf16.msra.mxu0 0
    %9646 = vmatprep.subr.bf16.mxu0 0
    %9647 = vmatpush1.bf16.msra.mxu0 0
    %9648 = vmatprep.subr.bf16.mxu0 0
    %9649 = vmatpush1.bf16.msra.mxu0 0
    %9650 = vmatprep.subr.bf16.mxu0 0
    %9651 = vmatpush1.bf16.msra.mxu0 0
    %9652 = vmatprep.subr.bf16.mxu0 0
    %9653 = vmatpush1.bf16.msra.mxu0 0
    %9654 = vmatprep.mubr.bf16.mxu0 0
    %9655 = vmatmul.mubr.bf16.gmra.mrb[0].mxu0 %v9620
    %v9656 = vpop.f32.mrb[0].mxu0
    %v9657 = vadd.f32 0.0, %v9656
    %v9658 = vpop.f32.mrb[0].mxu0
    %v9659 = vadd.f32 0.0, %v9658
    %v9660 = vpop.f32.mrb[0].mxu0
    %v9661 = vpop.f32.mrb[0].mxu0
    %9662 = vdwg.mxu0
    %9663 = vmatprep.subr.bf16.mxu0 0
    %9664 = vmatpush1.bf16.msra.mxu0 %v8791
    %9665 = vmatprep.subr.bf16.mxu0 0
    %9666 = vmatpush1.bf16.msra.mxu0 0
    %9667 = vmatprep.subr.bf16.mxu0 0
    %9668 = vmatpush1.bf16.msra.mxu0 0
    %9669 = vmatprep.subr.bf16.mxu0 0
    %9670 = vmatpush1.bf16.msra.mxu0 0
    %9671 = vmatprep.subr.bf16.mxu0 0
    %9672 = vmatpush1.bf16.msra.mxu0 0
    %9673 = vmatprep.subr.bf16.mxu0 0
    %9674 = vmatpush1.bf16.msra.mxu0 0
    %9675 = vmatprep.subr.bf16.mxu0 0
    %9676 = vmatpush1.bf16.msra.mxu0 0
    %9677 = vmatprep.subr.bf16.mxu0 0
    %9678 = vmatpush1.bf16.msra.mxu0 0
    %9679 = vmatprep.subr.bf16.mxu0 0
    %9680 = vmatpush1.bf16.msra.mxu0 0
    %9681 = vmatprep.subr.bf16.mxu0 0
    %9682 = vmatpush1.bf16.msra.mxu0 0
    %9683 = vmatprep.subr.bf16.mxu0 0
    %9684 = vmatpush1.bf16.msra.mxu0 0
    %9685 = vmatprep.subr.bf16.mxu0 0
    %9686 = vmatpush1.bf16.msra.mxu0 0
    %9687 = vmatprep.subr.bf16.mxu0 0
    %9688 = vmatpush1.bf16.msra.mxu0 0
    %9689 = vmatprep.subr.bf16.mxu0 0
    %9690 = vmatpush1.bf16.msra.mxu0 0
    %9691 = vmatprep.subr.bf16.mxu0 0
    %9692 = vmatpush1.bf16.msra.mxu0 0
    %9693 = vmatprep.subr.bf16.mxu0 0
    %9694 = vmatpush1.bf16.msra.mxu0 0
    %9695 = vmatprep.mubr.bf16.mxu0 0
    %9696 = vmatmul.mubr.bf16.gmra.mrb[0].mxu0 %v9620
    %v9697 = vpop.f32.mrb[0].mxu0
    %v9698 = vadd.f32 0.0, %v9697
    %v9699 = vpop.f32.mrb[0].mxu0
    %v9700 = vpop.f32.mrb[0].mxu0
    %v9701 = vpop.f32.mrb[0].mxu0
    %9702 = vdwg.mxu0
    %v9703 = vpack.c.bf16 %v9657, %v9657
    %v9704 = vpack.c.bf16 %v9659, %v9659
    %v9705 = vpack.c.bf16 %v9698, %v9698
    %s9706 = scalar_lea.vmem %s10, 640
    %v9707 = vld [vmem:[%s9706] sm:$0xff]
    %v9708 = vld [vmem:[%s9706 + $0x8] sm:$0xff]
    %v9709 = vld [vmem:[%s9706 + $0x10] sm:$0xff]
    %v9710 = vld [vmem:[%s9706 + $0x18] sm:$0xff]
    %v9711 = vld [vmem:[%s9706 + $0x20] sm:$0xff]
    %v9712 = vld [vmem:[%s9706 + $0x28] sm:$0xff]
    %v9713 = vld [vmem:[%s9706 + $0x30] sm:$0xff]
    %v9714 = vld [vmem:[%s9706 + $0x38] sm:$0xff]
    %v9715 = vld [vmem:[%s9706 + $0x40] sm:$0xff]
    %v9716 = vld [vmem:[%s9706 + $0x48] sm:$0xff]
    %v9717 = vld [vmem:[%s9706 + $0x50] sm:$0xff]
    %v9718 = vld [vmem:[%s9706 + $0x58] sm:$0xff]
    %v9719 = vld [vmem:[%s9706 + $0x60] sm:$0xff]
    %v9720 = vld [vmem:[%s9706 + $0x68] sm:$0xff]
    %v9721 = vld [vmem:[%s9706 + $0x70] sm:$0xff]
    %v9722 = vld [vmem:[%s9706 + $0x78] sm:$0xff]
    %v9723 = vld [vmem:[%s9706 + $0x80] sm:$0xff]
    %v9724 = vld [vmem:[%s9706 + $0x88] sm:$0xff]
    %v9725 = vld [vmem:[%s9706 + $0x90] sm:$0xff]
    %v9726 = vld [vmem:[%s9706 + $0x98] sm:$0xff]
    %v9727 = vld [vmem:[%s9706 + $0xa0] sm:$0xff]
    %v9728 = vld [vmem:[%s9706 + $0xa8] sm:$0xff]
    %v9729 = vld [vmem:[%s9706 + $0xb0] sm:$0xff]
    %v9730 = vld [vmem:[%s9706 + $0xb8] sm:$0xff]
    %v9731 = vld [vmem:[%s9706 + $0xc0] sm:$0xff]
    %v9732 = vld [vmem:[%s9706 + $0xc8] sm:$0xff]
    %v9733 = vld [vmem:[%s9706 + $0xd0] sm:$0xff]
    %v9734 = vld [vmem:[%s9706 + $0xd8] sm:$0xff]
    %v9735 = vld [vmem:[%s9706 + $0xe0] sm:$0xff]
    %v9736 = vld [vmem:[%s9706 + $0xe8] sm:$0xff]
    %v9737 = vld [vmem:[%s9706 + $0xf0] sm:$0xff]
    %v9738 = vld [vmem:[%s9706 + $0xf8] sm:$0xff]
    %v9739 = vld [vmem:[%s9706 + $0x100] sm:$0xff]
    %v9740 = vld [vmem:[%s9706 + $0x108] sm:$0xff]
    %v9741 = vld [vmem:[%s9706 + $0x110] sm:$0xff]
    %v9742 = vld [vmem:[%s9706 + $0x118] sm:$0xff]
    %v9743 = vld [vmem:[%s9706 + $0x120] sm:$0xff]
    %v9744 = vld [vmem:[%s9706 + $0x128] sm:$0xff]
    %v9745 = vld [vmem:[%s9706 + $0x130] sm:$0xff]
    %v9746 = vld [vmem:[%s9706 + $0x138] sm:$0xff]
    %v9787 = vunpack.c.l.b16 %v9707
    %v9788 = vunpack.c.h.b16 %v9707
    %v9789 = vunpack.c.l.b16 %v9708
    %v9790 = vunpack.c.h.b16 %v9708
    %v9791 = vunpack.c.l.b16 %v9709
    %v9792 = vunpack.c.h.b16 %v9709
    %v9793 = vunpack.c.l.b16 %v9710
    %v9794 = vunpack.c.h.b16 %v9710
    %v9795 = vunpack.c.l.b16 %v9711
    %v9796 = vunpack.c.h.b16 %v9711
    %v9797 = vunpack.c.l.b16 %v9712
    %v9798 = vunpack.c.h.b16 %v9712
    %v9799 = vunpack.c.l.b16 %v9713
    %v9800 = vunpack.c.h.b16 %v9713
    %v9801 = vunpack.c.l.b16 %v9714
    %v9802 = vunpack.c.h.b16 %v9714
    %v9803 = vunpack.c.l.b16 %v9715
    %v9804 = vunpack.c.h.b16 %v9715
    %v9805 = vunpack.c.l.b16 %v9716
    %v9806 = vunpack.c.h.b16 %v9716
    %v9807 = vunpack.c.l.b16 %v9717
    %v9808 = vunpack.c.h.b16 %v9717
    %v9809 = vunpack.c.l.b16 %v9718
    %v9810 = vunpack.c.h.b16 %v9718
    %v9811 = vunpack.c.l.b16 %v9719
    %v9812 = vunpack.c.h.b16 %v9719
    %v9813 = vunpack.c.l.b16 %v9720
    %v9814 = vunpack.c.h.b16 %v9720
    %v9815 = vunpack.c.l.b16 %v9721
    %v9816 = vunpack.c.h.b16 %v9721
    %v9817 = vunpack.c.l.b16 %v9722
    %v9818 = vunpack.c.h.b16 %v9722
    %v9819 = vunpack.c.l.b16 %v9723
    %v9820 = vunpack.c.h.b16 %v9723
    %v9821 = vunpack.c.l.b16 %v9724
    %v9822 = vunpack.c.h.b16 %v9724
    %v9823 = vunpack.c.l.b16 %v9725
    %v9824 = vunpack.c.h.b16 %v9725
    %v9825 = vunpack.c.l.b16 %v9726
    %v9826 = vunpack.c.h.b16 %v9726
    %v9827 = vunpack.c.l.b16 %v9727
    %v9828 = vunpack.c.h.b16 %v9727
    %v9829 = vunpack.c.l.b16 %v9728
    %v9830 = vunpack.c.h.b16 %v9728
    %v9831 = vunpack.c.l.b16 %v9729
    %v9832 = vunpack.c.h.b16 %v9729
    %v9833 = vunpack.c.l.b16 %v9730
    %v9834 = vunpack.c.h.b16 %v9730
    %v9835 = vunpack.c.l.b16 %v9731
    %v9836 = vunpack.c.h.b16 %v9731
    %v9837 = vunpack.c.l.b16 %v9732
    %v9838 = vunpack.c.h.b16 %v9732
    %v9839 = vunpack.c.l.b16 %v9733
    %v9840 = vunpack.c.h.b16 %v9733
    %v9841 = vunpack.c.l.b16 %v9734
    %v9842 = vunpack.c.h.b16 %v9734
    %v9843 = vunpack.c.l.b16 %v9735
    %v9844 = vunpack.c.h.b16 %v9735
    %v9845 = vunpack.c.l.b16 %v9736
    %v9846 = vunpack.c.h.b16 %v9736
    %v9847 = vunpack.c.l.b16 %v9737
    %v9848 = vunpack.c.h.b16 %v9737
    %v9849 = vunpack.c.l.b16 %v9738
    %v9850 = vunpack.c.h.b16 %v9738
    %v9851 = vunpack.c.l.b16 %v9739
    %v9852 = vunpack.c.h.b16 %v9739
    %v9853 = vunpack.c.l.b16 %v9740
    %v9854 = vunpack.c.h.b16 %v9740
    %v9855 = vunpack.c.l.b16 %v9741
    %v9856 = vunpack.c.h.b16 %v9741
    %v9857 = vunpack.c.l.b16 %v9742
    %v9858 = vunpack.c.h.b16 %v9742
    %v9859 = vunpack.c.l.b16 %v9743
    %v9860 = vunpack.c.h.b16 %v9743
    %v9861 = vunpack.c.l.b16 %v9744
    %v9862 = vunpack.c.h.b16 %v9744
    %v9863 = vunpack.c.l.b16 %v9745
    %v9864 = vunpack.c.h.b16 %v9745
    %v9865 = vunpack.c.l.b16 %v9746
    %v9866 = vunpack.c.h.b16 %v9746
    %v9867 = vpack.c.b16 %v9789, %v9787
    %v9868 = vpack.c.b16 %v9790, %v9788
    %v9869 = vpack.c.b16 %v9793, %v9791
    %v9870 = vpack.c.b16 %v9794, %v9792
    %v9871 = vpack.c.b16 %v9797, %v9795
    %v9872 = vpack.c.b16 %v9798, %v9796
    %v9873 = vpack.c.b16 %v9801, %v9799
    %v9874 = vpack.c.b16 %v9802, %v9800
    %v9875 = vpack.c.b16 %v9805, %v9803
    %v9876 = vpack.c.b16 %v9806, %v9804
    %v9877 = vpack.c.b16 %v9809, %v9807
    %v9878 = vpack.c.b16 %v9810, %v9808
    %v9879 = vpack.c.b16 %v9813, %v9811
    %v9880 = vpack.c.b16 %v9814, %v9812
    %v9881 = vpack.c.b16 %v9817, %v9815
    %v9882 = vpack.c.b16 %v9818, %v9816
    %v9883 = vpack.c.b16 %v9821, %v9819
    %v9884 = vpack.c.b16 %v9822, %v9820
    %v9885 = vpack.c.b16 %v9825, %v9823
    %v9886 = vpack.c.b16 %v9826, %v9824
    %v9887 = vpack.c.b16 %v9829, %v9827
    %v9888 = vpack.c.b16 %v9830, %v9828
    %v9889 = vpack.c.b16 %v9833, %v9831
    %v9890 = vpack.c.b16 %v9834, %v9832
    %v9891 = vpack.c.b16 %v9837, %v9835
    %v9892 = vpack.c.b16 %v9838, %v9836
    %v9893 = vpack.c.b16 %v9841, %v9839
    %v9894 = vpack.c.b16 %v9842, %v9840
    %v9895 = vpack.c.b16 %v9845, %v9843
    %v9896 = vpack.c.b16 %v9846, %v9844
    %v9897 = vpack.c.b16 %v9849, %v9847
    %v9898 = vpack.c.b16 %v9850, %v9848
    %v9899 = vpack.c.b16 %v9853, %v9851
    %v9900 = vpack.c.b16 %v9854, %v9852
    %v9901 = vpack.c.b16 %v9857, %v9855
    %v9902 = vpack.c.b16 %v9858, %v9856
    %v9903 = vpack.c.b16 %v9861, %v9859
    %v9904 = vpack.c.b16 %v9862, %v9860
    %v9905 = vpack.c.b16 %v9865, %v9863
    %v9906 = vpack.c.b16 %v9866, %v9864
    %v9948 = vsel %vm75, %v9705, 0
    %9950 = vmatprep.subr.bf16.mxu0 %v9868
    %9951 = vmatpush1.bf16.msra.mxu0 %v9867
    %9952 = vmatprep.subr.bf16.mxu0 %v9870
    %9953 = vmatpush1.bf16.msra.mxu0 %v9869
    %9954 = vmatprep.subr.bf16.mxu0 %v9872
    %9955 = vmatpush1.bf16.msra.mxu0 %v9871
    %9956 = vmatprep.subr.bf16.mxu0 %v9874
    %9957 = vmatpush1.bf16.msra.mxu0 %v9873
    %9958 = vmatprep.subr.bf16.mxu0 %v9876
    %9959 = vmatpush1.bf16.msra.mxu0 %v9875
    %9960 = vmatprep.subr.bf16.mxu0 %v9878
    %9961 = vmatpush1.bf16.msra.mxu0 %v9877
    %9962 = vmatprep.subr.bf16.mxu0 %v9880
    %9963 = vmatpush1.bf16.msra.mxu0 %v9879
    %9964 = vmatprep.subr.bf16.mxu0 %v9882
    %9965 = vmatpush1.bf16.msra.mxu0 %v9881
    %9966 = vmatprep.subr.bf16.mxu0 %v9884
    %9967 = vmatpush1.bf16.msra.mxu0 %v9883
    %9968 = vmatprep.subr.bf16.mxu0 %v9886
    %9969 = vmatpush1.bf16.msra.mxu0 %v9885
    %9970 = vmatprep.subr.bf16.mxu0 %v9888
    %9971 = vmatpush1.bf16.msra.mxu0 %v9887
    %9972 = vmatprep.subr.bf16.mxu0 %v9890
    %9973 = vmatpush1.bf16.msra.mxu0 %v9889
    %9974 = vmatprep.subr.bf16.mxu0 %v9892
    %9975 = vmatpush1.bf16.msra.mxu0 %v9891
    %9976 = vmatprep.subr.bf16.mxu0 %v9894
    %9977 = vmatpush1.bf16.msra.mxu0 %v9893
    %9978 = vmatprep.subr.bf16.mxu0 %v9896
    %9979 = vmatpush1.bf16.msra.mxu0 %v9895
    %9980 = vmatprep.subr.bf16.mxu0 %v9898
    %9981 = vmatpush1.bf16.msra.mxu0 %v9897
    %9982 = vmatprep.mubr.bf16.mxu0 %v9704
    %9983 = vmatmul.mubr.bf16.gmra.mrb[0].mxu0 %v9703
    %v9984 = vpop.f32.mrb[0].mxu0
    %v9985 = vadd.f32 0.0, %v9984
    %v9986 = vpop.f32.mrb[0].mxu0
    %v9987 = vadd.f32 0.0, %v9986
    %v9988 = vpop.f32.mrb[0].mxu0
    %v9989 = vpop.f32.mrb[0].mxu0
    %9990 = vdwg.mxu0
    %9991 = vmatprep.subr.bf16.mxu0 %v9900
    %9992 = vmatpush1.bf16.msra.mxu0 %v9899
    %9993 = vmatprep.subr.bf16.mxu0 %v9902
    %9994 = vmatpush1.bf16.msra.mxu0 %v9901
    %9995 = vmatprep.subr.bf16.mxu0 %v9904
    %9996 = vmatpush1.bf16.msra.mxu0 %v9903
    %9997 = vmatprep.subr.bf16.mxu0 %v9906
    %9998 = vmatpush1.bf16.msra.mxu0 %v9905
    %9999 = vmatprep.subr.bf16.mxu0 0
    %10000 = vmatpush1.bf16.msra.mxu0 0
    %10001 = vmatprep.subr.bf16.mxu0 0
    %10002 = vmatpush1.bf16.msra.mxu0 0
    %10003 = vmatprep.subr.bf16.mxu0 0
    %10004 = vmatpush1.bf16.msra.mxu0 0
    %10005 = vmatprep.subr.bf16.mxu0 0
    %10006 = vmatpush1.bf16.msra.mxu0 0
    %10007 = vmatprep.subr.bf16.mxu0 0
    %10008 = vmatpush1.bf16.msra.mxu0 0
    %10009 = vmatprep.subr.bf16.mxu0 0
    %10010 = vmatpush1.bf16.msra.mxu0 0
    %10011 = vmatprep.subr.bf16.mxu0 0
    %10012 = vmatpush1.bf16.msra.mxu0 0
    %10013 = vmatprep.subr.bf16.mxu0 0
    %10014 = vmatpush1.bf16.msra.mxu0 0
    %10015 = vmatprep.subr.bf16.mxu0 0
    %10016 = vmatpush1.bf16.msra.mxu0 0
    %10017 = vmatprep.subr.bf16.mxu0 0
    %10018 = vmatpush1.bf16.msra.mxu0 0
    %10019 = vmatprep.subr.bf16.mxu0 0
    %10020 = vmatpush1.bf16.msra.mxu0 0
    %10021 = vmatprep.subr.bf16.mxu0 0
    %10022 = vmatpush1.bf16.msra.mxu0 0
    %10023 = vmatprep.mubr.bf16.mxu0 0
    %10024 = vmatmul.mubr.bf16.gmra.mrb[0].mxu0 %v9948
    %v10025 = vpop.f32.mrb[0].mxu0
    %v10026 = vadd.f32 %v9985, %v10025
    %v10027 = vpop.f32.mrb[0].mxu0
    %v10028 = vadd.f32 %v9987, %v10027
    %v10029 = vpop.f32.mrb[0].mxu0
    %v10030 = vpop.f32.mrb[0].mxu0
    %10031 = vdwg.mxu0
    %v10032 = vadd.f32 %v9611, %v10026
    %v10033 = vadd.f32 %v9613, %v10028
    %s10034 = scalar_lea.vmem %s6, 3
    %v10035 = vld [vmem:[%s10034] sm:$0x1]
    %v10037 = vsel %vm8779, %v10035, 0
    %10039 = vmatprep.subr.bf16.mxu0 %v8788
    %10040 = vmatpush1.bf16.msra.mxu0 %v8785
    %10041 = vmatprep.subr.bf16.mxu0 0
    %10042 = vmatpush1.bf16.msra.mxu0 0
    %10043 = vmatprep.subr.bf16.mxu0 0
    %10044 = vmatpush1.bf16.msra.mxu0 0
    %10045 = vmatprep.subr.bf16.mxu0 0
    %10046 = vmatpush1.bf16.msra.mxu0 0
    %10047 = vmatprep.subr.bf16.mxu0 0
    %10048 = vmatpush1.bf16.msra.mxu0 0
    %10049 = vmatprep.subr.bf16.mxu0 0
    %10050 = vmatpush1.bf16.msra.mxu0 0
    %10051 = vmatprep.subr.bf16.mxu0 0
    %10052 = vmatpush1.bf16.msra.mxu0 0
    %10053 = vmatprep.subr.bf16.mxu0 0
    %10054 = vmatpush1.bf16.msra.mxu0 0
    %10055 = vmatprep.subr.bf16.mxu0 0
    %10056 = vmatpush1.bf16.msra.mxu0 0
    %10057 = vmatprep.subr.bf16.mxu0 0
    %10058 = vmatpush1.bf16.msra.mxu0 0
    %10059 = vmatprep.subr.bf16.mxu0 0
    %10060 = vmatpush1.bf16.msra.mxu0 0
    %10061 = vmatprep.subr.bf16.mxu0 0
    %10062 = vmatpush1.bf16.msra.mxu0 0
    %10063 = vmatprep.subr.bf16.mxu0 0
    %10064 = vmatpush1.bf16.msra.mxu0 0
    %10065 = vmatprep.subr.bf16.mxu0 0
    %10066 = vmatpush1.bf16.msra.mxu0 0
    %10067 = vmatprep.subr.bf16.mxu0 0
    %10068 = vmatpush1.bf16.msra.mxu0 0
    %10069 = vmatprep.subr.bf16.mxu0 0
    %10070 = vmatpush1.bf16.msra.mxu0 0
    %10071 = vmatprep.mubr.bf16.mxu0 0
    %10072 = vmatmul.mubr.bf16.gmra.mrb[0].mxu0 %v10037
    %v10073 = vpop.f32.mrb[0].mxu0
    %v10074 = vadd.f32 0.0, %v10073
    %v10075 = vpop.f32.mrb[0].mxu0
    %v10076 = vadd.f32 0.0, %v10075
    %v10077 = vpop.f32.mrb[0].mxu0
    %v10078 = vpop.f32.mrb[0].mxu0
    %10079 = vdwg.mxu0
    %10080 = vmatprep.subr.bf16.mxu0 0
    %10081 = vmatpush1.bf16.msra.mxu0 %v8791
    %10082 = vmatprep.subr.bf16.mxu0 0
    %10083 = vmatpush1.bf16.msra.mxu0 0
    %10084 = vmatprep.subr.bf16.mxu0 0
    %10085 = vmatpush1.bf16.msra.mxu0 0
    %10086 = vmatprep.subr.bf16.mxu0 0
    %10087 = vmatpush1.bf16.msra.mxu0 0
    %10088 = vmatprep.subr.bf16.mxu0 0
    %10089 = vmatpush1.bf16.msra.mxu0 0
    %10090 = vmatprep.subr.bf16.mxu0 0
    %10091 = vmatpush1.bf16.msra.mxu0 0
    %10092 = vmatprep.subr.bf16.mxu0 0
    %10093 = vmatpush1.bf16.msra.mxu0 0
    %10094 = vmatprep.subr.bf16.mxu0 0
    %10095 = vmatpush1.bf16.msra.mxu0 0
    %10096 = vmatprep.subr.bf16.mxu0 0
    %10097 = vmatpush1.bf16.msra.mxu0 0
    %10098 = vmatprep.subr.bf16.mxu0 0
    %10099 = vmatpush1.bf16.msra.mxu0 0
    %10100 = vmatprep.subr.bf16.mxu0 0
    %10101 = vmatpush1.bf16.msra.mxu0 0
    %10102 = vmatprep.subr.bf16.mxu0 0
    %10103 = vmatpush1.bf16.msra.mxu0 0
    %10104 = vmatprep.subr.bf16.mxu0 0
    %10105 = vmatpush1.bf16.msra.mxu0 0
    %10106 = vmatprep.subr.bf16.mxu0 0
    %10107 = vmatpush1.bf16.msra.mxu0 0
    %10108 = vmatprep.subr.bf16.mxu0 0
    %10109 = vmatpush1.bf16.msra.mxu0 0
    %10110 = vmatprep.subr.bf16.mxu0 0
    %10111 = vmatpush1.bf16.msra.mxu0 0
    %10112 = vmatprep.mubr.bf16.mxu0 0
    %10113 = vmatmul.mubr.bf16.gmra.mrb[0].mxu0 %v10037
    %v10114 = vpop.f32.mrb[0].mxu0
    %v10115 = vadd.f32 0.0, %v10114
    %v10116 = vpop.f32.mrb[0].mxu0
    %v10117 = vpop.f32.mrb[0].mxu0
    %v10118 = vpop.f32.mrb[0].mxu0
    %10119 = vdwg.mxu0
    %v10120 = vpack.c.bf16 %v10074, %v10074
    %v10121 = vpack.c.bf16 %v10076, %v10076
    %v10122 = vpack.c.bf16 %v10115, %v10115
    %s10123 = scalar_lea.vmem %s10, 960
    %v10124 = vld [vmem:[%s10123] sm:$0xff]
    %v10125 = vld [vmem:[%s10123 + $0x8] sm:$0xff]
    %v10126 = vld [vmem:[%s10123 + $0x10] sm:$0xff]
    %v10127 = vld [vmem:[%s10123 + $0x18] sm:$0xff]
    %v10128 = vld [vmem:[%s10123 + $0x20] sm:$0xff]
    %v10129 = vld [vmem:[%s10123 + $0x28] sm:$0xff]
    %v10130 = vld [vmem:[%s10123 + $0x30] sm:$0xff]
    %v10131 = vld [vmem:[%s10123 + $0x38] sm:$0xff]
    %v10132 = vld [vmem:[%s10123 + $0x40] sm:$0xff]
    %v10133 = vld [vmem:[%s10123 + $0x48] sm:$0xff]
    %v10134 = vld [vmem:[%s10123 + $0x50] sm:$0xff]
    %v10135 = vld [vmem:[%s10123 + $0x58] sm:$0xff]
    %v10136 = vld [vmem:[%s10123 + $0x60] sm:$0xff]
    %v10137 = vld [vmem:[%s10123 + $0x68] sm:$0xff]
    %v10138 = vld [vmem:[%s10123 + $0x70] sm:$0xff]
    %v10139 = vld [vmem:[%s10123 + $0x78] sm:$0xff]
    %v10140 = vld [vmem:[%s10123 + $0x80] sm:$0xff]
    %v10141 = vld [vmem:[%s10123 + $0x88] sm:$0xff]
    %v10142 = vld [vmem:[%s10123 + $0x90] sm:$0xff]
    %v10143 = vld [vmem:[%s10123 + $0x98] sm:$0xff]
    %v10144 = vld [vmem:[%s10123 + $0xa0] sm:$0xff]
    %v10145 = vld [vmem:[%s10123 + $0xa8] sm:$0xff]
    %v10146 = vld [vmem:[%s10123 + $0xb0] sm:$0xff]
    %v10147 = vld [vmem:[%s10123 + $0xb8] sm:$0xff]
    %v10148 = vld [vmem:[%s10123 + $0xc0] sm:$0xff]
    %v10149 = vld [vmem:[%s10123 + $0xc8] sm:$0xff]
    %v10150 = vld [vmem:[%s10123 + $0xd0] sm:$0xff]
    %v10151 = vld [vmem:[%s10123 + $0xd8] sm:$0xff]
    %v10152 = vld [vmem:[%s10123 + $0xe0] sm:$0xff]
    %v10153 = vld [vmem:[%s10123 + $0xe8] sm:$0xff]
    %v10154 = vld [vmem:[%s10123 + $0xf0] sm:$0xff]
    %v10155 = vld [vmem:[%s10123 + $0xf8] sm:$0xff]
    %v10156 = vld [vmem:[%s10123 + $0x100] sm:$0xff]
    %v10157 = vld [vmem:[%s10123 + $0x108] sm:$0xff]
    %v10158 = vld [vmem:[%s10123 + $0x110] sm:$0xff]
    %v10159 = vld [vmem:[%s10123 + $0x118] sm:$0xff]
    %v10160 = vld [vmem:[%s10123 + $0x120] sm:$0xff]
    %v10161 = vld [vmem:[%s10123 + $0x128] sm:$0xff]
    %v10162 = vld [vmem:[%s10123 + $0x130] sm:$0xff]
    %v10163 = vld [vmem:[%s10123 + $0x138] sm:$0xff]
    %v10204 = vunpack.c.l.b16 %v10124
    %v10205 = vunpack.c.h.b16 %v10124
    %v10206 = vunpack.c.l.b16 %v10125
    %v10207 = vunpack.c.h.b16 %v10125
    %v10208 = vunpack.c.l.b16 %v10126
    %v10209 = vunpack.c.h.b16 %v10126
    %v10210 = vunpack.c.l.b16 %v10127
    %v10211 = vunpack.c.h.b16 %v10127
    %v10212 = vunpack.c.l.b16 %v10128
    %v10213 = vunpack.c.h.b16 %v10128
    %v10214 = vunpack.c.l.b16 %v10129
    %v10215 = vunpack.c.h.b16 %v10129
    %v10216 = vunpack.c.l.b16 %v10130
    %v10217 = vunpack.c.h.b16 %v10130
    %v10218 = vunpack.c.l.b16 %v10131
    %v10219 = vunpack.c.h.b16 %v10131
    %v10220 = vunpack.c.l.b16 %v10132
    %v10221 = vunpack.c.h.b16 %v10132
    %v10222 = vunpack.c.l.b16 %v10133
    %v10223 = vunpack.c.h.b16 %v10133
    %v10224 = vunpack.c.l.b16 %v10134
    %v10225 = vunpack.c.h.b16 %v10134
    %v10226 = vunpack.c.l.b16 %v10135
    %v10227 = vunpack.c.h.b16 %v10135
    %v10228 = vunpack.c.l.b16 %v10136
    %v10229 = vunpack.c.h.b16 %v10136
    %v10230 = vunpack.c.l.b16 %v10137
    %v10231 = vunpack.c.h.b16 %v10137
    %v10232 = vunpack.c.l.b16 %v10138
    %v10233 = vunpack.c.h.b16 %v10138
    %v10234 = vunpack.c.l.b16 %v10139
    %v10235 = vunpack.c.h.b16 %v10139
    %v10236 = vunpack.c.l.b16 %v10140
    %v10237 = vunpack.c.h.b16 %v10140
    %v10238 = vunpack.c.l.b16 %v10141
    %v10239 = vunpack.c.h.b16 %v10141
    %v10240 = vunpack.c.l.b16 %v10142
    %v10241 = vunpack.c.h.b16 %v10142
    %v10242 = vunpack.c.l.b16 %v10143
    %v10243 = vunpack.c.h.b16 %v10143
    %v10244 = vunpack.c.l.b16 %v10144
    %v10245 = vunpack.c.h.b16 %v10144
    %v10246 = vunpack.c.l.b16 %v10145
    %v10247 = vunpack.c.h.b16 %v10145
    %v10248 = vunpack.c.l.b16 %v10146
    %v10249 = vunpack.c.h.b16 %v10146
    %v10250 = vunpack.c.l.b16 %v10147
    %v10251 = vunpack.c.h.b16 %v10147
    %v10252 = vunpack.c.l.b16 %v10148
    %v10253 = vunpack.c.h.b16 %v10148
    %v10254 = vunpack.c.l.b16 %v10149
    %v10255 = vunpack.c.h.b16 %v10149
    %v10256 = vunpack.c.l.b16 %v10150
    %v10257 = vunpack.c.h.b16 %v10150
    %v10258 = vunpack.c.l.b16 %v10151
    %v10259 = vunpack.c.h.b16 %v10151
    %v10260 = vunpack.c.l.b16 %v10152
    %v10261 = vunpack.c.h.b16 %v10152
    %v10262 = vunpack.c.l.b16 %v10153
    %v10263 = vunpack.c.h.b16 %v10153
    %v10264 = vunpack.c.l.b16 %v10154
    %v10265 = vunpack.c.h.b16 %v10154
    %v10266 = vunpack.c.l.b16 %v10155
    %v10267 = vunpack.c.h.b16 %v10155
    %v10268 = vunpack.c.l.b16 %v10156
    %v10269 = vunpack.c.h.b16 %v10156
    %v10270 = vunpack.c.l.b16 %v10157
    %v10271 = vunpack.c.h.b16 %v10157
    %v10272 = vunpack.c.l.b16 %v10158
    %v10273 = vunpack.c.h.b16 %v10158
    %v10274 = vunpack.c.l.b16 %v10159
    %v10275 = vunpack.c.h.b16 %v10159
    %v10276 = vunpack.c.l.b16 %v10160
    %v10277 = vunpack.c.h.b16 %v10160
    %v10278 = vunpack.c.l.b16 %v10161
    %v10279 = vunpack.c.h.b16 %v10161
    %v10280 = vunpack.c.l.b16 %v10162
    %v10281 = vunpack.c.h.b16 %v10162
    %v10282 = vunpack.c.l.b16 %v10163
    %v10283 = vunpack.c.h.b16 %v10163
    %v10284 = vpack.c.b16 %v10206, %v10204
    %v10285 = vpack.c.b16 %v10207, %v10205
    %v10286 = vpack.c.b16 %v10210, %v10208
    %v10287 = vpack.c.b16 %v10211, %v10209
    %v10288 = vpack.c.b16 %v10214, %v10212
    %v10289 = vpack.c.b16 %v10215, %v10213
    %v10290 = vpack.c.b16 %v10218, %v10216
    %v10291 = vpack.c.b16 %v10219, %v10217
    %v10292 = vpack.c.b16 %v10222, %v10220
    %v10293 = vpack.c.b16 %v10223, %v10221
    %v10294 = vpack.c.b16 %v10226, %v10224
    %v10295 = vpack.c.b16 %v10227, %v10225
    %v10296 = vpack.c.b16 %v10230, %v10228
    %v10297 = vpack.c.b16 %v10231, %v10229
    %v10298 = vpack.c.b16 %v10234, %v10232
    %v10299 = vpack.c.b16 %v10235, %v10233
    %v10300 = vpack.c.b16 %v10238, %v10236
    %v10301 = vpack.c.b16 %v10239, %v10237
    %v10302 = vpack.c.b16 %v10242, %v10240
    %v10303 = vpack.c.b16 %v10243, %v10241
    %v10304 = vpack.c.b16 %v10246, %v10244
    %v10305 = vpack.c.b16 %v10247, %v10245
    %v10306 = vpack.c.b16 %v10250, %v10248
    %v10307 = vpack.c.b16 %v10251, %v10249
    %v10308 = vpack.c.b16 %v10254, %v10252
    %v10309 = vpack.c.b16 %v10255, %v10253
    %v10310 = vpack.c.b16 %v10258, %v10256
    %v10311 = vpack.c.b16 %v10259, %v10257
    %v10312 = vpack.c.b16 %v10262, %v10260
    %v10313 = vpack.c.b16 %v10263, %v10261
    %v10314 = vpack.c.b16 %v10266, %v10264
    %v10315 = vpack.c.b16 %v10267, %v10265
    %v10316 = vpack.c.b16 %v10270, %v10268
    %v10317 = vpack.c.b16 %v10271, %v10269
    %v10318 = vpack.c.b16 %v10274, %v10272
    %v10319 = vpack.c.b16 %v10275, %v10273
    %v10320 = vpack.c.b16 %v10278, %v10276
    %v10321 = vpack.c.b16 %v10279, %v10277
    %v10322 = vpack.c.b16 %v10282, %v10280
    %v10323 = vpack.c.b16 %v10283, %v10281
    %v10365 = vsel %vm75, %v10122, 0
    %10367 = vmatprep.subr.bf16.mxu0 %v10285
    %10368 = vmatpush1.bf16.msra.mxu0 %v10284
    %10369 = vmatprep.subr.bf16.mxu0 %v10287
    %10370 = vmatpush1.bf16.msra.mxu0 %v10286
    %10371 = vmatprep.subr.bf16.mxu0 %v10289
    %10372 = vmatpush1.bf16.msra.mxu0 %v10288
    %10373 = vmatprep.subr.bf16.mxu0 %v10291
    %10374 = vmatpush1.bf16.msra.mxu0 %v10290
    %10375 = vmatprep.subr.bf16.mxu0 %v10293
    %10376 = vmatpush1.bf16.msra.mxu0 %v10292
    %10377 = vmatprep.subr.bf16.mxu0 %v10295
    %10378 = vmatpush1.bf16.msra.mxu0 %v10294
    %10379 = vmatprep.subr.bf16.mxu0 %v10297
    %10380 = vmatpush1.bf16.msra.mxu0 %v10296
    %10381 = vmatprep.subr.bf16.mxu0 %v10299
    %10382 = vmatpush1.bf16.msra.mxu0 %v10298
    %10383 = vmatprep.subr.bf16.mxu0 %v10301
    %10384 = vmatpush1.bf16.msra.mxu0 %v10300
    %10385 = vmatprep.subr.bf16.mxu0 %v10303
    %10386 = vmatpush1.bf16.msra.mxu0 %v10302
    %10387 = vmatprep.subr.bf16.mxu0 %v10305
    %10388 = vmatpush1.bf16.msra.mxu0 %v10304
    %10389 = vmatprep.subr.bf16.mxu0 %v10307
    %10390 = vmatpush1.bf16.msra.mxu0 %v10306
    %10391 = vmatprep.subr.bf16.mxu0 %v10309
    %10392 = vmatpush1.bf16.msra.mxu0 %v10308
    %10393 = vmatprep.subr.bf16.mxu0 %v10311
    %10394 = vmatpush1.bf16.msra.mxu0 %v10310
    %10395 = vmatprep.subr.bf16.mxu0 %v10313
    %10396 = vmatpush1.bf16.msra.mxu0 %v10312
    %10397 = vmatprep.subr.bf16.mxu0 %v10315
    %10398 = vmatpush1.bf16.msra.mxu0 %v10314
    %10399 = vmatprep.mubr.bf16.mxu0 %v10121
    %10400 = vmatmul.mubr.bf16.gmra.mrb[0].mxu0 %v10120
    %v10401 = vpop.f32.mrb[0].mxu0
    %v10402 = vadd.f32 0.0, %v10401
    %v10403 = vpop.f32.mrb[0].mxu0
    %v10404 = vadd.f32 0.0, %v10403
    %v10405 = vpop.f32.mrb[0].mxu0
    %v10406 = vpop.f32.mrb[0].mxu0
    %10407 = vdwg.mxu0
    %10408 = vmatprep.subr.bf16.mxu0 %v10317
    %10409 = vmatpush1.bf16.msra.mxu0 %v10316
    %10410 = vmatprep.subr.bf16.mxu0 %v10319
    %10411 = vmatpush1.bf16.msra.mxu0 %v10318
    %10412 = vmatprep.subr.bf16.mxu0 %v10321
    %10413 = vmatpush1.bf16.msra.mxu0 %v10320
    %10414 = vmatprep.subr.bf16.mxu0 %v10323
    %10415 = vmatpush1.bf16.msra.mxu0 %v10322
    %10416 = vmatprep.subr.bf16.mxu0 0
    %10417 = vmatpush1.bf16.msra.mxu0 0
    %10418 = vmatprep.subr.bf16.mxu0 0
    %10419 = vmatpush1.bf16.msra.mxu0 0
    %10420 = vmatprep.subr.bf16.mxu0 0
    %10421 = vmatpush1.bf16.msra.mxu0 0
    %10422 = vmatprep.subr.bf16.mxu0 0
    %10423 = vmatpush1.bf16.msra.mxu0 0
    %10424 = vmatprep.subr.bf16.mxu0 0
    %10425 = vmatpush1.bf16.msra.mxu0 0
    %10426 = vmatprep.subr.bf16.mxu0 0
    %10427 = vmatpush1.bf16.msra.mxu0 0
    %10428 = vmatprep.subr.bf16.mxu0 0
    %10429 = vmatpush1.bf16.msra.mxu0 0
    %10430 = vmatprep.subr.bf16.mxu0 0
    %10431 = vmatpush1.bf16.msra.mxu0 0
    %10432 = vmatprep.subr.bf16.mxu0 0
    %10433 = vmatpush1.bf16.msra.mxu0 0
    %10434 = vmatprep.subr.bf16.mxu0 0
    %10435 = vmatpush1.bf16.msra.mxu0 0
    %10436 = vmatprep.subr.bf16.mxu0 0
    %10437 = vmatpush1.bf16.msra.mxu0 0
    %10438 = vmatprep.subr.bf16.mxu0 0
    %10439 = vmatpush1.bf16.msra.mxu0 0
    %10440 = vmatprep.mubr.bf16.mxu0 0
    %10441 = vmatmul.mubr.bf16.gmra.mrb[0].mxu0 %v10365
    %v10442 = vpop.f32.mrb[0].mxu0
    %v10443 = vadd.f32 %v10402, %v10442
    %v10444 = vpop.f32.mrb[0].mxu0
    %v10445 = vadd.f32 %v10404, %v10444
    %v10446 = vpop.f32.mrb[0].mxu0
    %v10447 = vpop.f32.mrb[0].mxu0
    %10448 = vdwg.mxu0
    %v10449 = vadd.f32 %v10032, %v10443
    %v10450 = vadd.f32 %v10033, %v10445
    %s10451 = scalar_lea.vmem %s6, 4
    %v10452 = vld [vmem:[%s10451] sm:$0x1]
    %v10454 = vsel %vm8779, %v10452, 0
    %10456 = vmatprep.subr.bf16.mxu0 %v8788
    %10457 = vmatpush1.bf16.msra.mxu0 %v8785
    %10458 = vmatprep.subr.bf16.mxu0 0
    %10459 = vmatpush1.bf16.msra.mxu0 0
    %10460 = vmatprep.subr.bf16.mxu0 0
    %10461 = vmatpush1.bf16.msra.mxu0 0
    %10462 = vmatprep.subr.bf16.mxu0 0
    %10463 = vmatpush1.bf16.msra.mxu0 0
    %10464 = vmatprep.subr.bf16.mxu0 0
    %10465 = vmatpush1.bf16.msra.mxu0 0
    %10466 = vmatprep.subr.bf16.mxu0 0
    %10467 = vmatpush1.bf16.msra.mxu0 0
    %10468 = vmatprep.subr.bf16.mxu0 0
    %10469 = vmatpush1.bf16.msra.mxu0 0
    %10470 = vmatprep.subr.bf16.mxu0 0
    %10471 = vmatpush1.bf16.msra.mxu0 0
    %10472 = vmatprep.subr.bf16.mxu0 0
    %10473 = vmatpush1.bf16.msra.mxu0 0
    %10474 = vmatprep.subr.bf16.mxu0 0
    %10475 = vmatpush1.bf16.msra.mxu0 0
    %10476 = vmatprep.subr.bf16.mxu0 0
    %10477 = vmatpush1.bf16.msra.mxu0 0
    %10478 = vmatprep.subr.bf16.mxu0 0
    %10479 = vmatpush1.bf16.msra.mxu0 0
    %10480 = vmatprep.subr.bf16.mxu0 0
    %10481 = vmatpush1.bf16.msra.mxu0 0
    %10482 = vmatprep.subr.bf16.mxu0 0
    %10483 = vmatpush1.bf16.msra.mxu0 0
    %10484 = vmatprep.subr.bf16.mxu0 0
    %10485 = vmatpush1.bf16.msra.mxu0 0
    %10486 = vmatprep.subr.bf16.mxu0 0
    %10487 = vmatpush1.bf16.msra.mxu0 0
    %10488 = vmatprep.mubr.bf16.mxu0 0
    %10489 = vmatmul.mubr.bf16.gmra.mrb[0].mxu0 %v10454
    %v10490 = vpop.f32.mrb[0].mxu0
    %v10491 = vadd.f32 0.0, %v10490
    %v10492 = vpop.f32.mrb[0].mxu0
    %v10493 = vadd.f32 0.0, %v10492
    %v10494 = vpop.f32.mrb[0].mxu0
    %v10495 = vpop.f32.mrb[0].mxu0
    %10496 = vdwg.mxu0
    %10497 = vmatprep.subr.bf16.mxu0 0
    %10498 = vmatpush1.bf16.msra.mxu0 %v8791
    %10499 = vmatprep.subr.bf16.mxu0 0
    %10500 = vmatpush1.bf16.msra.mxu0 0
    %10501 = vmatprep.subr.bf16.mxu0 0
    %10502 = vmatpush1.bf16.msra.mxu0 0
    %10503 = vmatprep.subr.bf16.mxu0 0
    %10504 = vmatpush1.bf16.msra.mxu0 0
    %10505 = vmatprep.subr.bf16.mxu0 0
    %10506 = vmatpush1.bf16.msra.mxu0 0
    %10507 = vmatprep.subr.bf16.mxu0 0
    %10508 = vmatpush1.bf16.msra.mxu0 0
    %10509 = vmatprep.subr.bf16.mxu0 0
    %10510 = vmatpush1.bf16.msra.mxu0 0
    %10511 = vmatprep.subr.bf16.mxu0 0
    %10512 = vmatpush1.bf16.msra.mxu0 0
    %10513 = vmatprep.subr.bf16.mxu0 0
    %10514 = vmatpush1.bf16.msra.mxu0 0
    %10515 = vmatprep.subr.bf16.mxu0 0
    %10516 = vmatpush1.bf16.msra.mxu0 0
    %10517 = vmatprep.subr.bf16.mxu0 0
    %10518 = vmatpush1.bf16.msra.mxu0 0
    %10519 = vmatprep.subr.bf16.mxu0 0
    %10520 = vmatpush1.bf16.msra.mxu0 0
    %10521 = vmatprep.subr.bf16.mxu0 0
    %10522 = vmatpush1.bf16.msra.mxu0 0
    %10523 = vmatprep.subr.bf16.mxu0 0
    %10524 = vmatpush1.bf16.msra.mxu0 0
    %10525 = vmatprep.subr.bf16.mxu0 0
    %10526 = vmatpush1.bf16.msra.mxu0 0
    %10527 = vmatprep.subr.bf16.mxu0 0
    %10528 = vmatpush1.bf16.msra.mxu0 0
    %10529 = vmatprep.mubr.bf16.mxu0 0
    %10530 = vmatmul.mubr.bf16.gmra.mrb[0].mxu0 %v10454
    %v10531 = vpop.f32.mrb[0].mxu0
    %v10532 = vadd.f32 0.0, %v10531
    %v10533 = vpop.f32.mrb[0].mxu0
    %v10534 = vpop.f32.mrb[0].mxu0
    %v10535 = vpop.f32.mrb[0].mxu0
    %10536 = vdwg.mxu0
    %v10537 = vpack.c.bf16 %v10491, %v10491
    %v10538 = vpack.c.bf16 %v10493, %v10493
    %v10539 = vpack.c.bf16 %v10532, %v10532
    %s10540 = scalar_lea.vmem %s10, 1280
    %v10541 = vld [vmem:[%s10540] sm:$0xff]
    %v10542 = vld [vmem:[%s10540 + $0x8] sm:$0xff]
    %v10543 = vld [vmem:[%s10540 + $0x10] sm:$0xff]
    %v10544 = vld [vmem:[%s10540 + $0x18] sm:$0xff]
    %v10545 = vld [vmem:[%s10540 + $0x20] sm:$0xff]
    %v10546 = vld [vmem:[%s10540 + $0x28] sm:$0xff]
    %v10547 = vld [vmem:[%s10540 + $0x30] sm:$0xff]
    %v10548 = vld [vmem:[%s10540 + $0x38] sm:$0xff]
    %v10549 = vld [vmem:[%s10540 + $0x40] sm:$0xff]
    %v10550 = vld [vmem:[%s10540 + $0x48] sm:$0xff]
    %v10551 = vld [vmem:[%s10540 + $0x50] sm:$0xff]
    %v10552 = vld [vmem:[%s10540 + $0x58] sm:$0xff]
    %v10553 = vld [vmem:[%s10540 + $0x60] sm:$0xff]
    %v10554 = vld [vmem:[%s10540 + $0x68] sm:$0xff]
    %v10555 = vld [vmem:[%s10540 + $0x70] sm:$0xff]
    %v10556 = vld [vmem:[%s10540 + $0x78] sm:$0xff]
    %v10557 = vld [vmem:[%s10540 + $0x80] sm:$0xff]
    %v10558 = vld [vmem:[%s10540 + $0x88] sm:$0xff]
    %v10559 = vld [vmem:[%s10540 + $0x90] sm:$0xff]
    %v10560 = vld [vmem:[%s10540 + $0x98] sm:$0xff]
    %v10561 = vld [vmem:[%s10540 + $0xa0] sm:$0xff]
    %v10562 = vld [vmem:[%s10540 + $0xa8] sm:$0xff]
    %v10563 = vld [vmem:[%s10540 + $0xb0] sm:$0xff]
    %v10564 = vld [vmem:[%s10540 + $0xb8] sm:$0xff]
    %v10565 = vld [vmem:[%s10540 + $0xc0] sm:$0xff]
    %v10566 = vld [vmem:[%s10540 + $0xc8] sm:$0xff]
    %v10567 = vld [vmem:[%s10540 + $0xd0] sm:$0xff]
    %v10568 = vld [vmem:[%s10540 + $0xd8] sm:$0xff]
    %v10569 = vld [vmem:[%s10540 + $0xe0] sm:$0xff]
    %v10570 = vld [vmem:[%s10540 + $0xe8] sm:$0xff]
    %v10571 = vld [vmem:[%s10540 + $0xf0] sm:$0xff]
    %v10572 = vld [vmem:[%s10540 + $0xf8] sm:$0xff]
    %v10573 = vld [vmem:[%s10540 + $0x100] sm:$0xff]
    %v10574 = vld [vmem:[%s10540 + $0x108] sm:$0xff]
    %v10575 = vld [vmem:[%s10540 + $0x110] sm:$0xff]
    %v10576 = vld [vmem:[%s10540 + $0x118] sm:$0xff]
    %v10577 = vld [vmem:[%s10540 + $0x120] sm:$0xff]
    %v10578 = vld [vmem:[%s10540 + $0x128] sm:$0xff]
    %v10579 = vld [vmem:[%s10540 + $0x130] sm:$0xff]
    %v10580 = vld [vmem:[%s10540 + $0x138] sm:$0xff]
    %v10621 = vunpack.c.l.b16 %v10541
    %v10622 = vunpack.c.h.b16 %v10541
    %v10623 = vunpack.c.l.b16 %v10542
    %v10624 = vunpack.c.h.b16 %v10542
    %v10625 = vunpack.c.l.b16 %v10543
    %v10626 = vunpack.c.h.b16 %v10543
    %v10627 = vunpack.c.l.b16 %v10544
    %v10628 = vunpack.c.h.b16 %v10544
    %v10629 = vunpack.c.l.b16 %v10545
    %v10630 = vunpack.c.h.b16 %v10545
    %v10631 = vunpack.c.l.b16 %v10546
    %v10632 = vunpack.c.h.b16 %v10546
    %v10633 = vunpack.c.l.b16 %v10547
    %v10634 = vunpack.c.h.b16 %v10547
    %v10635 = vunpack.c.l.b16 %v10548
    %v10636 = vunpack.c.h.b16 %v10548
    %v10637 = vunpack.c.l.b16 %v10549
    %v10638 = vunpack.c.h.b16 %v10549
    %v10639 = vunpack.c.l.b16 %v10550
    %v10640 = vunpack.c.h.b16 %v10550
    %v10641 = vunpack.c.l.b16 %v10551
    %v10642 = vunpack.c.h.b16 %v10551
    %v10643 = vunpack.c.l.b16 %v10552
    %v10644 = vunpack.c.h.b16 %v10552
    %v10645 = vunpack.c.l.b16 %v10553
    %v10646 = vunpack.c.h.b16 %v10553
    %v10647 = vunpack.c.l.b16 %v10554
    %v10648 = vunpack.c.h.b16 %v10554
    %v10649 = vunpack.c.l.b16 %v10555
    %v10650 = vunpack.c.h.b16 %v10555
    %v10651 = vunpack.c.l.b16 %v10556
    %v10652 = vunpack.c.h.b16 %v10556
    %v10653 = vunpack.c.l.b16 %v10557
    %v10654 = vunpack.c.h.b16 %v10557
    %v10655 = vunpack.c.l.b16 %v10558
    %v10656 = vunpack.c.h.b16 %v10558
    %v10657 = vunpack.c.l.b16 %v10559
    %v10658 = vunpack.c.h.b16 %v10559
    %v10659 = vunpack.c.l.b16 %v10560
    %v10660 = vunpack.c.h.b16 %v10560
    %v10661 = vunpack.c.l.b16 %v10561
    %v10662 = vunpack.c.h.b16 %v10561
    %v10663 = vunpack.c.l.b16 %v10562
    %v10664 = vunpack.c.h.b16 %v10562
    %v10665 = vunpack.c.l.b16 %v10563
    %v10666 = vunpack.c.h.b16 %v10563
    %v10667 = vunpack.c.l.b16 %v10564
    %v10668 = vunpack.c.h.b16 %v10564
    %v10669 = vunpack.c.l.b16 %v10565
    %v10670 = vunpack.c.h.b16 %v10565
    %v10671 = vunpack.c.l.b16 %v10566
    %v10672 = vunpack.c.h.b16 %v10566
    %v10673 = vunpack.c.l.b16 %v10567
    %v10674 = vunpack.c.h.b16 %v10567
    %v10675 = vunpack.c.l.b16 %v10568
    %v10676 = vunpack.c.h.b16 %v10568
    %v10677 = vunpack.c.l.b16 %v10569
    %v10678 = vunpack.c.h.b16 %v10569
    %v10679 = vunpack.c.l.b16 %v10570
    %v10680 = vunpack.c.h.b16 %v10570
    %v10681 = vunpack.c.l.b16 %v10571
    %v10682 = vunpack.c.h.b16 %v10571
    %v10683 = vunpack.c.l.b16 %v10572
    %v10684 = vunpack.c.h.b16 %v10572
    %v10685 = vunpack.c.l.b16 %v10573
    %v10686 = vunpack.c.h.b16 %v10573
    %v10687 = vunpack.c.l.b16 %v10574
    %v10688 = vunpack.c.h.b16 %v10574
    %v10689 = vunpack.c.l.b16 %v10575
    %v10690 = vunpack.c.h.b16 %v10575
    %v10691 = vunpack.c.l.b16 %v10576
    %v10692 = vunpack.c.h.b16 %v10576
    %v10693 = vunpack.c.l.b16 %v10577
    %v10694 = vunpack.c.h.b16 %v10577
    %v10695 = vunpack.c.l.b16 %v10578
    %v10696 = vunpack.c.h.b16 %v10578
    %v10697 = vunpack.c.l.b16 %v10579
    %v10698 = vunpack.c.h.b16 %v10579
    %v10699 = vunpack.c.l.b16 %v10580
    %v10700 = vunpack.c.h.b16 %v10580
    %v10701 = vpack.c.b16 %v10623, %v10621
    %v10702 = vpack.c.b16 %v10624, %v10622
    %v10703 = vpack.c.b16 %v10627, %v10625
    %v10704 = vpack.c.b16 %v10628, %v10626
    %v10705 = vpack.c.b16 %v10631, %v10629
    %v10706 = vpack.c.b16 %v10632, %v10630
    %v10707 = vpack.c.b16 %v10635, %v10633
    %v10708 = vpack.c.b16 %v10636, %v10634
    %v10709 = vpack.c.b16 %v10639, %v10637
    %v10710 = vpack.c.b16 %v10640, %v10638
    %v10711 = vpack.c.b16 %v10643, %v10641
    %v10712 = vpack.c.b16 %v10644, %v10642
    %v10713 = vpack.c.b16 %v10647, %v10645
    %v10714 = vpack.c.b16 %v10648, %v10646
    %v10715 = vpack.c.b16 %v10651, %v10649
    %v10716 = vpack.c.b16 %v10652, %v10650
    %v10717 = vpack.c.b16 %v10655, %v10653
    %v10718 = vpack.c.b16 %v10656, %v10654
    %v10719 = vpack.c.b16 %v10659, %v10657
    %v10720 = vpack.c.b16 %v10660, %v10658
    %v10721 = vpack.c.b16 %v10663, %v10661
    %v10722 = vpack.c.b16 %v10664, %v10662
    %v10723 = vpack.c.b16 %v10667, %v10665
    %v10724 = vpack.c.b16 %v10668, %v10666
    %v10725 = vpack.c.b16 %v10671, %v10669
    %v10726 = vpack.c.b16 %v10672, %v10670
    %v10727 = vpack.c.b16 %v10675, %v10673
    %v10728 = vpack.c.b16 %v10676, %v10674
    %v10729 = vpack.c.b16 %v10679, %v10677
    %v10730 = vpack.c.b16 %v10680, %v10678
    %v10731 = vpack.c.b16 %v10683, %v10681
    %v10732 = vpack.c.b16 %v10684, %v10682
    %v10733 = vpack.c.b16 %v10687, %v10685
    %v10734 = vpack.c.b16 %v10688, %v10686
    %v10735 = vpack.c.b16 %v10691, %v10689
    %v10736 = vpack.c.b16 %v10692, %v10690
    %v10737 = vpack.c.b16 %v10695, %v10693
    %v10738 = vpack.c.b16 %v10696, %v10694
    %v10739 = vpack.c.b16 %v10699, %v10697
    %v10740 = vpack.c.b16 %v10700, %v10698
    %v10782 = vsel %vm75, %v10539, 0
    %10784 = vmatprep.subr.bf16.mxu0 %v10702
    %10785 = vmatpush1.bf16.msra.mxu0 %v10701
    %10786 = vmatprep.subr.bf16.mxu0 %v10704
    %10787 = vmatpush1.bf16.msra.mxu0 %v10703
    %10788 = vmatprep.subr.bf16.mxu0 %v10706
    %10789 = vmatpush1.bf16.msra.mxu0 %v10705
    %10790 = vmatprep.subr.bf16.mxu0 %v10708
    %10791 = vmatpush1.bf16.msra.mxu0 %v10707
    %10792 = vmatprep.subr.bf16.mxu0 %v10710
    %10793 = vmatpush1.bf16.msra.mxu0 %v10709
    %10794 = vmatprep.subr.bf16.mxu0 %v10712
    %10795 = vmatpush1.bf16.msra.mxu0 %v10711
    %10796 = vmatprep.subr.bf16.mxu0 %v10714
    %10797 = vmatpush1.bf16.msra.mxu0 %v10713
    %10798 = vmatprep.subr.bf16.mxu0 %v10716
    %10799 = vmatpush1.bf16.msra.mxu0 %v10715
    %10800 = vmatprep.subr.bf16.mxu0 %v10718
    %10801 = vmatpush1.bf16.msra.mxu0 %v10717
    %10802 = vmatprep.subr.bf16.mxu0 %v10720
    %10803 = vmatpush1.bf16.msra.mxu0 %v10719
    %10804 = vmatprep.subr.bf16.mxu0 %v10722
    %10805 = vmatpush1.bf16.msra.mxu0 %v10721
    %10806 = vmatprep.subr.bf16.mxu0 %v10724
    %10807 = vmatpush1.bf16.msra.mxu0 %v10723
    %10808 = vmatprep.subr.bf16.mxu0 %v10726
    %10809 = vmatpush1.bf16.msra.mxu0 %v10725
    %10810 = vmatprep.subr.bf16.mxu0 %v10728
    %10811 = vmatpush1.bf16.msra.mxu0 %v10727
    %10812 = vmatprep.subr.bf16.mxu0 %v10730
    %10813 = vmatpush1.bf16.msra.mxu0 %v10729
    %10814 = vmatprep.subr.bf16.mxu0 %v10732
    %10815 = vmatpush1.bf16.msra.mxu0 %v10731
    %10816 = vmatprep.mubr.bf16.mxu0 %v10538
    %10817 = vmatmul.mubr.bf16.gmra.mrb[0].mxu0 %v10537
    %v10818 = vpop.f32.mrb[0].mxu0
    %v10819 = vadd.f32 0.0, %v10818
    %v10820 = vpop.f32.mrb[0].mxu0
    %v10821 = vadd.f32 0.0, %v10820
    %v10822 = vpop.f32.mrb[0].mxu0
    %v10823 = vpop.f32.mrb[0].mxu0
    %10824 = vdwg.mxu0
    %10825 = vmatprep.subr.bf16.mxu0 %v10734
    %10826 = vmatpush1.bf16.msra.mxu0 %v10733
    %10827 = vmatprep.subr.bf16.mxu0 %v10736
    %10828 = vmatpush1.bf16.msra.mxu0 %v10735
    %10829 = vmatprep.subr.bf16.mxu0 %v10738
    %10830 = vmatpush1.bf16.msra.mxu0 %v10737
    %10831 = vmatprep.subr.bf16.mxu0 %v10740
    %10832 = vmatpush1.bf16.msra.mxu0 %v10739
    %10833 = vmatprep.subr.bf16.mxu0 0
    %10834 = vmatpush1.bf16.msra.mxu0 0
    %10835 = vmatprep.subr.bf16.mxu0 0
    %10836 = vmatpush1.bf16.msra.mxu0 0
    %10837 = vmatprep.subr.bf16.mxu0 0
    %10838 = vmatpush1.bf16.msra.mxu0 0
    %10839 = vmatprep.subr.bf16.mxu0 0
    %10840 = vmatpush1.bf16.msra.mxu0 0
    %10841 = vmatprep.subr.bf16.mxu0 0
    %10842 = vmatpush1.bf16.msra.mxu0 0
    %10843 = vmatprep.subr.bf16.mxu0 0
    %10844 = vmatpush1.bf16.msra.mxu0 0
    %10845 = vmatprep.subr.bf16.mxu0 0
    %10846 = vmatpush1.bf16.msra.mxu0 0
    %10847 = vmatprep.subr.bf16.mxu0 0
    %10848 = vmatpush1.bf16.msra.mxu0 0
    %10849 = vmatprep.subr.bf16.mxu0 0
    %10850 = vmatpush1.bf16.msra.mxu0 0
    %10851 = vmatprep.subr.bf16.mxu0 0
    %10852 = vmatpush1.bf16.msra.mxu0 0
    %10853 = vmatprep.subr.bf16.mxu0 0
    %10854 = vmatpush1.bf16.msra.mxu0 0
    %10855 = vmatprep.subr.bf16.mxu0 0
    %10856 = vmatpush1.bf16.msra.mxu0 0
    %10857 = vmatprep.mubr.bf16.mxu0 0
    %10858 = vmatmul.mubr.bf16.gmra.mrb[0].mxu0 %v10782
    %v10859 = vpop.f32.mrb[0].mxu0
    %v10860 = vadd.f32 %v10819, %v10859
    %v10861 = vpop.f32.mrb[0].mxu0
    %v10862 = vadd.f32 %v10821, %v10861
    %v10863 = vpop.f32.mrb[0].mxu0
    %v10864 = vpop.f32.mrb[0].mxu0
    %10865 = vdwg.mxu0
    %v10866 = vadd.f32 %v10449, %v10860
    %v10867 = vadd.f32 %v10450, %v10862
    %v10868 = vld [vmem:[%s11] sm:$0x3]
    %v10870 = vlaneseq
    %v10871 = vshrl.u32 %v10870, 7
    %v10872 = vsub.s32 0, %v10871
    %v10873 = vrot.slane %v10868, %v10872
    %v10874 = vlaneseq
    %v10875 = vshrl.u32 %v10874, 7
    %v10876 = vsub.s32 1, %v10875
    %v10877 = vrot.slane %v10868, %v10876
    %v10880 = vadd.f32 %v10866, %v10873
    %v10881 = vadd.f32 %v10867, %v10877
    %v10882 = vmax.f32 %v10880, 0.0
    %v10883 = vmax.f32 %v10881, 0.0
    %v10884 = vpack.c.bf16 %v10882, %v10882
    %v10885 = vpack.c.bf16 %v10883, %v10883
    %v10886 = vld [vmem:[%s12] sm:$0xf]
    %v10887 = vld [vmem:[%s12 + $0x4] sm:$0xf]
    %v10888 = vld [vmem:[%s12 + $0x8] sm:$0xf]
    %v10889 = vld [vmem:[%s12 + $0xc] sm:$0xf]
    %v10890 = vld [vmem:[%s12 + $0x10] sm:$0xf]
    %v10891 = vld [vmem:[%s12 + $0x14] sm:$0xf]
    %v10892 = vld [vmem:[%s12 + $0x18] sm:$0xf]
    %v10893 = vld [vmem:[%s12 + $0x1c] sm:$0xf]
    %v10894 = vld [vmem:[%s12 + $0x20] sm:$0xf]
    %v10895 = vld [vmem:[%s12 + $0x24] sm:$0xf]
    %v10896 = vld [vmem:[%s12 + $0x28] sm:$0xf]
    %v10897 = vld [vmem:[%s12 + $0x2c] sm:$0xf]
    %v10898 = vld [vmem:[%s12 + $0x30] sm:$0xf]
    %v10899 = vld [vmem:[%s12 + $0x34] sm:$0xf]
    %v10900 = vld [vmem:[%s12 + $0x38] sm:$0xf]
    %v10901 = vld [vmem:[%s12 + $0x3c] sm:$0xf]
    %v10902 = vld [vmem:[%s12 + $0x40] sm:$0xf]
    %v10903 = vld [vmem:[%s12 + $0x44] sm:$0xf]
    %v10904 = vld [vmem:[%s12 + $0x48] sm:$0xf]
    %v10905 = vld [vmem:[%s12 + $0x4c] sm:$0xf]
    %v10906 = vld [vmem:[%s12 + $0x50] sm:$0xf]
    %v10907 = vld [vmem:[%s12 + $0x54] sm:$0xf]
    %v10908 = vld [vmem:[%s12 + $0x58] sm:$0xf]
    %v10909 = vld [vmem:[%s12 + $0x5c] sm:$0xf]
    %v10910 = vld [vmem:[%s12 + $0x60] sm:$0xf]
    %v10911 = vld [vmem:[%s12 + $0x64] sm:$0xf]
    %v10912 = vld [vmem:[%s12 + $0x68] sm:$0xf]
    %v10913 = vld [vmem:[%s12 + $0x6c] sm:$0xf]
    %v10914 = vld [vmem:[%s12 + $0x70] sm:$0xf]
    %v10915 = vld [vmem:[%s12 + $0x74] sm:$0xf]
    %v10916 = vld [vmem:[%s12 + $0x78] sm:$0xf]
    %v10917 = vld [vmem:[%s12 + $0x7c] sm:$0xf]
    %v10918 = vld [vmem:[%s13] sm:$0x1]
    %v10920 = vlaneseq
    %v10921 = vshrl.u32 %v10920, 7
    %v10922 = vsub.s32 0, %v10921
    %v10923 = vrot.slane %v10918, %v10922
    %v10957 = vunpack.c.l.b16 %v10886
    %v10958 = vunpack.c.l.b16 %v10887
    %v10959 = vunpack.c.l.b16 %v10888
    %v10960 = vunpack.c.l.b16 %v10889
    %v10961 = vunpack.c.l.b16 %v10890
    %v10962 = vunpack.c.l.b16 %v10891
    %v10963 = vunpack.c.l.b16 %v10892
    %v10964 = vunpack.c.l.b16 %v10893
    %v10965 = vunpack.c.l.b16 %v10894
    %v10966 = vunpack.c.l.b16 %v10895
    %v10967 = vunpack.c.l.b16 %v10896
    %v10968 = vunpack.c.l.b16 %v10897
    %v10969 = vunpack.c.l.b16 %v10898
    %v10970 = vunpack.c.l.b16 %v10899
    %v10971 = vunpack.c.l.b16 %v10900
    %v10972 = vunpack.c.l.b16 %v10901
    %v10973 = vunpack.c.l.b16 %v10902
    %v10974 = vunpack.c.l.b16 %v10903
    %v10975 = vunpack.c.l.b16 %v10904
    %v10976 = vunpack.c.l.b16 %v10905
    %v10977 = vunpack.c.l.b16 %v10906
    %v10978 = vunpack.c.l.b16 %v10907
    %v10979 = vunpack.c.l.b16 %v10908
    %v10980 = vunpack.c.l.b16 %v10909
    %v10981 = vunpack.c.l.b16 %v10910
    %v10982 = vunpack.c.l.b16 %v10911
    %v10983 = vunpack.c.l.b16 %v10912
    %v10984 = vunpack.c.l.b16 %v10913
    %v10985 = vunpack.c.l.b16 %v10914
    %v10986 = vunpack.c.l.b16 %v10915
    %v10987 = vunpack.c.l.b16 %v10916
    %v10988 = vunpack.c.l.b16 %v10917
    %v10989 = vpack.c.b16 %v10958, %v10957
    %v10990 = vpack.c.b16 %v10960, %v10959
    %v10991 = vpack.c.b16 %v10962, %v10961
    %v10992 = vpack.c.b16 %v10964, %v10963
    %v10993 = vpack.c.b16 %v10966, %v10965
    %v10994 = vpack.c.b16 %v10968, %v10967
    %v10995 = vpack.c.b16 %v10970, %v10969
    %v10996 = vpack.c.b16 %v10972, %v10971
    %v10997 = vpack.c.b16 %v10974, %v10973
    %v10998 = vpack.c.b16 %v10976, %v10975
    %v10999 = vpack.c.b16 %v10978, %v10977
    %v11000 = vpack.c.b16 %v10980, %v10979
    %v11001 = vpack.c.b16 %v10982, %v10981
    %v11002 = vpack.c.b16 %v10984, %v10983
    %v11003 = vpack.c.b16 %v10986, %v10985
    %v11004 = vpack.c.b16 %v10988, %v10987
    %11021 = vmatprep.subr.bf16.mxu0 0
    %11022 = vmatpush1.bf16.msra.mxu0 %v10989
    %11023 = vmatprep.subr.bf16.mxu0 0
    %11024 = vmatpush1.bf16.msra.mxu0 %v10990
    %11025 = vmatprep.subr.bf16.mxu0 0
    %11026 = vmatpush1.bf16.msra.mxu0 %v10991
    %11027 = vmatprep.subr.bf16.mxu0 0
    %11028 = vmatpush1.bf16.msra.mxu0 %v10992
    %11029 = vmatprep.subr.bf16.mxu0 0
    %11030 = vmatpush1.bf16.msra.mxu0 %v10993
    %11031 = vmatprep.subr.bf16.mxu0 0
    %11032 = vmatpush1.bf16.msra.mxu0 %v10994
    %11033 = vmatprep.subr.bf16.mxu0 0
    %11034 = vmatpush1.bf16.msra.mxu0 %v10995
    %11035 = vmatprep.subr.bf16.mxu0 0
    %11036 = vmatpush1.bf16.msra.mxu0 %v10996
    %11037 = vmatprep.subr.bf16.mxu0 0
    %11038 = vmatpush1.bf16.msra.mxu0 %v10997
    %11039 = vmatprep.subr.bf16.mxu0 0
    %11040 = vmatpush1.bf16.msra.mxu0 %v10998
    %11041 = vmatprep.subr.bf16.mxu0 0
    %11042 = vmatpush1.bf16.msra.mxu0 %v10999
    %11043 = vmatprep.subr.bf16.mxu0 0
    %11044 = vmatpush1.bf16.msra.mxu0 %v11000
    %11045 = vmatprep.subr.bf16.mxu0 0
    %11046 = vmatpush1.bf16.msra.mxu0 %v11001
    %11047 = vmatprep.subr.bf16.mxu0 0
    %11048 = vmatpush1.bf16.msra.mxu0 %v11002
    %11049 = vmatprep.subr.bf16.mxu0 0
    %11050 = vmatpush1.bf16.msra.mxu0 %v11003
    %11051 = vmatprep.subr.bf16.mxu0 0
    %11052 = vmatpush1.bf16.msra.mxu0 %v11004
    %11053 = vmatprep.mubr.bf16.mxu0 %v10885
    %11054 = vmatmul.mubr.bf16.gmra.mrb[0].mxu0 %v10884
    %v11055 = vpop.f32.mrb[0].mxu0
    %v11056 = vadd.f32 %v10923, %v11055
    %v11057 = vpop.f32.mrb[0].mxu0
    %v11058 = vpop.f32.mrb[0].mxu0
    %v11059 = vpop.f32.mrb[0].mxu0
    %11060 = vdwg.mxu0
    %v11061 = vmax.f32 %v11056, 0.0
    %v11062 = vpack.c.bf16 %v11061, %v11061
    %v11063 = vld [vmem:[%s14] sm:$0xf]
    %v11064 = vld [vmem:[%s14 + $0x4] sm:$0xf]
    %v11065 = vld [vmem:[%s14 + $0x8] sm:$0xf]
    %v11066 = vld [vmem:[%s14 + $0xc] sm:$0xf]
    %v11067 = vld [vmem:[%s14 + $0x10] sm:$0xf]
    %v11068 = vld [vmem:[%s14 + $0x14] sm:$0xf]
    %v11069 = vld [vmem:[%s14 + $0x18] sm:$0xf]
    %v11070 = vld [vmem:[%s14 + $0x1c] sm:$0xf]
    %v11071 = vld [vmem:[%s15] sm:$0x1]
    %v11073 = vlaneseq
    %v11074 = vshrl.u32 %v11073, 7
    %v11075 = vsub.s32 0, %v11074
    %v11076 = vrot.slane %v11071, %v11075
    %v11086 = vunpack.c.l.b16 %v11063
    %v11087 = vunpack.c.l.b16 %v11064
    %v11088 = vunpack.c.l.b16 %v11065
    %v11089 = vunpack.c.l.b16 %v11066
    %v11090 = vunpack.c.l.b16 %v11067
    %v11091 = vunpack.c.l.b16 %v11068
    %v11092 = vunpack.c.l.b16 %v11069
    %v11093 = vunpack.c.l.b16 %v11070
    %v11094 = vpack.c.b16 %v11087, %v11086
    %v11095 = vpack.c.b16 %v11089, %v11088
    %v11096 = vpack.c.b16 %v11091, %v11090
    %v11097 = vpack.c.b16 %v11093, %v11092
    %v11103 = vsel %vm75, %v11062, 0
    %11105 = vmatprep.subr.bf16.mxu0 0
    %11106 = vmatpush1.bf16.msra.mxu0 %v11094
    %11107 = vmatprep.subr.bf16.mxu0 0
    %11108 = vmatpush1.bf16.msra.mxu0 %v11095
    %11109 = vmatprep.subr.bf16.mxu0 0
    %11110 = vmatpush1.bf16.msra.mxu0 %v11096
    %11111 = vmatprep.subr.bf16.mxu0 0
    %11112 = vmatpush1.bf16.msra.mxu0 %v11097
    %11113 = vmatprep.subr.bf16.mxu0 0
    %11114 = vmatpush1.bf16.msra.mxu0 0
    %11115 = vmatprep.subr.bf16.mxu0 0
    %11116 = vmatpush1.bf16.msra.mxu0 0
    %11117 = vmatprep.subr.bf16.mxu0 0
    %11118 = vmatpush1.bf16.msra.mxu0 0
    %11119 = vmatprep.subr.bf16.mxu0 0
    %11120 = vmatpush1.bf16.msra.mxu0 0
    %11121 = vmatprep.subr.bf16.mxu0 0
    %11122 = vmatpush1.bf16.msra.mxu0 0
    %11123 = vmatprep.subr.bf16.mxu0 0
    %11124 = vmatpush1.bf16.msra.mxu0 0
    %11125 = vmatprep.subr.bf16.mxu0 0
    %11126 = vmatpush1.bf16.msra.mxu0 0
    %11127 = vmatprep.subr.bf16.mxu0 0
    %11128 = vmatpush1.bf16.msra.mxu0 0
    %11129 = vmatprep.subr.bf16.mxu0 0
    %11130 = vmatpush1.bf16.msra.mxu0 0
    %11131 = vmatprep.subr.bf16.mxu0 0
    %11132 = vmatpush1.bf16.msra.mxu0 0
    %11133 = vmatprep.subr.bf16.mxu0 0
    %11134 = vmatpush1.bf16.msra.mxu0 0
    %11135 = vmatprep.subr.bf16.mxu0 0
    %11136 = vmatpush1.bf16.msra.mxu0 0
    %11137 = vmatprep.mubr.bf16.mxu0 0
    %11138 = vmatmul.mubr.bf16.gmra.mrb[0].mxu0 %v11103
    %v11139 = vpop.f32.mrb[0].mxu0
    %v11140 = vadd.f32 %v11076, %v11139
    %v11141 = vpop.f32.mrb[0].mxu0
    %v11142 = vpop.f32.mrb[0].mxu0
    %v11143 = vpop.f32.mrb[0].mxu0
    %11144 = vdwg.mxu0
    %11145 = vst [vmem:[#allocation5] sm:$0x3] %v11140
    // Predicated region
    $region66: #{simple_cnn_forward.1} parent=1 // pred_check
      _
    $region67: #{simple_cnn_forward.1} parent=1 // pred_check_branch
      %11147 = sbr.rel (0) target = $region69
    $region68: #{simple_cnn_forward.1} parent=1 // pred_region
      %s11149 = ssub.s32 32, 32
      %11150 = vsyncadd [#allocation6], %s11149
      %s11152 = sshll.u32 [#allocation5], 4
      %s11153 = int_to_ptr.vmem [resolvable:$true] %s11152
      %11155 = dma.vmem_to_hbm [thread:$0]  %s11153, 32, %s16, [#allocation6]
    $region69: #{simple_cnn_forward.1} parent=1 // pred_fallthru
      _
    // Predicated region
    $region70: #{simple_cnn_forward.1} parent=1 // pred_check
      _
    $region71: #{simple_cnn_forward.1} parent=1 // pred_check_branch
      %11157 = sbr.rel (0) target = $region73
    $region72: #{simple_cnn_forward.1} parent=1 // pred_region
      %11158 = dma.done [#allocation6], 32
    $region73: #{simple_cnn_forward.1} parent=1 // pred_fallthru
      _
    %11159 = vsyncpa [#allocation6], 1

</llo_original>
